<compile_context>
chip_gen: v5e
topology: v5e:2x2
jax: 0.10.0
libtpu: 0.0.40
codegen_flags: <defaults>
</compile_context>

<pallas_src>
import math

import jax
import jax.numpy as jnp
from jax import lax
from jax.experimental import pallas as pl
from jax.experimental.pallas import tpu as pltpu

LANE = 128


def _round_up(x, m):
    return ((x + m - 1) // m) * m


def _cdiv(a, b):
    return -(-a // b)


# ----------------------------- Pallas kernel --------------------------------

def _make_kernel(*, m_p, z_p, base_in, dyn, n_rep1, n_rep2, w1p, w2p,
                 out_cols):
    """Builds the fused HyperNetwork forward kernel (static dims baked in)."""

    def _mm(x, w_ref):
        # bf16 x bf16 -> f32 accumulation on the MXU.
        return jnp.dot(x.astype(jnp.bfloat16), w_ref[...],
                       preferred_element_type=jnp.float32)

    def _linear(x, w_ref, b_ref):
        return _mm(x, w_ref) + b_ref[...]

    def _resblock(x, wa, ba, wb, bb):
        h = _linear(jax.nn.relu(x), wa, ba)
        h = _linear(jax.nn.relu(h), wb, bb)
        return x + h

    def _block_sum(n_rows, block, n_cols):
        # S[j, d] = 1.0  iff  j // block == d.  Built in-kernel with iota +
        # cmp only (no HBM constant, no DMA).  0/1 is exact in bf16, so the
        # downstream dot is a single-pass bf16 MXU matmul.
        j = lax.broadcasted_iota(jnp.int32, (n_rows, n_cols), 0)
        d = lax.broadcasted_iota(jnp.int32, (n_rows, n_cols), 1)
        m = jnp.logical_and(j >= d * block, j < (d + 1) * block)
        return m.astype(jnp.bfloat16)

    def kernel(*refs):
        in_ref = refs[0]                           # fused [ meta | base ] slab
        emb = refs[1:31]                           # 15 (W, b) pairs
        (hw1w, hw1b, hb1w, hb1b,
         hw2w, hw2b, hb2w, hb2b) = refs[31:39]     # Head params (layer1, last)
        out_ref = refs[39]                         # [ z | out ] slab

        def W(i):
            return emb[2 * i]

        def B(i):
            return emb[2 * i + 1]

        xin = in_ref[...]                          # (TILE_B, m_p + base_cols) bf16
        x = xin[:, :m_p]                           # lane-aligned slice
        base = xin[:, m_p:m_p + base_in].astype(jnp.float32)

        # ---- Meta_Embedding: Linear + 2 ResBlocks, x3 stages ----
        x = _linear(x, W(0), B(0))
        x = _resblock(x, W(1), B(1), W(2), B(2))
        x = _resblock(x, W(3), B(3), W(4), B(4))
        x = _linear(x, W(5), B(5))
        x = _resblock(x, W(6), B(6), W(7), B(7))
        x = _resblock(x, W(8), B(8), W(9), B(9))
        x = _linear(x, W(10), B(10))
        x = _resblock(x, W(11), B(11), W(12), B(12))
        x = _resblock(x, W(13), B(13), W(14), B(14))
        z = x                                      # (TILE_B, z_p) f32; pad cols = 0

        # ---- Heads: per-sample (flattened) weights & biases ----
        w1_flat = _linear(z, hw1w, hw1b)           # (TILE_B, w1p)
        b1v = _linear(z, hb1w, hb1b)               # (TILE_B, dyn)
        w2_flat = _linear(z, hw2w, hw2b)           # (TILE_B, w2p)
        b2v = _linear(z, hb2w, hb2b)               # (TILE_B, out_cols); pad = 0

        # ---- dynamic 2-layer MLP (torch.bmm done as pure 2-D ops) ----
        base_exp = jnp.tile(base, (1, n_rep1))     # lane tiling: VPU/XLU slots
        s1 = _block_sum(w1p, base_in, dyn)
        p1 = (w1_flat * base_exp).astype(jnp.bfloat16)   # single-pass MXU operand
        h = jnp.dot(p1, s1, preferred_element_type=jnp.float32) + b1v
        h = jax.nn.relu(h)                         # (TILE_B, dyn)
        # TODO(synk): if production dyn < 128, pad dyn (and restructure the
        # w2_flat column layout) to keep b1v/h/s1-output lane-dense.

        h_exp = jnp.tile(h, (1, n_rep2))           # (TILE_B, w2p)
        s2 = _block_sum(w2p, dyn, out_cols)
        p2 = (w2_flat * h_exp).astype(jnp.bfloat16)
        out = jnp.dot(p2, s2, preferred_element_type=jnp.float32) + b2v

        # Two direct 128-aligned stores (no concat temporary); both unmasked.
        out_ref[:, :z_p] = z
        out_ref[:, z_p:z_p + out_cols] = out

    return kernel


# ------------------------------ glue / wrapper -------------------------------

def _vmem_capacity_bytes():
    # Generation-aware VMEM cap: 128 MiB on v5e/v6e, 64 MiB per TC on v7x.
    try:
        return int(pltpu.get_tpu_info().vmem_capacity_bytes)
    except Exception:
        return 64 << 20          # safe on every generation


def hypernetwork_forward(meta_v, base_v, params, *, base_v_input_dim,
                         base_v_output_dim, dynamic_layer_dim, z_dim,
                         tile_b=256):
    emb_params, head_params = params
    bsz, meta_dim = meta_v.shape
    base_in, dyn, base_out = base_v_input_dim, dynamic_layer_dim, base_v_output_dim

    # Padded (lane-aligned) geometry.
    m_p = _round_up(meta_dim, LANE)
    z_p = _round_up(z_dim, LANE)
    out_cols = _round_up(base_out, LANE)
    base_cols = _round_up(base_in, LANE)
    # Head flat widths: multiples of the block size (extra trailing columns are
    # zero weights -> contribute 0).  They are also LANE multiples whenever
    # base_in / dyn are powers of two (true here); for other values this only
    # degrades lane-density, never correctness.
    w1p = base_in * _cdiv(_round_up(dyn * base_in, LANE), base_in)
    w2p = dyn * _cdiv(_round_up(base_out * dyn, LANE), dyn)
    n_rep1 = w1p // base_in
    n_rep2 = w2p // dyn
    in_w = m_p + base_cols           # fused bf16 input slab [ meta | base ]
    out_w = z_p + out_cols

    # Production-sized batch tile (multiple of 16 for bf16 sublane packing),
    # capped to the rounded-up batch so tiny demos don't over-pad.
    tile_b = max(16, int(tile_b))
    tile_b = min(_round_up(tile_b, 16), _round_up(bsz, 16))
    b_pad = _round_up(max(bsz, tile_b), tile_b)
    grid = (b_pad // tile_b,)

    f32, bf16 = jnp.float32, jnp.bfloat16

    def pad2(a, rows, cols, dtype):
        a = a.astype(f32)
        a = jnp.pad(a, ((0, rows - a.shape[0]), (0, cols - a.shape[1])))
        return a.astype(dtype)

    # Fused, lane-padded, bf16 activation slab (single streaming DMA per step).
    xin = jnp.zeros((b_pad, in_w), f32)
    xin = xin.at[:bsz, :meta_dim].set(meta_v.astype(f32))
    xin = xin.at[:bsz, m_p:m_p + base_in].set(base_v.astype(f32))
    xin = xin.astype(bf16)

    # Weights -> bf16 (halves VMEM, MXU-native); biases stay f32 (VPU add).
    flat = [xin]
    for w, b in emb_params:
        rp, cp = _round_up(w.shape[0], LANE), _round_up(w.shape[1], LANE)
        flat.append(pad2(w, rp, cp, bf16))
        flat.append(pad2(b, 1, cp, f32))

    (w1w, w1b), (b1w, b1b), (w2w, w2b), (b2w, b2b) = head_params
    flat += [pad2(w1w, z_p, w1p, bf16), pad2(w1b, 1, w1p, f32),
             pad2(b1w, z_p, dyn, bf16), pad2(b1b, 1, dyn, f32),
             pad2(w2w, z_p, w2p, bf16), pad2(w2b, 1, w2p, f32),
             pad2(b2w, z_p, out_cols, bf16), pad2(b2b, 1, out_cols, f32)]

    def batch_map(i):
        return (i, 0)

    # Activations stream through the batch grid; weights/biases are placed in
    # VMEM in full (single resident copy, no per-step re-DMA, no double
    # buffering -> halves the weight footprint vs. pipelined const-index specs).
    in_specs = [pl.BlockSpec((tile_b, in_w), batch_map)]
    in_specs += [pl.BlockSpec(memory_space=pltpu.MemorySpace.VMEM)
                 for _ in flat[1:]]
    out_specs = pl.BlockSpec((tile_b, out_w), batch_map)

    # Scoped-VMEM budget: 1x resident weights + double-buffered activation I/O
    # + temporaries headroom, capped at the chip's physical VMEM.
    cap = max(min(_vmem_capacity_bytes(), 128 << 20), 48 << 20)
    resident = sum(a.size * a.dtype.itemsize for a in flat[1:])
    streamed = 2 * tile_b * (in_w * 2 + out_w * 4)
    scratch = 16 * tile_b * max(m_p, z_p, w1p, w2p, out_cols) * 4
    vmem_limit = int(min(max(resident + streamed + scratch + (16 << 20),
                             32 << 20), cap))

    kernel = _make_kernel(m_p=m_p, z_p=z_p, base_in=base_in, dyn=dyn,
                          n_rep1=n_rep1, n_rep2=n_rep2, w1p=w1p, w2p=w2p,
                          out_cols=out_cols)

    slab = pl.pallas_call(
        kernel,
        out_shape=jax.ShapeDtypeStruct((b_pad, out_w), jnp.float32),
        grid=grid,
        in_specs=in_specs,
        out_specs=out_specs,
        compiler_params=pltpu.CompilerParams(
            dimension_semantics=("parallel",),
            vmem_limit_bytes=vmem_limit),
    )(*flat)

    z = slab[:bsz, :z_dim]
    out = slab[:bsz, z_p:z_p + base_out]
    return z, out


def init_params(key, meta_dim, z_dim, base_in, base_out, dyn):
    q, half = z_dim // 4, z_dim // 2
    emb_dims = [(meta_dim, q),
                (q, q), (q, q), (q, q), (q, q),
                (q, half),
                (half, half), (half, half), (half, half), (half, half),
                (half, z_dim),
                (z_dim, z_dim), (z_dim, z_dim), (z_dim, z_dim), (z_dim, z_dim)]
    head_dims = [(z_dim, dyn * base_in), (z_dim, dyn),
                 (z_dim, base_out * dyn), (z_dim, base_out)]

    emb_params, head_params = [], []
    for fan_in, fan_out in emb_dims:
        key, kw, kb = jax.random.split(key, 3)
        wb = 1.0 / (2.0 * math.sqrt(fan_in))        # Meta_Embedding.init_layers
        bb = 1.0 / math.sqrt(fan_in)                # torch default Linear bias
        w = jax.random.uniform(kw, (fan_in, fan_out), jnp.float32, -wb, wb)
        b = jax.random.uniform(kb, (1, fan_out), jnp.float32, -bb, bb)
        emb_params.append((w, b))
    for fan_in, fan_out in head_dims:
        key, kw, kb = jax.random.split(key, 3)
        bd = 1.0 / math.sqrt(fan_in)                # torch default Linear init
        w = jax.random.uniform(kw, (fan_in, fan_out), jnp.float32, -bd, bd)
        b = jax.random.uniform(kb, (1, fan_out), jnp.float32, -bd, bd)
        head_params.append((w, b))
    return emb_params, head_params


# --------------------------- pure-JAX reference ------------------------------
# Mirrors the torch forward; matmul / bmm operands are quantized to bf16
# exactly where the kernel's MXU path quantizes them (f32 accumulation), so
# kernel/reference differ only by f32 summation order.

def reference_forward(meta_v, base_v, params, *, base_in, base_out, dyn):
    emb_params, head_params = params
    f32, bf16 = jnp.float32, jnp.bfloat16

    def lin(x, p):
        w, b = p
        return jnp.dot(x.astype(bf16), w.astype(bf16),
                       preferred_element_type=f32) + b

    def res(x, pa, pb):
        h = lin(jax.nn.relu(x), pa)
        h = lin(jax.nn.relu(h), pb)
        return x + h

    x = lin(meta_v, emb_params[0])
    x = res(x, emb_params[1], emb_params[2])
    x = res(x, emb_params[3], emb_params[4])
    x = lin(x, emb_params[5])
    x = res(x, emb_params[6], emb_params[7])
    x = res(x, emb_params[8], emb_params[9])
    x = lin(x, emb_params[10])
    x = res(x, emb_params[11], emb_params[12])
    x = res(x, emb_params[13], emb_params[14])
    z = x

    bsz = z.shape[0]
    w1 = lin(z, head_params[0]).reshape(bsz, dyn, base_in)
    b1 = lin(z, head_params[1])                       # (B, dyn)
    w2 = lin(z, head_params[2]).reshape(bsz, base_out, dyn)
    b2 = lin(z, head_params[3])                       # (B, base_out)

    bv = base_v.astype(bf16).astype(f32)              # kernel streams base as bf16
    p1 = (w1 * bv[:, None, :]).astype(bf16).astype(f32)
    h = jax.nn.relu(jnp.sum(p1, axis=-1) + b1)
    p2 = (w2 * h[:, None, :]).astype(bf16).astype(f32)
    out = jnp.sum(p2, axis=-1) + b2
    return z, out


# TODO(synk): Head.lr_approx (torch.svd low-rank approx) is not used by
# HyperNetwork.forward and is not implemented.

if __name__ == "__main__":
    META_DIM, Z_DIM = 8, 32
    BASE_IN, BASE_OUT, DYN = 4, 4, 16
    BATCH, TILE_B = 512, 256       # grid=(2,): even length, production MXU tile

    key = jax.random.PRNGKey(0)
    k_meta, k_base, k_params = jax.random.split(key, 3)
    meta_v = jax.random.normal(k_meta, (BATCH, META_DIM), dtype=jnp.float32)
    base_v = jax.random.normal(k_base, (BATCH, BASE_IN), dtype=jnp.float32)
    params = init_params(k_params, META_DIM, Z_DIM, BASE_IN, BASE_OUT, DYN)

    z, out = hypernetwork_forward(
        meta_v, base_v, params,
        base_v_input_dim=BASE_IN, base_v_output_dim=BASE_OUT,
        dynamic_layer_dim=DYN, z_dim=Z_DIM, tile_b=TILE_B)
    jax.block_until_ready((z, out))

    z_ref, out_ref = reference_forward(
        meta_v, base_v, params, base_in=BASE_IN, base_out=BASE_OUT, dyn=DYN)

    assert z.shape == (BATCH, Z_DIM) and out.shape == (BATCH, BASE_OUT)
    assert jnp.allclose(z, z_ref, atol=1e-3, rtol=1e-3), \
        float(jnp.max(jnp.abs(z - z_ref)))
    assert jnp.allclose(out, out_ref, atol=1e-3, rtol=1e-3), \
        float(jnp.max(jnp.abs(out - out_ref)))
    print("KERNEL_OK")
</pallas_src>

<mosaic_0001>
module attributes {stable_mosaic.version = 11 : i64} {
  func.func @kernel(%arg0: i32, %arg1: memref<256x256xbf16, #tpu.memory_space<vmem>>, %arg2: memref<128x128xbf16, #tpu.memory_space<vmem>>, %arg3: memref<1x128xf32, #tpu.memory_space<vmem>>, %arg4: memref<128x128xbf16, #tpu.memory_space<vmem>>, %arg5: memref<1x128xf32, #tpu.memory_space<vmem>>, %arg6: memref<128x128xbf16, #tpu.memory_space<vmem>>, %arg7: memref<1x128xf32, #tpu.memory_space<vmem>>, %arg8: memref<128x128xbf16, #tpu.memory_space<vmem>>, %arg9: memref<1x128xf32, #tpu.memory_space<vmem>>, %arg10: memref<128x128xbf16, #tpu.memory_space<vmem>>, %arg11: memref<1x128xf32, #tpu.memory_space<vmem>>, %arg12: memref<128x128xbf16, #tpu.memory_space<vmem>>, %arg13: memref<1x128xf32, #tpu.memory_space<vmem>>, %arg14: memref<128x128xbf16, #tpu.memory_space<vmem>>, %arg15: memref<1x128xf32, #tpu.memory_space<vmem>>, %arg16: memref<128x128xbf16, #tpu.memory_space<vmem>>, %arg17: memref<1x128xf32, #tpu.memory_space<vmem>>, %arg18: memref<128x128xbf16, #tpu.memory_space<vmem>>, %arg19: memref<1x128xf32, #tpu.memory_space<vmem>>, %arg20: memref<128x128xbf16, #tpu.memory_space<vmem>>, %arg21: memref<1x128xf32, #tpu.memory_space<vmem>>, %arg22: memref<128x128xbf16, #tpu.memory_space<vmem>>, %arg23: memref<1x128xf32, #tpu.memory_space<vmem>>, %arg24: memref<128x128xbf16, #tpu.memory_space<vmem>>, %arg25: memref<1x128xf32, #tpu.memory_space<vmem>>, %arg26: memref<128x128xbf16, #tpu.memory_space<vmem>>, %arg27: memref<1x128xf32, #tpu.memory_space<vmem>>, %arg28: memref<128x128xbf16, #tpu.memory_space<vmem>>, %arg29: memref<1x128xf32, #tpu.memory_space<vmem>>, %arg30: memref<128x128xbf16, #tpu.memory_space<vmem>>, %arg31: memref<1x128xf32, #tpu.memory_space<vmem>>, %arg32: memref<128x128xbf16, #tpu.memory_space<vmem>>, %arg33: memref<1x128xf32, #tpu.memory_space<vmem>>, %arg34: memref<128x16xbf16, #tpu.memory_space<vmem>>, %arg35: memref<1x16xf32, #tpu.memory_space<vmem>>, %arg36: memref<128x128xbf16, #tpu.memory_space<vmem>>, %arg37: memref<1x128xf32, #tpu.memory_space<vmem>>, %arg38: memref<128x128xbf16, #tpu.memory_space<vmem>>, %arg39: memref<1x128xf32, #tpu.memory_space<vmem>>, %arg40: memref<256x256xf32, #tpu.memory_space<vmem>>) attributes {dimension_semantics = [#tpu.dimension_semantics<parallel>], iteration_bounds = array<i64: 2>, scalar_prefetch = 0 : i64, scratch_operands = 0 : i64, tpu.core_type = #tpu.core_type<tc>, window_params = [{transform_indices = @transform_0, window_bounds = array<i64: 256, 256>}, {pipeline_mode = #tpu.pipeline_mode<synchronous>, transform_indices = @transform_1, window_bounds = array<i64: 128, 128>}, {pipeline_mode = #tpu.pipeline_mode<synchronous>, transform_indices = @transform_2, window_bounds = array<i64: 1, 128>}, {pipeline_mode = #tpu.pipeline_mode<synchronous>, transform_indices = @transform_3, window_bounds = array<i64: 128, 128>}, {pipeline_mode = #tpu.pipeline_mode<synchronous>, transform_indices = @transform_4, window_bounds = array<i64: 1, 128>}, {pipeline_mode = #tpu.pipeline_mode<synchronous>, transform_indices = @transform_5, window_bounds = array<i64: 128, 128>}, {pipeline_mode = #tpu.pipeline_mode<synchronous>, transform_indices = @transform_6, window_bounds = array<i64: 1, 128>}, {pipeline_mode = #tpu.pipeline_mode<synchronous>, transform_indices = @transform_7, window_bounds = array<i64: 128, 128>}, {pipeline_mode = #tpu.pipeline_mode<synchronous>, transform_indices = @transform_8, window_bounds = array<i64: 1, 128>}, {pipeline_mode = #tpu.pipeline_mode<synchronous>, transform_indices = @transform_9, window_bounds = array<i64: 128, 128>}, {pipeline_mode = #tpu.pipeline_mode<synchronous>, transform_indices = @transform_10, window_bounds = array<i64: 1, 128>}, {pipeline_mode = #tpu.pipeline_mode<synchronous>, transform_indices = @transform_11, window_bounds = array<i64: 128, 128>}, {pipeline_mode = #tpu.pipeline_mode<synchronous>, transform_indices = @transform_12, window_bounds = array<i64: 1, 128>}, {pipeline_mode = #tpu.pipeline_mode<synchronous>, transform_indices = @transform_13, window_bounds = array<i64: 128, 128>}, {pipeline_mode = #tpu.pipeline_mode<synchronous>, transform_indices = @transform_14, window_bounds = array<i64: 1, 128>}, {pipeline_mode = #tpu.pipeline_mode<synchronous>, transform_indices = @transform_15, window_bounds = array<i64: 128, 128>}, {pipeline_mode = #tpu.pipeline_mode<synchronous>, transform_indices = @transform_16, window_bounds = array<i64: 1, 128>}, {pipeline_mode = #tpu.pipeline_mode<synchronous>, transform_indices = @transform_17, window_bounds = array<i64: 128, 128>}, {pipeline_mode = #tpu.pipeline_mode<synchronous>, transform_indices = @transform_18, window_bounds = array<i64: 1, 128>}, {pipeline_mode = #tpu.pipeline_mode<synchronous>, transform_indices = @transform_19, window_bounds = array<i64: 128, 128>}, {pipeline_mode = #tpu.pipeline_mode<synchronous>, transform_indices = @transform_20, window_bounds = array<i64: 1, 128>}, {pipeline_mode = #tpu.pipeline_mode<synchronous>, transform_indices = @transform_21, window_bounds = array<i64: 128, 128>}, {pipeline_mode = #tpu.pipeline_mode<synchronous>, transform_indices = @transform_22, window_bounds = array<i64: 1, 128>}, {pipeline_mode = #tpu.pipeline_mode<synchronous>, transform_indices = @transform_23, window_bounds = array<i64: 128, 128>}, {pipeline_mode = #tpu.pipeline_mode<synchronous>, transform_indices = @transform_24, window_bounds = array<i64: 1, 128>}, {pipeline_mode = #tpu.pipeline_mode<synchronous>, transform_indices = @transform_25, window_bounds = array<i64: 128, 128>}, {pipeline_mode = #tpu.pipeline_mode<synchronous>, transform_indices = @transform_26, window_bounds = array<i64: 1, 128>}, {pipeline_mode = #tpu.pipeline_mode<synchronous>, transform_indices = @transform_27, window_bounds = array<i64: 128, 128>}, {pipeline_mode = #tpu.pipeline_mode<synchronous>, transform_indices = @transform_28, window_bounds = array<i64: 1, 128>}, {pipeline_mode = #tpu.pipeline_mode<synchronous>, transform_indices = @transform_29, window_bounds = array<i64: 128, 128>}, {pipeline_mode = #tpu.pipeline_mode<synchronous>, transform_indices = @transform_30, window_bounds = array<i64: 1, 128>}, {pipeline_mode = #tpu.pipeline_mode<synchronous>, transform_indices = @transform_31, window_bounds = array<i64: 128, 128>}, {pipeline_mode = #tpu.pipeline_mode<synchronous>, transform_indices = @transform_32, window_bounds = array<i64: 1, 128>}, {pipeline_mode = #tpu.pipeline_mode<synchronous>, transform_indices = @transform_33, window_bounds = array<i64: 128, 16>}, {pipeline_mode = #tpu.pipeline_mode<synchronous>, transform_indices = @transform_34, window_bounds = array<i64: 1, 16>}, {pipeline_mode = #tpu.pipeline_mode<synchronous>, transform_indices = @transform_35, window_bounds = array<i64: 128, 128>}, {pipeline_mode = #tpu.pipeline_mode<synchronous>, transform_indices = @transform_36, window_bounds = array<i64: 1, 128>}, {pipeline_mode = #tpu.pipeline_mode<synchronous>, transform_indices = @transform_37, window_bounds = array<i64: 128, 128>}, {pipeline_mode = #tpu.pipeline_mode<synchronous>, transform_indices = @transform_38, window_bounds = array<i64: 1, 128>}, {transform_indices = @transform_39, window_bounds = array<i64: 256, 256>}]} {
    %c0 = arith.constant 0 : index
    %c0_0 = arith.constant 0 : index
    %0 = vector.load %arg1[%c0, %c0_0] : memref<256x256xbf16, #tpu.memory_space<vmem>>, vector<256x256xbf16>
    %1 = vector.extract_strided_slice %0 {offsets = [0, 0], sizes = [256, 128], strides = [1, 1]} : vector<256x256xbf16> to vector<256x128xbf16>
    %2 = vector.extract_strided_slice %0 {offsets = [0, 128], sizes = [256, 4], strides = [1, 1]} : vector<256x256xbf16> to vector<256x4xbf16>
    %3 = arith.extf %2 : vector<256x4xbf16> to vector<256x4xf32>
    %c0_1 = arith.constant 0 : index
    %c0_2 = arith.constant 0 : index
    %4 = vector.load %arg2[%c0_1, %c0_2] : memref<128x128xbf16, #tpu.memory_space<vmem>>, vector<128x128xbf16>
    %cst = arith.constant dense<0.000000e+00> : vector<256x128xf32>
    %5 = tpu.matmul %1, %4, %cst {dimension_numbers = #tpu.dot_dimension_numbers<[1], [0], [0], [1], [0, 0, 1, 1], [], []>} : vector<256x128xbf16>, vector<128x128xbf16>, vector<256x128xf32> -> vector<256x128xf32>
    %c0_3 = arith.constant 0 : index
    %c0_4 = arith.constant 0 : index
    %6 = vector.load %arg3[%c0_3, %c0_4] : memref<1x128xf32, #tpu.memory_space<vmem>>, vector<1x128xf32>
    %7 = vector.broadcast %6 : vector<1x128xf32> to vector<256x128xf32>
    %8 = arith.addf %5, %7 : vector<256x128xf32>
    %cst_5 = arith.constant 0.000000e+00 : f32
    %9 = vector.broadcast %cst_5 : f32 to vector<256x128xf32>
    %10 = arith.maximumf %8, %9 : vector<256x128xf32>
    %11 = arith.truncf %10 : vector<256x128xf32> to vector<256x128xbf16>
    %c0_6 = arith.constant 0 : index
    %c0_7 = arith.constant 0 : index
    %12 = vector.load %arg4[%c0_6, %c0_7] : memref<128x128xbf16, #tpu.memory_space<vmem>>, vector<128x128xbf16>
    %cst_8 = arith.constant dense<0.000000e+00> : vector<256x128xf32>
    %13 = tpu.matmul %11, %12, %cst_8 {dimension_numbers = #tpu.dot_dimension_numbers<[1], [0], [0], [1], [0, 0, 1, 1], [], []>} : vector<256x128xbf16>, vector<128x128xbf16>, vector<256x128xf32> -> vector<256x128xf32>
    %c0_9 = arith.constant 0 : index
    %c0_10 = arith.constant 0 : index
    %14 = vector.load %arg5[%c0_9, %c0_10] : memref<1x128xf32, #tpu.memory_space<vmem>>, vector<1x128xf32>
    %15 = vector.broadcast %14 : vector<1x128xf32> to vector<256x128xf32>
    %16 = arith.addf %13, %15 : vector<256x128xf32>
    %cst_11 = arith.constant 0.000000e+00 : f32
    %17 = vector.broadcast %cst_11 : f32 to vector<256x128xf32>
    %18 = arith.maximumf %16, %17 : vector<256x128xf32>
    %19 = arith.truncf %18 : vector<256x128xf32> to vector<256x128xbf16>
    %c0_12 = arith.constant 0 : index
    %c0_13 = arith.constant 0 : index
    %20 = vector.load %arg6[%c0_12, %c0_13] : memref<128x128xbf16, #tpu.memory_space<vmem>>, vector<128x128xbf16>
    %cst_14 = arith.constant dense<0.000000e+00> : vector<256x128xf32>
    %21 = tpu.matmul %19, %20, %cst_14 {dimension_numbers = #tpu.dot_dimension_numbers<[1], [0], [0], [1], [0, 0, 1, 1], [], []>} : vector<256x128xbf16>, vector<128x128xbf16>, vector<256x128xf32> -> vector<256x128xf32>
    %c0_15 = arith.constant 0 : index
    %c0_16 = arith.constant 0 : index
    %22 = vector.load %arg7[%c0_15, %c0_16] : memref<1x128xf32, #tpu.memory_space<vmem>>, vector<1x128xf32>
    %23 = vector.broadcast %22 : vector<1x128xf32> to vector<256x128xf32>
    %24 = arith.addf %21, %23 : vector<256x128xf32>
    %25 = arith.addf %8, %24 : vector<256x128xf32>
    %cst_17 = arith.constant 0.000000e+00 : f32
    %26 = vector.broadcast %cst_17 : f32 to vector<256x128xf32>
    %27 = arith.maximumf %25, %26 : vector<256x128xf32>
    %28 = arith.truncf %27 : vector<256x128xf32> to vector<256x128xbf16>
    %c0_18 = arith.constant 0 : index
    %c0_19 = arith.constant 0 : index
    %29 = vector.load %arg8[%c0_18, %c0_19] : memref<128x128xbf16, #tpu.memory_space<vmem>>, vector<128x128xbf16>
    %cst_20 = arith.constant dense<0.000000e+00> : vector<256x128xf32>
    %30 = tpu.matmul %28, %29, %cst_20 {dimension_numbers = #tpu.dot_dimension_numbers<[1], [0], [0], [1], [0, 0, 1, 1], [], []>} : vector<256x128xbf16>, vector<128x128xbf16>, vector<256x128xf32> -> vector<256x128xf32>
    %c0_21 = arith.constant 0 : index
    %c0_22 = arith.constant 0 : index
    %31 = vector.load %arg9[%c0_21, %c0_22] : memref<1x128xf32, #tpu.memory_space<vmem>>, vector<1x128xf32>
    %32 = vector.broadcast %31 : vector<1x128xf32> to vector<256x128xf32>
    %33 = arith.addf %30, %32 : vector<256x128xf32>
    %cst_23 = arith.constant 0.000000e+00 : f32
    %34 = vector.broadcast %cst_23 : f32 to vector<256x128xf32>
    %35 = arith.maximumf %33, %34 : vector<256x128xf32>
    %36 = arith.truncf %35 : vector<256x128xf32> to vector<256x128xbf16>
    %c0_24 = arith.constant 0 : index
    %c0_25 = arith.constant 0 : index
    %37 = vector.load %arg10[%c0_24, %c0_25] : memref<128x128xbf16, #tpu.memory_space<vmem>>, vector<128x128xbf16>
    %cst_26 = arith.constant dense<0.000000e+00> : vector<256x128xf32>
    %38 = tpu.matmul %36, %37, %cst_26 {dimension_numbers = #tpu.dot_dimension_numbers<[1], [0], [0], [1], [0, 0, 1, 1], [], []>} : vector<256x128xbf16>, vector<128x128xbf16>, vector<256x128xf32> -> vector<256x128xf32>
    %c0_27 = arith.constant 0 : index
    %c0_28 = arith.constant 0 : index
    %39 = vector.load %arg11[%c0_27, %c0_28] : memref<1x128xf32, #tpu.memory_space<vmem>>, vector<1x128xf32>
    %40 = vector.broadcast %39 : vector<1x128xf32> to vector<256x128xf32>
    %41 = arith.addf %38, %40 : vector<256x128xf32>
    %42 = arith.addf %25, %41 : vector<256x128xf32>
    %43 = arith.truncf %42 : vector<256x128xf32> to vector<256x128xbf16>
    %c0_29 = arith.constant 0 : index
    %c0_30 = arith.constant 0 : index
    %44 = vector.load %arg12[%c0_29, %c0_30] : memref<128x128xbf16, #tpu.memory_space<vmem>>, vector<128x128xbf16>
    %cst_31 = arith.constant dense<0.000000e+00> : vector<256x128xf32>
    %45 = tpu.matmul %43, %44, %cst_31 {dimension_numbers = #tpu.dot_dimension_numbers<[1], [0], [0], [1], [0, 0, 1, 1], [], []>} : vector<256x128xbf16>, vector<128x128xbf16>, vector<256x128xf32> -> vector<256x128xf32>
    %c0_32 = arith.constant 0 : index
    %c0_33 = arith.constant 0 : index
    %46 = vector.load %arg13[%c0_32, %c0_33] : memref<1x128xf32, #tpu.memory_space<vmem>>, vector<1x128xf32>
    %47 = vector.broadcast %46 : vector<1x128xf32> to vector<256x128xf32>
    %48 = arith.addf %45, %47 : vector<256x128xf32>
    %cst_34 = arith.constant 0.000000e+00 : f32
    %49 = vector.broadcast %cst_34 : f32 to vector<256x128xf32>
    %50 = arith.maximumf %48, %49 : vector<256x128xf32>
    %51 = arith.truncf %50 : vector<256x128xf32> to vector<256x128xbf16>
    %c0_35 = arith.constant 0 : index
    %c0_36 = arith.constant 0 : index
    %52 = vector.load %arg14[%c0_35, %c0_36] : memref<128x128xbf16, #tpu.memory_space<vmem>>, vector<128x128xbf16>
    %cst_37 = arith.constant dense<0.000000e+00> : vector<256x128xf32>
    %53 = tpu.matmul %51, %52, %cst_37 {dimension_numbers = #tpu.dot_dimension_numbers<[1], [0], [0], [1], [0, 0, 1, 1], [], []>} : vector<256x128xbf16>, vector<128x128xbf16>, vector<256x128xf32> -> vector<256x128xf32>
    %c0_38 = arith.constant 0 : index
    %c0_39 = arith.constant 0 : index
    %54 = vector.load %arg15[%c0_38, %c0_39] : memref<1x128xf32, #tpu.memory_space<vmem>>, vector<1x128xf32>
    %55 = vector.broadcast %54 : vector<1x128xf32> to vector<256x128xf32>
    %56 = arith.addf %53, %55 : vector<256x128xf32>
    %cst_40 = arith.constant 0.000000e+00 : f32
    %57 = vector.broadcast %cst_40 : f32 to vector<256x128xf32>
    %58 = arith.maximumf %56, %57 : vector<256x128xf32>
    %59 = arith.truncf %58 : vector<256x128xf32> to vector<256x128xbf16>
    %c0_41 = arith.constant 0 : index
    %c0_42 = arith.constant 0 : index
    %60 = vector.load %arg16[%c0_41, %c0_42] : memref<128x128xbf16, #tpu.memory_space<vmem>>, vector<128x128xbf16>
    %cst_43 = arith.constant dense<0.000000e+00> : vector<256x128xf32>
    %61 = tpu.matmul %59, %60, %cst_43 {dimension_numbers = #tpu.dot_dimension_numbers<[1], [0], [0], [1], [0, 0, 1, 1], [], []>} : vector<256x128xbf16>, vector<128x128xbf16>, vector<256x128xf32> -> vector<256x128xf32>
    %c0_44 = arith.constant 0 : index
    %c0_45 = arith.constant 0 : index
    %62 = vector.load %arg17[%c0_44, %c0_45] : memref<1x128xf32, #tpu.memory_space<vmem>>, vector<1x128xf32>
    %63 = vector.broadcast %62 : vector<1x128xf32> to vector<256x128xf32>
    %64 = arith.addf %61, %63 : vector<256x128xf32>
    %65 = arith.addf %48, %64 : vector<256x128xf32>
    %cst_46 = arith.constant 0.000000e+00 : f32
    %66 = vector.broadcast %cst_46 : f32 to vector<256x128xf32>
    %67 = arith.maximumf %65, %66 : vector<256x128xf32>
    %68 = arith.truncf %67 : vector<256x128xf32> to vector<256x128xbf16>
    %c0_47 = arith.constant 0 : index
    %c0_48 = arith.constant 0 : index
    %69 = vector.load %arg18[%c0_47, %c0_48] : memref<128x128xbf16, #tpu.memory_space<vmem>>, vector<128x128xbf16>
    %cst_49 = arith.constant dense<0.000000e+00> : vector<256x128xf32>
    %70 = tpu.matmul %68, %69, %cst_49 {dimension_numbers = #tpu.dot_dimension_numbers<[1], [0], [0], [1], [0, 0, 1, 1], [], []>} : vector<256x128xbf16>, vector<128x128xbf16>, vector<256x128xf32> -> vector<256x128xf32>
    %c0_50 = arith.constant 0 : index
    %c0_51 = arith.constant 0 : index
    %71 = vector.load %arg19[%c0_50, %c0_51] : memref<1x128xf32, #tpu.memory_space<vmem>>, vector<1x128xf32>
    %72 = vector.broadcast %71 : vector<1x128xf32> to vector<256x128xf32>
    %73 = arith.addf %70, %72 : vector<256x128xf32>
    %cst_52 = arith.constant 0.000000e+00 : f32
    %74 = vector.broadcast %cst_52 : f32 to vector<256x128xf32>
    %75 = arith.maximumf %73, %74 : vector<256x128xf32>
    %76 = arith.truncf %75 : vector<256x128xf32> to vector<256x128xbf16>
    %c0_53 = arith.constant 0 : index
    %c0_54 = arith.constant 0 : index
    %77 = vector.load %arg20[%c0_53, %c0_54] : memref<128x128xbf16, #tpu.memory_space<vmem>>, vector<128x128xbf16>
    %cst_55 = arith.constant dense<0.000000e+00> : vector<256x128xf32>
    %78 = tpu.matmul %76, %77, %cst_55 {dimension_numbers = #tpu.dot_dimension_numbers<[1], [0], [0], [1], [0, 0, 1, 1], [], []>} : vector<256x128xbf16>, vector<128x128xbf16>, vector<256x128xf32> -> vector<256x128xf32>
    %c0_56 = arith.constant 0 : index
    %c0_57 = arith.constant 0 : index
    %79 = vector.load %arg21[%c0_56, %c0_57] : memref<1x128xf32, #tpu.memory_space<vmem>>, vector<1x128xf32>
    %80 = vector.broadcast %79 : vector<1x128xf32> to vector<256x128xf32>
    %81 = arith.addf %78, %80 : vector<256x128xf32>
    %82 = arith.addf %65, %81 : vector<256x128xf32>
    %83 = arith.truncf %82 : vector<256x128xf32> to vector<256x128xbf16>
    %c0_58 = arith.constant 0 : index
    %c0_59 = arith.constant 0 : index
    %84 = vector.load %arg22[%c0_58, %c0_59] : memref<128x128xbf16, #tpu.memory_space<vmem>>, vector<128x128xbf16>
    %cst_60 = arith.constant dense<0.000000e+00> : vector<256x128xf32>
    %85 = tpu.matmul %83, %84, %cst_60 {dimension_numbers = #tpu.dot_dimension_numbers<[1], [0], [0], [1], [0, 0, 1, 1], [], []>} : vector<256x128xbf16>, vector<128x128xbf16>, vector<256x128xf32> -> vector<256x128xf32>
    %c0_61 = arith.constant 0 : index
    %c0_62 = arith.constant 0 : index
    %86 = vector.load %arg23[%c0_61, %c0_62] : memref<1x128xf32, #tpu.memory_space<vmem>>, vector<1x128xf32>
    %87 = vector.broadcast %86 : vector<1x128xf32> to vector<256x128xf32>
    %88 = arith.addf %85, %87 : vector<256x128xf32>
    %cst_63 = arith.constant 0.000000e+00 : f32
    %89 = vector.broadcast %cst_63 : f32 to vector<256x128xf32>
    %90 = arith.maximumf %88, %89 : vector<256x128xf32>
    %91 = arith.truncf %90 : vector<256x128xf32> to vector<256x128xbf16>
    %c0_64 = arith.constant 0 : index
    %c0_65 = arith.constant 0 : index
    %92 = vector.load %arg24[%c0_64, %c0_65] : memref<128x128xbf16, #tpu.memory_space<vmem>>, vector<128x128xbf16>
    %cst_66 = arith.constant dense<0.000000e+00> : vector<256x128xf32>
    %93 = tpu.matmul %91, %92, %cst_66 {dimension_numbers = #tpu.dot_dimension_numbers<[1], [0], [0], [1], [0, 0, 1, 1], [], []>} : vector<256x128xbf16>, vector<128x128xbf16>, vector<256x128xf32> -> vector<256x128xf32>
    %c0_67 = arith.constant 0 : index
    %c0_68 = arith.constant 0 : index
    %94 = vector.load %arg25[%c0_67, %c0_68] : memref<1x128xf32, #tpu.memory_space<vmem>>, vector<1x128xf32>
    %95 = vector.broadcast %94 : vector<1x128xf32> to vector<256x128xf32>
    %96 = arith.addf %93, %95 : vector<256x128xf32>
    %cst_69 = arith.constant 0.000000e+00 : f32
    %97 = vector.broadcast %cst_69 : f32 to vector<256x128xf32>
    %98 = arith.maximumf %96, %97 : vector<256x128xf32>
    %99 = arith.truncf %98 : vector<256x128xf32> to vector<256x128xbf16>
    %c0_70 = arith.constant 0 : index
    %c0_71 = arith.constant 0 : index
    %100 = vector.load %arg26[%c0_70, %c0_71] : memref<128x128xbf16, #tpu.memory_space<vmem>>, vector<128x128xbf16>
    %cst_72 = arith.constant dense<0.000000e+00> : vector<256x128xf32>
    %101 = tpu.matmul %99, %100, %cst_72 {dimension_numbers = #tpu.dot_dimension_numbers<[1], [0], [0], [1], [0, 0, 1, 1], [], []>} : vector<256x128xbf16>, vector<128x128xbf16>, vector<256x128xf32> -> vector<256x128xf32>
    %c0_73 = arith.constant 0 : index
    %c0_74 = arith.constant 0 : index
    %102 = vector.load %arg27[%c0_73, %c0_74] : memref<1x128xf32, #tpu.memory_space<vmem>>, vector<1x128xf32>
    %103 = vector.broadcast %102 : vector<1x128xf32> to vector<256x128xf32>
    %104 = arith.addf %101, %103 : vector<256x128xf32>
    %105 = arith.addf %88, %104 : vector<256x128xf32>
    %cst_75 = arith.constant 0.000000e+00 : f32
    %106 = vector.broadcast %cst_75 : f32 to vector<256x128xf32>
    %107 = arith.maximumf %105, %106 : vector<256x128xf32>
    %108 = arith.truncf %107 : vector<256x128xf32> to vector<256x128xbf16>
    %c0_76 = arith.constant 0 : index
    %c0_77 = arith.constant 0 : index
    %109 = vector.load %arg28[%c0_76, %c0_77] : memref<128x128xbf16, #tpu.memory_space<vmem>>, vector<128x128xbf16>
    %cst_78 = arith.constant dense<0.000000e+00> : vector<256x128xf32>
    %110 = tpu.matmul %108, %109, %cst_78 {dimension_numbers = #tpu.dot_dimension_numbers<[1], [0], [0], [1], [0, 0, 1, 1], [], []>} : vector<256x128xbf16>, vector<128x128xbf16>, vector<256x128xf32> -> vector<256x128xf32>
    %c0_79 = arith.constant 0 : index
    %c0_80 = arith.constant 0 : index
    %111 = vector.load %arg29[%c0_79, %c0_80] : memref<1x128xf32, #tpu.memory_space<vmem>>, vector<1x128xf32>
    %112 = vector.broadcast %111 : vector<1x128xf32> to vector<256x128xf32>
    %113 = arith.addf %110, %112 : vector<256x128xf32>
    %cst_81 = arith.constant 0.000000e+00 : f32
    %114 = vector.broadcast %cst_81 : f32 to vector<256x128xf32>
    %115 = arith.maximumf %113, %114 : vector<256x128xf32>
    %116 = arith.truncf %115 : vector<256x128xf32> to vector<256x128xbf16>
    %c0_82 = arith.constant 0 : index
    %c0_83 = arith.constant 0 : index
    %117 = vector.load %arg30[%c0_82, %c0_83] : memref<128x128xbf16, #tpu.memory_space<vmem>>, vector<128x128xbf16>
    %cst_84 = arith.constant dense<0.000000e+00> : vector<256x128xf32>
    %118 = tpu.matmul %116, %117, %cst_84 {dimension_numbers = #tpu.dot_dimension_numbers<[1], [0], [0], [1], [0, 0, 1, 1], [], []>} : vector<256x128xbf16>, vector<128x128xbf16>, vector<256x128xf32> -> vector<256x128xf32>
    %c0_85 = arith.constant 0 : index
    %c0_86 = arith.constant 0 : index
    %119 = vector.load %arg31[%c0_85, %c0_86] : memref<1x128xf32, #tpu.memory_space<vmem>>, vector<1x128xf32>
    %120 = vector.broadcast %119 : vector<1x128xf32> to vector<256x128xf32>
    %121 = arith.addf %118, %120 : vector<256x128xf32>
    %122 = arith.addf %105, %121 : vector<256x128xf32>
    %123 = arith.truncf %122 : vector<256x128xf32> to vector<256x128xbf16>
    %c0_87 = arith.constant 0 : index
    %c0_88 = arith.constant 0 : index
    %124 = vector.load %arg32[%c0_87, %c0_88] : memref<128x128xbf16, #tpu.memory_space<vmem>>, vector<128x128xbf16>
    %cst_89 = arith.constant dense<0.000000e+00> : vector<256x128xf32>
    %125 = tpu.matmul %123, %124, %cst_89 {dimension_numbers = #tpu.dot_dimension_numbers<[1], [0], [0], [1], [0, 0, 1, 1], [], []>} : vector<256x128xbf16>, vector<128x128xbf16>, vector<256x128xf32> -> vector<256x128xf32>
    %c0_90 = arith.constant 0 : index
    %c0_91 = arith.constant 0 : index
    %126 = vector.load %arg33[%c0_90, %c0_91] : memref<1x128xf32, #tpu.memory_space<vmem>>, vector<1x128xf32>
    %127 = vector.broadcast %126 : vector<1x128xf32> to vector<256x128xf32>
    %128 = arith.addf %125, %127 : vector<256x128xf32>
    %129 = arith.truncf %122 : vector<256x128xf32> to vector<256x128xbf16>
    %c0_92 = arith.constant 0 : index
    %c0_93 = arith.constant 0 : index
    %130 = vector.load %arg34[%c0_92, %c0_93] : memref<128x16xbf16, #tpu.memory_space<vmem>>, vector<128x16xbf16>
    %cst_94 = arith.constant dense<0.000000e+00> : vector<256x16xf32>
    %131 = tpu.matmul %129, %130, %cst_94 {dimension_numbers = #tpu.dot_dimension_numbers<[1], [0], [0], [1], [0, 0, 1, 1], [], []>} : vector<256x128xbf16>, vector<128x16xbf16>, vector<256x16xf32> -> vector<256x16xf32>
    %c0_95 = arith.constant 0 : index
    %c0_96 = arith.constant 0 : index
    %132 = vector.load %arg35[%c0_95, %c0_96] : memref<1x16xf32, #tpu.memory_space<vmem>>, vector<1x16xf32>
    %133 = vector.broadcast %132 : vector<1x16xf32> to vector<256x16xf32>
    %134 = arith.addf %131, %133 : vector<256x16xf32>
    %135 = arith.truncf %122 : vector<256x128xf32> to vector<256x128xbf16>
    %c0_97 = arith.constant 0 : index
    %c0_98 = arith.constant 0 : index
    %136 = vector.load %arg36[%c0_97, %c0_98] : memref<128x128xbf16, #tpu.memory_space<vmem>>, vector<128x128xbf16>
    %cst_99 = arith.constant dense<0.000000e+00> : vector<256x128xf32>
    %137 = tpu.matmul %135, %136, %cst_99 {dimension_numbers = #tpu.dot_dimension_numbers<[1], [0], [0], [1], [0, 0, 1, 1], [], []>} : vector<256x128xbf16>, vector<128x128xbf16>, vector<256x128xf32> -> vector<256x128xf32>
    %c0_100 = arith.constant 0 : index
    %c0_101 = arith.constant 0 : index
    %138 = vector.load %arg37[%c0_100, %c0_101] : memref<1x128xf32, #tpu.memory_space<vmem>>, vector<1x128xf32>
    %139 = vector.broadcast %138 : vector<1x128xf32> to vector<256x128xf32>
    %140 = arith.addf %137, %139 : vector<256x128xf32>
    %141 = arith.truncf %122 : vector<256x128xf32> to vector<256x128xbf16>
    %c0_102 = arith.constant 0 : index
    %c0_103 = arith.constant 0 : index
    %142 = vector.load %arg38[%c0_102, %c0_103] : memref<128x128xbf16, #tpu.memory_space<vmem>>, vector<128x128xbf16>
    %cst_104 = arith.constant dense<0.000000e+00> : vector<256x128xf32>
    %143 = tpu.matmul %141, %142, %cst_104 {dimension_numbers = #tpu.dot_dimension_numbers<[1], [0], [0], [1], [0, 0, 1, 1], [], []>} : vector<256x128xbf16>, vector<128x128xbf16>, vector<256x128xf32> -> vector<256x128xf32>
    %c0_105 = arith.constant 0 : index
    %c0_106 = arith.constant 0 : index
    %144 = vector.load %arg39[%c0_105, %c0_106] : memref<1x128xf32, #tpu.memory_space<vmem>>, vector<1x128xf32>
    %145 = vector.broadcast %144 : vector<1x128xf32> to vector<256x128xf32>
    %146 = arith.addf %143, %145 : vector<256x128xf32>
    %147 = tpu.concatenate %3, %3, %3, %3, %3, %3, %3, %3, %3, %3, %3, %3, %3, %3, %3, %3, %3, %3, %3, %3, %3, %3, %3, %3, %3, %3, %3, %3, %3, %3, %3, %3 in 1 : vector<256x4xf32>, vector<256x4xf32>, vector<256x4xf32>, vector<256x4xf32>, vector<256x4xf32>, vector<256x4xf32>, vector<256x4xf32>, vector<256x4xf32>, vector<256x4xf32>, vector<256x4xf32>, vector<256x4xf32>, vector<256x4xf32>, vector<256x4xf32>, vector<256x4xf32>, vector<256x4xf32>, vector<256x4xf32>, vector<256x4xf32>, vector<256x4xf32>, vector<256x4xf32>, vector<256x4xf32>, vector<256x4xf32>, vector<256x4xf32>, vector<256x4xf32>, vector<256x4xf32>, vector<256x4xf32>, vector<256x4xf32>, vector<256x4xf32>, vector<256x4xf32>, vector<256x4xf32>, vector<256x4xf32>, vector<256x4xf32>, vector<256x4xf32> -> vector<256x128xf32>
    %148 = tpu.iota {dimensions = array<i32: 0>} : vector<128x16xi32>
    %149 = tpu.iota {dimensions = array<i32: 1>} : vector<128x16xi32>
    %c4_i32 = arith.constant 4 : i32
    %150 = vector.broadcast %c4_i32 : i32 to vector<128x16xi32>
    %151 = arith.muli %149, %150 : vector<128x16xi32>
    %152 = arith.cmpi sge, %148, %151 : vector<128x16xi32>
    %c1_i32 = arith.constant 1 : i32
    %153 = vector.broadcast %c1_i32 : i32 to vector<128x16xi32>
    %154 = arith.addi %149, %153 : vector<128x16xi32>
    %c4_i32_107 = arith.constant 4 : i32
    %155 = vector.broadcast %c4_i32_107 : i32 to vector<128x16xi32>
    %156 = arith.muli %154, %155 : vector<128x16xi32>
    %157 = arith.cmpi slt, %148, %156 : vector<128x16xi32>
    %158 = arith.andi %152, %157 : vector<128x16xi1>
    %159 = arith.extui %158 : vector<128x16xi1> to vector<128x16xi32>
    %160 = arith.sitofp %159 : vector<128x16xi32> to vector<128x16xf32>
    %161 = arith.truncf %160 : vector<128x16xf32> to vector<128x16xbf16>
    %162 = arith.mulf %128, %147 : vector<256x128xf32>
    %163 = arith.truncf %162 : vector<256x128xf32> to vector<256x128xbf16>
    %cst_108 = arith.constant dense<0.000000e+00> : vector<256x16xf32>
    %164 = tpu.matmul %163, %161, %cst_108 {dimension_numbers = #tpu.dot_dimension_numbers<[1], [0], [0], [1], [0, 0, 1, 1], [], []>} : vector<256x128xbf16>, vector<128x16xbf16>, vector<256x16xf32> -> vector<256x16xf32>
    %165 = arith.addf %164, %134 : vector<256x16xf32>
    %cst_109 = arith.constant 0.000000e+00 : f32
    %166 = vector.broadcast %cst_109 : f32 to vector<256x16xf32>
    %167 = arith.maximumf %165, %166 : vector<256x16xf32>
    %168 = tpu.concatenate %167, %167, %167, %167, %167, %167, %167, %167 in 1 : vector<256x16xf32>, vector<256x16xf32>, vector<256x16xf32>, vector<256x16xf32>, vector<256x16xf32>, vector<256x16xf32>, vector<256x16xf32>, vector<256x16xf32> -> vector<256x128xf32>
    %169 = tpu.iota {dimensions = array<i32: 0>} : vector<128x128xi32>
    %170 = tpu.iota {dimensions = array<i32: 1>} : vector<128x128xi32>
    %c16_i32 = arith.constant 16 : i32
    %171 = vector.broadcast %c16_i32 : i32 to vector<128x128xi32>
    %172 = arith.muli %170, %171 : vector<128x128xi32>
    %173 = arith.cmpi sge, %169, %172 : vector<128x128xi32>
    %c1_i32_110 = arith.constant 1 : i32
    %174 = vector.broadcast %c1_i32_110 : i32 to vector<128x128xi32>
    %175 = arith.addi %170, %174 : vector<128x128xi32>
    %c16_i32_111 = arith.constant 16 : i32
    %176 = vector.broadcast %c16_i32_111 : i32 to vector<128x128xi32>
    %177 = arith.muli %175, %176 : vector<128x128xi32>
    %178 = arith.cmpi slt, %169, %177 : vector<128x128xi32>
    %179 = arith.andi %173, %178 : vector<128x128xi1>
    %180 = arith.extui %179 : vector<128x128xi1> to vector<128x128xi32>
    %181 = arith.sitofp %180 : vector<128x128xi32> to vector<128x128xf32>
    %182 = arith.truncf %181 : vector<128x128xf32> to vector<128x128xbf16>
    %183 = arith.mulf %140, %168 : vector<256x128xf32>
    %184 = arith.truncf %183 : vector<256x128xf32> to vector<256x128xbf16>
    %cst_112 = arith.constant dense<0.000000e+00> : vector<256x128xf32>
    %185 = tpu.matmul %184, %182, %cst_112 {dimension_numbers = #tpu.dot_dimension_numbers<[1], [0], [0], [1], [0, 0, 1, 1], [], []>} : vector<256x128xbf16>, vector<128x128xbf16>, vector<256x128xf32> -> vector<256x128xf32>
    %186 = arith.addf %185, %146 : vector<256x128xf32>
    %c0_113 = arith.constant 0 : index
    %c0_114 = arith.constant 0 : index
    %187 = vector.load %arg40[%c0_113, %c0_114] : memref<256x256xf32, #tpu.memory_space<vmem>>, vector<256x128xf32>
    tpu.vector_store %arg40[%c0_113, %c0_114], %122 {strides = array<i32>} : memref<256x256xf32, #tpu.memory_space<vmem>>, vector<256x128xf32>,
    %c0_115 = arith.constant 0 : index
    %c128 = arith.constant 128 : index
    %188 = vector.load %arg40[%c0_115, %c128] : memref<256x256xf32, #tpu.memory_space<vmem>>, vector<256x128xf32>
    tpu.vector_store %arg40[%c0_115, %c128], %186 {strides = array<i32>} : memref<256x256xf32, #tpu.memory_space<vmem>>, vector<256x128xf32>,
    return
  }
  func.func @transform_0(%arg0: i32) -> (i32, i32) {
    %c0_i32 = arith.constant 0 : i32
    %c0_i32_0 = arith.constant 0 : i32
    return %arg0, %c0_i32 : i32, i32
  }
  func.func @transform_1(%arg0: i32) -> (i32, i32) {
    %c0_i32 = arith.constant 0 : i32
    %c0_i32_0 = arith.constant 0 : i32
    %c0_i32_1 = arith.constant 0 : i32
    return %c0_i32, %c0_i32_0 : i32, i32
  }
  func.func @transform_2(%arg0: i32) -> (i32, i32) {
    %c0_i32 = arith.constant 0 : i32
    %c0_i32_0 = arith.constant 0 : i32
    %c0_i32_1 = arith.constant 0 : i32
    return %c0_i32, %c0_i32_0 : i32, i32
  }
  func.func @transform_3(%arg0: i32) -> (i32, i32) {
    %c0_i32 = arith.constant 0 : i32
    %c0_i32_0 = arith.constant 0 : i32
    %c0_i32_1 = arith.constant 0 : i32
    return %c0_i32, %c0_i32_0 : i32, i32
  }
  func.func @transform_4(%arg0: i32) -> (i32, i32) {
    %c0_i32 = arith.constant 0 : i32
    %c0_i32_0 = arith.constant 0 : i32
    %c0_i32_1 = arith.constant 0 : i32
    return %c0_i32, %c0_i32_0 : i32, i32
  }
  func.func @transform_5(%arg0: i32) -> (i32, i32) {
    %c0_i32 = arith.constant 0 : i32
    %c0_i32_0 = arith.constant 0 : i32
    %c0_i32_1 = arith.constant 0 : i32
    return %c0_i32, %c0_i32_0 : i32, i32
  }
  func.func @transform_6(%arg0: i32) -> (i32, i32) {
    %c0_i32 = arith.constant 0 : i32
    %c0_i32_0 = arith.constant 0 : i32
    %c0_i32_1 = arith.constant 0 : i32
    return %c0_i32, %c0_i32_0 : i32, i32
  }
  func.func @transform_7(%arg0: i32) -> (i32, i32) {
    %c0_i32 = arith.constant 0 : i32
    %c0_i32_0 = arith.constant 0 : i32
    %c0_i32_1 = arith.constant 0 : i32
    return %c0_i32, %c0_i32_0 : i32, i32
  }
  func.func @transform_8(%arg0: i32) -> (i32, i32) {
    %c0_i32 = arith.constant 0 : i32
    %c0_i32_0 = arith.constant 0 : i32
    %c0_i32_1 = arith.constant 0 : i32
    return %c0_i32, %c0_i32_0 : i32, i32
  }
  func.func @transform_9(%arg0: i32) -> (i32, i32) {
    %c0_i32 = arith.constant 0 : i32
    %c0_i32_0 = arith.constant 0 : i32
    %c0_i32_1 = arith.constant 0 : i32
    return %c0_i32, %c0_i32_0 : i32, i32
  }
  func.func @transform_10(%arg0: i32) -> (i32, i32) {
    %c0_i32 = arith.constant 0 : i32
    %c0_i32_0 = arith.constant 0 : i32
    %c0_i32_1 = arith.constant 0 : i32
    return %c0_i32, %c0_i32_0 : i32, i32
  }
  func.func @transform_11(%arg0: i32) -> (i32, i32) {
    %c0_i32 = arith.constant 0 : i32
    %c0_i32_0 = arith.constant 0 : i32
    %c0_i32_1 = arith.constant 0 : i32
    return %c0_i32, %c0_i32_0 : i32, i32
  }
  func.func @transform_12(%arg0: i32) -> (i32, i32) {
    %c0_i32 = arith.constant 0 : i32
    %c0_i32_0 = arith.constant 0 : i32
    %c0_i32_1 = arith.constant 0 : i32
    return %c0_i32, %c0_i32_0 : i32, i32
  }
  func.func @transform_13(%arg0: i32) -> (i32, i32) {
    %c0_i32 = arith.constant 0 : i32
    %c0_i32_0 = arith.constant 0 : i32
    %c0_i32_1 = arith.constant 0 : i32
    return %c0_i32, %c0_i32_0 : i32, i32
  }
  func.func @transform_14(%arg0: i32) -> (i32, i32) {
    %c0_i32 = arith.constant 0 : i32
    %c0_i32_0 = arith.constant 0 : i32
    %c0_i32_1 = arith.constant 0 : i32
    return %c0_i32, %c0_i32_0 : i32, i32
  }
  func.func @transform_15(%arg0: i32) -> (i32, i32) {
    %c0_i32 = arith.constant 0 : i32
    %c0_i32_0 = arith.constant 0 : i32
    %c0_i32_1 = arith.constant 0 : i32
    return %c0_i32, %c0_i32_0 : i32, i32
  }
  func.func @transform_16(%arg0: i32) -> (i32, i32) {
    %c0_i32 = arith.constant 0 : i32
    %c0_i32_0 = arith.constant 0 : i32
    %c0_i32_1 = arith.constant 0 : i32
    return %c0_i32, %c0_i32_0 : i32, i32
  }
  func.func @transform_17(%arg0: i32) -> (i32, i32) {
    %c0_i32 = arith.constant 0 : i32
    %c0_i32_0 = arith.constant 0 : i32
    %c0_i32_1 = arith.constant 0 : i32
    return %c0_i32, %c0_i32_0 : i32, i32
  }
  func.func @transform_18(%arg0: i32) -> (i32, i32) {
    %c0_i32 = arith.constant 0 : i32
    %c0_i32_0 = arith.constant 0 : i32
    %c0_i32_1 = arith.constant 0 : i32
    return %c0_i32, %c0_i32_0 : i32, i32
  }
  func.func @transform_19(%arg0: i32) -> (i32, i32) {
    %c0_i32 = arith.constant 0 : i32
    %c0_i32_0 = arith.constant 0 : i32
    %c0_i32_1 = arith.constant 0 : i32
    return %c0_i32, %c0_i32_0 : i32, i32
  }
  func.func @transform_20(%arg0: i32) -> (i32, i32) {
    %c0_i32 = arith.constant 0 : i32
    %c0_i32_0 = arith.constant 0 : i32
    %c0_i32_1 = arith.constant 0 : i32
    return %c0_i32, %c0_i32_0 : i32, i32
  }
  func.func @transform_21(%arg0: i32) -> (i32, i32) {
    %c0_i32 = arith.constant 0 : i32
    %c0_i32_0 = arith.constant 0 : i32
    %c0_i32_1 = arith.constant 0 : i32
    return %c0_i32, %c0_i32_0 : i32, i32
  }
  func.func @transform_22(%arg0: i32) -> (i32, i32) {
    %c0_i32 = arith.constant 0 : i32
    %c0_i32_0 = arith.constant 0 : i32
    %c0_i32_1 = arith.constant 0 : i32
    return %c0_i32, %c0_i32_0 : i32, i32
  }
  func.func @transform_23(%arg0: i32) -> (i32, i32) {
    %c0_i32 = arith.constant 0 : i32
    %c0_i32_0 = arith.constant 0 : i32
    %c0_i32_1 = arith.constant 0 : i32
    return %c0_i32, %c0_i32_0 : i32, i32
  }
  func.func @transform_24(%arg0: i32) -> (i32, i32) {
    %c0_i32 = arith.constant 0 : i32
    %c0_i32_0 = arith.constant 0 : i32
    %c0_i32_1 = arith.constant 0 : i32
    return %c0_i32, %c0_i32_0 : i32, i32
  }
  func.func @transform_25(%arg0: i32) -> (i32, i32) {
    %c0_i32 = arith.constant 0 : i32
    %c0_i32_0 = arith.constant 0 : i32
    %c0_i32_1 = arith.constant 0 : i32
    return %c0_i32, %c0_i32_0 : i32, i32
  }
  func.func @transform_26(%arg0: i32) -> (i32, i32) {
    %c0_i32 = arith.constant 0 : i32
    %c0_i32_0 = arith.constant 0 : i32
    %c0_i32_1 = arith.constant 0 : i32
    return %c0_i32, %c0_i32_0 : i32, i32
  }
  func.func @transform_27(%arg0: i32) -> (i32, i32) {
    %c0_i32 = arith.constant 0 : i32
    %c0_i32_0 = arith.constant 0 : i32
    %c0_i32_1 = arith.constant 0 : i32
    return %c0_i32, %c0_i32_0 : i32, i32
  }
  func.func @transform_28(%arg0: i32) -> (i32, i32) {
    %c0_i32 = arith.constant 0 : i32
    %c0_i32_0 = arith.constant 0 : i32
    %c0_i32_1 = arith.constant 0 : i32
    return %c0_i32, %c0_i32_0 : i32, i32
  }
  func.func @transform_29(%arg0: i32) -> (i32, i32) {
    %c0_i32 = arith.constant 0 : i32
    %c0_i32_0 = arith.constant 0 : i32
    %c0_i32_1 = arith.constant 0 : i32
    return %c0_i32, %c0_i32_0 : i32, i32
  }
  func.func @transform_30(%arg0: i32) -> (i32, i32) {
    %c0_i32 = arith.constant 0 : i32
    %c0_i32_0 = arith.constant 0 : i32
    %c0_i32_1 = arith.constant 0 : i32
    return %c0_i32, %c0_i32_0 : i32, i32
  }
  func.func @transform_31(%arg0: i32) -> (i32, i32) {
    %c0_i32 = arith.constant 0 : i32
    %c0_i32_0 = arith.constant 0 : i32
    %c0_i32_1 = arith.constant 0 : i32
    return %c0_i32, %c0_i32_0 : i32, i32
  }
  func.func @transform_32(%arg0: i32) -> (i32, i32) {
    %c0_i32 = arith.constant 0 : i32
    %c0_i32_0 = arith.constant 0 : i32
    %c0_i32_1 = arith.constant 0 : i32
    return %c0_i32, %c0_i32_0 : i32, i32
  }
  func.func @transform_33(%arg0: i32) -> (i32, i32) {
    %c0_i32 = arith.constant 0 : i32
    %c0_i32_0 = arith.constant 0 : i32
    %c0_i32_1 = arith.constant 0 : i32
    return %c0_i32, %c0_i32_0 : i32, i32
  }
  func.func @transform_34(%arg0: i32) -> (i32, i32) {
    %c0_i32 = arith.constant 0 : i32
    %c0_i32_0 = arith.constant 0 : i32
    %c0_i32_1 = arith.constant 0 : i32
    return %c0_i32, %c0_i32_0 : i32, i32
  }
  func.func @transform_35(%arg0: i32) -> (i32, i32) {
    %c0_i32 = arith.constant 0 : i32
    %c0_i32_0 = arith.constant 0 : i32
    %c0_i32_1 = arith.constant 0 : i32
    return %c0_i32, %c0_i32_0 : i32, i32
  }
  func.func @transform_36(%arg0: i32) -> (i32, i32) {
    %c0_i32 = arith.constant 0 : i32
    %c0_i32_0 = arith.constant 0 : i32
    %c0_i32_1 = arith.constant 0 : i32
    return %c0_i32, %c0_i32_0 : i32, i32
  }
  func.func @transform_37(%arg0: i32) -> (i32, i32) {
    %c0_i32 = arith.constant 0 : i32
    %c0_i32_0 = arith.constant 0 : i32
    %c0_i32_1 = arith.constant 0 : i32
    return %c0_i32, %c0_i32_0 : i32, i32
  }
  func.func @transform_38(%arg0: i32) -> (i32, i32) {
    %c0_i32 = arith.constant 0 : i32
    %c0_i32_0 = arith.constant 0 : i32
    %c0_i32_1 = arith.constant 0 : i32
    return %c0_i32, %c0_i32_0 : i32, i32
  }
  func.func @transform_39(%arg0: i32) -> (i32, i32) {
    %c0_i32 = arith.constant 0 : i32
    %c0_i32_0 = arith.constant 0 : i32
    return %arg0, %c0_i32 : i32, i32
  }
}

</mosaic_0001>

<llo_original>
// kernel: tpu_custom_call.1
$region0: #{tpu_custom_call.1}
  #allocation0 [shape = 'u32[]', space=smem, size = 0x4, offset = 0x4, fixed_abs, tag = 'smem constant byte address 0x4 - core index']
  #allocation1 [shape = 'u32[72,128]{1,0:T(1,128)}', space=vmem, size = 0x9000, scoped, tag = 'internal scratch']
  %s0 = inlined_call_operand.smem [shape: u32[40], index: -1, kind: input, shape index: {}]
  %s1 = sld [smem:[%s0]]
  %s2 = scalar_lea.smem %s0, 1
  %s3 = sld [smem:[%s2]]
  %s4 = scalar_lea.smem %s0, 2
  %s5 = sld [smem:[%s4]]
  %s6 = scalar_lea.smem %s0, 3
  %s7 = sld [smem:[%s6]]
  %s8 = scalar_lea.smem %s0, 4
  %s9 = sld [smem:[%s8]]
  %s10 = scalar_lea.smem %s0, 5
  %s11 = sld [smem:[%s10]]
  %s12 = scalar_lea.smem %s0, 6
  %s13 = sld [smem:[%s12]]
  %s14 = scalar_lea.smem %s0, 7
  %s15 = sld [smem:[%s14]]
  %s16 = scalar_lea.smem %s0, 8
  %s17 = sld [smem:[%s16]]
  %s18 = scalar_lea.smem %s0, 9
  %s19 = sld [smem:[%s18]]
  %s20 = scalar_lea.smem %s0, 10
  %s21 = sld [smem:[%s20]]
  %s22 = scalar_lea.smem %s0, 11
  %s23 = sld [smem:[%s22]]
  %s24 = scalar_lea.smem %s0, 12
  %s25 = sld [smem:[%s24]]
  %s26 = scalar_lea.smem %s0, 13
  %s27 = sld [smem:[%s26]]
  %s28 = scalar_lea.smem %s0, 14
  %s29 = sld [smem:[%s28]]
  %s30 = scalar_lea.smem %s0, 15
  %s31 = sld [smem:[%s30]]
  %s32 = scalar_lea.smem %s0, 16
  %s33 = sld [smem:[%s32]]
  %s34 = scalar_lea.smem %s0, 17
  %s35 = sld [smem:[%s34]]
  %s36 = scalar_lea.smem %s0, 18
  %s37 = sld [smem:[%s36]]
  %s38 = scalar_lea.smem %s0, 19
  %s39 = sld [smem:[%s38]]
  %s40 = scalar_lea.smem %s0, 20
  %s41 = sld [smem:[%s40]]
  %s42 = scalar_lea.smem %s0, 21
  %s43 = sld [smem:[%s42]]
  %s44 = scalar_lea.smem %s0, 22
  %s45 = sld [smem:[%s44]]
  %s46 = scalar_lea.smem %s0, 23
  %s47 = sld [smem:[%s46]]
  %s48 = scalar_lea.smem %s0, 24
  %s49 = sld [smem:[%s48]]
  %s50 = scalar_lea.smem %s0, 25
  %s51 = sld [smem:[%s50]]
  %s52 = scalar_lea.smem %s0, 26
  %s53 = sld [smem:[%s52]]
  %s54 = scalar_lea.smem %s0, 27
  %s55 = sld [smem:[%s54]]
  %s56 = scalar_lea.smem %s0, 28
  %s57 = sld [smem:[%s56]]
  %s58 = scalar_lea.smem %s0, 29
  %s59 = sld [smem:[%s58]]
  %s60 = scalar_lea.smem %s0, 30
  %s61 = sld [smem:[%s60]]
  %s62 = scalar_lea.smem %s0, 31
  %s63 = sld [smem:[%s62]]
  %s64 = scalar_lea.smem %s0, 32
  %s65 = sld [smem:[%s64]]
  %s66 = scalar_lea.smem %s0, 33
  %s67 = sld [smem:[%s66]]
  %s68 = scalar_lea.smem %s0, 34
  %s69 = sld [smem:[%s68]]
  %s70 = scalar_lea.smem %s0, 35
  %s71 = sld [smem:[%s70]]
  %s72 = scalar_lea.smem %s0, 36
  %s73 = sld [smem:[%s72]]
  %s74 = scalar_lea.smem %s0, 37
  %s75 = sld [smem:[%s74]]
  %s76 = scalar_lea.smem %s0, 38
  %s77 = sld [smem:[%s76]]
  %s78 = scalar_lea.smem %s0, 39
  %s79 = sld [smem:[%s78]]
  %s80 = sld [smem:[#allocation0]]
  $region261: #{tpu_custom_call.1} parent=0
    _
  %s82 = ssub.s32 1, %s80
  %s83 = scalar_select 0, %s82, %s80
  $region1: #{tpu_custom_call.1} parent=0
    #allocation2 [shape = 'u8[262144]{0}', space=vmem, size = 0x40000, scoped, tag = 'input window, operand 0']
    #allocation3 [shape = 's32[2]{0}', space=sflag, size = 0x8, scoped, tag = 'scoped memory for tpu_custom_call.1']
    #allocation4 [shape = 's32[2]{0}', space=sflag, size = 0x8, scoped, tag = 'scoped memory for tpu_custom_call.1']
    #allocation5 [shape = 'u8[32768]{0}', space=vmem, size = 0x8000, scoped, tag = 'input window, operand 3, single buffered']
    #allocation6 [shape = 's32[1]{0}', space=sflag, size = 0x4, scoped, tag = 'scoped memory for tpu_custom_call.1']
    #allocation7 [shape = 'u8[32768]{0}', space=vmem, size = 0x8000, scoped, tag = 'input window, operand 5, single buffered']
    #allocation8 [shape = 'u8[32768]{0}', space=vmem, size = 0x8000, scoped, tag = 'input window, operand 7, single buffered']
    #allocation9 [shape = 's32[1]{0}', space=sflag, size = 0x4, scoped, tag = 'scoped memory for tpu_custom_call.1']
    #allocation10 [shape = 'u8[32768]{0}', space=vmem, size = 0x8000, scoped, tag = 'input window, operand 9, single buffered']
    #allocation11 [shape = 'u8[32768]{0}', space=vmem, size = 0x8000, scoped, tag = 'input window, operand 11, single buffered']
    #allocation12 [shape = 's32[1]{0}', space=sflag, size = 0x4, scoped, tag = 'scoped memory for tpu_custom_call.1']
    #allocation13 [shape = 'u8[32768]{0}', space=vmem, size = 0x8000, scoped, tag = 'input window, operand 13, single buffered']
    #allocation14 [shape = 'u8[32768]{0}', space=vmem, size = 0x8000, scoped, tag = 'input window, operand 15, single buffered']
    #allocation15 [shape = 's32[1]{0}', space=sflag, size = 0x4, scoped, tag = 'scoped memory for tpu_custom_call.1']
    #allocation16 [shape = 'u8[32768]{0}', space=vmem, size = 0x8000, scoped, tag = 'input window, operand 17, single buffered']
    #allocation17 [shape = 'u8[32768]{0}', space=vmem, size = 0x8000, scoped, tag = 'input window, operand 19, single buffered']
    #allocation18 [shape = 's32[1]{0}', space=sflag, size = 0x4, scoped, tag = 'scoped memory for tpu_custom_call.1']
    #allocation19 [shape = 'u8[32768]{0}', space=vmem, size = 0x8000, scoped, tag = 'input window, operand 21, single buffered']
    #allocation20 [shape = 'u8[32768]{0}', space=vmem, size = 0x8000, scoped, tag = 'input window, operand 23, single buffered']
    #allocation21 [shape = 's32[1]{0}', space=sflag, size = 0x4, scoped, tag = 'scoped memory for tpu_custom_call.1']
    #allocation22 [shape = 'u8[32768]{0}', space=vmem, size = 0x8000, scoped, tag = 'input window, operand 25, single buffered']
    #allocation23 [shape = 'u8[32768]{0}', space=vmem, size = 0x8000, scoped, tag = 'input window, operand 27, single buffered']
    #allocation24 [shape = 's32[1]{0}', space=sflag, size = 0x4, scoped, tag = 'scoped memory for tpu_custom_call.1']
    #allocation25 [shape = 'u8[32768]{0}', space=vmem, size = 0x8000, scoped, tag = 'input window, operand 29, single buffered']
    #allocation26 [shape = 'u8[32768]{0}', space=vmem, size = 0x8000, scoped, tag = 'input window, operand 31, single buffered']
    #allocation27 [shape = 's32[1]{0}', space=sflag, size = 0x4, scoped, tag = 'scoped memory for tpu_custom_call.1']
    #allocation28 [shape = 'u8[32768]{0}', space=vmem, size = 0x8000, scoped, tag = 'input window, operand 35, single buffered']
    #allocation29 [shape = 'u8[32768]{0}', space=vmem, size = 0x8000, scoped, tag = 'input window, operand 37, single buffered']
    #allocation30 [shape = 's32[1]{0}', space=sflag, size = 0x4, scoped, tag = 'scoped memory for tpu_custom_call.1']
    #allocation31 [shape = 'u8[524288]{0}', space=vmem, size = 0x80000, scoped, tag = 'output window, operand 0']
    %84 = vsyncpa [#allocation3], 0
    %s85 = scalar_lea.sflag [#allocation3], 1
    %86 = vsyncpa %s85, 0
    %87 = vsyncpa [#allocation6], 0
    %88 = vsyncpa [#allocation9], 0
    %89 = vsyncpa [#allocation12], 0
    %90 = vsyncpa [#allocation15], 0
    %91 = vsyncpa [#allocation18], 0
    %92 = vsyncpa [#allocation21], 0
    %93 = vsyncpa [#allocation24], 0
    %94 = vsyncpa [#allocation27], 0
    %95 = vsyncpa [#allocation30], 0
    %96 = vsyncpa [#allocation4], 0
    %s97 = scalar_lea.sflag [#allocation4], 1
    %98 = vsyncpa %s97, 0
    loop: start=0, step=1, limit=4
    $region2: #{tpu_custom_call.1} parent=1 // loop_pre_header
      _
    $region3: #{tpu_custom_call.1} parent=1 // loop_header
      %s100 = sphi 0, %s104
      %p101 = scmp.ge.s32.totalorder %s100, 4
      %s110 = sphi 0, %s112
      %s113 = sphi 0, %s110
      %s114 = sphi 0, %s113
      %s130 = sphi 0, %s114
      %s134 = sphi 0, %s134
      %s136 = sphi 0, %s134
      %s137 = sphi 0, %s136
      %s151 = sphi 0, %s137
      %s155 = sphi 0, %s155
      %s157 = sphi 0, %s155
      %s158 = sphi 0, %s157
      %s172 = sphi 0, %s158
      %s176 = sphi 0, %s176
      %s178 = sphi 0, %s176
      %s179 = sphi 0, %s178
      %s193 = sphi 0, %s179
      %s197 = sphi 0, %s197
      %s199 = sphi 0, %s197
      %s200 = sphi 0, %s199
      %s214 = sphi 0, %s200
      %s218 = sphi 0, %s218
      %s220 = sphi 0, %s218
      %s221 = sphi 0, %s220
      %s235 = sphi 0, %s221
      %s239 = sphi 0, %s239
      %s241 = sphi 0, %s239
      %s242 = sphi 0, %s241
      %s256 = sphi 0, %s242
      %s260 = sphi 0, %s260
      %s262 = sphi 0, %s260
      %s263 = sphi 0, %s262
      %s277 = sphi 0, %s263
      %s281 = sphi 0, %s281
      %s283 = sphi 0, %s281
      %s284 = sphi 0, %s283
      %s298 = sphi 0, %s284
      %s302 = sphi 0, %s302
      %s304 = sphi 0, %s302
      %s305 = sphi 0, %s304
      %s319 = sphi 0, %s305
      %s323 = sphi 0, %s323
      %s325 = sphi 0, %s323
      %s326 = sphi 0, %s325
      %s340 = sphi 0, %s326
      %s344 = sphi 0, %s344
      %s346 = sphi 0, %s344
      %s347 = sphi 0, %s346
      %s361 = sphi 0, %s347
      %s365 = sphi 0, %s365
      %s367 = sphi 0, %s365
      %s368 = sphi 0, %s367
      %s382 = sphi 0, %s368
      %s386 = sphi 0, %s386
      %s388 = sphi 0, %s386
      %s389 = sphi 0, %s388
      %s403 = sphi 0, %s389
      %s407 = sphi 0, %s407
      %s409 = sphi 0, %s407
      %s410 = sphi 0, %s409
      %s424 = sphi 0, %s410
      %s428 = sphi 0, %s428
      %s430 = sphi 0, %s428
      %s431 = sphi 0, %s430
      %s445 = sphi 0, %s431
      %s449 = sphi 0, %s449
      %s451 = sphi 0, %s449
      %s452 = sphi 0, %s451
      %s466 = sphi 0, %s452
      %s470 = sphi 0, %s470
      %s472 = sphi 0, %s470
      %s473 = sphi 0, %s472
      %s487 = sphi 0, %s473
      %s491 = sphi 0, %s491
      %s493 = sphi 0, %s491
      %s494 = sphi 0, %s493
      %s508 = sphi 0, %s494
      %s512 = sphi 0, %s512
      %s514 = sphi 0, %s512
      %s515 = sphi 0, %s514
      %s529 = sphi 0, %s515
      %s533 = sphi 0, %s533
      %s535 = sphi 0, %s533
      %s536 = sphi 0, %s535
      %s550 = sphi 0, %s536
      %s554 = sphi 0, %s554
      %s556 = sphi 0, %s554
      %s557 = sphi 0, %s556
      %s571 = sphi 0, %s557
      %s575 = sphi 0, %s575
      %s577 = sphi 0, %s575
      %s578 = sphi 0, %s577
      %s592 = sphi 0, %s578
      %s596 = sphi 0, %s596
      %s598 = sphi 0, %s596
      %s599 = sphi 0, %s598
      %s613 = sphi 0, %s599
      %s617 = sphi 0, %s617
      %s619 = sphi 0, %s617
      %s620 = sphi 0, %s619
      %s634 = sphi 0, %s620
      %s638 = sphi 0, %s638
      %s640 = sphi 0, %s638
      %s641 = sphi 0, %s640
      %s655 = sphi 0, %s641
      %s659 = sphi 0, %s659
      %s661 = sphi 0, %s659
      %s662 = sphi 0, %s661
      %s676 = sphi 0, %s662
      %s680 = sphi 0, %s680
      %s682 = sphi 0, %s680
      %s683 = sphi 0, %s682
      %s697 = sphi 0, %s683
      %s701 = sphi 0, %s701
      %s703 = sphi 0, %s701
      %s704 = sphi 0, %s703
      %s718 = sphi 0, %s704
      %s722 = sphi 0, %s722
      %s724 = sphi 0, %s722
      %s725 = sphi 0, %s724
      %s739 = sphi 0, %s725
      %s743 = sphi 0, %s743
      %s745 = sphi 0, %s743
      %s746 = sphi 0, %s745
      %s760 = sphi 0, %s746
      %s764 = sphi 0, %s764
      %s766 = sphi 0, %s764
      %s767 = sphi 0, %s766
      %s781 = sphi 0, %s767
      %s785 = sphi 0, %s785
      %s787 = sphi 0, %s785
      %s788 = sphi 0, %s787
      %s802 = sphi 0, %s788
      %s806 = sphi 0, %s806
      %s808 = sphi 0, %s806
      %s809 = sphi 0, %s808
      %s823 = sphi 0, %s809
      %s827 = sphi 0, %s827
      %s829 = sphi 0, %s827
      %s830 = sphi 0, %s829
      %s844 = sphi 0, %s830
      %s848 = sphi 0, %s848
      %s850 = sphi 0, %s848
      %s851 = sphi 0, %s850
      %s865 = sphi 0, %s851
      %s869 = sphi 0, %s869
      %s871 = sphi 0, %s869
      %s872 = sphi 0, %s871
      %s886 = sphi 0, %s872
      %s890 = sphi 0, %s890
      %s892 = sphi 0, %s890
      %s893 = sphi 0, %s892
      %s907 = sphi 0, %s893
      %s911 = sphi 0, %s911
      %s913 = sphi 0, %s911
      %s914 = sphi 0, %s913
      %s928 = sphi 0, %s914
      %s934 = sphi 0, %s936
      %s937 = sphi 0, %s934
      %s938 = sphi 0, %s937
      %s954 = sphi 0, %s938
    $region4: #{tpu_custom_call.1} parent=1 // loop_header_branch
      %103 = sbr.rel (%p101) target = $region8
    $region5: #{tpu_custom_call.1} parent=1 // loop_body
      %s105 = ssub.s32 %s100, 1
      %s106 = ssub.s32 %s100, 2
      %s107 = sadd.s32 %s100, 1
      %s108 = ssub.s32 %s100, %s107
      %p109 = scmp.eq.s32.totalorder %s108, 0
      %s111 = sadd.s32 %s110, 1
      %s112 = scalar_select %p109, %s110, %s111
      %p115 = pneg %p109
      %p116 = scmp.eq.s32.totalorder %s100, 1
      %p117 = por %p115, %p116
      %p118 = scmp.ne.s32.totalorder %s110, %s113
      %p119 = scmp.eq.s32.totalorder %s100, 0
      %p120 = por %p118, %p119
      %p121 = scmp.ne.s32.totalorder %s110, %s113
      %p122 = scmp.eq.s32.totalorder %s105, 1
      %p123 = por %p121, %p122
      %p124 = scmp.ne.s32.totalorder %s113, %s114
      %p125 = scmp.eq.s32.totalorder %s105, 0
      %p126 = por %p124, %p125
      %p127 = scmp.ne.s32.totalorder %s113, %s114
      %p128 = scmp.eq.s32.totalorder %s106, 1
      %p129 = por %p127, %p128
      %p131 = scmp.ne.s32.totalorder %s114, %s130
      %p132 = scmp.eq.s32.totalorder %s106, 0
      %p133 = por %p131, %p132
      %s135 = sadd.s32 %s134, 1
      %p138 = scmp.eq.s32.totalorder %s100, 1
      %p139 = scmp.ne.s32.totalorder %s134, %s136
      %p140 = scmp.eq.s32.totalorder %s100, 0
      %p141 = por %p139, %p140
      %p142 = scmp.ne.s32.totalorder %s134, %s136
      %p143 = scmp.eq.s32.totalorder %s105, 1
      %p144 = por %p142, %p143
      %p145 = scmp.ne.s32.totalorder %s136, %s137
      %p146 = scmp.eq.s32.totalorder %s105, 0
      %p147 = por %p145, %p146
      %p148 = scmp.ne.s32.totalorder %s136, %s137
      %p149 = scmp.eq.s32.totalorder %s106, 1
      %p150 = por %p148, %p149
      %p152 = scmp.ne.s32.totalorder %s137, %s151
      %p153 = scmp.eq.s32.totalorder %s106, 0
      %p154 = por %p152, %p153
      %s156 = sadd.s32 %s155, 1
      %p159 = scmp.eq.s32.totalorder %s100, 1
      %p160 = scmp.ne.s32.totalorder %s155, %s157
      %p161 = scmp.eq.s32.totalorder %s100, 0
      %p162 = por %p160, %p161
      %p163 = scmp.ne.s32.totalorder %s155, %s157
      %p164 = scmp.eq.s32.totalorder %s105, 1
      %p165 = por %p163, %p164
      %p166 = scmp.ne.s32.totalorder %s157, %s158
      %p167 = scmp.eq.s32.totalorder %s105, 0
      %p168 = por %p166, %p167
      %p169 = scmp.ne.s32.totalorder %s157, %s158
      %p170 = scmp.eq.s32.totalorder %s106, 1
      %p171 = por %p169, %p170
      %p173 = scmp.ne.s32.totalorder %s158, %s172
      %p174 = scmp.eq.s32.totalorder %s106, 0
      %p175 = por %p173, %p174
      %s177 = sadd.s32 %s176, 1
      %p180 = scmp.eq.s32.totalorder %s100, 1
      %p181 = scmp.ne.s32.totalorder %s176, %s178
      %p182 = scmp.eq.s32.totalorder %s100, 0
      %p183 = por %p181, %p182
      %p184 = scmp.ne.s32.totalorder %s176, %s178
      %p185 = scmp.eq.s32.totalorder %s105, 1
      %p186 = por %p184, %p185
      %p187 = scmp.ne.s32.totalorder %s178, %s179
      %p188 = scmp.eq.s32.totalorder %s105, 0
      %p189 = por %p187, %p188
      %p190 = scmp.ne.s32.totalorder %s178, %s179
      %p191 = scmp.eq.s32.totalorder %s106, 1
      %p192 = por %p190, %p191
      %p194 = scmp.ne.s32.totalorder %s179, %s193
      %p195 = scmp.eq.s32.totalorder %s106, 0
      %p196 = por %p194, %p195
      %s198 = sadd.s32 %s197, 1
      %p201 = scmp.eq.s32.totalorder %s100, 1
      %p202 = scmp.ne.s32.totalorder %s197, %s199
      %p203 = scmp.eq.s32.totalorder %s100, 0
      %p204 = por %p202, %p203
      %p205 = scmp.ne.s32.totalorder %s197, %s199
      %p206 = scmp.eq.s32.totalorder %s105, 1
      %p207 = por %p205, %p206
      %p208 = scmp.ne.s32.totalorder %s199, %s200
      %p209 = scmp.eq.s32.totalorder %s105, 0
      %p210 = por %p208, %p209
      %p211 = scmp.ne.s32.totalorder %s199, %s200
      %p212 = scmp.eq.s32.totalorder %s106, 1
      %p213 = por %p211, %p212
      %p215 = scmp.ne.s32.totalorder %s200, %s214
      %p216 = scmp.eq.s32.totalorder %s106, 0
      %p217 = por %p215, %p216
      %s219 = sadd.s32 %s218, 1
      %p222 = scmp.eq.s32.totalorder %s100, 1
      %p223 = scmp.ne.s32.totalorder %s218, %s220
      %p224 = scmp.eq.s32.totalorder %s100, 0
      %p225 = por %p223, %p224
      %p226 = scmp.ne.s32.totalorder %s218, %s220
      %p227 = scmp.eq.s32.totalorder %s105, 1
      %p228 = por %p226, %p227
      %p229 = scmp.ne.s32.totalorder %s220, %s221
      %p230 = scmp.eq.s32.totalorder %s105, 0
      %p231 = por %p229, %p230
      %p232 = scmp.ne.s32.totalorder %s220, %s221
      %p233 = scmp.eq.s32.totalorder %s106, 1
      %p234 = por %p232, %p233
      %p236 = scmp.ne.s32.totalorder %s221, %s235
      %p237 = scmp.eq.s32.totalorder %s106, 0
      %p238 = por %p236, %p237
      %s240 = sadd.s32 %s239, 1
      %p243 = scmp.eq.s32.totalorder %s100, 1
      %p244 = scmp.ne.s32.totalorder %s239, %s241
      %p245 = scmp.eq.s32.totalorder %s100, 0
      %p246 = por %p244, %p245
      %p247 = scmp.ne.s32.totalorder %s239, %s241
      %p248 = scmp.eq.s32.totalorder %s105, 1
      %p249 = por %p247, %p248
      %p250 = scmp.ne.s32.totalorder %s241, %s242
      %p251 = scmp.eq.s32.totalorder %s105, 0
      %p252 = por %p250, %p251
      %p253 = scmp.ne.s32.totalorder %s241, %s242
      %p254 = scmp.eq.s32.totalorder %s106, 1
      %p255 = por %p253, %p254
      %p257 = scmp.ne.s32.totalorder %s242, %s256
      %p258 = scmp.eq.s32.totalorder %s106, 0
      %p259 = por %p257, %p258
      %s261 = sadd.s32 %s260, 1
      %p264 = scmp.eq.s32.totalorder %s100, 1
      %p265 = scmp.ne.s32.totalorder %s260, %s262
      %p266 = scmp.eq.s32.totalorder %s100, 0
      %p267 = por %p265, %p266
      %p268 = scmp.ne.s32.totalorder %s260, %s262
      %p269 = scmp.eq.s32.totalorder %s105, 1
      %p270 = por %p268, %p269
      %p271 = scmp.ne.s32.totalorder %s262, %s263
      %p272 = scmp.eq.s32.totalorder %s105, 0
      %p273 = por %p271, %p272
      %p274 = scmp.ne.s32.totalorder %s262, %s263
      %p275 = scmp.eq.s32.totalorder %s106, 1
      %p276 = por %p274, %p275
      %p278 = scmp.ne.s32.totalorder %s263, %s277
      %p279 = scmp.eq.s32.totalorder %s106, 0
      %p280 = por %p278, %p279
      %s282 = sadd.s32 %s281, 1
      %p285 = scmp.eq.s32.totalorder %s100, 1
      %p286 = scmp.ne.s32.totalorder %s281, %s283
      %p287 = scmp.eq.s32.totalorder %s100, 0
      %p288 = por %p286, %p287
      %p289 = scmp.ne.s32.totalorder %s281, %s283
      %p290 = scmp.eq.s32.totalorder %s105, 1
      %p291 = por %p289, %p290
      %p292 = scmp.ne.s32.totalorder %s283, %s284
      %p293 = scmp.eq.s32.totalorder %s105, 0
      %p294 = por %p292, %p293
      %p295 = scmp.ne.s32.totalorder %s283, %s284
      %p296 = scmp.eq.s32.totalorder %s106, 1
      %p297 = por %p295, %p296
      %p299 = scmp.ne.s32.totalorder %s284, %s298
      %p300 = scmp.eq.s32.totalorder %s106, 0
      %p301 = por %p299, %p300
      %s303 = sadd.s32 %s302, 1
      %p306 = scmp.eq.s32.totalorder %s100, 1
      %p307 = scmp.ne.s32.totalorder %s302, %s304
      %p308 = scmp.eq.s32.totalorder %s100, 0
      %p309 = por %p307, %p308
      %p310 = scmp.ne.s32.totalorder %s302, %s304
      %p311 = scmp.eq.s32.totalorder %s105, 1
      %p312 = por %p310, %p311
      %p313 = scmp.ne.s32.totalorder %s304, %s305
      %p314 = scmp.eq.s32.totalorder %s105, 0
      %p315 = por %p313, %p314
      %p316 = scmp.ne.s32.totalorder %s304, %s305
      %p317 = scmp.eq.s32.totalorder %s106, 1
      %p318 = por %p316, %p317
      %p320 = scmp.ne.s32.totalorder %s305, %s319
      %p321 = scmp.eq.s32.totalorder %s106, 0
      %p322 = por %p320, %p321
      %s324 = sadd.s32 %s323, 1
      %p327 = scmp.eq.s32.totalorder %s100, 1
      %p328 = scmp.ne.s32.totalorder %s323, %s325
      %p329 = scmp.eq.s32.totalorder %s100, 0
      %p330 = por %p328, %p329
      %p331 = scmp.ne.s32.totalorder %s323, %s325
      %p332 = scmp.eq.s32.totalorder %s105, 1
      %p333 = por %p331, %p332
      %p334 = scmp.ne.s32.totalorder %s325, %s326
      %p335 = scmp.eq.s32.totalorder %s105, 0
      %p336 = por %p334, %p335
      %p337 = scmp.ne.s32.totalorder %s325, %s326
      %p338 = scmp.eq.s32.totalorder %s106, 1
      %p339 = por %p337, %p338
      %p341 = scmp.ne.s32.totalorder %s326, %s340
      %p342 = scmp.eq.s32.totalorder %s106, 0
      %p343 = por %p341, %p342
      %s345 = sadd.s32 %s344, 1
      %p348 = scmp.eq.s32.totalorder %s100, 1
      %p349 = scmp.ne.s32.totalorder %s344, %s346
      %p350 = scmp.eq.s32.totalorder %s100, 0
      %p351 = por %p349, %p350
      %p352 = scmp.ne.s32.totalorder %s344, %s346
      %p353 = scmp.eq.s32.totalorder %s105, 1
      %p354 = por %p352, %p353
      %p355 = scmp.ne.s32.totalorder %s346, %s347
      %p356 = scmp.eq.s32.totalorder %s105, 0
      %p357 = por %p355, %p356
      %p358 = scmp.ne.s32.totalorder %s346, %s347
      %p359 = scmp.eq.s32.totalorder %s106, 1
      %p360 = por %p358, %p359
      %p362 = scmp.ne.s32.totalorder %s347, %s361
      %p363 = scmp.eq.s32.totalorder %s106, 0
      %p364 = por %p362, %p363
      %s366 = sadd.s32 %s365, 1
      %p369 = scmp.eq.s32.totalorder %s100, 1
      %p370 = scmp.ne.s32.totalorder %s365, %s367
      %p371 = scmp.eq.s32.totalorder %s100, 0
      %p372 = por %p370, %p371
      %p373 = scmp.ne.s32.totalorder %s365, %s367
      %p374 = scmp.eq.s32.totalorder %s105, 1
      %p375 = por %p373, %p374
      %p376 = scmp.ne.s32.totalorder %s367, %s368
      %p377 = scmp.eq.s32.totalorder %s105, 0
      %p378 = por %p376, %p377
      %p379 = scmp.ne.s32.totalorder %s367, %s368
      %p380 = scmp.eq.s32.totalorder %s106, 1
      %p381 = por %p379, %p380
      %p383 = scmp.ne.s32.totalorder %s368, %s382
      %p384 = scmp.eq.s32.totalorder %s106, 0
      %p385 = por %p383, %p384
      %s387 = sadd.s32 %s386, 1
      %p390 = scmp.eq.s32.totalorder %s100, 1
      %p391 = scmp.ne.s32.totalorder %s386, %s388
      %p392 = scmp.eq.s32.totalorder %s100, 0
      %p393 = por %p391, %p392
      %p394 = scmp.ne.s32.totalorder %s386, %s388
      %p395 = scmp.eq.s32.totalorder %s105, 1
      %p396 = por %p394, %p395
      %p397 = scmp.ne.s32.totalorder %s388, %s389
      %p398 = scmp.eq.s32.totalorder %s105, 0
      %p399 = por %p397, %p398
      %p400 = scmp.ne.s32.totalorder %s388, %s389
      %p401 = scmp.eq.s32.totalorder %s106, 1
      %p402 = por %p400, %p401
      %p404 = scmp.ne.s32.totalorder %s389, %s403
      %p405 = scmp.eq.s32.totalorder %s106, 0
      %p406 = por %p404, %p405
      %s408 = sadd.s32 %s407, 1
      %p411 = scmp.eq.s32.totalorder %s100, 1
      %p412 = scmp.ne.s32.totalorder %s407, %s409
      %p413 = scmp.eq.s32.totalorder %s100, 0
      %p414 = por %p412, %p413
      %p415 = scmp.ne.s32.totalorder %s407, %s409
      %p416 = scmp.eq.s32.totalorder %s105, 1
      %p417 = por %p415, %p416
      %p418 = scmp.ne.s32.totalorder %s409, %s410
      %p419 = scmp.eq.s32.totalorder %s105, 0
      %p420 = por %p418, %p419
      %p421 = scmp.ne.s32.totalorder %s409, %s410
      %p422 = scmp.eq.s32.totalorder %s106, 1
      %p423 = por %p421, %p422
      %p425 = scmp.ne.s32.totalorder %s410, %s424
      %p426 = scmp.eq.s32.totalorder %s106, 0
      %p427 = por %p425, %p426
      %s429 = sadd.s32 %s428, 1
      %p432 = scmp.eq.s32.totalorder %s100, 1
      %p433 = scmp.ne.s32.totalorder %s428, %s430
      %p434 = scmp.eq.s32.totalorder %s100, 0
      %p435 = por %p433, %p434
      %p436 = scmp.ne.s32.totalorder %s428, %s430
      %p437 = scmp.eq.s32.totalorder %s105, 1
      %p438 = por %p436, %p437
      %p439 = scmp.ne.s32.totalorder %s430, %s431
      %p440 = scmp.eq.s32.totalorder %s105, 0
      %p441 = por %p439, %p440
      %p442 = scmp.ne.s32.totalorder %s430, %s431
      %p443 = scmp.eq.s32.totalorder %s106, 1
      %p444 = por %p442, %p443
      %p446 = scmp.ne.s32.totalorder %s431, %s445
      %p447 = scmp.eq.s32.totalorder %s106, 0
      %p448 = por %p446, %p447
      %s450 = sadd.s32 %s449, 1
      %p453 = scmp.eq.s32.totalorder %s100, 1
      %p454 = scmp.ne.s32.totalorder %s449, %s451
      %p455 = scmp.eq.s32.totalorder %s100, 0
      %p456 = por %p454, %p455
      %p457 = scmp.ne.s32.totalorder %s449, %s451
      %p458 = scmp.eq.s32.totalorder %s105, 1
      %p459 = por %p457, %p458
      %p460 = scmp.ne.s32.totalorder %s451, %s452
      %p461 = scmp.eq.s32.totalorder %s105, 0
      %p462 = por %p460, %p461
      %p463 = scmp.ne.s32.totalorder %s451, %s452
      %p464 = scmp.eq.s32.totalorder %s106, 1
      %p465 = por %p463, %p464
      %p467 = scmp.ne.s32.totalorder %s452, %s466
      %p468 = scmp.eq.s32.totalorder %s106, 0
      %p469 = por %p467, %p468
      %s471 = sadd.s32 %s470, 1
      %p474 = scmp.eq.s32.totalorder %s100, 1
      %p475 = scmp.ne.s32.totalorder %s470, %s472
      %p476 = scmp.eq.s32.totalorder %s100, 0
      %p477 = por %p475, %p476
      %p478 = scmp.ne.s32.totalorder %s470, %s472
      %p479 = scmp.eq.s32.totalorder %s105, 1
      %p480 = por %p478, %p479
      %p481 = scmp.ne.s32.totalorder %s472, %s473
      %p482 = scmp.eq.s32.totalorder %s105, 0
      %p483 = por %p481, %p482
      %p484 = scmp.ne.s32.totalorder %s472, %s473
      %p485 = scmp.eq.s32.totalorder %s106, 1
      %p486 = por %p484, %p485
      %p488 = scmp.ne.s32.totalorder %s473, %s487
      %p489 = scmp.eq.s32.totalorder %s106, 0
      %p490 = por %p488, %p489
      %s492 = sadd.s32 %s491, 1
      %p495 = scmp.eq.s32.totalorder %s100, 1
      %p496 = scmp.ne.s32.totalorder %s491, %s493
      %p497 = scmp.eq.s32.totalorder %s100, 0
      %p498 = por %p496, %p497
      %p499 = scmp.ne.s32.totalorder %s491, %s493
      %p500 = scmp.eq.s32.totalorder %s105, 1
      %p501 = por %p499, %p500
      %p502 = scmp.ne.s32.totalorder %s493, %s494
      %p503 = scmp.eq.s32.totalorder %s105, 0
      %p504 = por %p502, %p503
      %p505 = scmp.ne.s32.totalorder %s493, %s494
      %p506 = scmp.eq.s32.totalorder %s106, 1
      %p507 = por %p505, %p506
      %p509 = scmp.ne.s32.totalorder %s494, %s508
      %p510 = scmp.eq.s32.totalorder %s106, 0
      %p511 = por %p509, %p510
      %s513 = sadd.s32 %s512, 1
      %p516 = scmp.eq.s32.totalorder %s100, 1
      %p517 = scmp.ne.s32.totalorder %s512, %s514
      %p518 = scmp.eq.s32.totalorder %s100, 0
      %p519 = por %p517, %p518
      %p520 = scmp.ne.s32.totalorder %s512, %s514
      %p521 = scmp.eq.s32.totalorder %s105, 1
      %p522 = por %p520, %p521
      %p523 = scmp.ne.s32.totalorder %s514, %s515
      %p524 = scmp.eq.s32.totalorder %s105, 0
      %p525 = por %p523, %p524
      %p526 = scmp.ne.s32.totalorder %s514, %s515
      %p527 = scmp.eq.s32.totalorder %s106, 1
      %p528 = por %p526, %p527
      %p530 = scmp.ne.s32.totalorder %s515, %s529
      %p531 = scmp.eq.s32.totalorder %s106, 0
      %p532 = por %p530, %p531
      %s534 = sadd.s32 %s533, 1
      %p537 = scmp.eq.s32.totalorder %s100, 1
      %p538 = scmp.ne.s32.totalorder %s533, %s535
      %p539 = scmp.eq.s32.totalorder %s100, 0
      %p540 = por %p538, %p539
      %p541 = scmp.ne.s32.totalorder %s533, %s535
      %p542 = scmp.eq.s32.totalorder %s105, 1
      %p543 = por %p541, %p542
      %p544 = scmp.ne.s32.totalorder %s535, %s536
      %p545 = scmp.eq.s32.totalorder %s105, 0
      %p546 = por %p544, %p545
      %p547 = scmp.ne.s32.totalorder %s535, %s536
      %p548 = scmp.eq.s32.totalorder %s106, 1
      %p549 = por %p547, %p548
      %p551 = scmp.ne.s32.totalorder %s536, %s550
      %p552 = scmp.eq.s32.totalorder %s106, 0
      %p553 = por %p551, %p552
      %s555 = sadd.s32 %s554, 1
      %p558 = scmp.eq.s32.totalorder %s100, 1
      %p559 = scmp.ne.s32.totalorder %s554, %s556
      %p560 = scmp.eq.s32.totalorder %s100, 0
      %p561 = por %p559, %p560
      %p562 = scmp.ne.s32.totalorder %s554, %s556
      %p563 = scmp.eq.s32.totalorder %s105, 1
      %p564 = por %p562, %p563
      %p565 = scmp.ne.s32.totalorder %s556, %s557
      %p566 = scmp.eq.s32.totalorder %s105, 0
      %p567 = por %p565, %p566
      %p568 = scmp.ne.s32.totalorder %s556, %s557
      %p569 = scmp.eq.s32.totalorder %s106, 1
      %p570 = por %p568, %p569
      %p572 = scmp.ne.s32.totalorder %s557, %s571
      %p573 = scmp.eq.s32.totalorder %s106, 0
      %p574 = por %p572, %p573
      %s576 = sadd.s32 %s575, 1
      %p579 = scmp.eq.s32.totalorder %s100, 1
      %p580 = scmp.ne.s32.totalorder %s575, %s577
      %p581 = scmp.eq.s32.totalorder %s100, 0
      %p582 = por %p580, %p581
      %p583 = scmp.ne.s32.totalorder %s575, %s577
      %p584 = scmp.eq.s32.totalorder %s105, 1
      %p585 = por %p583, %p584
      %p586 = scmp.ne.s32.totalorder %s577, %s578
      %p587 = scmp.eq.s32.totalorder %s105, 0
      %p588 = por %p586, %p587
      %p589 = scmp.ne.s32.totalorder %s577, %s578
      %p590 = scmp.eq.s32.totalorder %s106, 1
      %p591 = por %p589, %p590
      %p593 = scmp.ne.s32.totalorder %s578, %s592
      %p594 = scmp.eq.s32.totalorder %s106, 0
      %p595 = por %p593, %p594
      %s597 = sadd.s32 %s596, 1
      %p600 = scmp.eq.s32.totalorder %s100, 1
      %p601 = scmp.ne.s32.totalorder %s596, %s598
      %p602 = scmp.eq.s32.totalorder %s100, 0
      %p603 = por %p601, %p602
      %p604 = scmp.ne.s32.totalorder %s596, %s598
      %p605 = scmp.eq.s32.totalorder %s105, 1
      %p606 = por %p604, %p605
      %p607 = scmp.ne.s32.totalorder %s598, %s599
      %p608 = scmp.eq.s32.totalorder %s105, 0
      %p609 = por %p607, %p608
      %p610 = scmp.ne.s32.totalorder %s598, %s599
      %p611 = scmp.eq.s32.totalorder %s106, 1
      %p612 = por %p610, %p611
      %p614 = scmp.ne.s32.totalorder %s599, %s613
      %p615 = scmp.eq.s32.totalorder %s106, 0
      %p616 = por %p614, %p615
      %s618 = sadd.s32 %s617, 1
      %p621 = scmp.eq.s32.totalorder %s100, 1
      %p622 = scmp.ne.s32.totalorder %s617, %s619
      %p623 = scmp.eq.s32.totalorder %s100, 0
      %p624 = por %p622, %p623
      %p625 = scmp.ne.s32.totalorder %s617, %s619
      %p626 = scmp.eq.s32.totalorder %s105, 1
      %p627 = por %p625, %p626
      %p628 = scmp.ne.s32.totalorder %s619, %s620
      %p629 = scmp.eq.s32.totalorder %s105, 0
      %p630 = por %p628, %p629
      %p631 = scmp.ne.s32.totalorder %s619, %s620
      %p632 = scmp.eq.s32.totalorder %s106, 1
      %p633 = por %p631, %p632
      %p635 = scmp.ne.s32.totalorder %s620, %s634
      %p636 = scmp.eq.s32.totalorder %s106, 0
      %p637 = por %p635, %p636
      %s639 = sadd.s32 %s638, 1
      %p642 = scmp.eq.s32.totalorder %s100, 1
      %p643 = scmp.ne.s32.totalorder %s638, %s640
      %p644 = scmp.eq.s32.totalorder %s100, 0
      %p645 = por %p643, %p644
      %p646 = scmp.ne.s32.totalorder %s638, %s640
      %p647 = scmp.eq.s32.totalorder %s105, 1
      %p648 = por %p646, %p647
      %p649 = scmp.ne.s32.totalorder %s640, %s641
      %p650 = scmp.eq.s32.totalorder %s105, 0
      %p651 = por %p649, %p650
      %p652 = scmp.ne.s32.totalorder %s640, %s641
      %p653 = scmp.eq.s32.totalorder %s106, 1
      %p654 = por %p652, %p653
      %p656 = scmp.ne.s32.totalorder %s641, %s655
      %p657 = scmp.eq.s32.totalorder %s106, 0
      %p658 = por %p656, %p657
      %s660 = sadd.s32 %s659, 1
      %p663 = scmp.eq.s32.totalorder %s100, 1
      %p664 = scmp.ne.s32.totalorder %s659, %s661
      %p665 = scmp.eq.s32.totalorder %s100, 0
      %p666 = por %p664, %p665
      %p667 = scmp.ne.s32.totalorder %s659, %s661
      %p668 = scmp.eq.s32.totalorder %s105, 1
      %p669 = por %p667, %p668
      %p670 = scmp.ne.s32.totalorder %s661, %s662
      %p671 = scmp.eq.s32.totalorder %s105, 0
      %p672 = por %p670, %p671
      %p673 = scmp.ne.s32.totalorder %s661, %s662
      %p674 = scmp.eq.s32.totalorder %s106, 1
      %p675 = por %p673, %p674
      %p677 = scmp.ne.s32.totalorder %s662, %s676
      %p678 = scmp.eq.s32.totalorder %s106, 0
      %p679 = por %p677, %p678
      %s681 = sadd.s32 %s680, 1
      %p684 = scmp.eq.s32.totalorder %s100, 1
      %p685 = scmp.ne.s32.totalorder %s680, %s682
      %p686 = scmp.eq.s32.totalorder %s100, 0
      %p687 = por %p685, %p686
      %p688 = scmp.ne.s32.totalorder %s680, %s682
      %p689 = scmp.eq.s32.totalorder %s105, 1
      %p690 = por %p688, %p689
      %p691 = scmp.ne.s32.totalorder %s682, %s683
      %p692 = scmp.eq.s32.totalorder %s105, 0
      %p693 = por %p691, %p692
      %p694 = scmp.ne.s32.totalorder %s682, %s683
      %p695 = scmp.eq.s32.totalorder %s106, 1
      %p696 = por %p694, %p695
      %p698 = scmp.ne.s32.totalorder %s683, %s697
      %p699 = scmp.eq.s32.totalorder %s106, 0
      %p700 = por %p698, %p699
      %s702 = sadd.s32 %s701, 1
      %p705 = scmp.eq.s32.totalorder %s100, 1
      %p706 = scmp.ne.s32.totalorder %s701, %s703
      %p707 = scmp.eq.s32.totalorder %s100, 0
      %p708 = por %p706, %p707
      %p709 = scmp.ne.s32.totalorder %s701, %s703
      %p710 = scmp.eq.s32.totalorder %s105, 1
      %p711 = por %p709, %p710
      %p712 = scmp.ne.s32.totalorder %s703, %s704
      %p713 = scmp.eq.s32.totalorder %s105, 0
      %p714 = por %p712, %p713
      %p715 = scmp.ne.s32.totalorder %s703, %s704
      %p716 = scmp.eq.s32.totalorder %s106, 1
      %p717 = por %p715, %p716
      %p719 = scmp.ne.s32.totalorder %s704, %s718
      %p720 = scmp.eq.s32.totalorder %s106, 0
      %p721 = por %p719, %p720
      %s723 = sadd.s32 %s722, 1
      %p726 = scmp.eq.s32.totalorder %s100, 1
      %p727 = scmp.ne.s32.totalorder %s722, %s724
      %p728 = scmp.eq.s32.totalorder %s100, 0
      %p729 = por %p727, %p728
      %p730 = scmp.ne.s32.totalorder %s722, %s724
      %p731 = scmp.eq.s32.totalorder %s105, 1
      %p732 = por %p730, %p731
      %p733 = scmp.ne.s32.totalorder %s724, %s725
      %p734 = scmp.eq.s32.totalorder %s105, 0
      %p735 = por %p733, %p734
      %p736 = scmp.ne.s32.totalorder %s724, %s725
      %p737 = scmp.eq.s32.totalorder %s106, 1
      %p738 = por %p736, %p737
      %p740 = scmp.ne.s32.totalorder %s725, %s739
      %p741 = scmp.eq.s32.totalorder %s106, 0
      %p742 = por %p740, %p741
      %s744 = sadd.s32 %s743, 1
      %p747 = scmp.eq.s32.totalorder %s100, 1
      %p748 = scmp.ne.s32.totalorder %s743, %s745
      %p749 = scmp.eq.s32.totalorder %s100, 0
      %p750 = por %p748, %p749
      %p751 = scmp.ne.s32.totalorder %s743, %s745
      %p752 = scmp.eq.s32.totalorder %s105, 1
      %p753 = por %p751, %p752
      %p754 = scmp.ne.s32.totalorder %s745, %s746
      %p755 = scmp.eq.s32.totalorder %s105, 0
      %p756 = por %p754, %p755
      %p757 = scmp.ne.s32.totalorder %s745, %s746
      %p758 = scmp.eq.s32.totalorder %s106, 1
      %p759 = por %p757, %p758
      %p761 = scmp.ne.s32.totalorder %s746, %s760
      %p762 = scmp.eq.s32.totalorder %s106, 0
      %p763 = por %p761, %p762
      %s765 = sadd.s32 %s764, 1
      %p768 = scmp.eq.s32.totalorder %s100, 1
      %p769 = scmp.ne.s32.totalorder %s764, %s766
      %p770 = scmp.eq.s32.totalorder %s100, 0
      %p771 = por %p769, %p770
      %p772 = scmp.ne.s32.totalorder %s764, %s766
      %p773 = scmp.eq.s32.totalorder %s105, 1
      %p774 = por %p772, %p773
      %p775 = scmp.ne.s32.totalorder %s766, %s767
      %p776 = scmp.eq.s32.totalorder %s105, 0
      %p777 = por %p775, %p776
      %p778 = scmp.ne.s32.totalorder %s766, %s767
      %p779 = scmp.eq.s32.totalorder %s106, 1
      %p780 = por %p778, %p779
      %p782 = scmp.ne.s32.totalorder %s767, %s781
      %p783 = scmp.eq.s32.totalorder %s106, 0
      %p784 = por %p782, %p783
      %s786 = sadd.s32 %s785, 1
      %p789 = scmp.eq.s32.totalorder %s100, 1
      %p790 = scmp.ne.s32.totalorder %s785, %s787
      %p791 = scmp.eq.s32.totalorder %s100, 0
      %p792 = por %p790, %p791
      %p793 = scmp.ne.s32.totalorder %s785, %s787
      %p794 = scmp.eq.s32.totalorder %s105, 1
      %p795 = por %p793, %p794
      %p796 = scmp.ne.s32.totalorder %s787, %s788
      %p797 = scmp.eq.s32.totalorder %s105, 0
      %p798 = por %p796, %p797
      %p799 = scmp.ne.s32.totalorder %s787, %s788
      %p800 = scmp.eq.s32.totalorder %s106, 1
      %p801 = por %p799, %p800
      %p803 = scmp.ne.s32.totalorder %s788, %s802
      %p804 = scmp.eq.s32.totalorder %s106, 0
      %p805 = por %p803, %p804
      %s807 = sadd.s32 %s806, 1
      %p810 = scmp.eq.s32.totalorder %s100, 1
      %p811 = scmp.ne.s32.totalorder %s806, %s808
      %p812 = scmp.eq.s32.totalorder %s100, 0
      %p813 = por %p811, %p812
      %p814 = scmp.ne.s32.totalorder %s806, %s808
      %p815 = scmp.eq.s32.totalorder %s105, 1
      %p816 = por %p814, %p815
      %p817 = scmp.ne.s32.totalorder %s808, %s809
      %p818 = scmp.eq.s32.totalorder %s105, 0
      %p819 = por %p817, %p818
      %p820 = scmp.ne.s32.totalorder %s808, %s809
      %p821 = scmp.eq.s32.totalorder %s106, 1
      %p822 = por %p820, %p821
      %p824 = scmp.ne.s32.totalorder %s809, %s823
      %p825 = scmp.eq.s32.totalorder %s106, 0
      %p826 = por %p824, %p825
      %s828 = sadd.s32 %s827, 1
      %p831 = scmp.eq.s32.totalorder %s100, 1
      %p832 = scmp.ne.s32.totalorder %s827, %s829
      %p833 = scmp.eq.s32.totalorder %s100, 0
      %p834 = por %p832, %p833
      %p835 = scmp.ne.s32.totalorder %s827, %s829
      %p836 = scmp.eq.s32.totalorder %s105, 1
      %p837 = por %p835, %p836
      %p838 = scmp.ne.s32.totalorder %s829, %s830
      %p839 = scmp.eq.s32.totalorder %s105, 0
      %p840 = por %p838, %p839
      %p841 = scmp.ne.s32.totalorder %s829, %s830
      %p842 = scmp.eq.s32.totalorder %s106, 1
      %p843 = por %p841, %p842
      %p845 = scmp.ne.s32.totalorder %s830, %s844
      %p846 = scmp.eq.s32.totalorder %s106, 0
      %p847 = por %p845, %p846
      %s849 = sadd.s32 %s848, 1
      %p852 = scmp.eq.s32.totalorder %s100, 1
      %p853 = scmp.ne.s32.totalorder %s848, %s850
      %p854 = scmp.eq.s32.totalorder %s100, 0
      %p855 = por %p853, %p854
      %p856 = scmp.ne.s32.totalorder %s848, %s850
      %p857 = scmp.eq.s32.totalorder %s105, 1
      %p858 = por %p856, %p857
      %p859 = scmp.ne.s32.totalorder %s850, %s851
      %p860 = scmp.eq.s32.totalorder %s105, 0
      %p861 = por %p859, %p860
      %p862 = scmp.ne.s32.totalorder %s850, %s851
      %p863 = scmp.eq.s32.totalorder %s106, 1
      %p864 = por %p862, %p863
      %p866 = scmp.ne.s32.totalorder %s851, %s865
      %p867 = scmp.eq.s32.totalorder %s106, 0
      %p868 = por %p866, %p867
      %s870 = sadd.s32 %s869, 1
      %p873 = scmp.eq.s32.totalorder %s100, 1
      %p874 = scmp.ne.s32.totalorder %s869, %s871
      %p875 = scmp.eq.s32.totalorder %s100, 0
      %p876 = por %p874, %p875
      %p877 = scmp.ne.s32.totalorder %s869, %s871
      %p878 = scmp.eq.s32.totalorder %s105, 1
      %p879 = por %p877, %p878
      %p880 = scmp.ne.s32.totalorder %s871, %s872
      %p881 = scmp.eq.s32.totalorder %s105, 0
      %p882 = por %p880, %p881
      %p883 = scmp.ne.s32.totalorder %s871, %s872
      %p884 = scmp.eq.s32.totalorder %s106, 1
      %p885 = por %p883, %p884
      %p887 = scmp.ne.s32.totalorder %s872, %s886
      %p888 = scmp.eq.s32.totalorder %s106, 0
      %p889 = por %p887, %p888
      %s891 = sadd.s32 %s890, 1
      %p894 = scmp.eq.s32.totalorder %s100, 1
      %p895 = scmp.ne.s32.totalorder %s890, %s892
      %p896 = scmp.eq.s32.totalorder %s100, 0
      %p897 = por %p895, %p896
      %p898 = scmp.ne.s32.totalorder %s890, %s892
      %p899 = scmp.eq.s32.totalorder %s105, 1
      %p900 = por %p898, %p899
      %p901 = scmp.ne.s32.totalorder %s892, %s893
      %p902 = scmp.eq.s32.totalorder %s105, 0
      %p903 = por %p901, %p902
      %p904 = scmp.ne.s32.totalorder %s892, %s893
      %p905 = scmp.eq.s32.totalorder %s106, 1
      %p906 = por %p904, %p905
      %p908 = scmp.ne.s32.totalorder %s893, %s907
      %p909 = scmp.eq.s32.totalorder %s106, 0
      %p910 = por %p908, %p909
      %s912 = sadd.s32 %s911, 1
      %p915 = scmp.eq.s32.totalorder %s100, 1
      %p916 = scmp.ne.s32.totalorder %s911, %s913
      %p917 = scmp.eq.s32.totalorder %s100, 0
      %p918 = por %p916, %p917
      %p919 = scmp.ne.s32.totalorder %s911, %s913
      %p920 = scmp.eq.s32.totalorder %s105, 1
      %p921 = por %p919, %p920
      %p922 = scmp.ne.s32.totalorder %s913, %s914
      %p923 = scmp.eq.s32.totalorder %s105, 0
      %p924 = por %p922, %p923
      %p925 = scmp.ne.s32.totalorder %s913, %s914
      %p926 = scmp.eq.s32.totalorder %s106, 1
      %p927 = por %p925, %p926
      %p929 = scmp.ne.s32.totalorder %s914, %s928
      %p930 = scmp.eq.s32.totalorder %s106, 0
      %p931 = por %p929, %p930
      %s932 = ssub.s32 %s100, %s107
      %p933 = scmp.eq.s32.totalorder %s932, 0
      %s935 = sadd.s32 %s934, 1
      %s936 = scalar_select %p933, %s934, %s935
      %p939 = pneg %p933
      %p940 = scmp.eq.s32.totalorder %s100, 1
      %p941 = por %p939, %p940
      %p942 = scmp.ne.s32.totalorder %s934, %s937
      %p943 = scmp.eq.s32.totalorder %s100, 0
      %p944 = por %p942, %p943
      %p945 = scmp.ne.s32.totalorder %s934, %s937
      %p946 = scmp.eq.s32.totalorder %s105, 1
      %p947 = por %p945, %p946
      %p948 = scmp.ne.s32.totalorder %s937, %s938
      %p949 = scmp.eq.s32.totalorder %s105, 0
      %p950 = por %p948, %p949
      %p951 = scmp.ne.s32.totalorder %s937, %s938
      %p952 = scmp.eq.s32.totalorder %s106, 1
      %p953 = por %p951, %p952
      %p955 = scmp.ne.s32.totalorder %s938, %s954
      %p956 = scmp.eq.s32.totalorder %s106, 0
      %p957 = por %p955, %p956
      %p958 = scmp.le.s32.totalorder 1, %s100
      %p959 = scmp.lt.s32.totalorder %s100, 3
      %p960 = pnand %p958, %p959
      %p961 = pneg %p960
      // Predicated region
      $region9: #{tpu_custom_call.1} parent=5 // pred_check
        _
      $region10: #{tpu_custom_call.1} parent=5 // pred_check_branch
        %963 = sbr.rel (%p960) target = $region12
      $region11: #{tpu_custom_call.1} parent=5 // pred_region
        %s964 = ssub.s32 %s100, 1
        // Predicated region
        $region13: #{tpu_custom_call.1} parent=11 // pred_check
          %p965 = pneg %p147
        $region14: #{tpu_custom_call.1} parent=11 // pred_check_branch
          %967 = sbr.rel (%p965) target = $region16
        $region15: #{tpu_custom_call.1} parent=11 // pred_region
          _
        $region16: #{tpu_custom_call.1} parent=11 // pred_fallthru
          _
        // Predicated region
        $region17: #{tpu_custom_call.1} parent=11 // pred_check
          %p968 = pneg %p168
        $region18: #{tpu_custom_call.1} parent=11 // pred_check_branch
          %970 = sbr.rel (%p968) target = $region20
        $region19: #{tpu_custom_call.1} parent=11 // pred_region
          _
        $region20: #{tpu_custom_call.1} parent=11 // pred_fallthru
          _
        // Predicated region
        $region21: #{tpu_custom_call.1} parent=11 // pred_check
          %p971 = pneg %p189
        $region22: #{tpu_custom_call.1} parent=11 // pred_check_branch
          %973 = sbr.rel (%p971) target = $region24
        $region23: #{tpu_custom_call.1} parent=11 // pred_region
          %975 = vsyncadd [#allocation6], 0
          %s976 = sshll.u32 %s7, 4
          %s977 = int_to_ptr.hbm [resolvable:$true] %s976
          %s978 = sshll.u32 [#allocation5], 4
          %s979 = int_to_ptr.vmem [resolvable:$true] %s978
          %984 = dma.hbm_to_vmem [thread:$0]  %s977, 1024, %s979, [#allocation6], 64, 64, 4
        $region24: #{tpu_custom_call.1} parent=11 // pred_fallthru
          _
        // Predicated region
        $region25: #{tpu_custom_call.1} parent=11 // pred_check
          %p985 = pneg %p210
        $region26: #{tpu_custom_call.1} parent=11 // pred_check_branch
          %987 = sbr.rel (%p985) target = $region28
        $region27: #{tpu_custom_call.1} parent=11 // pred_region
          _
        $region28: #{tpu_custom_call.1} parent=11 // pred_fallthru
          _
        // Predicated region
        $region29: #{tpu_custom_call.1} parent=11 // pred_check
          %p988 = pneg %p231
        $region30: #{tpu_custom_call.1} parent=11 // pred_check_branch
          %990 = sbr.rel (%p988) target = $region32
        $region31: #{tpu_custom_call.1} parent=11 // pred_region
          %992 = vsyncadd [#allocation6], 0
          %s993 = sshll.u32 %s11, 4
          %s994 = int_to_ptr.hbm [resolvable:$true] %s993
          %s995 = sshll.u32 [#allocation7], 4
          %s996 = int_to_ptr.vmem [resolvable:$true] %s995
          %1001 = dma.hbm_to_vmem [thread:$0]  %s994, 1024, %s996, [#allocation6], 64, 64, 4
        $region32: #{tpu_custom_call.1} parent=11 // pred_fallthru
          _
        // Predicated region
        $region33: #{tpu_custom_call.1} parent=11 // pred_check
          %p1002 = pneg %p252
        $region34: #{tpu_custom_call.1} parent=11 // pred_check_branch
          %1004 = sbr.rel (%p1002) target = $region36
        $region35: #{tpu_custom_call.1} parent=11 // pred_region
          _
        $region36: #{tpu_custom_call.1} parent=11 // pred_fallthru
          _
        // Predicated region
        $region37: #{tpu_custom_call.1} parent=11 // pred_check
          %p1005 = pneg %p273
        $region38: #{tpu_custom_call.1} parent=11 // pred_check_branch
          %1007 = sbr.rel (%p1005) target = $region40
        $region39: #{tpu_custom_call.1} parent=11 // pred_region
          %1009 = vsyncadd [#allocation9], 0
          %s1010 = sshll.u32 %s15, 4
          %s1011 = int_to_ptr.hbm [resolvable:$true] %s1010
          %s1012 = sshll.u32 [#allocation8], 4
          %s1013 = int_to_ptr.vmem [resolvable:$true] %s1012
          %1018 = dma.hbm_to_vmem [thread:$0]  %s1011, 1024, %s1013, [#allocation9], 64, 64, 4
        $region40: #{tpu_custom_call.1} parent=11 // pred_fallthru
          _
        // Predicated region
        $region41: #{tpu_custom_call.1} parent=11 // pred_check
          %p1019 = pneg %p294
        $region42: #{tpu_custom_call.1} parent=11 // pred_check_branch
          %1021 = sbr.rel (%p1019) target = $region44
        $region43: #{tpu_custom_call.1} parent=11 // pred_region
          _
        $region44: #{tpu_custom_call.1} parent=11 // pred_fallthru
          _
        // Predicated region
        $region45: #{tpu_custom_call.1} parent=11 // pred_check
          %p1022 = pneg %p315
        $region46: #{tpu_custom_call.1} parent=11 // pred_check_branch
          %1024 = sbr.rel (%p1022) target = $region48
        $region47: #{tpu_custom_call.1} parent=11 // pred_region
          %1026 = vsyncadd [#allocation9], 0
          %s1027 = sshll.u32 %s19, 4
          %s1028 = int_to_ptr.hbm [resolvable:$true] %s1027
          %s1029 = sshll.u32 [#allocation10], 4
          %s1030 = int_to_ptr.vmem [resolvable:$true] %s1029
          %1035 = dma.hbm_to_vmem [thread:$0]  %s1028, 1024, %s1030, [#allocation9], 64, 64, 4
        $region48: #{tpu_custom_call.1} parent=11 // pred_fallthru
          _
        // Predicated region
        $region49: #{tpu_custom_call.1} parent=11 // pred_check
          %p1036 = pneg %p336
        $region50: #{tpu_custom_call.1} parent=11 // pred_check_branch
          %1038 = sbr.rel (%p1036) target = $region52
        $region51: #{tpu_custom_call.1} parent=11 // pred_region
          _
        $region52: #{tpu_custom_call.1} parent=11 // pred_fallthru
          _
        // Predicated region
        $region53: #{tpu_custom_call.1} parent=11 // pred_check
          %p1039 = pneg %p357
        $region54: #{tpu_custom_call.1} parent=11 // pred_check_branch
          %1041 = sbr.rel (%p1039) target = $region56
        $region55: #{tpu_custom_call.1} parent=11 // pred_region
          %1043 = vsyncadd [#allocation12], 0
          %s1044 = sshll.u32 %s23, 4
          %s1045 = int_to_ptr.hbm [resolvable:$true] %s1044
          %s1046 = sshll.u32 [#allocation11], 4
          %s1047 = int_to_ptr.vmem [resolvable:$true] %s1046
          %1052 = dma.hbm_to_vmem [thread:$0]  %s1045, 1024, %s1047, [#allocation12], 64, 64, 4
        $region56: #{tpu_custom_call.1} parent=11 // pred_fallthru
          _
        // Predicated region
        $region57: #{tpu_custom_call.1} parent=11 // pred_check
          %p1053 = pneg %p378
        $region58: #{tpu_custom_call.1} parent=11 // pred_check_branch
          %1055 = sbr.rel (%p1053) target = $region60
        $region59: #{tpu_custom_call.1} parent=11 // pred_region
          _
        $region60: #{tpu_custom_call.1} parent=11 // pred_fallthru
          _
        // Predicated region
        $region61: #{tpu_custom_call.1} parent=11 // pred_check
          %p1056 = pneg %p399
        $region62: #{tpu_custom_call.1} parent=11 // pred_check_branch
          %1058 = sbr.rel (%p1056) target = $region64
        $region63: #{tpu_custom_call.1} parent=11 // pred_region
          %1060 = vsyncadd [#allocation12], 0
          %s1061 = sshll.u32 %s27, 4
          %s1062 = int_to_ptr.hbm [resolvable:$true] %s1061
          %s1063 = sshll.u32 [#allocation13], 4
          %s1064 = int_to_ptr.vmem [resolvable:$true] %s1063
          %1069 = dma.hbm_to_vmem [thread:$0]  %s1062, 1024, %s1064, [#allocation12], 64, 64, 4
        $region64: #{tpu_custom_call.1} parent=11 // pred_fallthru
          _
        // Predicated region
        $region65: #{tpu_custom_call.1} parent=11 // pred_check
          %p1070 = pneg %p420
        $region66: #{tpu_custom_call.1} parent=11 // pred_check_branch
          %1072 = sbr.rel (%p1070) target = $region68
        $region67: #{tpu_custom_call.1} parent=11 // pred_region
          _
        $region68: #{tpu_custom_call.1} parent=11 // pred_fallthru
          _
        // Predicated region
        $region69: #{tpu_custom_call.1} parent=11 // pred_check
          %p1073 = pneg %p441
        $region70: #{tpu_custom_call.1} parent=11 // pred_check_branch
          %1075 = sbr.rel (%p1073) target = $region72
        $region71: #{tpu_custom_call.1} parent=11 // pred_region
          %1077 = vsyncadd [#allocation15], 0
          %s1078 = sshll.u32 %s31, 4
          %s1079 = int_to_ptr.hbm [resolvable:$true] %s1078
          %s1080 = sshll.u32 [#allocation14], 4
          %s1081 = int_to_ptr.vmem [resolvable:$true] %s1080
          %1086 = dma.hbm_to_vmem [thread:$0]  %s1079, 1024, %s1081, [#allocation15], 64, 64, 4
        $region72: #{tpu_custom_call.1} parent=11 // pred_fallthru
          _
        // Predicated region
        $region73: #{tpu_custom_call.1} parent=11 // pred_check
          %p1087 = pneg %p462
        $region74: #{tpu_custom_call.1} parent=11 // pred_check_branch
          %1089 = sbr.rel (%p1087) target = $region76
        $region75: #{tpu_custom_call.1} parent=11 // pred_region
          _
        $region76: #{tpu_custom_call.1} parent=11 // pred_fallthru
          _
        // Predicated region
        $region77: #{tpu_custom_call.1} parent=11 // pred_check
          %p1090 = pneg %p483
        $region78: #{tpu_custom_call.1} parent=11 // pred_check_branch
          %1092 = sbr.rel (%p1090) target = $region80
        $region79: #{tpu_custom_call.1} parent=11 // pred_region
          %1094 = vsyncadd [#allocation15], 0
          %s1095 = sshll.u32 %s35, 4
          %s1096 = int_to_ptr.hbm [resolvable:$true] %s1095
          %s1097 = sshll.u32 [#allocation16], 4
          %s1098 = int_to_ptr.vmem [resolvable:$true] %s1097
          %1103 = dma.hbm_to_vmem [thread:$0]  %s1096, 1024, %s1098, [#allocation15], 64, 64, 4
        $region80: #{tpu_custom_call.1} parent=11 // pred_fallthru
          _
        // Predicated region
        $region81: #{tpu_custom_call.1} parent=11 // pred_check
          %p1104 = pneg %p504
        $region82: #{tpu_custom_call.1} parent=11 // pred_check_branch
          %1106 = sbr.rel (%p1104) target = $region84
        $region83: #{tpu_custom_call.1} parent=11 // pred_region
          _
        $region84: #{tpu_custom_call.1} parent=11 // pred_fallthru
          _
        // Predicated region
        $region85: #{tpu_custom_call.1} parent=11 // pred_check
          %p1107 = pneg %p525
        $region86: #{tpu_custom_call.1} parent=11 // pred_check_branch
          %1109 = sbr.rel (%p1107) target = $region88
        $region87: #{tpu_custom_call.1} parent=11 // pred_region
          %1111 = vsyncadd [#allocation18], 0
          %s1112 = sshll.u32 %s39, 4
          %s1113 = int_to_ptr.hbm [resolvable:$true] %s1112
          %s1114 = sshll.u32 [#allocation17], 4
          %s1115 = int_to_ptr.vmem [resolvable:$true] %s1114
          %1120 = dma.hbm_to_vmem [thread:$0]  %s1113, 1024, %s1115, [#allocation18], 64, 64, 4
        $region88: #{tpu_custom_call.1} parent=11 // pred_fallthru
          _
        // Predicated region
        $region89: #{tpu_custom_call.1} parent=11 // pred_check
          %p1121 = pneg %p546
        $region90: #{tpu_custom_call.1} parent=11 // pred_check_branch
          %1123 = sbr.rel (%p1121) target = $region92
        $region91: #{tpu_custom_call.1} parent=11 // pred_region
          _
        $region92: #{tpu_custom_call.1} parent=11 // pred_fallthru
          _
        // Predicated region
        $region93: #{tpu_custom_call.1} parent=11 // pred_check
          %p1124 = pneg %p567
        $region94: #{tpu_custom_call.1} parent=11 // pred_check_branch
          %1126 = sbr.rel (%p1124) target = $region96
        $region95: #{tpu_custom_call.1} parent=11 // pred_region
          %1128 = vsyncadd [#allocation18], 0
          %s1129 = sshll.u32 %s43, 4
          %s1130 = int_to_ptr.hbm [resolvable:$true] %s1129
          %s1131 = sshll.u32 [#allocation19], 4
          %s1132 = int_to_ptr.vmem [resolvable:$true] %s1131
          %1137 = dma.hbm_to_vmem [thread:$0]  %s1130, 1024, %s1132, [#allocation18], 64, 64, 4
        $region96: #{tpu_custom_call.1} parent=11 // pred_fallthru
          _
        // Predicated region
        $region97: #{tpu_custom_call.1} parent=11 // pred_check
          %p1138 = pneg %p588
        $region98: #{tpu_custom_call.1} parent=11 // pred_check_branch
          %1140 = sbr.rel (%p1138) target = $region100
        $region99: #{tpu_custom_call.1} parent=11 // pred_region
          _
        $region100: #{tpu_custom_call.1} parent=11 // pred_fallthru
          _
        // Predicated region
        $region101: #{tpu_custom_call.1} parent=11 // pred_check
          %p1141 = pneg %p609
        $region102: #{tpu_custom_call.1} parent=11 // pred_check_branch
          %1143 = sbr.rel (%p1141) target = $region104
        $region103: #{tpu_custom_call.1} parent=11 // pred_region
          %1145 = vsyncadd [#allocation21], 0
          %s1146 = sshll.u32 %s47, 4
          %s1147 = int_to_ptr.hbm [resolvable:$true] %s1146
          %s1148 = sshll.u32 [#allocation20], 4
          %s1149 = int_to_ptr.vmem [resolvable:$true] %s1148
          %1154 = dma.hbm_to_vmem [thread:$0]  %s1147, 1024, %s1149, [#allocation21], 64, 64, 4
        $region104: #{tpu_custom_call.1} parent=11 // pred_fallthru
          _
        // Predicated region
        $region105: #{tpu_custom_call.1} parent=11 // pred_check
          %p1155 = pneg %p630
        $region106: #{tpu_custom_call.1} parent=11 // pred_check_branch
          %1157 = sbr.rel (%p1155) target = $region108
        $region107: #{tpu_custom_call.1} parent=11 // pred_region
          _
        $region108: #{tpu_custom_call.1} parent=11 // pred_fallthru
          _
        // Predicated region
        $region109: #{tpu_custom_call.1} parent=11 // pred_check
          %p1158 = pneg %p651
        $region110: #{tpu_custom_call.1} parent=11 // pred_check_branch
          %1160 = sbr.rel (%p1158) target = $region112
        $region111: #{tpu_custom_call.1} parent=11 // pred_region
          %1162 = vsyncadd [#allocation21], 0
          %s1163 = sshll.u32 %s51, 4
          %s1164 = int_to_ptr.hbm [resolvable:$true] %s1163
          %s1165 = sshll.u32 [#allocation22], 4
          %s1166 = int_to_ptr.vmem [resolvable:$true] %s1165
          %1171 = dma.hbm_to_vmem [thread:$0]  %s1164, 1024, %s1166, [#allocation21], 64, 64, 4
        $region112: #{tpu_custom_call.1} parent=11 // pred_fallthru
          _
        // Predicated region
        $region113: #{tpu_custom_call.1} parent=11 // pred_check
          %p1172 = pneg %p672
        $region114: #{tpu_custom_call.1} parent=11 // pred_check_branch
          %1174 = sbr.rel (%p1172) target = $region116
        $region115: #{tpu_custom_call.1} parent=11 // pred_region
          _
        $region116: #{tpu_custom_call.1} parent=11 // pred_fallthru
          _
        // Predicated region
        $region117: #{tpu_custom_call.1} parent=11 // pred_check
          %p1175 = pneg %p693
        $region118: #{tpu_custom_call.1} parent=11 // pred_check_branch
          %1177 = sbr.rel (%p1175) target = $region120
        $region119: #{tpu_custom_call.1} parent=11 // pred_region
          %1179 = vsyncadd [#allocation24], 0
          %s1180 = sshll.u32 %s55, 4
          %s1181 = int_to_ptr.hbm [resolvable:$true] %s1180
          %s1182 = sshll.u32 [#allocation23], 4
          %s1183 = int_to_ptr.vmem [resolvable:$true] %s1182
          %1188 = dma.hbm_to_vmem [thread:$0]  %s1181, 1024, %s1183, [#allocation24], 64, 64, 4
        $region120: #{tpu_custom_call.1} parent=11 // pred_fallthru
          _
        // Predicated region
        $region121: #{tpu_custom_call.1} parent=11 // pred_check
          %p1189 = pneg %p714
        $region122: #{tpu_custom_call.1} parent=11 // pred_check_branch
          %1191 = sbr.rel (%p1189) target = $region124
        $region123: #{tpu_custom_call.1} parent=11 // pred_region
          _
        $region124: #{tpu_custom_call.1} parent=11 // pred_fallthru
          _
        // Predicated region
        $region125: #{tpu_custom_call.1} parent=11 // pred_check
          %p1192 = pneg %p735
        $region126: #{tpu_custom_call.1} parent=11 // pred_check_branch
          %1194 = sbr.rel (%p1192) target = $region128
        $region127: #{tpu_custom_call.1} parent=11 // pred_region
          %1196 = vsyncadd [#allocation24], 0
          %s1197 = sshll.u32 %s59, 4
          %s1198 = int_to_ptr.hbm [resolvable:$true] %s1197
          %s1199 = sshll.u32 [#allocation25], 4
          %s1200 = int_to_ptr.vmem [resolvable:$true] %s1199
          %1205 = dma.hbm_to_vmem [thread:$0]  %s1198, 1024, %s1200, [#allocation24], 64, 64, 4
        $region128: #{tpu_custom_call.1} parent=11 // pred_fallthru
          _
        // Predicated region
        $region129: #{tpu_custom_call.1} parent=11 // pred_check
          %p1206 = pneg %p756
        $region130: #{tpu_custom_call.1} parent=11 // pred_check_branch
          %1208 = sbr.rel (%p1206) target = $region132
        $region131: #{tpu_custom_call.1} parent=11 // pred_region
          _
        $region132: #{tpu_custom_call.1} parent=11 // pred_fallthru
          _
        // Predicated region
        $region133: #{tpu_custom_call.1} parent=11 // pred_check
          %p1209 = pneg %p777
        $region134: #{tpu_custom_call.1} parent=11 // pred_check_branch
          %1211 = sbr.rel (%p1209) target = $region136
        $region135: #{tpu_custom_call.1} parent=11 // pred_region
          %1213 = vsyncadd [#allocation27], 0
          %s1214 = sshll.u32 %s63, 4
          %s1215 = int_to_ptr.hbm [resolvable:$true] %s1214
          %s1216 = sshll.u32 [#allocation26], 4
          %s1217 = int_to_ptr.vmem [resolvable:$true] %s1216
          %1222 = dma.hbm_to_vmem [thread:$0]  %s1215, 1024, %s1217, [#allocation27], 64, 64, 4
        $region136: #{tpu_custom_call.1} parent=11 // pred_fallthru
          _
        // Predicated region
        $region137: #{tpu_custom_call.1} parent=11 // pred_check
          %p1223 = pneg %p798
        $region138: #{tpu_custom_call.1} parent=11 // pred_check_branch
          %1225 = sbr.rel (%p1223) target = $region140
        $region139: #{tpu_custom_call.1} parent=11 // pred_region
          _
        $region140: #{tpu_custom_call.1} parent=11 // pred_fallthru
          _
        // Predicated region
        $region141: #{tpu_custom_call.1} parent=11 // pred_check
          %p1226 = pneg %p819
        $region142: #{tpu_custom_call.1} parent=11 // pred_check_branch
          %1228 = sbr.rel (%p1226) target = $region144
        $region143: #{tpu_custom_call.1} parent=11 // pred_region
          _
        $region144: #{tpu_custom_call.1} parent=11 // pred_fallthru
          _
        // Predicated region
        $region145: #{tpu_custom_call.1} parent=11 // pred_check
          %p1229 = pneg %p840
        $region146: #{tpu_custom_call.1} parent=11 // pred_check_branch
          %1231 = sbr.rel (%p1229) target = $region148
        $region147: #{tpu_custom_call.1} parent=11 // pred_region
          _
        $region148: #{tpu_custom_call.1} parent=11 // pred_fallthru
          _
        // Predicated region
        $region149: #{tpu_custom_call.1} parent=11 // pred_check
          %p1232 = pneg %p861
        $region150: #{tpu_custom_call.1} parent=11 // pred_check_branch
          %1234 = sbr.rel (%p1232) target = $region152
        $region151: #{tpu_custom_call.1} parent=11 // pred_region
          %1236 = vsyncadd [#allocation27], 0
          %s1237 = sshll.u32 %s71, 4
          %s1238 = int_to_ptr.hbm [resolvable:$true] %s1237
          %s1239 = sshll.u32 [#allocation28], 4
          %s1240 = int_to_ptr.vmem [resolvable:$true] %s1239
          %1245 = dma.hbm_to_vmem [thread:$0]  %s1238, 1024, %s1240, [#allocation27], 64, 64, 4
        $region152: #{tpu_custom_call.1} parent=11 // pred_fallthru
          _
        // Predicated region
        $region153: #{tpu_custom_call.1} parent=11 // pred_check
          %p1246 = pneg %p882
        $region154: #{tpu_custom_call.1} parent=11 // pred_check_branch
          %1248 = sbr.rel (%p1246) target = $region156
        $region155: #{tpu_custom_call.1} parent=11 // pred_region
          _
        $region156: #{tpu_custom_call.1} parent=11 // pred_fallthru
          _
        // Predicated region
        $region157: #{tpu_custom_call.1} parent=11 // pred_check
          %p1249 = pneg %p903
        $region158: #{tpu_custom_call.1} parent=11 // pred_check_branch
          %1251 = sbr.rel (%p1249) target = $region160
        $region159: #{tpu_custom_call.1} parent=11 // pred_region
          %1253 = vsyncadd [#allocation30], 0
          %s1254 = sshll.u32 %s75, 4
          %s1255 = int_to_ptr.hbm [resolvable:$true] %s1254
          %s1256 = sshll.u32 [#allocation29], 4
          %s1257 = int_to_ptr.vmem [resolvable:$true] %s1256
          %1262 = dma.hbm_to_vmem [thread:$0]  %s1255, 1024, %s1257, [#allocation30], 64, 64, 4
        $region160: #{tpu_custom_call.1} parent=11 // pred_fallthru
          _
        // Predicated region
        $region161: #{tpu_custom_call.1} parent=11 // pred_check
          %p1263 = pneg %p924
        $region162: #{tpu_custom_call.1} parent=11 // pred_check_branch
          %1265 = sbr.rel (%p1263) target = $region164
        $region163: #{tpu_custom_call.1} parent=11 // pred_region
          _
        $region164: #{tpu_custom_call.1} parent=11 // pred_fallthru
          _
      $region12: #{tpu_custom_call.1} parent=5 // pred_fallthru
        _
      %p1266 = scmp.lt.s32.totalorder %s100, 2
      // Predicated region
      $region165: #{tpu_custom_call.1} parent=5 // pred_check
        %p1267 = pneg %p1266
      $region166: #{tpu_custom_call.1} parent=5 // pred_check_branch
        %1269 = sbr.rel (%p1267) target = $region168
      $region167: #{tpu_custom_call.1} parent=5 // pred_region
        // Predicated region
        $region169: #{tpu_custom_call.1} parent=167 // pred_check
          %p1270 = pneg %p120
        $region170: #{tpu_custom_call.1} parent=167 // pred_check_branch
          %1272 = sbr.rel (%p1270) target = $region172
        $region171: #{tpu_custom_call.1} parent=167 // pred_region
          %s1273 = sand.u32 %s110, 1
          %s1274 = scalar_lea.sflag [#allocation3], %s1273
          %s1275 = sand.u32 %s110, 1
          %s1276 = smul.addr %s1275, 256
          %s1277 = scalar_lea.vmem [#allocation2], %s1276
          %s1278 = smul.u32 32, %s100
          %1280 = vsyncadd %s1274, 0
          %s1281 = smul.addr %s1278, 2
          %s1282 = smul.addr %s1281, 4
          %s1283 = scalar_lea.hbm %s1, %s1282
          %s1284 = sshll.u32 %s1283, 4
          %s1285 = int_to_ptr.hbm [resolvable:$true] %s1284
          %s1286 = sshll.u32 %s1277, 4
          %s1287 = int_to_ptr.vmem [resolvable:$true] %s1286
          %1292 = dma.hbm_to_vmem [thread:$0]  %s1285, 4096, %s1287, %s1274, 128, 128, 8
        $region172: #{tpu_custom_call.1} parent=167 // pred_fallthru
          _
      $region168: #{tpu_custom_call.1} parent=5 // pred_fallthru
        _
      %p1293 = scmp.le.s32.totalorder 1, %s100
      %p1294 = scmp.lt.s32.totalorder %s100, 3
      %p1295 = pnand %p1293, %p1294
      %p1296 = pneg %p1295
      // Predicated region
      $region173: #{tpu_custom_call.1} parent=5 // pred_check
        _
      $region174: #{tpu_custom_call.1} parent=5 // pred_check_branch
        %1298 = sbr.rel (%p1295) target = $region176
      $region175: #{tpu_custom_call.1} parent=5 // pred_region
        %s1299 = ssub.s32 %s100, 1
        %s1300 = sand.u32 %s113, 1
        %s1301 = scalar_lea.sflag [#allocation3], %s1300
        %s1302 = sand.u32 %s113, 1
        %s1303 = smul.addr %s1302, 256
        %s1304 = scalar_lea.vmem [#allocation2], %s1303
        // Predicated region
        $region177: #{tpu_custom_call.1} parent=175 // pred_check
          %p1305 = pneg %p126
        $region178: #{tpu_custom_call.1} parent=175 // pred_check_branch
          %1307 = sbr.rel (%p1305) target = $region180
        $region179: #{tpu_custom_call.1} parent=175 // pred_region
          %1309 = dma.done %s1301, 4096
        $region180: #{tpu_custom_call.1} parent=175 // pred_fallthru
          _
        // Predicated region
        $region181: #{tpu_custom_call.1} parent=175 // pred_check
          %p1310 = pneg %p189
        $region182: #{tpu_custom_call.1} parent=175 // pred_check_branch
          %1312 = sbr.rel (%p1310) target = $region184
        $region183: #{tpu_custom_call.1} parent=175 // pred_region
          %1314 = dma.done [#allocation6], 1024
        $region184: #{tpu_custom_call.1} parent=175 // pred_fallthru
          _
        // Predicated region
        $region185: #{tpu_custom_call.1} parent=175 // pred_check
          %p1315 = pneg %p231
        $region186: #{tpu_custom_call.1} parent=175 // pred_check_branch
          %1317 = sbr.rel (%p1315) target = $region188
        $region187: #{tpu_custom_call.1} parent=175 // pred_region
          %1319 = dma.done [#allocation6], 1024
        $region188: #{tpu_custom_call.1} parent=175 // pred_fallthru
          _
        // Predicated region
        $region189: #{tpu_custom_call.1} parent=175 // pred_check
          %p1320 = pneg %p273
        $region190: #{tpu_custom_call.1} parent=175 // pred_check_branch
          %1322 = sbr.rel (%p1320) target = $region192
        $region191: #{tpu_custom_call.1} parent=175 // pred_region
          %1324 = dma.done [#allocation9], 1024
        $region192: #{tpu_custom_call.1} parent=175 // pred_fallthru
          _
        // Predicated region
        $region193: #{tpu_custom_call.1} parent=175 // pred_check
          %p1325 = pneg %p315
        $region194: #{tpu_custom_call.1} parent=175 // pred_check_branch
          %1327 = sbr.rel (%p1325) target = $region196
        $region195: #{tpu_custom_call.1} parent=175 // pred_region
          %1329 = dma.done [#allocation9], 1024
        $region196: #{tpu_custom_call.1} parent=175 // pred_fallthru
          _
        // Predicated region
        $region197: #{tpu_custom_call.1} parent=175 // pred_check
          %p1330 = pneg %p357
        $region198: #{tpu_custom_call.1} parent=175 // pred_check_branch
          %1332 = sbr.rel (%p1330) target = $region200
        $region199: #{tpu_custom_call.1} parent=175 // pred_region
          %1334 = dma.done [#allocation12], 1024
        $region200: #{tpu_custom_call.1} parent=175 // pred_fallthru
          _
        // Predicated region
        $region201: #{tpu_custom_call.1} parent=175 // pred_check
          %p1335 = pneg %p399
        $region202: #{tpu_custom_call.1} parent=175 // pred_check_branch
          %1337 = sbr.rel (%p1335) target = $region204
        $region203: #{tpu_custom_call.1} parent=175 // pred_region
          %1339 = dma.done [#allocation12], 1024
        $region204: #{tpu_custom_call.1} parent=175 // pred_fallthru
          _
        // Predicated region
        $region205: #{tpu_custom_call.1} parent=175 // pred_check
          %p1340 = pneg %p441
        $region206: #{tpu_custom_call.1} parent=175 // pred_check_branch
          %1342 = sbr.rel (%p1340) target = $region208
        $region207: #{tpu_custom_call.1} parent=175 // pred_region
          %1344 = dma.done [#allocation15], 1024
        $region208: #{tpu_custom_call.1} parent=175 // pred_fallthru
          _
        // Predicated region
        $region209: #{tpu_custom_call.1} parent=175 // pred_check
          %p1345 = pneg %p483
        $region210: #{tpu_custom_call.1} parent=175 // pred_check_branch
          %1347 = sbr.rel (%p1345) target = $region212
        $region211: #{tpu_custom_call.1} parent=175 // pred_region
          %1349 = dma.done [#allocation15], 1024
        $region212: #{tpu_custom_call.1} parent=175 // pred_fallthru
          _
        // Predicated region
        $region213: #{tpu_custom_call.1} parent=175 // pred_check
          %p1350 = pneg %p525
        $region214: #{tpu_custom_call.1} parent=175 // pred_check_branch
          %1352 = sbr.rel (%p1350) target = $region216
        $region215: #{tpu_custom_call.1} parent=175 // pred_region
          %1354 = dma.done [#allocation18], 1024
        $region216: #{tpu_custom_call.1} parent=175 // pred_fallthru
          _
        // Predicated region
        $region217: #{tpu_custom_call.1} parent=175 // pred_check
          %p1355 = pneg %p567
        $region218: #{tpu_custom_call.1} parent=175 // pred_check_branch
          %1357 = sbr.rel (%p1355) target = $region220
        $region219: #{tpu_custom_call.1} parent=175 // pred_region
          %1359 = dma.done [#allocation18], 1024
        $region220: #{tpu_custom_call.1} parent=175 // pred_fallthru
          _
        // Predicated region
        $region221: #{tpu_custom_call.1} parent=175 // pred_check
          %p1360 = pneg %p609
        $region222: #{tpu_custom_call.1} parent=175 // pred_check_branch
          %1362 = sbr.rel (%p1360) target = $region224
        $region223: #{tpu_custom_call.1} parent=175 // pred_region
          %1364 = dma.done [#allocation21], 1024
        $region224: #{tpu_custom_call.1} parent=175 // pred_fallthru
          _
        // Predicated region
        $region225: #{tpu_custom_call.1} parent=175 // pred_check
          %p1365 = pneg %p651
        $region226: #{tpu_custom_call.1} parent=175 // pred_check_branch
          %1367 = sbr.rel (%p1365) target = $region228
        $region227: #{tpu_custom_call.1} parent=175 // pred_region
          %1369 = dma.done [#allocation21], 1024
        $region228: #{tpu_custom_call.1} parent=175 // pred_fallthru
          _
        // Predicated region
        $region229: #{tpu_custom_call.1} parent=175 // pred_check
          %p1370 = pneg %p693
        $region230: #{tpu_custom_call.1} parent=175 // pred_check_branch
          %1372 = sbr.rel (%p1370) target = $region232
        $region231: #{tpu_custom_call.1} parent=175 // pred_region
          %1374 = dma.done [#allocation24], 1024
        $region232: #{tpu_custom_call.1} parent=175 // pred_fallthru
          _
        // Predicated region
        $region233: #{tpu_custom_call.1} parent=175 // pred_check
          %p1375 = pneg %p735
        $region234: #{tpu_custom_call.1} parent=175 // pred_check_branch
          %1377 = sbr.rel (%p1375) target = $region236
        $region235: #{tpu_custom_call.1} parent=175 // pred_region
          %1379 = dma.done [#allocation24], 1024
        $region236: #{tpu_custom_call.1} parent=175 // pred_fallthru
          _
        // Predicated region
        $region237: #{tpu_custom_call.1} parent=175 // pred_check
          %p1380 = pneg %p777
        $region238: #{tpu_custom_call.1} parent=175 // pred_check_branch
          %1382 = sbr.rel (%p1380) target = $region240
        $region239: #{tpu_custom_call.1} parent=175 // pred_region
          %1384 = dma.done [#allocation27], 1024
        $region240: #{tpu_custom_call.1} parent=175 // pred_fallthru
          _
        // Predicated region
        $region241: #{tpu_custom_call.1} parent=175 // pred_check
          %p1385 = pneg %p861
        $region242: #{tpu_custom_call.1} parent=175 // pred_check_branch
          %1387 = sbr.rel (%p1385) target = $region244
        $region243: #{tpu_custom_call.1} parent=175 // pred_region
          %1389 = dma.done [#allocation27], 1024
        $region244: #{tpu_custom_call.1} parent=175 // pred_fallthru
          _
        // Predicated region
        $region245: #{tpu_custom_call.1} parent=175 // pred_check
          %p1390 = pneg %p903
        $region246: #{tpu_custom_call.1} parent=175 // pred_check_branch
          %1392 = sbr.rel (%p1390) target = $region248
        $region247: #{tpu_custom_call.1} parent=175 // pred_region
          %1394 = dma.done [#allocation30], 1024
        $region248: #{tpu_custom_call.1} parent=175 // pred_fallthru
          _
        %s1395 = sand.u32 %s113, 1
        %s1396 = scalar_lea.sflag [#allocation3], %s1395
        %s1397 = sand.u32 %s113, 1
        %s1398 = smul.addr %s1397, 256
        %s1399 = scalar_lea.vmem [#allocation2], %s1398
        %p1400 = pneg %p126
        %p1401 = pneg %p123
        %p1402 = pneg %p147
        %p1403 = pneg %p144
        %p1404 = pneg %p168
        %p1405 = pneg %p165
        %p1406 = pneg %p189
        %p1407 = pneg %p186
        %p1408 = pneg %p210
        %p1409 = pneg %p207
        %p1410 = pneg %p231
        %p1411 = pneg %p228
        %p1412 = pneg %p252
        %p1413 = pneg %p249
        %p1414 = pneg %p273
        %p1415 = pneg %p270
        %p1416 = pneg %p294
        %p1417 = pneg %p291
        %p1418 = pneg %p315
        %p1419 = pneg %p312
        %p1420 = pneg %p336
        %p1421 = pneg %p333
        %p1422 = pneg %p357
        %p1423 = pneg %p354
        %p1424 = pneg %p378
        %p1425 = pneg %p375
        %p1426 = pneg %p399
        %p1427 = pneg %p396
        %p1428 = pneg %p420
        %p1429 = pneg %p417
        %p1430 = pneg %p441
        %p1431 = pneg %p438
        %p1432 = pneg %p462
        %p1433 = pneg %p459
        %p1434 = pneg %p483
        %p1435 = pneg %p480
        %p1436 = pneg %p504
        %p1437 = pneg %p501
        %p1438 = pneg %p525
        %p1439 = pneg %p522
        %p1440 = pneg %p546
        %p1441 = pneg %p543
        %p1442 = pneg %p567
        %p1443 = pneg %p564
        %p1444 = pneg %p588
        %p1445 = pneg %p585
        %p1446 = pneg %p609
        %p1447 = pneg %p606
        %p1448 = pneg %p630
        %p1449 = pneg %p627
        %p1450 = pneg %p651
        %p1451 = pneg %p648
        %p1452 = pneg %p672
        %p1453 = pneg %p669
        %p1454 = pneg %p693
        %p1455 = pneg %p690
        %p1456 = pneg %p714
        %p1457 = pneg %p711
        %p1458 = pneg %p735
        %p1459 = pneg %p732
        %p1460 = pneg %p756
        %p1461 = pneg %p753
        %p1462 = pneg %p777
        %p1463 = pneg %p774
        %p1464 = pneg %p798
        %p1465 = pneg %p795
        %p1466 = pneg %p819
        %p1467 = pneg %p816
        %p1468 = pneg %p840
        %p1469 = pneg %p837
        %p1470 = pneg %p861
        %p1471 = pneg %p858
        %p1472 = pneg %p882
        %p1473 = pneg %p879
        %p1474 = pneg %p903
        %p1475 = pneg %p900
        %p1476 = pneg %p924
        %p1477 = pneg %p921
        %p1478 = pneg %p950
        %p1479 = pneg %p947
        %s1480 = sand.u32 %s937, 1
        %s1481 = scalar_lea.sflag [#allocation4], %s1480
        %s1482 = sand.u32 %s937, 1
        %s1483 = smul.addr %s1482, 512
        %s1484 = scalar_lea.vmem [#allocation31], %s1483
        %s1485 = smul.u32 32, %s105
        %s1486 = smul.u32 32, %s105
        %v1487 = vld [vmem:[%s1304] sm:$0xff]
        %v1488 = vld [vmem:[%s1304 + $0x8] sm:$0xff]
        %v1489 = vld [vmem:[%s1304 + $0x10] sm:$0xff]
        %v1490 = vld [vmem:[%s1304 + $0x18] sm:$0xff]
        %v1491 = vld [vmem:[%s1304 + $0x20] sm:$0xff]
        %v1492 = vld [vmem:[%s1304 + $0x28] sm:$0xff]
        %v1493 = vld [vmem:[%s1304 + $0x30] sm:$0xff]
        %v1494 = vld [vmem:[%s1304 + $0x38] sm:$0xff]
        %v1495 = vld [vmem:[%s1304 + $0x40] sm:$0xff]
        %v1496 = vld [vmem:[%s1304 + $0x48] sm:$0xff]
        %v1497 = vld [vmem:[%s1304 + $0x50] sm:$0xff]
        %v1498 = vld [vmem:[%s1304 + $0x58] sm:$0xff]
        %v1499 = vld [vmem:[%s1304 + $0x60] sm:$0xff]
        %v1500 = vld [vmem:[%s1304 + $0x68] sm:$0xff]
        %v1501 = vld [vmem:[%s1304 + $0x70] sm:$0xff]
        %v1502 = vld [vmem:[%s1304 + $0x78] sm:$0xff]
        %v1503 = vld [vmem:[%s1304 + $0x80] sm:$0xff]
        %v1504 = vld [vmem:[%s1304 + $0x88] sm:$0xff]
        %v1505 = vld [vmem:[%s1304 + $0x90] sm:$0xff]
        %v1506 = vld [vmem:[%s1304 + $0x98] sm:$0xff]
        %v1507 = vld [vmem:[%s1304 + $0xa0] sm:$0xff]
        %v1508 = vld [vmem:[%s1304 + $0xa8] sm:$0xff]
        %v1509 = vld [vmem:[%s1304 + $0xb0] sm:$0xff]
        %v1510 = vld [vmem:[%s1304 + $0xb8] sm:$0xff]
        %v1511 = vld [vmem:[%s1304 + $0xc0] sm:$0xff]
        %v1512 = vld [vmem:[%s1304 + $0xc8] sm:$0xff]
        %v1513 = vld [vmem:[%s1304 + $0xd0] sm:$0xff]
        %v1514 = vld [vmem:[%s1304 + $0xd8] sm:$0xff]
        %v1515 = vld [vmem:[%s1304 + $0xe0] sm:$0xff]
        %v1516 = vld [vmem:[%s1304 + $0xe8] sm:$0xff]
        %v1517 = vld [vmem:[%s1304 + $0xf0] sm:$0xff]
        %v1518 = vld [vmem:[%s1304 + $0xf8] sm:$0xff]
        %v1551 = vrot.slane %v1487, 4
        %v1552 = vrot.slane %v1488, 4
        %v1553 = vrot.slane %v1489, 4
        %v1554 = vrot.slane %v1490, 4
        %v1555 = vrot.slane %v1491, 4
        %v1556 = vrot.slane %v1492, 4
        %v1557 = vrot.slane %v1493, 4
        %v1558 = vrot.slane %v1494, 4
        %v1559 = vrot.slane %v1495, 4
        %v1560 = vrot.slane %v1496, 4
        %v1561 = vrot.slane %v1497, 4
        %v1562 = vrot.slane %v1498, 4
        %v1563 = vrot.slane %v1499, 4
        %v1564 = vrot.slane %v1500, 4
        %v1565 = vrot.slane %v1501, 4
        %v1566 = vrot.slane %v1502, 4
        %v1567 = vrot.slane %v1503, 4
        %v1568 = vrot.slane %v1504, 4
        %v1569 = vrot.slane %v1505, 4
        %v1570 = vrot.slane %v1506, 4
        %v1571 = vrot.slane %v1507, 4
        %v1572 = vrot.slane %v1508, 4
        %v1573 = vrot.slane %v1509, 4
        %v1574 = vrot.slane %v1510, 4
        %v1575 = vrot.slane %v1511, 4
        %v1576 = vrot.slane %v1512, 4
        %v1577 = vrot.slane %v1513, 4
        %v1578 = vrot.slane %v1514, 4
        %v1579 = vrot.slane %v1515, 4
        %v1580 = vrot.slane %v1516, 4
        %v1581 = vrot.slane %v1517, 4
        %v1582 = vrot.slane %v1518, 4
        %v1615 = vunpack.c.l.bf16 %v1551
        %v1616 = vunpack.c.l.bf16 %v1552
        %v1617 = vunpack.c.l.bf16 %v1553
        %v1618 = vunpack.c.l.bf16 %v1554
        %v1619 = vunpack.c.l.bf16 %v1555
        %v1620 = vunpack.c.l.bf16 %v1556
        %v1621 = vunpack.c.l.bf16 %v1557
        %v1622 = vunpack.c.l.bf16 %v1558
        %v1623 = vunpack.c.l.bf16 %v1559
        %v1624 = vunpack.c.l.bf16 %v1560
        %v1625 = vunpack.c.l.bf16 %v1561
        %v1626 = vunpack.c.l.bf16 %v1562
        %v1627 = vunpack.c.l.bf16 %v1563
        %v1628 = vunpack.c.l.bf16 %v1564
        %v1629 = vunpack.c.l.bf16 %v1565
        %v1630 = vunpack.c.l.bf16 %v1566
        %v1631 = vunpack.c.l.bf16 %v1567
        %v1632 = vunpack.c.l.bf16 %v1568
        %v1633 = vunpack.c.l.bf16 %v1569
        %v1634 = vunpack.c.l.bf16 %v1570
        %v1635 = vunpack.c.l.bf16 %v1571
        %v1636 = vunpack.c.l.bf16 %v1572
        %v1637 = vunpack.c.l.bf16 %v1573
        %v1638 = vunpack.c.l.bf16 %v1574
        %v1639 = vunpack.c.l.bf16 %v1575
        %v1640 = vunpack.c.l.bf16 %v1576
        %v1641 = vunpack.c.l.bf16 %v1577
        %v1642 = vunpack.c.l.bf16 %v1578
        %v1643 = vunpack.c.l.bf16 %v1579
        %v1644 = vunpack.c.l.bf16 %v1580
        %v1645 = vunpack.c.l.bf16 %v1581
        %v1646 = vunpack.c.l.bf16 %v1582
        %v1647 = vld [vmem:[%s3] sm:$0xf]
        %v1648 = vld [vmem:[%s3 + $0x4] sm:$0xf]
        %v1649 = vld [vmem:[%s3 + $0x8] sm:$0xf]
        %v1650 = vld [vmem:[%s3 + $0xc] sm:$0xf]
        %v1651 = vld [vmem:[%s3 + $0x10] sm:$0xf]
        %v1652 = vld [vmem:[%s3 + $0x14] sm:$0xf]
        %v1653 = vld [vmem:[%s3 + $0x18] sm:$0xf]
        %v1654 = vld [vmem:[%s3 + $0x1c] sm:$0xf]
        %v1655 = vld [vmem:[%s3 + $0x20] sm:$0xf]
        %v1656 = vld [vmem:[%s3 + $0x24] sm:$0xf]
        %v1657 = vld [vmem:[%s3 + $0x28] sm:$0xf]
        %v1658 = vld [vmem:[%s3 + $0x2c] sm:$0xf]
        %v1659 = vld [vmem:[%s3 + $0x30] sm:$0xf]
        %v1660 = vld [vmem:[%s3 + $0x34] sm:$0xf]
        %v1661 = vld [vmem:[%s3 + $0x38] sm:$0xf]
        %v1662 = vld [vmem:[%s3 + $0x3c] sm:$0xf]
        %v1663 = vld [vmem:[%s5] sm:$0x1]
        %v1665 = vperm.slane %v1663, 0
        %v1667 = vunpack.c.l.b16 %v1487
        %v1668 = vunpack.c.l.b16 %v1488
        %v1669 = vunpack.c.l.b16 %v1489
        %v1670 = vunpack.c.l.b16 %v1490
        %v1671 = vunpack.c.l.b16 %v1491
        %v1672 = vunpack.c.l.b16 %v1492
        %v1673 = vunpack.c.l.b16 %v1493
        %v1674 = vunpack.c.l.b16 %v1494
        %v1675 = vunpack.c.l.b16 %v1495
        %v1676 = vunpack.c.l.b16 %v1496
        %v1677 = vunpack.c.l.b16 %v1497
        %v1678 = vunpack.c.l.b16 %v1498
        %v1679 = vunpack.c.l.b16 %v1499
        %v1680 = vunpack.c.l.b16 %v1500
        %v1681 = vunpack.c.l.b16 %v1501
        %v1682 = vunpack.c.l.b16 %v1502
        %v1683 = vunpack.c.l.b16 %v1503
        %v1684 = vunpack.c.l.b16 %v1504
        %v1685 = vunpack.c.l.b16 %v1505
        %v1686 = vunpack.c.l.b16 %v1506
        %v1687 = vunpack.c.l.b16 %v1507
        %v1688 = vunpack.c.l.b16 %v1508
        %v1689 = vunpack.c.l.b16 %v1509
        %v1690 = vunpack.c.l.b16 %v1510
        %v1691 = vunpack.c.l.b16 %v1511
        %v1692 = vunpack.c.l.b16 %v1512
        %v1693 = vunpack.c.l.b16 %v1513
        %v1694 = vunpack.c.l.b16 %v1514
        %v1695 = vunpack.c.l.b16 %v1515
        %v1696 = vunpack.c.l.b16 %v1516
        %v1697 = vunpack.c.l.b16 %v1517
        %v1698 = vunpack.c.l.b16 %v1518
        %v1699 = vpack.c.b16 %v1668, %v1667
        %v1700 = vpack.c.b16 %v1670, %v1669
        %v1701 = vpack.c.b16 %v1672, %v1671
        %v1702 = vpack.c.b16 %v1674, %v1673
        %v1703 = vpack.c.b16 %v1676, %v1675
        %v1704 = vpack.c.b16 %v1678, %v1677
        %v1705 = vpack.c.b16 %v1680, %v1679
        %v1706 = vpack.c.b16 %v1682, %v1681
        %v1707 = vpack.c.b16 %v1684, %v1683
        %v1708 = vpack.c.b16 %v1686, %v1685
        %v1709 = vpack.c.b16 %v1688, %v1687
        %v1710 = vpack.c.b16 %v1690, %v1689
        %v1711 = vpack.c.b16 %v1692, %v1691
        %v1712 = vpack.c.b16 %v1694, %v1693
        %v1713 = vpack.c.b16 %v1696, %v1695
        %v1714 = vpack.c.b16 %v1698, %v1697
        %v1747 = vunpack.c.l.b16 %v1647
        %v1748 = vunpack.c.l.b16 %v1648
        %v1749 = vunpack.c.l.b16 %v1649
        %v1750 = vunpack.c.l.b16 %v1650
        %v1751 = vunpack.c.l.b16 %v1651
        %v1752 = vunpack.c.l.b16 %v1652
        %v1753 = vunpack.c.l.b16 %v1653
        %v1754 = vunpack.c.l.b16 %v1654
        %v1755 = vunpack.c.l.b16 %v1655
        %v1756 = vunpack.c.l.b16 %v1656
        %v1757 = vunpack.c.l.b16 %v1657
        %v1758 = vunpack.c.l.b16 %v1658
        %v1759 = vunpack.c.l.b16 %v1659
        %v1760 = vunpack.c.l.b16 %v1660
        %v1761 = vunpack.c.l.b16 %v1661
        %v1762 = vunpack.c.l.b16 %v1662
        %v1763 = vpack.c.b16 %v1748, %v1747
        %v1764 = vpack.c.b16 %v1750, %v1749
        %v1765 = vpack.c.b16 %v1752, %v1751
        %v1766 = vpack.c.b16 %v1754, %v1753
        %v1767 = vpack.c.b16 %v1756, %v1755
        %v1768 = vpack.c.b16 %v1758, %v1757
        %v1769 = vpack.c.b16 %v1760, %v1759
        %v1770 = vpack.c.b16 %v1762, %v1761
        %1779 = vmatpush.bf16.msra.mxu0 %v1770
        %1780 = vmatpush.bf16.msra.mxu0 %v1769
        %1781 = vmatpush.bf16.msra.mxu0 %v1768
        %1782 = vmatpush.bf16.msra.mxu0 %v1767
        %1783 = vmatpush.bf16.msra.mxu0 %v1766
        %1784 = vmatpush.bf16.msra.mxu0 %v1765
        %1785 = vmatpush.bf16.msra.mxu0 %v1764
        %1786 = vmatpush.bf16.msra.mxu0 %v1763
        %1787 = vmatmul.bf16.gmra.mxu0 %v1699
        %v1788 = vpop.f32.mrf.mxu0
        %v1789 = vadd.f32 %v1665, %v1788
        %v1790 = vpop.f32.mrf.mxu0
        %v1791 = vadd.f32 %v1665, %v1790
        %1792 = vmatmul.bf16.gmra.mxu0 %v1700
        %v1793 = vpop.f32.mrf.mxu0
        %v1794 = vadd.f32 %v1665, %v1793
        %v1795 = vpop.f32.mrf.mxu0
        %v1796 = vadd.f32 %v1665, %v1795
        %1797 = vmatmul.bf16.gmra.mxu0 %v1701
        %v1798 = vpop.f32.mrf.mxu0
        %v1799 = vadd.f32 %v1665, %v1798
        %v1800 = vpop.f32.mrf.mxu0
        %v1801 = vadd.f32 %v1665, %v1800
        %1802 = vmatmul.bf16.gmra.mxu0 %v1702
        %v1803 = vpop.f32.mrf.mxu0
        %v1804 = vadd.f32 %v1665, %v1803
        %v1805 = vpop.f32.mrf.mxu0
        %v1806 = vadd.f32 %v1665, %v1805
        %1807 = vmatmul.bf16.gmra.mxu0 %v1703
        %v1808 = vpop.f32.mrf.mxu0
        %v1809 = vadd.f32 %v1665, %v1808
        %v1810 = vpop.f32.mrf.mxu0
        %v1811 = vadd.f32 %v1665, %v1810
        %1812 = vmatmul.bf16.gmra.mxu0 %v1704
        %v1813 = vpop.f32.mrf.mxu0
        %v1814 = vadd.f32 %v1665, %v1813
        %v1815 = vpop.f32.mrf.mxu0
        %v1816 = vadd.f32 %v1665, %v1815
        %1817 = vmatmul.bf16.gmra.mxu0 %v1705
        %v1818 = vpop.f32.mrf.mxu0
        %v1819 = vadd.f32 %v1665, %v1818
        %v1820 = vpop.f32.mrf.mxu0
        %v1821 = vadd.f32 %v1665, %v1820
        %1822 = vmatmul.bf16.gmra.mxu0 %v1706
        %v1823 = vpop.f32.mrf.mxu0
        %v1824 = vadd.f32 %v1665, %v1823
        %v1825 = vpop.f32.mrf.mxu0
        %v1826 = vadd.f32 %v1665, %v1825
        %1827 = vmatmul.bf16.gmra.mxu0 %v1707
        %v1828 = vpop.f32.mrf.mxu0
        %v1829 = vadd.f32 %v1665, %v1828
        %v1830 = vpop.f32.mrf.mxu0
        %v1831 = vadd.f32 %v1665, %v1830
        %1832 = vmatmul.bf16.gmra.mxu0 %v1708
        %v1833 = vpop.f32.mrf.mxu0
        %v1834 = vadd.f32 %v1665, %v1833
        %v1835 = vpop.f32.mrf.mxu0
        %v1836 = vadd.f32 %v1665, %v1835
        %1837 = vmatmul.bf16.gmra.mxu0 %v1709
        %v1838 = vpop.f32.mrf.mxu0
        %v1839 = vadd.f32 %v1665, %v1838
        %v1840 = vpop.f32.mrf.mxu0
        %v1841 = vadd.f32 %v1665, %v1840
        %1842 = vmatmul.bf16.gmra.mxu0 %v1710
        %v1843 = vpop.f32.mrf.mxu0
        %v1844 = vadd.f32 %v1665, %v1843
        %v1845 = vpop.f32.mrf.mxu0
        %v1846 = vadd.f32 %v1665, %v1845
        %1847 = vmatmul.bf16.gmra.mxu0 %v1711
        %v1848 = vpop.f32.mrf.mxu0
        %v1849 = vadd.f32 %v1665, %v1848
        %v1850 = vpop.f32.mrf.mxu0
        %v1851 = vadd.f32 %v1665, %v1850
        %1852 = vmatmul.bf16.gmra.mxu0 %v1712
        %v1853 = vpop.f32.mrf.mxu0
        %v1854 = vadd.f32 %v1665, %v1853
        %v1855 = vpop.f32.mrf.mxu0
        %v1856 = vadd.f32 %v1665, %v1855
        %1857 = vmatmul.bf16.gmra.mxu0 %v1713
        %v1858 = vpop.f32.mrf.mxu0
        %v1859 = vadd.f32 %v1665, %v1858
        %v1860 = vpop.f32.mrf.mxu0
        %v1861 = vadd.f32 %v1665, %v1860
        %1862 = vmatmul.bf16.gmra.mxu0 %v1714
        %v1863 = vpop.f32.mrf.mxu0
        %v1864 = vadd.f32 %v1665, %v1863
        %v1865 = vpop.f32.mrf.mxu0
        %v1866 = vadd.f32 %v1665, %v1865
        %1867 = vdwg.mxu0
        %v1868 = vmax.f32 %v1789, 0.0
        %v1869 = vmax.f32 %v1791, 0.0
        %v1870 = vmax.f32 %v1794, 0.0
        %v1871 = vmax.f32 %v1796, 0.0
        %v1872 = vmax.f32 %v1799, 0.0
        %v1873 = vmax.f32 %v1801, 0.0
        %v1874 = vmax.f32 %v1804, 0.0
        %v1875 = vmax.f32 %v1806, 0.0
        %v1876 = vmax.f32 %v1809, 0.0
        %v1877 = vmax.f32 %v1811, 0.0
        %v1878 = vmax.f32 %v1814, 0.0
        %v1879 = vmax.f32 %v1816, 0.0
        %v1880 = vmax.f32 %v1819, 0.0
        %v1881 = vmax.f32 %v1821, 0.0
        %v1882 = vmax.f32 %v1824, 0.0
        %v1883 = vmax.f32 %v1826, 0.0
        %v1884 = vmax.f32 %v1829, 0.0
        %v1885 = vmax.f32 %v1831, 0.0
        %v1886 = vmax.f32 %v1834, 0.0
        %v1887 = vmax.f32 %v1836, 0.0
        %v1888 = vmax.f32 %v1839, 0.0
        %v1889 = vmax.f32 %v1841, 0.0
        %v1890 = vmax.f32 %v1844, 0.0
        %v1891 = vmax.f32 %v1846, 0.0
        %v1892 = vmax.f32 %v1849, 0.0
        %v1893 = vmax.f32 %v1851, 0.0
        %v1894 = vmax.f32 %v1854, 0.0
        %v1895 = vmax.f32 %v1856, 0.0
        %v1896 = vmax.f32 %v1859, 0.0
        %v1897 = vmax.f32 %v1861, 0.0
        %v1898 = vmax.f32 %v1864, 0.0
        %v1899 = vmax.f32 %v1866, 0.0
        %v1900 = vpack.c.bf16 %v1869, %v1868
        %v1901 = vpack.c.bf16 %v1871, %v1870
        %v1902 = vpack.c.bf16 %v1873, %v1872
        %v1903 = vpack.c.bf16 %v1875, %v1874
        %v1904 = vpack.c.bf16 %v1877, %v1876
        %v1905 = vpack.c.bf16 %v1879, %v1878
        %v1906 = vpack.c.bf16 %v1881, %v1880
        %v1907 = vpack.c.bf16 %v1883, %v1882
        %v1908 = vpack.c.bf16 %v1885, %v1884
        %v1909 = vpack.c.bf16 %v1887, %v1886
        %v1910 = vpack.c.bf16 %v1889, %v1888
        %v1911 = vpack.c.bf16 %v1891, %v1890
        %v1912 = vpack.c.bf16 %v1893, %v1892
        %v1913 = vpack.c.bf16 %v1895, %v1894
        %v1914 = vpack.c.bf16 %v1897, %v1896
        %v1915 = vpack.c.bf16 %v1899, %v1898
        %v1916 = vld [vmem:[#allocation5] sm:$0xf]
        %v1917 = vld [vmem:[#allocation5 + $0x4] sm:$0xf]
        %v1918 = vld [vmem:[#allocation5 + $0x8] sm:$0xf]
        %v1919 = vld [vmem:[#allocation5 + $0xc] sm:$0xf]
        %v1920 = vld [vmem:[#allocation5 + $0x10] sm:$0xf]
        %v1921 = vld [vmem:[#allocation5 + $0x14] sm:$0xf]
        %v1922 = vld [vmem:[#allocation5 + $0x18] sm:$0xf]
        %v1923 = vld [vmem:[#allocation5 + $0x1c] sm:$0xf]
        %v1924 = vld [vmem:[#allocation5 + $0x20] sm:$0xf]
        %v1925 = vld [vmem:[#allocation5 + $0x24] sm:$0xf]
        %v1926 = vld [vmem:[#allocation5 + $0x28] sm:$0xf]
        %v1927 = vld [vmem:[#allocation5 + $0x2c] sm:$0xf]
        %v1928 = vld [vmem:[#allocation5 + $0x30] sm:$0xf]
        %v1929 = vld [vmem:[#allocation5 + $0x34] sm:$0xf]
        %v1930 = vld [vmem:[#allocation5 + $0x38] sm:$0xf]
        %v1931 = vld [vmem:[#allocation5 + $0x3c] sm:$0xf]
        %v1932 = vld [vmem:[%s9] sm:$0x1]
        %v1934 = vperm.slane %v1932, 0
        %v1952 = vunpack.c.l.b16 %v1916
        %v1953 = vunpack.c.l.b16 %v1917
        %v1954 = vunpack.c.l.b16 %v1918
        %v1955 = vunpack.c.l.b16 %v1919
        %v1956 = vunpack.c.l.b16 %v1920
        %v1957 = vunpack.c.l.b16 %v1921
        %v1958 = vunpack.c.l.b16 %v1922
        %v1959 = vunpack.c.l.b16 %v1923
        %v1960 = vunpack.c.l.b16 %v1924
        %v1961 = vunpack.c.l.b16 %v1925
        %v1962 = vunpack.c.l.b16 %v1926
        %v1963 = vunpack.c.l.b16 %v1927
        %v1964 = vunpack.c.l.b16 %v1928
        %v1965 = vunpack.c.l.b16 %v1929
        %v1966 = vunpack.c.l.b16 %v1930
        %v1967 = vunpack.c.l.b16 %v1931
        %v1968 = vpack.c.b16 %v1953, %v1952
        %v1969 = vpack.c.b16 %v1955, %v1954
        %v1970 = vpack.c.b16 %v1957, %v1956
        %v1971 = vpack.c.b16 %v1959, %v1958
        %v1972 = vpack.c.b16 %v1961, %v1960
        %v1973 = vpack.c.b16 %v1963, %v1962
        %v1974 = vpack.c.b16 %v1965, %v1964
        %v1975 = vpack.c.b16 %v1967, %v1966
        %1984 = vmatpush.bf16.msra.mxu0 %v1975
        %1985 = vmatpush.bf16.msra.mxu0 %v1974
        %1986 = vmatpush.bf16.msra.mxu0 %v1973
        %1987 = vmatpush.bf16.msra.mxu0 %v1972
        %1988 = vmatpush.bf16.msra.mxu0 %v1971
        %1989 = vmatpush.bf16.msra.mxu0 %v1970
        %1990 = vmatpush.bf16.msra.mxu0 %v1969
        %1991 = vmatpush.bf16.msra.mxu0 %v1968
        %1992 = vmatmul.bf16.gmra.mxu0 %v1900
        %v1993 = vpop.f32.mrf.mxu0
        %v1994 = vadd.f32 %v1934, %v1993
        %v1995 = vpop.f32.mrf.mxu0
        %v1996 = vadd.f32 %v1934, %v1995
        %1997 = vmatmul.bf16.gmra.mxu0 %v1901
        %v1998 = vpop.f32.mrf.mxu0
        %v1999 = vadd.f32 %v1934, %v1998
        %v2000 = vpop.f32.mrf.mxu0
        %v2001 = vadd.f32 %v1934, %v2000
        %2002 = vmatmul.bf16.gmra.mxu0 %v1902
        %v2003 = vpop.f32.mrf.mxu0
        %v2004 = vadd.f32 %v1934, %v2003
        %v2005 = vpop.f32.mrf.mxu0
        %v2006 = vadd.f32 %v1934, %v2005
        %2007 = vmatmul.bf16.gmra.mxu0 %v1903
        %v2008 = vpop.f32.mrf.mxu0
        %v2009 = vadd.f32 %v1934, %v2008
        %v2010 = vpop.f32.mrf.mxu0
        %v2011 = vadd.f32 %v1934, %v2010
        %2012 = vmatmul.bf16.gmra.mxu0 %v1904
        %v2013 = vpop.f32.mrf.mxu0
        %v2014 = vadd.f32 %v1934, %v2013
        %v2015 = vpop.f32.mrf.mxu0
        %v2016 = vadd.f32 %v1934, %v2015
        %2017 = vmatmul.bf16.gmra.mxu0 %v1905
        %v2018 = vpop.f32.mrf.mxu0
        %v2019 = vadd.f32 %v1934, %v2018
        %v2020 = vpop.f32.mrf.mxu0
        %v2021 = vadd.f32 %v1934, %v2020
        %2022 = vmatmul.bf16.gmra.mxu0 %v1906
        %v2023 = vpop.f32.mrf.mxu0
        %v2024 = vadd.f32 %v1934, %v2023
        %v2025 = vpop.f32.mrf.mxu0
        %v2026 = vadd.f32 %v1934, %v2025
        %2027 = vmatmul.bf16.gmra.mxu0 %v1907
        %v2028 = vpop.f32.mrf.mxu0
        %v2029 = vadd.f32 %v1934, %v2028
        %v2030 = vpop.f32.mrf.mxu0
        %v2031 = vadd.f32 %v1934, %v2030
        %2032 = vmatmul.bf16.gmra.mxu0 %v1908
        %v2033 = vpop.f32.mrf.mxu0
        %v2034 = vadd.f32 %v1934, %v2033
        %v2035 = vpop.f32.mrf.mxu0
        %v2036 = vadd.f32 %v1934, %v2035
        %2037 = vmatmul.bf16.gmra.mxu0 %v1909
        %v2038 = vpop.f32.mrf.mxu0
        %v2039 = vadd.f32 %v1934, %v2038
        %v2040 = vpop.f32.mrf.mxu0
        %v2041 = vadd.f32 %v1934, %v2040
        %2042 = vmatmul.bf16.gmra.mxu0 %v1910
        %v2043 = vpop.f32.mrf.mxu0
        %v2044 = vadd.f32 %v1934, %v2043
        %v2045 = vpop.f32.mrf.mxu0
        %v2046 = vadd.f32 %v1934, %v2045
        %2047 = vmatmul.bf16.gmra.mxu0 %v1911
        %v2048 = vpop.f32.mrf.mxu0
        %v2049 = vadd.f32 %v1934, %v2048
        %v2050 = vpop.f32.mrf.mxu0
        %v2051 = vadd.f32 %v1934, %v2050
        %2052 = vmatmul.bf16.gmra.mxu0 %v1912
        %v2053 = vpop.f32.mrf.mxu0
        %v2054 = vadd.f32 %v1934, %v2053
        %v2055 = vpop.f32.mrf.mxu0
        %v2056 = vadd.f32 %v1934, %v2055
        %2057 = vmatmul.bf16.gmra.mxu0 %v1913
        %v2058 = vpop.f32.mrf.mxu0
        %v2059 = vadd.f32 %v1934, %v2058
        %v2060 = vpop.f32.mrf.mxu0
        %v2061 = vadd.f32 %v1934, %v2060
        %2062 = vmatmul.bf16.gmra.mxu0 %v1914
        %v2063 = vpop.f32.mrf.mxu0
        %v2064 = vadd.f32 %v1934, %v2063
        %v2065 = vpop.f32.mrf.mxu0
        %v2066 = vadd.f32 %v1934, %v2065
        %2067 = vmatmul.bf16.gmra.mxu0 %v1915
        %v2068 = vpop.f32.mrf.mxu0
        %v2069 = vadd.f32 %v1934, %v2068
        %v2070 = vpop.f32.mrf.mxu0
        %v2071 = vadd.f32 %v1934, %v2070
        %2072 = vdwg.mxu0
        %v2073 = vmax.f32 %v1994, 0.0
        %v2074 = vmax.f32 %v1996, 0.0
        %v2075 = vmax.f32 %v1999, 0.0
        %v2076 = vmax.f32 %v2001, 0.0
        %v2077 = vmax.f32 %v2004, 0.0
        %v2078 = vmax.f32 %v2006, 0.0
        %v2079 = vmax.f32 %v2009, 0.0
        %v2080 = vmax.f32 %v2011, 0.0
        %v2081 = vmax.f32 %v2014, 0.0
        %v2082 = vmax.f32 %v2016, 0.0
        %v2083 = vmax.f32 %v2019, 0.0
        %v2084 = vmax.f32 %v2021, 0.0
        %v2085 = vmax.f32 %v2024, 0.0
        %v2086 = vmax.f32 %v2026, 0.0
        %v2087 = vmax.f32 %v2029, 0.0
        %v2088 = vmax.f32 %v2031, 0.0
        %v2089 = vmax.f32 %v2034, 0.0
        %v2090 = vmax.f32 %v2036, 0.0
        %v2091 = vmax.f32 %v2039, 0.0
        %v2092 = vmax.f32 %v2041, 0.0
        %v2093 = vmax.f32 %v2044, 0.0
        %v2094 = vmax.f32 %v2046, 0.0
        %v2095 = vmax.f32 %v2049, 0.0
        %v2096 = vmax.f32 %v2051, 0.0
        %v2097 = vmax.f32 %v2054, 0.0
        %v2098 = vmax.f32 %v2056, 0.0
        %v2099 = vmax.f32 %v2059, 0.0
        %v2100 = vmax.f32 %v2061, 0.0
        %v2101 = vmax.f32 %v2064, 0.0
        %v2102 = vmax.f32 %v2066, 0.0
        %v2103 = vmax.f32 %v2069, 0.0
        %v2104 = vmax.f32 %v2071, 0.0
        %v2105 = vpack.c.bf16 %v2074, %v2073
        %v2106 = vpack.c.bf16 %v2076, %v2075
        %v2107 = vpack.c.bf16 %v2078, %v2077
        %v2108 = vpack.c.bf16 %v2080, %v2079
        %v2109 = vpack.c.bf16 %v2082, %v2081
        %v2110 = vpack.c.bf16 %v2084, %v2083
        %v2111 = vpack.c.bf16 %v2086, %v2085
        %v2112 = vpack.c.bf16 %v2088, %v2087
        %v2113 = vpack.c.bf16 %v2090, %v2089
        %v2114 = vpack.c.bf16 %v2092, %v2091
        %v2115 = vpack.c.bf16 %v2094, %v2093
        %v2116 = vpack.c.bf16 %v2096, %v2095
        %v2117 = vpack.c.bf16 %v2098, %v2097
        %v2118 = vpack.c.bf16 %v2100, %v2099
        %v2119 = vpack.c.bf16 %v2102, %v2101
        %v2120 = vpack.c.bf16 %v2104, %v2103
        %v2121 = vld [vmem:[#allocation7] sm:$0xf]
        %v2122 = vld [vmem:[#allocation7 + $0x4] sm:$0xf]
        %v2123 = vld [vmem:[#allocation7 + $0x8] sm:$0xf]
        %v2124 = vld [vmem:[#allocation7 + $0xc] sm:$0xf]
        %v2125 = vld [vmem:[#allocation7 + $0x10] sm:$0xf]
        %v2126 = vld [vmem:[#allocation7 + $0x14] sm:$0xf]
        %v2127 = vld [vmem:[#allocation7 + $0x18] sm:$0xf]
        %v2128 = vld [vmem:[#allocation7 + $0x1c] sm:$0xf]
        %v2129 = vld [vmem:[#allocation7 + $0x20] sm:$0xf]
        %v2130 = vld [vmem:[#allocation7 + $0x24] sm:$0xf]
        %v2131 = vld [vmem:[#allocation7 + $0x28] sm:$0xf]
        %v2132 = vld [vmem:[#allocation7 + $0x2c] sm:$0xf]
        %v2133 = vld [vmem:[#allocation7 + $0x30] sm:$0xf]
        %v2134 = vld [vmem:[#allocation7 + $0x34] sm:$0xf]
        %v2135 = vld [vmem:[#allocation7 + $0x38] sm:$0xf]
        %v2136 = vld [vmem:[#allocation7 + $0x3c] sm:$0xf]
        %v2137 = vld [vmem:[%s13] sm:$0x1]
        %v2139 = vperm.slane %v2137, 0
        %v2157 = vunpack.c.l.b16 %v2121
        %v2158 = vunpack.c.l.b16 %v2122
        %v2159 = vunpack.c.l.b16 %v2123
        %v2160 = vunpack.c.l.b16 %v2124
        %v2161 = vunpack.c.l.b16 %v2125
        %v2162 = vunpack.c.l.b16 %v2126
        %v2163 = vunpack.c.l.b16 %v2127
        %v2164 = vunpack.c.l.b16 %v2128
        %v2165 = vunpack.c.l.b16 %v2129
        %v2166 = vunpack.c.l.b16 %v2130
        %v2167 = vunpack.c.l.b16 %v2131
        %v2168 = vunpack.c.l.b16 %v2132
        %v2169 = vunpack.c.l.b16 %v2133
        %v2170 = vunpack.c.l.b16 %v2134
        %v2171 = vunpack.c.l.b16 %v2135
        %v2172 = vunpack.c.l.b16 %v2136
        %v2173 = vpack.c.b16 %v2158, %v2157
        %v2174 = vpack.c.b16 %v2160, %v2159
        %v2175 = vpack.c.b16 %v2162, %v2161
        %v2176 = vpack.c.b16 %v2164, %v2163
        %v2177 = vpack.c.b16 %v2166, %v2165
        %v2178 = vpack.c.b16 %v2168, %v2167
        %v2179 = vpack.c.b16 %v2170, %v2169
        %v2180 = vpack.c.b16 %v2172, %v2171
        %2189 = vmatpush.bf16.msra.mxu0 %v2180
        %2190 = vmatpush.bf16.msra.mxu0 %v2179
        %2191 = vmatpush.bf16.msra.mxu0 %v2178
        %2192 = vmatpush.bf16.msra.mxu0 %v2177
        %2193 = vmatpush.bf16.msra.mxu0 %v2176
        %2194 = vmatpush.bf16.msra.mxu0 %v2175
        %2195 = vmatpush.bf16.msra.mxu0 %v2174
        %2196 = vmatpush.bf16.msra.mxu0 %v2173
        %2197 = vmatmul.bf16.gmra.mxu0 %v2105
        %v2198 = vpop.f32.mrf.mxu0
        %v2199 = vadd.f32 %v2139, %v2198
        %v2200 = vpop.f32.mrf.mxu0
        %v2201 = vadd.f32 %v2139, %v2200
        %2202 = vmatmul.bf16.gmra.mxu0 %v2106
        %v2203 = vpop.f32.mrf.mxu0
        %v2204 = vadd.f32 %v2139, %v2203
        %v2205 = vpop.f32.mrf.mxu0
        %v2206 = vadd.f32 %v2139, %v2205
        %2207 = vmatmul.bf16.gmra.mxu0 %v2107
        %v2208 = vpop.f32.mrf.mxu0
        %v2209 = vadd.f32 %v2139, %v2208
        %v2210 = vpop.f32.mrf.mxu0
        %v2211 = vadd.f32 %v2139, %v2210
        %2212 = vmatmul.bf16.gmra.mxu0 %v2108
        %v2213 = vpop.f32.mrf.mxu0
        %v2214 = vadd.f32 %v2139, %v2213
        %v2215 = vpop.f32.mrf.mxu0
        %v2216 = vadd.f32 %v2139, %v2215
        %2217 = vmatmul.bf16.gmra.mxu0 %v2109
        %v2218 = vpop.f32.mrf.mxu0
        %v2219 = vadd.f32 %v2139, %v2218
        %v2220 = vpop.f32.mrf.mxu0
        %v2221 = vadd.f32 %v2139, %v2220
        %2222 = vmatmul.bf16.gmra.mxu0 %v2110
        %v2223 = vpop.f32.mrf.mxu0
        %v2224 = vadd.f32 %v2139, %v2223
        %v2225 = vpop.f32.mrf.mxu0
        %v2226 = vadd.f32 %v2139, %v2225
        %2227 = vmatmul.bf16.gmra.mxu0 %v2111
        %v2228 = vpop.f32.mrf.mxu0
        %v2229 = vadd.f32 %v2139, %v2228
        %v2230 = vpop.f32.mrf.mxu0
        %v2231 = vadd.f32 %v2139, %v2230
        %2232 = vmatmul.bf16.gmra.mxu0 %v2112
        %v2233 = vpop.f32.mrf.mxu0
        %v2234 = vadd.f32 %v2139, %v2233
        %v2235 = vpop.f32.mrf.mxu0
        %v2236 = vadd.f32 %v2139, %v2235
        %2237 = vmatmul.bf16.gmra.mxu0 %v2113
        %v2238 = vpop.f32.mrf.mxu0
        %v2239 = vadd.f32 %v2139, %v2238
        %v2240 = vpop.f32.mrf.mxu0
        %v2241 = vadd.f32 %v2139, %v2240
        %2242 = vmatmul.bf16.gmra.mxu0 %v2114
        %v2243 = vpop.f32.mrf.mxu0
        %v2244 = vadd.f32 %v2139, %v2243
        %v2245 = vpop.f32.mrf.mxu0
        %v2246 = vadd.f32 %v2139, %v2245
        %2247 = vmatmul.bf16.gmra.mxu0 %v2115
        %v2248 = vpop.f32.mrf.mxu0
        %v2249 = vadd.f32 %v2139, %v2248
        %v2250 = vpop.f32.mrf.mxu0
        %v2251 = vadd.f32 %v2139, %v2250
        %2252 = vmatmul.bf16.gmra.mxu0 %v2116
        %v2253 = vpop.f32.mrf.mxu0
        %v2254 = vadd.f32 %v2139, %v2253
        %v2255 = vpop.f32.mrf.mxu0
        %v2256 = vadd.f32 %v2139, %v2255
        %2257 = vmatmul.bf16.gmra.mxu0 %v2117
        %v2258 = vpop.f32.mrf.mxu0
        %v2259 = vadd.f32 %v2139, %v2258
        %v2260 = vpop.f32.mrf.mxu0
        %v2261 = vadd.f32 %v2139, %v2260
        %2262 = vmatmul.bf16.gmra.mxu0 %v2118
        %v2263 = vpop.f32.mrf.mxu0
        %v2264 = vadd.f32 %v2139, %v2263
        %v2265 = vpop.f32.mrf.mxu0
        %v2266 = vadd.f32 %v2139, %v2265
        %2267 = vmatmul.bf16.gmra.mxu0 %v2119
        %v2268 = vpop.f32.mrf.mxu0
        %v2269 = vadd.f32 %v2139, %v2268
        %v2270 = vpop.f32.mrf.mxu0
        %v2271 = vadd.f32 %v2139, %v2270
        %2272 = vmatmul.bf16.gmra.mxu0 %v2120
        %v2273 = vpop.f32.mrf.mxu0
        %v2274 = vadd.f32 %v2139, %v2273
        %v2275 = vpop.f32.mrf.mxu0
        %v2276 = vadd.f32 %v2139, %v2275
        %2277 = vdwg.mxu0
        %v2278 = vadd.f32 %v1789, %v2199
        %v2279 = vadd.f32 %v1791, %v2201
        %v2280 = vadd.f32 %v1794, %v2204
        %v2281 = vadd.f32 %v1796, %v2206
        %v2282 = vadd.f32 %v1799, %v2209
        %v2283 = vadd.f32 %v1801, %v2211
        %v2284 = vadd.f32 %v1804, %v2214
        %v2285 = vadd.f32 %v1806, %v2216
        %v2286 = vadd.f32 %v1809, %v2219
        %v2287 = vadd.f32 %v1811, %v2221
        %v2288 = vadd.f32 %v1814, %v2224
        %v2289 = vadd.f32 %v1816, %v2226
        %v2290 = vadd.f32 %v1819, %v2229
        %v2291 = vadd.f32 %v1821, %v2231
        %v2292 = vadd.f32 %v1824, %v2234
        %v2293 = vadd.f32 %v1826, %v2236
        %v2294 = vadd.f32 %v1829, %v2239
        %v2295 = vadd.f32 %v1831, %v2241
        %v2296 = vadd.f32 %v1834, %v2244
        %v2297 = vadd.f32 %v1836, %v2246
        %v2298 = vadd.f32 %v1839, %v2249
        %v2299 = vadd.f32 %v1841, %v2251
        %v2300 = vadd.f32 %v1844, %v2254
        %v2301 = vadd.f32 %v1846, %v2256
        %v2302 = vadd.f32 %v1849, %v2259
        %v2303 = vadd.f32 %v1851, %v2261
        %v2304 = vadd.f32 %v1854, %v2264
        %v2305 = vadd.f32 %v1856, %v2266
        %v2306 = vadd.f32 %v1859, %v2269
        %v2307 = vadd.f32 %v1861, %v2271
        %v2308 = vadd.f32 %v1864, %v2274
        %v2309 = vadd.f32 %v1866, %v2276
        %v2310 = vmax.f32 %v2278, 0.0
        %v2311 = vmax.f32 %v2279, 0.0
        %v2312 = vmax.f32 %v2280, 0.0
        %v2313 = vmax.f32 %v2281, 0.0
        %v2314 = vmax.f32 %v2282, 0.0
        %v2315 = vmax.f32 %v2283, 0.0
        %v2316 = vmax.f32 %v2284, 0.0
        %v2317 = vmax.f32 %v2285, 0.0
        %v2318 = vmax.f32 %v2286, 0.0
        %v2319 = vmax.f32 %v2287, 0.0
        %v2320 = vmax.f32 %v2288, 0.0
        %v2321 = vmax.f32 %v2289, 0.0
        %v2322 = vmax.f32 %v2290, 0.0
        %v2323 = vmax.f32 %v2291, 0.0
        %v2324 = vmax.f32 %v2292, 0.0
        %v2325 = vmax.f32 %v2293, 0.0
        %v2326 = vmax.f32 %v2294, 0.0
        %v2327 = vmax.f32 %v2295, 0.0
        %v2328 = vmax.f32 %v2296, 0.0
        %v2329 = vmax.f32 %v2297, 0.0
        %v2330 = vmax.f32 %v2298, 0.0
        %v2331 = vmax.f32 %v2299, 0.0
        %v2332 = vmax.f32 %v2300, 0.0
        %v2333 = vmax.f32 %v2301, 0.0
        %v2334 = vmax.f32 %v2302, 0.0
        %v2335 = vmax.f32 %v2303, 0.0
        %v2336 = vmax.f32 %v2304, 0.0
        %v2337 = vmax.f32 %v2305, 0.0
        %v2338 = vmax.f32 %v2306, 0.0
        %v2339 = vmax.f32 %v2307, 0.0
        %v2340 = vmax.f32 %v2308, 0.0
        %v2341 = vmax.f32 %v2309, 0.0
        %v2342 = vpack.c.bf16 %v2311, %v2310
        %v2343 = vpack.c.bf16 %v2313, %v2312
        %v2344 = vpack.c.bf16 %v2315, %v2314
        %v2345 = vpack.c.bf16 %v2317, %v2316
        %v2346 = vpack.c.bf16 %v2319, %v2318
        %v2347 = vpack.c.bf16 %v2321, %v2320
        %v2348 = vpack.c.bf16 %v2323, %v2322
        %v2349 = vpack.c.bf16 %v2325, %v2324
        %v2350 = vpack.c.bf16 %v2327, %v2326
        %v2351 = vpack.c.bf16 %v2329, %v2328
        %v2352 = vpack.c.bf16 %v2331, %v2330
        %v2353 = vpack.c.bf16 %v2333, %v2332
        %v2354 = vpack.c.bf16 %v2335, %v2334
        %v2355 = vpack.c.bf16 %v2337, %v2336
        %v2356 = vpack.c.bf16 %v2339, %v2338
        %v2357 = vpack.c.bf16 %v2341, %v2340
        %v2358 = vld [vmem:[#allocation8] sm:$0xf]
        %v2359 = vld [vmem:[#allocation8 + $0x4] sm:$0xf]
        %v2360 = vld [vmem:[#allocation8 + $0x8] sm:$0xf]
        %v2361 = vld [vmem:[#allocation8 + $0xc] sm:$0xf]
        %v2362 = vld [vmem:[#allocation8 + $0x10] sm:$0xf]
        %v2363 = vld [vmem:[#allocation8 + $0x14] sm:$0xf]
        %v2364 = vld [vmem:[#allocation8 + $0x18] sm:$0xf]
        %v2365 = vld [vmem:[#allocation8 + $0x1c] sm:$0xf]
        %v2366 = vld [vmem:[#allocation8 + $0x20] sm:$0xf]
        %v2367 = vld [vmem:[#allocation8 + $0x24] sm:$0xf]
        %v2368 = vld [vmem:[#allocation8 + $0x28] sm:$0xf]
        %v2369 = vld [vmem:[#allocation8 + $0x2c] sm:$0xf]
        %v2370 = vld [vmem:[#allocation8 + $0x30] sm:$0xf]
        %v2371 = vld [vmem:[#allocation8 + $0x34] sm:$0xf]
        %v2372 = vld [vmem:[#allocation8 + $0x38] sm:$0xf]
        %v2373 = vld [vmem:[#allocation8 + $0x3c] sm:$0xf]
        %v2374 = vld [vmem:[%s17] sm:$0x1]
        %v2376 = vperm.slane %v2374, 0
        %v2394 = vunpack.c.l.b16 %v2358
        %v2395 = vunpack.c.l.b16 %v2359
        %v2396 = vunpack.c.l.b16 %v2360
        %v2397 = vunpack.c.l.b16 %v2361
        %v2398 = vunpack.c.l.b16 %v2362
        %v2399 = vunpack.c.l.b16 %v2363
        %v2400 = vunpack.c.l.b16 %v2364
        %v2401 = vunpack.c.l.b16 %v2365
        %v2402 = vunpack.c.l.b16 %v2366
        %v2403 = vunpack.c.l.b16 %v2367
        %v2404 = vunpack.c.l.b16 %v2368
        %v2405 = vunpack.c.l.b16 %v2369
        %v2406 = vunpack.c.l.b16 %v2370
        %v2407 = vunpack.c.l.b16 %v2371
        %v2408 = vunpack.c.l.b16 %v2372
        %v2409 = vunpack.c.l.b16 %v2373
        %v2410 = vpack.c.b16 %v2395, %v2394
        %v2411 = vpack.c.b16 %v2397, %v2396
        %v2412 = vpack.c.b16 %v2399, %v2398
        %v2413 = vpack.c.b16 %v2401, %v2400
        %v2414 = vpack.c.b16 %v2403, %v2402
        %v2415 = vpack.c.b16 %v2405, %v2404
        %v2416 = vpack.c.b16 %v2407, %v2406
        %v2417 = vpack.c.b16 %v2409, %v2408
        %2426 = vmatpush.bf16.msra.mxu0 %v2417
        %2427 = vmatpush.bf16.msra.mxu0 %v2416
        %2428 = vmatpush.bf16.msra.mxu0 %v2415
        %2429 = vmatpush.bf16.msra.mxu0 %v2414
        %2430 = vmatpush.bf16.msra.mxu0 %v2413
        %2431 = vmatpush.bf16.msra.mxu0 %v2412
        %2432 = vmatpush.bf16.msra.mxu0 %v2411
        %2433 = vmatpush.bf16.msra.mxu0 %v2410
        %2434 = vmatmul.bf16.gmra.mxu0 %v2342
        %v2435 = vpop.f32.mrf.mxu0
        %v2436 = vadd.f32 %v2376, %v2435
        %v2437 = vpop.f32.mrf.mxu0
        %v2438 = vadd.f32 %v2376, %v2437
        %2439 = vmatmul.bf16.gmra.mxu0 %v2343
        %v2440 = vpop.f32.mrf.mxu0
        %v2441 = vadd.f32 %v2376, %v2440
        %v2442 = vpop.f32.mrf.mxu0
        %v2443 = vadd.f32 %v2376, %v2442
        %2444 = vmatmul.bf16.gmra.mxu0 %v2344
        %v2445 = vpop.f32.mrf.mxu0
        %v2446 = vadd.f32 %v2376, %v2445
        %v2447 = vpop.f32.mrf.mxu0
        %v2448 = vadd.f32 %v2376, %v2447
        %2449 = vmatmul.bf16.gmra.mxu0 %v2345
        %v2450 = vpop.f32.mrf.mxu0
        %v2451 = vadd.f32 %v2376, %v2450
        %v2452 = vpop.f32.mrf.mxu0
        %v2453 = vadd.f32 %v2376, %v2452
        %2454 = vmatmul.bf16.gmra.mxu0 %v2346
        %v2455 = vpop.f32.mrf.mxu0
        %v2456 = vadd.f32 %v2376, %v2455
        %v2457 = vpop.f32.mrf.mxu0
        %v2458 = vadd.f32 %v2376, %v2457
        %2459 = vmatmul.bf16.gmra.mxu0 %v2347
        %v2460 = vpop.f32.mrf.mxu0
        %v2461 = vadd.f32 %v2376, %v2460
        %v2462 = vpop.f32.mrf.mxu0
        %v2463 = vadd.f32 %v2376, %v2462
        %2464 = vmatmul.bf16.gmra.mxu0 %v2348
        %v2465 = vpop.f32.mrf.mxu0
        %v2466 = vadd.f32 %v2376, %v2465
        %v2467 = vpop.f32.mrf.mxu0
        %v2468 = vadd.f32 %v2376, %v2467
        %2469 = vmatmul.bf16.gmra.mxu0 %v2349
        %v2470 = vpop.f32.mrf.mxu0
        %v2471 = vadd.f32 %v2376, %v2470
        %v2472 = vpop.f32.mrf.mxu0
        %v2473 = vadd.f32 %v2376, %v2472
        %2474 = vmatmul.bf16.gmra.mxu0 %v2350
        %v2475 = vpop.f32.mrf.mxu0
        %v2476 = vadd.f32 %v2376, %v2475
        %v2477 = vpop.f32.mrf.mxu0
        %v2478 = vadd.f32 %v2376, %v2477
        %2479 = vmatmul.bf16.gmra.mxu0 %v2351
        %v2480 = vpop.f32.mrf.mxu0
        %v2481 = vadd.f32 %v2376, %v2480
        %v2482 = vpop.f32.mrf.mxu0
        %v2483 = vadd.f32 %v2376, %v2482
        %2484 = vmatmul.bf16.gmra.mxu0 %v2352
        %v2485 = vpop.f32.mrf.mxu0
        %v2486 = vadd.f32 %v2376, %v2485
        %v2487 = vpop.f32.mrf.mxu0
        %v2488 = vadd.f32 %v2376, %v2487
        %2489 = vmatmul.bf16.gmra.mxu0 %v2353
        %v2490 = vpop.f32.mrf.mxu0
        %v2491 = vadd.f32 %v2376, %v2490
        %v2492 = vpop.f32.mrf.mxu0
        %v2493 = vadd.f32 %v2376, %v2492
        %2494 = vmatmul.bf16.gmra.mxu0 %v2354
        %v2495 = vpop.f32.mrf.mxu0
        %v2496 = vadd.f32 %v2376, %v2495
        %v2497 = vpop.f32.mrf.mxu0
        %v2498 = vadd.f32 %v2376, %v2497
        %2499 = vmatmul.bf16.gmra.mxu0 %v2355
        %v2500 = vpop.f32.mrf.mxu0
        %v2501 = vadd.f32 %v2376, %v2500
        %v2502 = vpop.f32.mrf.mxu0
        %v2503 = vadd.f32 %v2376, %v2502
        %2504 = vmatmul.bf16.gmra.mxu0 %v2356
        %v2505 = vpop.f32.mrf.mxu0
        %v2506 = vadd.f32 %v2376, %v2505
        %v2507 = vpop.f32.mrf.mxu0
        %v2508 = vadd.f32 %v2376, %v2507
        %2509 = vmatmul.bf16.gmra.mxu0 %v2357
        %v2510 = vpop.f32.mrf.mxu0
        %v2511 = vadd.f32 %v2376, %v2510
        %v2512 = vpop.f32.mrf.mxu0
        %v2513 = vadd.f32 %v2376, %v2512
        %2514 = vdwg.mxu0
        %v2515 = vmax.f32 %v2436, 0.0
        %v2516 = vmax.f32 %v2438, 0.0
        %v2517 = vmax.f32 %v2441, 0.0
        %v2518 = vmax.f32 %v2443, 0.0
        %v2519 = vmax.f32 %v2446, 0.0
        %v2520 = vmax.f32 %v2448, 0.0
        %v2521 = vmax.f32 %v2451, 0.0
        %v2522 = vmax.f32 %v2453, 0.0
        %v2523 = vmax.f32 %v2456, 0.0
        %v2524 = vmax.f32 %v2458, 0.0
        %v2525 = vmax.f32 %v2461, 0.0
        %v2526 = vmax.f32 %v2463, 0.0
        %v2527 = vmax.f32 %v2466, 0.0
        %v2528 = vmax.f32 %v2468, 0.0
        %v2529 = vmax.f32 %v2471, 0.0
        %v2530 = vmax.f32 %v2473, 0.0
        %v2531 = vmax.f32 %v2476, 0.0
        %v2532 = vmax.f32 %v2478, 0.0
        %v2533 = vmax.f32 %v2481, 0.0
        %v2534 = vmax.f32 %v2483, 0.0
        %v2535 = vmax.f32 %v2486, 0.0
        %v2536 = vmax.f32 %v2488, 0.0
        %v2537 = vmax.f32 %v2491, 0.0
        %v2538 = vmax.f32 %v2493, 0.0
        %v2539 = vmax.f32 %v2496, 0.0
        %v2540 = vmax.f32 %v2498, 0.0
        %v2541 = vmax.f32 %v2501, 0.0
        %v2542 = vmax.f32 %v2503, 0.0
        %v2543 = vmax.f32 %v2506, 0.0
        %v2544 = vmax.f32 %v2508, 0.0
        %v2545 = vmax.f32 %v2511, 0.0
        %v2546 = vmax.f32 %v2513, 0.0
        %v2547 = vpack.c.bf16 %v2516, %v2515
        %v2548 = vpack.c.bf16 %v2518, %v2517
        %v2549 = vpack.c.bf16 %v2520, %v2519
        %v2550 = vpack.c.bf16 %v2522, %v2521
        %v2551 = vpack.c.bf16 %v2524, %v2523
        %v2552 = vpack.c.bf16 %v2526, %v2525
        %v2553 = vpack.c.bf16 %v2528, %v2527
        %v2554 = vpack.c.bf16 %v2530, %v2529
        %v2555 = vpack.c.bf16 %v2532, %v2531
        %v2556 = vpack.c.bf16 %v2534, %v2533
        %v2557 = vpack.c.bf16 %v2536, %v2535
        %v2558 = vpack.c.bf16 %v2538, %v2537
        %v2559 = vpack.c.bf16 %v2540, %v2539
        %v2560 = vpack.c.bf16 %v2542, %v2541
        %v2561 = vpack.c.bf16 %v2544, %v2543
        %v2562 = vpack.c.bf16 %v2546, %v2545
        %v2563 = vld [vmem:[#allocation10] sm:$0xf]
        %v2564 = vld [vmem:[#allocation10 + $0x4] sm:$0xf]
        %v2565 = vld [vmem:[#allocation10 + $0x8] sm:$0xf]
        %v2566 = vld [vmem:[#allocation10 + $0xc] sm:$0xf]
        %v2567 = vld [vmem:[#allocation10 + $0x10] sm:$0xf]
        %v2568 = vld [vmem:[#allocation10 + $0x14] sm:$0xf]
        %v2569 = vld [vmem:[#allocation10 + $0x18] sm:$0xf]
        %v2570 = vld [vmem:[#allocation10 + $0x1c] sm:$0xf]
        %v2571 = vld [vmem:[#allocation10 + $0x20] sm:$0xf]
        %v2572 = vld [vmem:[#allocation10 + $0x24] sm:$0xf]
        %v2573 = vld [vmem:[#allocation10 + $0x28] sm:$0xf]
        %v2574 = vld [vmem:[#allocation10 + $0x2c] sm:$0xf]
        %v2575 = vld [vmem:[#allocation10 + $0x30] sm:$0xf]
        %v2576 = vld [vmem:[#allocation10 + $0x34] sm:$0xf]
        %v2577 = vld [vmem:[#allocation10 + $0x38] sm:$0xf]
        %v2578 = vld [vmem:[#allocation10 + $0x3c] sm:$0xf]
        %v2579 = vld [vmem:[%s21] sm:$0x1]
        %v2581 = vperm.slane %v2579, 0
        %v2599 = vunpack.c.l.b16 %v2563
        %v2600 = vunpack.c.l.b16 %v2564
        %v2601 = vunpack.c.l.b16 %v2565
        %v2602 = vunpack.c.l.b16 %v2566
        %v2603 = vunpack.c.l.b16 %v2567
        %v2604 = vunpack.c.l.b16 %v2568
        %v2605 = vunpack.c.l.b16 %v2569
        %v2606 = vunpack.c.l.b16 %v2570
        %v2607 = vunpack.c.l.b16 %v2571
        %v2608 = vunpack.c.l.b16 %v2572
        %v2609 = vunpack.c.l.b16 %v2573
        %v2610 = vunpack.c.l.b16 %v2574
        %v2611 = vunpack.c.l.b16 %v2575
        %v2612 = vunpack.c.l.b16 %v2576
        %v2613 = vunpack.c.l.b16 %v2577
        %v2614 = vunpack.c.l.b16 %v2578
        %v2615 = vpack.c.b16 %v2600, %v2599
        %v2616 = vpack.c.b16 %v2602, %v2601
        %v2617 = vpack.c.b16 %v2604, %v2603
        %v2618 = vpack.c.b16 %v2606, %v2605
        %v2619 = vpack.c.b16 %v2608, %v2607
        %v2620 = vpack.c.b16 %v2610, %v2609
        %v2621 = vpack.c.b16 %v2612, %v2611
        %v2622 = vpack.c.b16 %v2614, %v2613
        %2631 = vmatpush.bf16.msra.mxu0 %v2622
        %2632 = vmatpush.bf16.msra.mxu0 %v2621
        %2633 = vmatpush.bf16.msra.mxu0 %v2620
        %2634 = vmatpush.bf16.msra.mxu0 %v2619
        %2635 = vmatpush.bf16.msra.mxu0 %v2618
        %2636 = vmatpush.bf16.msra.mxu0 %v2617
        %2637 = vmatpush.bf16.msra.mxu0 %v2616
        %2638 = vmatpush.bf16.msra.mxu0 %v2615
        %2639 = vmatmul.bf16.gmra.mxu0 %v2547
        %v2640 = vpop.f32.mrf.mxu0
        %v2641 = vadd.f32 %v2581, %v2640
        %v2642 = vpop.f32.mrf.mxu0
        %v2643 = vadd.f32 %v2581, %v2642
        %2644 = vmatmul.bf16.gmra.mxu0 %v2548
        %v2645 = vpop.f32.mrf.mxu0
        %v2646 = vadd.f32 %v2581, %v2645
        %v2647 = vpop.f32.mrf.mxu0
        %v2648 = vadd.f32 %v2581, %v2647
        %2649 = vmatmul.bf16.gmra.mxu0 %v2549
        %v2650 = vpop.f32.mrf.mxu0
        %v2651 = vadd.f32 %v2581, %v2650
        %v2652 = vpop.f32.mrf.mxu0
        %v2653 = vadd.f32 %v2581, %v2652
        %2654 = vmatmul.bf16.gmra.mxu0 %v2550
        %v2655 = vpop.f32.mrf.mxu0
        %v2656 = vadd.f32 %v2581, %v2655
        %v2657 = vpop.f32.mrf.mxu0
        %v2658 = vadd.f32 %v2581, %v2657
        %2659 = vmatmul.bf16.gmra.mxu0 %v2551
        %v2660 = vpop.f32.mrf.mxu0
        %v2661 = vadd.f32 %v2581, %v2660
        %v2662 = vpop.f32.mrf.mxu0
        %v2663 = vadd.f32 %v2581, %v2662
        %2664 = vmatmul.bf16.gmra.mxu0 %v2552
        %v2665 = vpop.f32.mrf.mxu0
        %v2666 = vadd.f32 %v2581, %v2665
        %v2667 = vpop.f32.mrf.mxu0
        %v2668 = vadd.f32 %v2581, %v2667
        %2669 = vmatmul.bf16.gmra.mxu0 %v2553
        %v2670 = vpop.f32.mrf.mxu0
        %v2671 = vadd.f32 %v2581, %v2670
        %v2672 = vpop.f32.mrf.mxu0
        %v2673 = vadd.f32 %v2581, %v2672
        %2674 = vmatmul.bf16.gmra.mxu0 %v2554
        %v2675 = vpop.f32.mrf.mxu0
        %v2676 = vadd.f32 %v2581, %v2675
        %v2677 = vpop.f32.mrf.mxu0
        %v2678 = vadd.f32 %v2581, %v2677
        %2679 = vmatmul.bf16.gmra.mxu0 %v2555
        %v2680 = vpop.f32.mrf.mxu0
        %v2681 = vadd.f32 %v2581, %v2680
        %v2682 = vpop.f32.mrf.mxu0
        %v2683 = vadd.f32 %v2581, %v2682
        %2684 = vmatmul.bf16.gmra.mxu0 %v2556
        %v2685 = vpop.f32.mrf.mxu0
        %v2686 = vadd.f32 %v2581, %v2685
        %v2687 = vpop.f32.mrf.mxu0
        %v2688 = vadd.f32 %v2581, %v2687
        %2689 = vmatmul.bf16.gmra.mxu0 %v2557
        %v2690 = vpop.f32.mrf.mxu0
        %v2691 = vadd.f32 %v2581, %v2690
        %v2692 = vpop.f32.mrf.mxu0
        %v2693 = vadd.f32 %v2581, %v2692
        %2694 = vmatmul.bf16.gmra.mxu0 %v2558
        %v2695 = vpop.f32.mrf.mxu0
        %v2696 = vadd.f32 %v2581, %v2695
        %v2697 = vpop.f32.mrf.mxu0
        %v2698 = vadd.f32 %v2581, %v2697
        %2699 = vmatmul.bf16.gmra.mxu0 %v2559
        %v2700 = vpop.f32.mrf.mxu0
        %v2701 = vadd.f32 %v2581, %v2700
        %v2702 = vpop.f32.mrf.mxu0
        %v2703 = vadd.f32 %v2581, %v2702
        %2704 = vmatmul.bf16.gmra.mxu0 %v2560
        %v2705 = vpop.f32.mrf.mxu0
        %v2706 = vadd.f32 %v2581, %v2705
        %v2707 = vpop.f32.mrf.mxu0
        %v2708 = vadd.f32 %v2581, %v2707
        %2709 = vmatmul.bf16.gmra.mxu0 %v2561
        %v2710 = vpop.f32.mrf.mxu0
        %v2711 = vadd.f32 %v2581, %v2710
        %v2712 = vpop.f32.mrf.mxu0
        %v2713 = vadd.f32 %v2581, %v2712
        %2714 = vmatmul.bf16.gmra.mxu0 %v2562
        %v2715 = vpop.f32.mrf.mxu0
        %v2716 = vadd.f32 %v2581, %v2715
        %v2717 = vpop.f32.mrf.mxu0
        %v2718 = vadd.f32 %v2581, %v2717
        %2719 = vdwg.mxu0
        %v2720 = vadd.f32 %v2278, %v2641
        %v2721 = vadd.f32 %v2279, %v2643
        %v2722 = vadd.f32 %v2280, %v2646
        %v2723 = vadd.f32 %v2281, %v2648
        %v2724 = vadd.f32 %v2282, %v2651
        %v2725 = vadd.f32 %v2283, %v2653
        %v2726 = vadd.f32 %v2284, %v2656
        %v2727 = vadd.f32 %v2285, %v2658
        %v2728 = vadd.f32 %v2286, %v2661
        %v2729 = vadd.f32 %v2287, %v2663
        %v2730 = vadd.f32 %v2288, %v2666
        %v2731 = vadd.f32 %v2289, %v2668
        %v2732 = vadd.f32 %v2290, %v2671
        %v2733 = vadd.f32 %v2291, %v2673
        %v2734 = vadd.f32 %v2292, %v2676
        %v2735 = vadd.f32 %v2293, %v2678
        %v2736 = vadd.f32 %v2294, %v2681
        %v2737 = vadd.f32 %v2295, %v2683
        %v2738 = vadd.f32 %v2296, %v2686
        %v2739 = vadd.f32 %v2297, %v2688
        %v2740 = vadd.f32 %v2298, %v2691
        %v2741 = vadd.f32 %v2299, %v2693
        %v2742 = vadd.f32 %v2300, %v2696
        %v2743 = vadd.f32 %v2301, %v2698
        %v2744 = vadd.f32 %v2302, %v2701
        %v2745 = vadd.f32 %v2303, %v2703
        %v2746 = vadd.f32 %v2304, %v2706
        %v2747 = vadd.f32 %v2305, %v2708
        %v2748 = vadd.f32 %v2306, %v2711
        %v2749 = vadd.f32 %v2307, %v2713
        %v2750 = vadd.f32 %v2308, %v2716
        %v2751 = vadd.f32 %v2309, %v2718
        %v2752 = vpack.c.bf16 %v2721, %v2720
        %v2753 = vpack.c.bf16 %v2723, %v2722
        %v2754 = vpack.c.bf16 %v2725, %v2724
        %v2755 = vpack.c.bf16 %v2727, %v2726
        %v2756 = vpack.c.bf16 %v2729, %v2728
        %v2757 = vpack.c.bf16 %v2731, %v2730
        %v2758 = vpack.c.bf16 %v2733, %v2732
        %v2759 = vpack.c.bf16 %v2735, %v2734
        %v2760 = vpack.c.bf16 %v2737, %v2736
        %v2761 = vpack.c.bf16 %v2739, %v2738
        %v2762 = vpack.c.bf16 %v2741, %v2740
        %v2763 = vpack.c.bf16 %v2743, %v2742
        %v2764 = vpack.c.bf16 %v2745, %v2744
        %v2765 = vpack.c.bf16 %v2747, %v2746
        %v2766 = vpack.c.bf16 %v2749, %v2748
        %v2767 = vpack.c.bf16 %v2751, %v2750
        %v2768 = vld [vmem:[#allocation11] sm:$0xf]
        %v2769 = vld [vmem:[#allocation11 + $0x4] sm:$0xf]
        %v2770 = vld [vmem:[#allocation11 + $0x8] sm:$0xf]
        %v2771 = vld [vmem:[#allocation11 + $0xc] sm:$0xf]
        %v2772 = vld [vmem:[#allocation11 + $0x10] sm:$0xf]
        %v2773 = vld [vmem:[#allocation11 + $0x14] sm:$0xf]
        %v2774 = vld [vmem:[#allocation11 + $0x18] sm:$0xf]
        %v2775 = vld [vmem:[#allocation11 + $0x1c] sm:$0xf]
        %v2776 = vld [vmem:[#allocation11 + $0x20] sm:$0xf]
        %v2777 = vld [vmem:[#allocation11 + $0x24] sm:$0xf]
        %v2778 = vld [vmem:[#allocation11 + $0x28] sm:$0xf]
        %v2779 = vld [vmem:[#allocation11 + $0x2c] sm:$0xf]
        %v2780 = vld [vmem:[#allocation11 + $0x30] sm:$0xf]
        %v2781 = vld [vmem:[#allocation11 + $0x34] sm:$0xf]
        %v2782 = vld [vmem:[#allocation11 + $0x38] sm:$0xf]
        %v2783 = vld [vmem:[#allocation11 + $0x3c] sm:$0xf]
        %v2784 = vld [vmem:[%s25] sm:$0x1]
        %v2786 = vperm.slane %v2784, 0
        %v2804 = vunpack.c.l.b16 %v2768
        %v2805 = vunpack.c.l.b16 %v2769
        %v2806 = vunpack.c.l.b16 %v2770
        %v2807 = vunpack.c.l.b16 %v2771
        %v2808 = vunpack.c.l.b16 %v2772
        %v2809 = vunpack.c.l.b16 %v2773
        %v2810 = vunpack.c.l.b16 %v2774
        %v2811 = vunpack.c.l.b16 %v2775
        %v2812 = vunpack.c.l.b16 %v2776
        %v2813 = vunpack.c.l.b16 %v2777
        %v2814 = vunpack.c.l.b16 %v2778
        %v2815 = vunpack.c.l.b16 %v2779
        %v2816 = vunpack.c.l.b16 %v2780
        %v2817 = vunpack.c.l.b16 %v2781
        %v2818 = vunpack.c.l.b16 %v2782
        %v2819 = vunpack.c.l.b16 %v2783
        %v2820 = vpack.c.b16 %v2805, %v2804
        %v2821 = vpack.c.b16 %v2807, %v2806
        %v2822 = vpack.c.b16 %v2809, %v2808
        %v2823 = vpack.c.b16 %v2811, %v2810
        %v2824 = vpack.c.b16 %v2813, %v2812
        %v2825 = vpack.c.b16 %v2815, %v2814
        %v2826 = vpack.c.b16 %v2817, %v2816
        %v2827 = vpack.c.b16 %v2819, %v2818
        %2836 = vmatpush.bf16.msra.mxu0 %v2827
        %2837 = vmatpush.bf16.msra.mxu0 %v2826
        %2838 = vmatpush.bf16.msra.mxu0 %v2825
        %2839 = vmatpush.bf16.msra.mxu0 %v2824
        %2840 = vmatpush.bf16.msra.mxu0 %v2823
        %2841 = vmatpush.bf16.msra.mxu0 %v2822
        %2842 = vmatpush.bf16.msra.mxu0 %v2821
        %2843 = vmatpush.bf16.msra.mxu0 %v2820
        %2844 = vmatmul.bf16.gmra.mxu0 %v2752
        %v2845 = vpop.f32.mrf.mxu0
        %v2846 = vadd.f32 %v2786, %v2845
        %v2847 = vpop.f32.mrf.mxu0
        %v2848 = vadd.f32 %v2786, %v2847
        %2849 = vmatmul.bf16.gmra.mxu0 %v2753
        %v2850 = vpop.f32.mrf.mxu0
        %v2851 = vadd.f32 %v2786, %v2850
        %v2852 = vpop.f32.mrf.mxu0
        %v2853 = vadd.f32 %v2786, %v2852
        %2854 = vmatmul.bf16.gmra.mxu0 %v2754
        %v2855 = vpop.f32.mrf.mxu0
        %v2856 = vadd.f32 %v2786, %v2855
        %v2857 = vpop.f32.mrf.mxu0
        %v2858 = vadd.f32 %v2786, %v2857
        %2859 = vmatmul.bf16.gmra.mxu0 %v2755
        %v2860 = vpop.f32.mrf.mxu0
        %v2861 = vadd.f32 %v2786, %v2860
        %v2862 = vpop.f32.mrf.mxu0
        %v2863 = vadd.f32 %v2786, %v2862
        %2864 = vmatmul.bf16.gmra.mxu0 %v2756
        %v2865 = vpop.f32.mrf.mxu0
        %v2866 = vadd.f32 %v2786, %v2865
        %v2867 = vpop.f32.mrf.mxu0
        %v2868 = vadd.f32 %v2786, %v2867
        %2869 = vmatmul.bf16.gmra.mxu0 %v2757
        %v2870 = vpop.f32.mrf.mxu0
        %v2871 = vadd.f32 %v2786, %v2870
        %v2872 = vpop.f32.mrf.mxu0
        %v2873 = vadd.f32 %v2786, %v2872
        %2874 = vmatmul.bf16.gmra.mxu0 %v2758
        %v2875 = vpop.f32.mrf.mxu0
        %v2876 = vadd.f32 %v2786, %v2875
        %v2877 = vpop.f32.mrf.mxu0
        %v2878 = vadd.f32 %v2786, %v2877
        %2879 = vmatmul.bf16.gmra.mxu0 %v2759
        %v2880 = vpop.f32.mrf.mxu0
        %v2881 = vadd.f32 %v2786, %v2880
        %v2882 = vpop.f32.mrf.mxu0
        %v2883 = vadd.f32 %v2786, %v2882
        %2884 = vmatmul.bf16.gmra.mxu0 %v2760
        %v2885 = vpop.f32.mrf.mxu0
        %v2886 = vadd.f32 %v2786, %v2885
        %v2887 = vpop.f32.mrf.mxu0
        %v2888 = vadd.f32 %v2786, %v2887
        %2889 = vmatmul.bf16.gmra.mxu0 %v2761
        %v2890 = vpop.f32.mrf.mxu0
        %v2891 = vadd.f32 %v2786, %v2890
        %v2892 = vpop.f32.mrf.mxu0
        %v2893 = vadd.f32 %v2786, %v2892
        %2894 = vmatmul.bf16.gmra.mxu0 %v2762
        %v2895 = vpop.f32.mrf.mxu0
        %v2896 = vadd.f32 %v2786, %v2895
        %v2897 = vpop.f32.mrf.mxu0
        %v2898 = vadd.f32 %v2786, %v2897
        %2899 = vmatmul.bf16.gmra.mxu0 %v2763
        %v2900 = vpop.f32.mrf.mxu0
        %v2901 = vadd.f32 %v2786, %v2900
        %v2902 = vpop.f32.mrf.mxu0
        %v2903 = vadd.f32 %v2786, %v2902
        %2904 = vmatmul.bf16.gmra.mxu0 %v2764
        %v2905 = vpop.f32.mrf.mxu0
        %v2906 = vadd.f32 %v2786, %v2905
        %v2907 = vpop.f32.mrf.mxu0
        %v2908 = vadd.f32 %v2786, %v2907
        %2909 = vmatmul.bf16.gmra.mxu0 %v2765
        %v2910 = vpop.f32.mrf.mxu0
        %v2911 = vadd.f32 %v2786, %v2910
        %v2912 = vpop.f32.mrf.mxu0
        %v2913 = vadd.f32 %v2786, %v2912
        %2914 = vmatmul.bf16.gmra.mxu0 %v2766
        %v2915 = vpop.f32.mrf.mxu0
        %v2916 = vadd.f32 %v2786, %v2915
        %v2917 = vpop.f32.mrf.mxu0
        %v2918 = vadd.f32 %v2786, %v2917
        %2919 = vmatmul.bf16.gmra.mxu0 %v2767
        %v2920 = vpop.f32.mrf.mxu0
        %v2921 = vadd.f32 %v2786, %v2920
        %v2922 = vpop.f32.mrf.mxu0
        %v2923 = vadd.f32 %v2786, %v2922
        %2924 = vdwg.mxu0
        %v2925 = vmax.f32 %v2846, 0.0
        %v2926 = vmax.f32 %v2848, 0.0
        %v2927 = vmax.f32 %v2851, 0.0
        %v2928 = vmax.f32 %v2853, 0.0
        %v2929 = vmax.f32 %v2856, 0.0
        %v2930 = vmax.f32 %v2858, 0.0
        %v2931 = vmax.f32 %v2861, 0.0
        %v2932 = vmax.f32 %v2863, 0.0
        %v2933 = vmax.f32 %v2866, 0.0
        %v2934 = vmax.f32 %v2868, 0.0
        %v2935 = vmax.f32 %v2871, 0.0
        %v2936 = vmax.f32 %v2873, 0.0
        %v2937 = vmax.f32 %v2876, 0.0
        %v2938 = vmax.f32 %v2878, 0.0
        %v2939 = vmax.f32 %v2881, 0.0
        %v2940 = vmax.f32 %v2883, 0.0
        %v2941 = vmax.f32 %v2886, 0.0
        %v2942 = vmax.f32 %v2888, 0.0
        %v2943 = vmax.f32 %v2891, 0.0
        %v2944 = vmax.f32 %v2893, 0.0
        %v2945 = vmax.f32 %v2896, 0.0
        %v2946 = vmax.f32 %v2898, 0.0
        %v2947 = vmax.f32 %v2901, 0.0
        %v2948 = vmax.f32 %v2903, 0.0
        %v2949 = vmax.f32 %v2906, 0.0
        %v2950 = vmax.f32 %v2908, 0.0
        %v2951 = vmax.f32 %v2911, 0.0
        %v2952 = vmax.f32 %v2913, 0.0
        %v2953 = vmax.f32 %v2916, 0.0
        %v2954 = vmax.f32 %v2918, 0.0
        %v2955 = vmax.f32 %v2921, 0.0
        %v2956 = vmax.f32 %v2923, 0.0
        %v2957 = vpack.c.bf16 %v2926, %v2925
        %v2958 = vpack.c.bf16 %v2928, %v2927
        %v2959 = vpack.c.bf16 %v2930, %v2929
        %v2960 = vpack.c.bf16 %v2932, %v2931
        %v2961 = vpack.c.bf16 %v2934, %v2933
        %v2962 = vpack.c.bf16 %v2936, %v2935
        %v2963 = vpack.c.bf16 %v2938, %v2937
        %v2964 = vpack.c.bf16 %v2940, %v2939
        %v2965 = vpack.c.bf16 %v2942, %v2941
        %v2966 = vpack.c.bf16 %v2944, %v2943
        %v2967 = vpack.c.bf16 %v2946, %v2945
        %v2968 = vpack.c.bf16 %v2948, %v2947
        %v2969 = vpack.c.bf16 %v2950, %v2949
        %v2970 = vpack.c.bf16 %v2952, %v2951
        %v2971 = vpack.c.bf16 %v2954, %v2953
        %v2972 = vpack.c.bf16 %v2956, %v2955
        %v2973 = vld [vmem:[#allocation13] sm:$0xf]
        %v2974 = vld [vmem:[#allocation13 + $0x4] sm:$0xf]
        %v2975 = vld [vmem:[#allocation13 + $0x8] sm:$0xf]
        %v2976 = vld [vmem:[#allocation13 + $0xc] sm:$0xf]
        %v2977 = vld [vmem:[#allocation13 + $0x10] sm:$0xf]
        %v2978 = vld [vmem:[#allocation13 + $0x14] sm:$0xf]
        %v2979 = vld [vmem:[#allocation13 + $0x18] sm:$0xf]
        %v2980 = vld [vmem:[#allocation13 + $0x1c] sm:$0xf]
        %v2981 = vld [vmem:[#allocation13 + $0x20] sm:$0xf]
        %v2982 = vld [vmem:[#allocation13 + $0x24] sm:$0xf]
        %v2983 = vld [vmem:[#allocation13 + $0x28] sm:$0xf]
        %v2984 = vld [vmem:[#allocation13 + $0x2c] sm:$0xf]
        %v2985 = vld [vmem:[#allocation13 + $0x30] sm:$0xf]
        %v2986 = vld [vmem:[#allocation13 + $0x34] sm:$0xf]
        %v2987 = vld [vmem:[#allocation13 + $0x38] sm:$0xf]
        %v2988 = vld [vmem:[#allocation13 + $0x3c] sm:$0xf]
        %v2989 = vld [vmem:[%s29] sm:$0x1]
        %v2991 = vperm.slane %v2989, 0
        %v3009 = vunpack.c.l.b16 %v2973
        %v3010 = vunpack.c.l.b16 %v2974
        %v3011 = vunpack.c.l.b16 %v2975
        %v3012 = vunpack.c.l.b16 %v2976
        %v3013 = vunpack.c.l.b16 %v2977
        %v3014 = vunpack.c.l.b16 %v2978
        %v3015 = vunpack.c.l.b16 %v2979
        %v3016 = vunpack.c.l.b16 %v2980
        %v3017 = vunpack.c.l.b16 %v2981
        %v3018 = vunpack.c.l.b16 %v2982
        %v3019 = vunpack.c.l.b16 %v2983
        %v3020 = vunpack.c.l.b16 %v2984
        %v3021 = vunpack.c.l.b16 %v2985
        %v3022 = vunpack.c.l.b16 %v2986
        %v3023 = vunpack.c.l.b16 %v2987
        %v3024 = vunpack.c.l.b16 %v2988
        %v3025 = vpack.c.b16 %v3010, %v3009
        %v3026 = vpack.c.b16 %v3012, %v3011
        %v3027 = vpack.c.b16 %v3014, %v3013
        %v3028 = vpack.c.b16 %v3016, %v3015
        %v3029 = vpack.c.b16 %v3018, %v3017
        %v3030 = vpack.c.b16 %v3020, %v3019
        %v3031 = vpack.c.b16 %v3022, %v3021
        %v3032 = vpack.c.b16 %v3024, %v3023
        %3041 = vmatpush.bf16.msra.mxu0 %v3032
        %3042 = vmatpush.bf16.msra.mxu0 %v3031
        %3043 = vmatpush.bf16.msra.mxu0 %v3030
        %3044 = vmatpush.bf16.msra.mxu0 %v3029
        %3045 = vmatpush.bf16.msra.mxu0 %v3028
        %3046 = vmatpush.bf16.msra.mxu0 %v3027
        %3047 = vmatpush.bf16.msra.mxu0 %v3026
        %3048 = vmatpush.bf16.msra.mxu0 %v3025
        %3049 = vmatmul.bf16.gmra.mxu0 %v2957
        %v3050 = vpop.f32.mrf.mxu0
        %v3051 = vadd.f32 %v2991, %v3050
        %v3052 = vpop.f32.mrf.mxu0
        %v3053 = vadd.f32 %v2991, %v3052
        %3054 = vmatmul.bf16.gmra.mxu0 %v2958
        %v3055 = vpop.f32.mrf.mxu0
        %v3056 = vadd.f32 %v2991, %v3055
        %v3057 = vpop.f32.mrf.mxu0
        %v3058 = vadd.f32 %v2991, %v3057
        %3059 = vmatmul.bf16.gmra.mxu0 %v2959
        %v3060 = vpop.f32.mrf.mxu0
        %v3061 = vadd.f32 %v2991, %v3060
        %v3062 = vpop.f32.mrf.mxu0
        %v3063 = vadd.f32 %v2991, %v3062
        %3064 = vmatmul.bf16.gmra.mxu0 %v2960
        %v3065 = vpop.f32.mrf.mxu0
        %v3066 = vadd.f32 %v2991, %v3065
        %v3067 = vpop.f32.mrf.mxu0
        %v3068 = vadd.f32 %v2991, %v3067
        %3069 = vmatmul.bf16.gmra.mxu0 %v2961
        %v3070 = vpop.f32.mrf.mxu0
        %v3071 = vadd.f32 %v2991, %v3070
        %v3072 = vpop.f32.mrf.mxu0
        %v3073 = vadd.f32 %v2991, %v3072
        %3074 = vmatmul.bf16.gmra.mxu0 %v2962
        %v3075 = vpop.f32.mrf.mxu0
        %v3076 = vadd.f32 %v2991, %v3075
        %v3077 = vpop.f32.mrf.mxu0
        %v3078 = vadd.f32 %v2991, %v3077
        %3079 = vmatmul.bf16.gmra.mxu0 %v2963
        %v3080 = vpop.f32.mrf.mxu0
        %v3081 = vadd.f32 %v2991, %v3080
        %v3082 = vpop.f32.mrf.mxu0
        %v3083 = vadd.f32 %v2991, %v3082
        %3084 = vmatmul.bf16.gmra.mxu0 %v2964
        %v3085 = vpop.f32.mrf.mxu0
        %v3086 = vadd.f32 %v2991, %v3085
        %v3087 = vpop.f32.mrf.mxu0
        %v3088 = vadd.f32 %v2991, %v3087
        %3089 = vmatmul.bf16.gmra.mxu0 %v2965
        %v3090 = vpop.f32.mrf.mxu0
        %v3091 = vadd.f32 %v2991, %v3090
        %v3092 = vpop.f32.mrf.mxu0
        %v3093 = vadd.f32 %v2991, %v3092
        %3094 = vmatmul.bf16.gmra.mxu0 %v2966
        %v3095 = vpop.f32.mrf.mxu0
        %v3096 = vadd.f32 %v2991, %v3095
        %v3097 = vpop.f32.mrf.mxu0
        %v3098 = vadd.f32 %v2991, %v3097
        %3099 = vmatmul.bf16.gmra.mxu0 %v2967
        %v3100 = vpop.f32.mrf.mxu0
        %v3101 = vadd.f32 %v2991, %v3100
        %v3102 = vpop.f32.mrf.mxu0
        %v3103 = vadd.f32 %v2991, %v3102
        %3104 = vmatmul.bf16.gmra.mxu0 %v2968
        %v3105 = vpop.f32.mrf.mxu0
        %v3106 = vadd.f32 %v2991, %v3105
        %v3107 = vpop.f32.mrf.mxu0
        %v3108 = vadd.f32 %v2991, %v3107
        %3109 = vmatmul.bf16.gmra.mxu0 %v2969
        %v3110 = vpop.f32.mrf.mxu0
        %v3111 = vadd.f32 %v2991, %v3110
        %v3112 = vpop.f32.mrf.mxu0
        %v3113 = vadd.f32 %v2991, %v3112
        %3114 = vmatmul.bf16.gmra.mxu0 %v2970
        %v3115 = vpop.f32.mrf.mxu0
        %v3116 = vadd.f32 %v2991, %v3115
        %v3117 = vpop.f32.mrf.mxu0
        %v3118 = vadd.f32 %v2991, %v3117
        %3119 = vmatmul.bf16.gmra.mxu0 %v2971
        %v3120 = vpop.f32.mrf.mxu0
        %v3121 = vadd.f32 %v2991, %v3120
        %v3122 = vpop.f32.mrf.mxu0
        %v3123 = vadd.f32 %v2991, %v3122
        %3124 = vmatmul.bf16.gmra.mxu0 %v2972
        %v3125 = vpop.f32.mrf.mxu0
        %v3126 = vadd.f32 %v2991, %v3125
        %v3127 = vpop.f32.mrf.mxu0
        %v3128 = vadd.f32 %v2991, %v3127
        %3129 = vdwg.mxu0
        %v3130 = vmax.f32 %v3051, 0.0
        %v3131 = vmax.f32 %v3053, 0.0
        %v3132 = vmax.f32 %v3056, 0.0
        %v3133 = vmax.f32 %v3058, 0.0
        %v3134 = vmax.f32 %v3061, 0.0
        %v3135 = vmax.f32 %v3063, 0.0
        %v3136 = vmax.f32 %v3066, 0.0
        %v3137 = vmax.f32 %v3068, 0.0
        %v3138 = vmax.f32 %v3071, 0.0
        %v3139 = vmax.f32 %v3073, 0.0
        %v3140 = vmax.f32 %v3076, 0.0
        %v3141 = vmax.f32 %v3078, 0.0
        %v3142 = vmax.f32 %v3081, 0.0
        %v3143 = vmax.f32 %v3083, 0.0
        %v3144 = vmax.f32 %v3086, 0.0
        %v3145 = vmax.f32 %v3088, 0.0
        %v3146 = vmax.f32 %v3091, 0.0
        %v3147 = vmax.f32 %v3093, 0.0
        %v3148 = vmax.f32 %v3096, 0.0
        %v3149 = vmax.f32 %v3098, 0.0
        %v3150 = vmax.f32 %v3101, 0.0
        %v3151 = vmax.f32 %v3103, 0.0
        %v3152 = vmax.f32 %v3106, 0.0
        %v3153 = vmax.f32 %v3108, 0.0
        %v3154 = vmax.f32 %v3111, 0.0
        %v3155 = vmax.f32 %v3113, 0.0
        %v3156 = vmax.f32 %v3116, 0.0
        %v3157 = vmax.f32 %v3118, 0.0
        %v3158 = vmax.f32 %v3121, 0.0
        %v3159 = vmax.f32 %v3123, 0.0
        %v3160 = vmax.f32 %v3126, 0.0
        %v3161 = vmax.f32 %v3128, 0.0
        %v3162 = vpack.c.bf16 %v3131, %v3130
        %v3163 = vpack.c.bf16 %v3133, %v3132
        %v3164 = vpack.c.bf16 %v3135, %v3134
        %v3165 = vpack.c.bf16 %v3137, %v3136
        %v3166 = vpack.c.bf16 %v3139, %v3138
        %v3167 = vpack.c.bf16 %v3141, %v3140
        %v3168 = vpack.c.bf16 %v3143, %v3142
        %v3169 = vpack.c.bf16 %v3145, %v3144
        %v3170 = vpack.c.bf16 %v3147, %v3146
        %v3171 = vpack.c.bf16 %v3149, %v3148
        %v3172 = vpack.c.bf16 %v3151, %v3150
        %v3173 = vpack.c.bf16 %v3153, %v3152
        %v3174 = vpack.c.bf16 %v3155, %v3154
        %v3175 = vpack.c.bf16 %v3157, %v3156
        %v3176 = vpack.c.bf16 %v3159, %v3158
        %v3177 = vpack.c.bf16 %v3161, %v3160
        %v3178 = vld [vmem:[#allocation14] sm:$0xf]
        %v3179 = vld [vmem:[#allocation14 + $0x4] sm:$0xf]
        %v3180 = vld [vmem:[#allocation14 + $0x8] sm:$0xf]
        %v3181 = vld [vmem:[#allocation14 + $0xc] sm:$0xf]
        %v3182 = vld [vmem:[#allocation14 + $0x10] sm:$0xf]
        %v3183 = vld [vmem:[#allocation14 + $0x14] sm:$0xf]
        %v3184 = vld [vmem:[#allocation14 + $0x18] sm:$0xf]
        %v3185 = vld [vmem:[#allocation14 + $0x1c] sm:$0xf]
        %v3186 = vld [vmem:[#allocation14 + $0x20] sm:$0xf]
        %v3187 = vld [vmem:[#allocation14 + $0x24] sm:$0xf]
        %v3188 = vld [vmem:[#allocation14 + $0x28] sm:$0xf]
        %v3189 = vld [vmem:[#allocation14 + $0x2c] sm:$0xf]
        %v3190 = vld [vmem:[#allocation14 + $0x30] sm:$0xf]
        %v3191 = vld [vmem:[#allocation14 + $0x34] sm:$0xf]
        %v3192 = vld [vmem:[#allocation14 + $0x38] sm:$0xf]
        %v3193 = vld [vmem:[#allocation14 + $0x3c] sm:$0xf]
        %v3194 = vld [vmem:[%s33] sm:$0x1]
        %v3196 = vperm.slane %v3194, 0
        %v3214 = vunpack.c.l.b16 %v3178
        %v3215 = vunpack.c.l.b16 %v3179
        %v3216 = vunpack.c.l.b16 %v3180
        %v3217 = vunpack.c.l.b16 %v3181
        %v3218 = vunpack.c.l.b16 %v3182
        %v3219 = vunpack.c.l.b16 %v3183
        %v3220 = vunpack.c.l.b16 %v3184
        %v3221 = vunpack.c.l.b16 %v3185
        %v3222 = vunpack.c.l.b16 %v3186
        %v3223 = vunpack.c.l.b16 %v3187
        %v3224 = vunpack.c.l.b16 %v3188
        %v3225 = vunpack.c.l.b16 %v3189
        %v3226 = vunpack.c.l.b16 %v3190
        %v3227 = vunpack.c.l.b16 %v3191
        %v3228 = vunpack.c.l.b16 %v3192
        %v3229 = vunpack.c.l.b16 %v3193
        %v3230 = vpack.c.b16 %v3215, %v3214
        %v3231 = vpack.c.b16 %v3217, %v3216
        %v3232 = vpack.c.b16 %v3219, %v3218
        %v3233 = vpack.c.b16 %v3221, %v3220
        %v3234 = vpack.c.b16 %v3223, %v3222
        %v3235 = vpack.c.b16 %v3225, %v3224
        %v3236 = vpack.c.b16 %v3227, %v3226
        %v3237 = vpack.c.b16 %v3229, %v3228
        %3246 = vmatpush.bf16.msra.mxu0 %v3237
        %3247 = vmatpush.bf16.msra.mxu0 %v3236
        %3248 = vmatpush.bf16.msra.mxu0 %v3235
        %3249 = vmatpush.bf16.msra.mxu0 %v3234
        %3250 = vmatpush.bf16.msra.mxu0 %v3233
        %3251 = vmatpush.bf16.msra.mxu0 %v3232
        %3252 = vmatpush.bf16.msra.mxu0 %v3231
        %3253 = vmatpush.bf16.msra.mxu0 %v3230
        %3254 = vmatmul.bf16.gmra.mxu0 %v3162
        %v3255 = vpop.f32.mrf.mxu0
        %v3256 = vadd.f32 %v3196, %v3255
        %v3257 = vpop.f32.mrf.mxu0
        %v3258 = vadd.f32 %v3196, %v3257
        %3259 = vmatmul.bf16.gmra.mxu0 %v3163
        %v3260 = vpop.f32.mrf.mxu0
        %v3261 = vadd.f32 %v3196, %v3260
        %v3262 = vpop.f32.mrf.mxu0
        %v3263 = vadd.f32 %v3196, %v3262
        %3264 = vmatmul.bf16.gmra.mxu0 %v3164
        %v3265 = vpop.f32.mrf.mxu0
        %v3266 = vadd.f32 %v3196, %v3265
        %v3267 = vpop.f32.mrf.mxu0
        %v3268 = vadd.f32 %v3196, %v3267
        %3269 = vmatmul.bf16.gmra.mxu0 %v3165
        %v3270 = vpop.f32.mrf.mxu0
        %v3271 = vadd.f32 %v3196, %v3270
        %v3272 = vpop.f32.mrf.mxu0
        %v3273 = vadd.f32 %v3196, %v3272
        %3274 = vmatmul.bf16.gmra.mxu0 %v3166
        %v3275 = vpop.f32.mrf.mxu0
        %v3276 = vadd.f32 %v3196, %v3275
        %v3277 = vpop.f32.mrf.mxu0
        %v3278 = vadd.f32 %v3196, %v3277
        %3279 = vmatmul.bf16.gmra.mxu0 %v3167
        %v3280 = vpop.f32.mrf.mxu0
        %v3281 = vadd.f32 %v3196, %v3280
        %v3282 = vpop.f32.mrf.mxu0
        %v3283 = vadd.f32 %v3196, %v3282
        %3284 = vmatmul.bf16.gmra.mxu0 %v3168
        %v3285 = vpop.f32.mrf.mxu0
        %v3286 = vadd.f32 %v3196, %v3285
        %v3287 = vpop.f32.mrf.mxu0
        %v3288 = vadd.f32 %v3196, %v3287
        %3289 = vmatmul.bf16.gmra.mxu0 %v3169
        %v3290 = vpop.f32.mrf.mxu0
        %v3291 = vadd.f32 %v3196, %v3290
        %v3292 = vpop.f32.mrf.mxu0
        %v3293 = vadd.f32 %v3196, %v3292
        %3294 = vmatmul.bf16.gmra.mxu0 %v3170
        %v3295 = vpop.f32.mrf.mxu0
        %v3296 = vadd.f32 %v3196, %v3295
        %v3297 = vpop.f32.mrf.mxu0
        %v3298 = vadd.f32 %v3196, %v3297
        %3299 = vmatmul.bf16.gmra.mxu0 %v3171
        %v3300 = vpop.f32.mrf.mxu0
        %v3301 = vadd.f32 %v3196, %v3300
        %v3302 = vpop.f32.mrf.mxu0
        %v3303 = vadd.f32 %v3196, %v3302
        %3304 = vmatmul.bf16.gmra.mxu0 %v3172
        %v3305 = vpop.f32.mrf.mxu0
        %v3306 = vadd.f32 %v3196, %v3305
        %v3307 = vpop.f32.mrf.mxu0
        %v3308 = vadd.f32 %v3196, %v3307
        %3309 = vmatmul.bf16.gmra.mxu0 %v3173
        %v3310 = vpop.f32.mrf.mxu0
        %v3311 = vadd.f32 %v3196, %v3310
        %v3312 = vpop.f32.mrf.mxu0
        %v3313 = vadd.f32 %v3196, %v3312
        %3314 = vmatmul.bf16.gmra.mxu0 %v3174
        %v3315 = vpop.f32.mrf.mxu0
        %v3316 = vadd.f32 %v3196, %v3315
        %v3317 = vpop.f32.mrf.mxu0
        %v3318 = vadd.f32 %v3196, %v3317
        %3319 = vmatmul.bf16.gmra.mxu0 %v3175
        %v3320 = vpop.f32.mrf.mxu0
        %v3321 = vadd.f32 %v3196, %v3320
        %v3322 = vpop.f32.mrf.mxu0
        %v3323 = vadd.f32 %v3196, %v3322
        %3324 = vmatmul.bf16.gmra.mxu0 %v3176
        %v3325 = vpop.f32.mrf.mxu0
        %v3326 = vadd.f32 %v3196, %v3325
        %v3327 = vpop.f32.mrf.mxu0
        %v3328 = vadd.f32 %v3196, %v3327
        %3329 = vmatmul.bf16.gmra.mxu0 %v3177
        %v3330 = vpop.f32.mrf.mxu0
        %v3331 = vadd.f32 %v3196, %v3330
        %v3332 = vpop.f32.mrf.mxu0
        %v3333 = vadd.f32 %v3196, %v3332
        %3334 = vdwg.mxu0
        %v3335 = vadd.f32 %v2846, %v3256
        %v3336 = vadd.f32 %v2848, %v3258
        %v3337 = vadd.f32 %v2851, %v3261
        %v3338 = vadd.f32 %v2853, %v3263
        %v3339 = vadd.f32 %v2856, %v3266
        %v3340 = vadd.f32 %v2858, %v3268
        %v3341 = vadd.f32 %v2861, %v3271
        %v3342 = vadd.f32 %v2863, %v3273
        %v3343 = vadd.f32 %v2866, %v3276
        %v3344 = vadd.f32 %v2868, %v3278
        %v3345 = vadd.f32 %v2871, %v3281
        %v3346 = vadd.f32 %v2873, %v3283
        %v3347 = vadd.f32 %v2876, %v3286
        %v3348 = vadd.f32 %v2878, %v3288
        %v3349 = vadd.f32 %v2881, %v3291
        %v3350 = vadd.f32 %v2883, %v3293
        %v3351 = vadd.f32 %v2886, %v3296
        %v3352 = vadd.f32 %v2888, %v3298
        %v3353 = vadd.f32 %v2891, %v3301
        %v3354 = vadd.f32 %v2893, %v3303
        %v3355 = vadd.f32 %v2896, %v3306
        %v3356 = vadd.f32 %v2898, %v3308
        %v3357 = vadd.f32 %v2901, %v3311
        %v3358 = vadd.f32 %v2903, %v3313
        %v3359 = vadd.f32 %v2906, %v3316
        %v3360 = vadd.f32 %v2908, %v3318
        %v3361 = vadd.f32 %v2911, %v3321
        %v3362 = vadd.f32 %v2913, %v3323
        %v3363 = vadd.f32 %v2916, %v3326
        %v3364 = vadd.f32 %v2918, %v3328
        %v3365 = vadd.f32 %v2921, %v3331
        %v3366 = vadd.f32 %v2923, %v3333
        %v3367 = vmax.f32 %v3335, 0.0
        %v3368 = vmax.f32 %v3336, 0.0
        %v3369 = vmax.f32 %v3337, 0.0
        %v3370 = vmax.f32 %v3338, 0.0
        %v3371 = vmax.f32 %v3339, 0.0
        %v3372 = vmax.f32 %v3340, 0.0
        %v3373 = vmax.f32 %v3341, 0.0
        %v3374 = vmax.f32 %v3342, 0.0
        %v3375 = vmax.f32 %v3343, 0.0
        %v3376 = vmax.f32 %v3344, 0.0
        %v3377 = vmax.f32 %v3345, 0.0
        %v3378 = vmax.f32 %v3346, 0.0
        %v3379 = vmax.f32 %v3347, 0.0
        %v3380 = vmax.f32 %v3348, 0.0
        %v3381 = vmax.f32 %v3349, 0.0
        %v3382 = vmax.f32 %v3350, 0.0
        %v3383 = vmax.f32 %v3351, 0.0
        %v3384 = vmax.f32 %v3352, 0.0
        %v3385 = vmax.f32 %v3353, 0.0
        %v3386 = vmax.f32 %v3354, 0.0
        %v3387 = vmax.f32 %v3355, 0.0
        %v3388 = vmax.f32 %v3356, 0.0
        %v3389 = vmax.f32 %v3357, 0.0
        %v3390 = vmax.f32 %v3358, 0.0
        %v3391 = vmax.f32 %v3359, 0.0
        %v3392 = vmax.f32 %v3360, 0.0
        %v3393 = vmax.f32 %v3361, 0.0
        %v3394 = vmax.f32 %v3362, 0.0
        %v3395 = vmax.f32 %v3363, 0.0
        %v3396 = vmax.f32 %v3364, 0.0
        %v3397 = vmax.f32 %v3365, 0.0
        %v3398 = vmax.f32 %v3366, 0.0
        %v3399 = vpack.c.bf16 %v3368, %v3367
        %v3400 = vpack.c.bf16 %v3370, %v3369
        %v3401 = vpack.c.bf16 %v3372, %v3371
        %v3402 = vpack.c.bf16 %v3374, %v3373
        %v3403 = vpack.c.bf16 %v3376, %v3375
        %v3404 = vpack.c.bf16 %v3378, %v3377
        %v3405 = vpack.c.bf16 %v3380, %v3379
        %v3406 = vpack.c.bf16 %v3382, %v3381
        %v3407 = vpack.c.bf16 %v3384, %v3383
        %v3408 = vpack.c.bf16 %v3386, %v3385
        %v3409 = vpack.c.bf16 %v3388, %v3387
        %v3410 = vpack.c.bf16 %v3390, %v3389
        %v3411 = vpack.c.bf16 %v3392, %v3391
        %v3412 = vpack.c.bf16 %v3394, %v3393
        %v3413 = vpack.c.bf16 %v3396, %v3395
        %v3414 = vpack.c.bf16 %v3398, %v3397
        %v3415 = vld [vmem:[#allocation16] sm:$0xf]
        %v3416 = vld [vmem:[#allocation16 + $0x4] sm:$0xf]
        %v3417 = vld [vmem:[#allocation16 + $0x8] sm:$0xf]
        %v3418 = vld [vmem:[#allocation16 + $0xc] sm:$0xf]
        %v3419 = vld [vmem:[#allocation16 + $0x10] sm:$0xf]
        %v3420 = vld [vmem:[#allocation16 + $0x14] sm:$0xf]
        %v3421 = vld [vmem:[#allocation16 + $0x18] sm:$0xf]
        %v3422 = vld [vmem:[#allocation16 + $0x1c] sm:$0xf]
        %v3423 = vld [vmem:[#allocation16 + $0x20] sm:$0xf]
        %v3424 = vld [vmem:[#allocation16 + $0x24] sm:$0xf]
        %v3425 = vld [vmem:[#allocation16 + $0x28] sm:$0xf]
        %v3426 = vld [vmem:[#allocation16 + $0x2c] sm:$0xf]
        %v3427 = vld [vmem:[#allocation16 + $0x30] sm:$0xf]
        %v3428 = vld [vmem:[#allocation16 + $0x34] sm:$0xf]
        %v3429 = vld [vmem:[#allocation16 + $0x38] sm:$0xf]
        %v3430 = vld [vmem:[#allocation16 + $0x3c] sm:$0xf]
        %v3431 = vld [vmem:[%s37] sm:$0x1]
        %v3433 = vperm.slane %v3431, 0
        %v3451 = vunpack.c.l.b16 %v3415
        %v3452 = vunpack.c.l.b16 %v3416
        %v3453 = vunpack.c.l.b16 %v3417
        %v3454 = vunpack.c.l.b16 %v3418
        %v3455 = vunpack.c.l.b16 %v3419
        %v3456 = vunpack.c.l.b16 %v3420
        %v3457 = vunpack.c.l.b16 %v3421
        %v3458 = vunpack.c.l.b16 %v3422
        %v3459 = vunpack.c.l.b16 %v3423
        %v3460 = vunpack.c.l.b16 %v3424
        %v3461 = vunpack.c.l.b16 %v3425
        %v3462 = vunpack.c.l.b16 %v3426
        %v3463 = vunpack.c.l.b16 %v3427
        %v3464 = vunpack.c.l.b16 %v3428
        %v3465 = vunpack.c.l.b16 %v3429
        %v3466 = vunpack.c.l.b16 %v3430
        %v3467 = vpack.c.b16 %v3452, %v3451
        %v3468 = vpack.c.b16 %v3454, %v3453
        %v3469 = vpack.c.b16 %v3456, %v3455
        %v3470 = vpack.c.b16 %v3458, %v3457
        %v3471 = vpack.c.b16 %v3460, %v3459
        %v3472 = vpack.c.b16 %v3462, %v3461
        %v3473 = vpack.c.b16 %v3464, %v3463
        %v3474 = vpack.c.b16 %v3466, %v3465
        %3483 = vmatpush.bf16.msra.mxu0 %v3474
        %3484 = vmatpush.bf16.msra.mxu0 %v3473
        %3485 = vmatpush.bf16.msra.mxu0 %v3472
        %3486 = vmatpush.bf16.msra.mxu0 %v3471
        %3487 = vmatpush.bf16.msra.mxu0 %v3470
        %3488 = vmatpush.bf16.msra.mxu0 %v3469
        %3489 = vmatpush.bf16.msra.mxu0 %v3468
        %3490 = vmatpush.bf16.msra.mxu0 %v3467
        %3491 = vmatmul.bf16.gmra.mxu0 %v3399
        %v3492 = vpop.f32.mrf.mxu0
        %v3493 = vadd.f32 %v3433, %v3492
        %v3494 = vpop.f32.mrf.mxu0
        %v3495 = vadd.f32 %v3433, %v3494
        %3496 = vmatmul.bf16.gmra.mxu0 %v3400
        %v3497 = vpop.f32.mrf.mxu0
        %v3498 = vadd.f32 %v3433, %v3497
        %v3499 = vpop.f32.mrf.mxu0
        %v3500 = vadd.f32 %v3433, %v3499
        %3501 = vmatmul.bf16.gmra.mxu0 %v3401
        %v3502 = vpop.f32.mrf.mxu0
        %v3503 = vadd.f32 %v3433, %v3502
        %v3504 = vpop.f32.mrf.mxu0
        %v3505 = vadd.f32 %v3433, %v3504
        %3506 = vmatmul.bf16.gmra.mxu0 %v3402
        %v3507 = vpop.f32.mrf.mxu0
        %v3508 = vadd.f32 %v3433, %v3507
        %v3509 = vpop.f32.mrf.mxu0
        %v3510 = vadd.f32 %v3433, %v3509
        %3511 = vmatmul.bf16.gmra.mxu0 %v3403
        %v3512 = vpop.f32.mrf.mxu0
        %v3513 = vadd.f32 %v3433, %v3512
        %v3514 = vpop.f32.mrf.mxu0
        %v3515 = vadd.f32 %v3433, %v3514
        %3516 = vmatmul.bf16.gmra.mxu0 %v3404
        %v3517 = vpop.f32.mrf.mxu0
        %v3518 = vadd.f32 %v3433, %v3517
        %v3519 = vpop.f32.mrf.mxu0
        %v3520 = vadd.f32 %v3433, %v3519
        %3521 = vmatmul.bf16.gmra.mxu0 %v3405
        %v3522 = vpop.f32.mrf.mxu0
        %v3523 = vadd.f32 %v3433, %v3522
        %v3524 = vpop.f32.mrf.mxu0
        %v3525 = vadd.f32 %v3433, %v3524
        %3526 = vmatmul.bf16.gmra.mxu0 %v3406
        %v3527 = vpop.f32.mrf.mxu0
        %v3528 = vadd.f32 %v3433, %v3527
        %v3529 = vpop.f32.mrf.mxu0
        %v3530 = vadd.f32 %v3433, %v3529
        %3531 = vmatmul.bf16.gmra.mxu0 %v3407
        %v3532 = vpop.f32.mrf.mxu0
        %v3533 = vadd.f32 %v3433, %v3532
        %v3534 = vpop.f32.mrf.mxu0
        %v3535 = vadd.f32 %v3433, %v3534
        %3536 = vmatmul.bf16.gmra.mxu0 %v3408
        %v3537 = vpop.f32.mrf.mxu0
        %v3538 = vadd.f32 %v3433, %v3537
        %v3539 = vpop.f32.mrf.mxu0
        %v3540 = vadd.f32 %v3433, %v3539
        %3541 = vmatmul.bf16.gmra.mxu0 %v3409
        %v3542 = vpop.f32.mrf.mxu0
        %v3543 = vadd.f32 %v3433, %v3542
        %v3544 = vpop.f32.mrf.mxu0
        %v3545 = vadd.f32 %v3433, %v3544
        %3546 = vmatmul.bf16.gmra.mxu0 %v3410
        %v3547 = vpop.f32.mrf.mxu0
        %v3548 = vadd.f32 %v3433, %v3547
        %v3549 = vpop.f32.mrf.mxu0
        %v3550 = vadd.f32 %v3433, %v3549
        %3551 = vmatmul.bf16.gmra.mxu0 %v3411
        %v3552 = vpop.f32.mrf.mxu0
        %v3553 = vadd.f32 %v3433, %v3552
        %v3554 = vpop.f32.mrf.mxu0
        %v3555 = vadd.f32 %v3433, %v3554
        %3556 = vmatmul.bf16.gmra.mxu0 %v3412
        %v3557 = vpop.f32.mrf.mxu0
        %v3558 = vadd.f32 %v3433, %v3557
        %v3559 = vpop.f32.mrf.mxu0
        %v3560 = vadd.f32 %v3433, %v3559
        %3561 = vmatmul.bf16.gmra.mxu0 %v3413
        %v3562 = vpop.f32.mrf.mxu0
        %v3563 = vadd.f32 %v3433, %v3562
        %v3564 = vpop.f32.mrf.mxu0
        %v3565 = vadd.f32 %v3433, %v3564
        %3566 = vmatmul.bf16.gmra.mxu0 %v3414
        %v3567 = vpop.f32.mrf.mxu0
        %v3568 = vadd.f32 %v3433, %v3567
        %v3569 = vpop.f32.mrf.mxu0
        %v3570 = vadd.f32 %v3433, %v3569
        %3571 = vdwg.mxu0
        %v3572 = vmax.f32 %v3493, 0.0
        %v3573 = vmax.f32 %v3495, 0.0
        %v3574 = vmax.f32 %v3498, 0.0
        %v3575 = vmax.f32 %v3500, 0.0
        %v3576 = vmax.f32 %v3503, 0.0
        %v3577 = vmax.f32 %v3505, 0.0
        %v3578 = vmax.f32 %v3508, 0.0
        %v3579 = vmax.f32 %v3510, 0.0
        %v3580 = vmax.f32 %v3513, 0.0
        %v3581 = vmax.f32 %v3515, 0.0
        %v3582 = vmax.f32 %v3518, 0.0
        %v3583 = vmax.f32 %v3520, 0.0
        %v3584 = vmax.f32 %v3523, 0.0
        %v3585 = vmax.f32 %v3525, 0.0
        %v3586 = vmax.f32 %v3528, 0.0
        %v3587 = vmax.f32 %v3530, 0.0
        %v3588 = vmax.f32 %v3533, 0.0
        %v3589 = vmax.f32 %v3535, 0.0
        %v3590 = vmax.f32 %v3538, 0.0
        %v3591 = vmax.f32 %v3540, 0.0
        %v3592 = vmax.f32 %v3543, 0.0
        %v3593 = vmax.f32 %v3545, 0.0
        %v3594 = vmax.f32 %v3548, 0.0
        %v3595 = vmax.f32 %v3550, 0.0
        %v3596 = vmax.f32 %v3553, 0.0
        %v3597 = vmax.f32 %v3555, 0.0
        %v3598 = vmax.f32 %v3558, 0.0
        %v3599 = vmax.f32 %v3560, 0.0
        %v3600 = vmax.f32 %v3563, 0.0
        %v3601 = vmax.f32 %v3565, 0.0
        %v3602 = vmax.f32 %v3568, 0.0
        %v3603 = vmax.f32 %v3570, 0.0
        %v3604 = vpack.c.bf16 %v3573, %v3572
        %v3605 = vpack.c.bf16 %v3575, %v3574
        %v3606 = vpack.c.bf16 %v3577, %v3576
        %v3607 = vpack.c.bf16 %v3579, %v3578
        %v3608 = vpack.c.bf16 %v3581, %v3580
        %v3609 = vpack.c.bf16 %v3583, %v3582
        %v3610 = vpack.c.bf16 %v3585, %v3584
        %v3611 = vpack.c.bf16 %v3587, %v3586
        %v3612 = vpack.c.bf16 %v3589, %v3588
        %v3613 = vpack.c.bf16 %v3591, %v3590
        %v3614 = vpack.c.bf16 %v3593, %v3592
        %v3615 = vpack.c.bf16 %v3595, %v3594
        %v3616 = vpack.c.bf16 %v3597, %v3596
        %v3617 = vpack.c.bf16 %v3599, %v3598
        %v3618 = vpack.c.bf16 %v3601, %v3600
        %v3619 = vpack.c.bf16 %v3603, %v3602
        %v3620 = vld [vmem:[#allocation17] sm:$0xf]
        %v3621 = vld [vmem:[#allocation17 + $0x4] sm:$0xf]
        %v3622 = vld [vmem:[#allocation17 + $0x8] sm:$0xf]
        %v3623 = vld [vmem:[#allocation17 + $0xc] sm:$0xf]
        %v3624 = vld [vmem:[#allocation17 + $0x10] sm:$0xf]
        %v3625 = vld [vmem:[#allocation17 + $0x14] sm:$0xf]
        %v3626 = vld [vmem:[#allocation17 + $0x18] sm:$0xf]
        %v3627 = vld [vmem:[#allocation17 + $0x1c] sm:$0xf]
        %v3628 = vld [vmem:[#allocation17 + $0x20] sm:$0xf]
        %v3629 = vld [vmem:[#allocation17 + $0x24] sm:$0xf]
        %v3630 = vld [vmem:[#allocation17 + $0x28] sm:$0xf]
        %v3631 = vld [vmem:[#allocation17 + $0x2c] sm:$0xf]
        %v3632 = vld [vmem:[#allocation17 + $0x30] sm:$0xf]
        %v3633 = vld [vmem:[#allocation17 + $0x34] sm:$0xf]
        %v3634 = vld [vmem:[#allocation17 + $0x38] sm:$0xf]
        %v3635 = vld [vmem:[#allocation17 + $0x3c] sm:$0xf]
        %v3636 = vld [vmem:[%s41] sm:$0x1]
        %v3638 = vperm.slane %v3636, 0
        %v3656 = vunpack.c.l.b16 %v3620
        %v3657 = vunpack.c.l.b16 %v3621
        %v3658 = vunpack.c.l.b16 %v3622
        %v3659 = vunpack.c.l.b16 %v3623
        %v3660 = vunpack.c.l.b16 %v3624
        %v3661 = vunpack.c.l.b16 %v3625
        %v3662 = vunpack.c.l.b16 %v3626
        %v3663 = vunpack.c.l.b16 %v3627
        %v3664 = vunpack.c.l.b16 %v3628
        %v3665 = vunpack.c.l.b16 %v3629
        %v3666 = vunpack.c.l.b16 %v3630
        %v3667 = vunpack.c.l.b16 %v3631
        %v3668 = vunpack.c.l.b16 %v3632
        %v3669 = vunpack.c.l.b16 %v3633
        %v3670 = vunpack.c.l.b16 %v3634
        %v3671 = vunpack.c.l.b16 %v3635
        %v3672 = vpack.c.b16 %v3657, %v3656
        %v3673 = vpack.c.b16 %v3659, %v3658
        %v3674 = vpack.c.b16 %v3661, %v3660
        %v3675 = vpack.c.b16 %v3663, %v3662
        %v3676 = vpack.c.b16 %v3665, %v3664
        %v3677 = vpack.c.b16 %v3667, %v3666
        %v3678 = vpack.c.b16 %v3669, %v3668
        %v3679 = vpack.c.b16 %v3671, %v3670
        %3688 = vmatpush.bf16.msra.mxu0 %v3679
        %3689 = vmatpush.bf16.msra.mxu0 %v3678
        %3690 = vmatpush.bf16.msra.mxu0 %v3677
        %3691 = vmatpush.bf16.msra.mxu0 %v3676
        %3692 = vmatpush.bf16.msra.mxu0 %v3675
        %3693 = vmatpush.bf16.msra.mxu0 %v3674
        %3694 = vmatpush.bf16.msra.mxu0 %v3673
        %3695 = vmatpush.bf16.msra.mxu0 %v3672
        %3696 = vmatmul.bf16.gmra.mxu0 %v3604
        %v3697 = vpop.f32.mrf.mxu0
        %v3698 = vadd.f32 %v3638, %v3697
        %v3699 = vpop.f32.mrf.mxu0
        %v3700 = vadd.f32 %v3638, %v3699
        %3701 = vmatmul.bf16.gmra.mxu0 %v3605
        %v3702 = vpop.f32.mrf.mxu0
        %v3703 = vadd.f32 %v3638, %v3702
        %v3704 = vpop.f32.mrf.mxu0
        %v3705 = vadd.f32 %v3638, %v3704
        %3706 = vmatmul.bf16.gmra.mxu0 %v3606
        %v3707 = vpop.f32.mrf.mxu0
        %v3708 = vadd.f32 %v3638, %v3707
        %v3709 = vpop.f32.mrf.mxu0
        %v3710 = vadd.f32 %v3638, %v3709
        %3711 = vmatmul.bf16.gmra.mxu0 %v3607
        %v3712 = vpop.f32.mrf.mxu0
        %v3713 = vadd.f32 %v3638, %v3712
        %v3714 = vpop.f32.mrf.mxu0
        %v3715 = vadd.f32 %v3638, %v3714
        %3716 = vmatmul.bf16.gmra.mxu0 %v3608
        %v3717 = vpop.f32.mrf.mxu0
        %v3718 = vadd.f32 %v3638, %v3717
        %v3719 = vpop.f32.mrf.mxu0
        %v3720 = vadd.f32 %v3638, %v3719
        %3721 = vmatmul.bf16.gmra.mxu0 %v3609
        %v3722 = vpop.f32.mrf.mxu0
        %v3723 = vadd.f32 %v3638, %v3722
        %v3724 = vpop.f32.mrf.mxu0
        %v3725 = vadd.f32 %v3638, %v3724
        %3726 = vmatmul.bf16.gmra.mxu0 %v3610
        %v3727 = vpop.f32.mrf.mxu0
        %v3728 = vadd.f32 %v3638, %v3727
        %v3729 = vpop.f32.mrf.mxu0
        %v3730 = vadd.f32 %v3638, %v3729
        %3731 = vmatmul.bf16.gmra.mxu0 %v3611
        %v3732 = vpop.f32.mrf.mxu0
        %v3733 = vadd.f32 %v3638, %v3732
        %v3734 = vpop.f32.mrf.mxu0
        %v3735 = vadd.f32 %v3638, %v3734
        %3736 = vmatmul.bf16.gmra.mxu0 %v3612
        %v3737 = vpop.f32.mrf.mxu0
        %v3738 = vadd.f32 %v3638, %v3737
        %v3739 = vpop.f32.mrf.mxu0
        %v3740 = vadd.f32 %v3638, %v3739
        %3741 = vmatmul.bf16.gmra.mxu0 %v3613
        %v3742 = vpop.f32.mrf.mxu0
        %v3743 = vadd.f32 %v3638, %v3742
        %v3744 = vpop.f32.mrf.mxu0
        %v3745 = vadd.f32 %v3638, %v3744
        %3746 = vmatmul.bf16.gmra.mxu0 %v3614
        %v3747 = vpop.f32.mrf.mxu0
        %v3748 = vadd.f32 %v3638, %v3747
        %v3749 = vpop.f32.mrf.mxu0
        %v3750 = vadd.f32 %v3638, %v3749
        %3751 = vmatmul.bf16.gmra.mxu0 %v3615
        %v3752 = vpop.f32.mrf.mxu0
        %v3753 = vadd.f32 %v3638, %v3752
        %v3754 = vpop.f32.mrf.mxu0
        %v3755 = vadd.f32 %v3638, %v3754
        %3756 = vmatmul.bf16.gmra.mxu0 %v3616
        %v3757 = vpop.f32.mrf.mxu0
        %v3758 = vadd.f32 %v3638, %v3757
        %v3759 = vpop.f32.mrf.mxu0
        %v3760 = vadd.f32 %v3638, %v3759
        %3761 = vmatmul.bf16.gmra.mxu0 %v3617
        %v3762 = vpop.f32.mrf.mxu0
        %v3763 = vadd.f32 %v3638, %v3762
        %v3764 = vpop.f32.mrf.mxu0
        %v3765 = vadd.f32 %v3638, %v3764
        %3766 = vmatmul.bf16.gmra.mxu0 %v3618
        %v3767 = vpop.f32.mrf.mxu0
        %v3768 = vadd.f32 %v3638, %v3767
        %v3769 = vpop.f32.mrf.mxu0
        %v3770 = vadd.f32 %v3638, %v3769
        %3771 = vmatmul.bf16.gmra.mxu0 %v3619
        %v3772 = vpop.f32.mrf.mxu0
        %v3773 = vadd.f32 %v3638, %v3772
        %v3774 = vpop.f32.mrf.mxu0
        %v3775 = vadd.f32 %v3638, %v3774
        %3776 = vdwg.mxu0
        %v3777 = vadd.f32 %v3335, %v3698
        %v3778 = vadd.f32 %v3336, %v3700
        %v3779 = vadd.f32 %v3337, %v3703
        %v3780 = vadd.f32 %v3338, %v3705
        %v3781 = vadd.f32 %v3339, %v3708
        %v3782 = vadd.f32 %v3340, %v3710
        %v3783 = vadd.f32 %v3341, %v3713
        %v3784 = vadd.f32 %v3342, %v3715
        %v3785 = vadd.f32 %v3343, %v3718
        %v3786 = vadd.f32 %v3344, %v3720
        %v3787 = vadd.f32 %v3345, %v3723
        %v3788 = vadd.f32 %v3346, %v3725
        %v3789 = vadd.f32 %v3347, %v3728
        %v3790 = vadd.f32 %v3348, %v3730
        %v3791 = vadd.f32 %v3349, %v3733
        %v3792 = vadd.f32 %v3350, %v3735
        %v3793 = vadd.f32 %v3351, %v3738
        %v3794 = vadd.f32 %v3352, %v3740
        %v3795 = vadd.f32 %v3353, %v3743
        %v3796 = vadd.f32 %v3354, %v3745
        %v3797 = vadd.f32 %v3355, %v3748
        %v3798 = vadd.f32 %v3356, %v3750
        %v3799 = vadd.f32 %v3357, %v3753
        %v3800 = vadd.f32 %v3358, %v3755
        %v3801 = vadd.f32 %v3359, %v3758
        %v3802 = vadd.f32 %v3360, %v3760
        %v3803 = vadd.f32 %v3361, %v3763
        %v3804 = vadd.f32 %v3362, %v3765
        %v3805 = vadd.f32 %v3363, %v3768
        %v3806 = vadd.f32 %v3364, %v3770
        %v3807 = vadd.f32 %v3365, %v3773
        %v3808 = vadd.f32 %v3366, %v3775
        %v3809 = vpack.c.bf16 %v3778, %v3777
        %v3810 = vpack.c.bf16 %v3780, %v3779
        %v3811 = vpack.c.bf16 %v3782, %v3781
        %v3812 = vpack.c.bf16 %v3784, %v3783
        %v3813 = vpack.c.bf16 %v3786, %v3785
        %v3814 = vpack.c.bf16 %v3788, %v3787
        %v3815 = vpack.c.bf16 %v3790, %v3789
        %v3816 = vpack.c.bf16 %v3792, %v3791
        %v3817 = vpack.c.bf16 %v3794, %v3793
        %v3818 = vpack.c.bf16 %v3796, %v3795
        %v3819 = vpack.c.bf16 %v3798, %v3797
        %v3820 = vpack.c.bf16 %v3800, %v3799
        %v3821 = vpack.c.bf16 %v3802, %v3801
        %v3822 = vpack.c.bf16 %v3804, %v3803
        %v3823 = vpack.c.bf16 %v3806, %v3805
        %v3824 = vpack.c.bf16 %v3808, %v3807
        %v3825 = vld [vmem:[#allocation19] sm:$0xf]
        %v3826 = vld [vmem:[#allocation19 + $0x4] sm:$0xf]
        %v3827 = vld [vmem:[#allocation19 + $0x8] sm:$0xf]
        %v3828 = vld [vmem:[#allocation19 + $0xc] sm:$0xf]
        %v3829 = vld [vmem:[#allocation19 + $0x10] sm:$0xf]
        %v3830 = vld [vmem:[#allocation19 + $0x14] sm:$0xf]
        %v3831 = vld [vmem:[#allocation19 + $0x18] sm:$0xf]
        %v3832 = vld [vmem:[#allocation19 + $0x1c] sm:$0xf]
        %v3833 = vld [vmem:[#allocation19 + $0x20] sm:$0xf]
        %v3834 = vld [vmem:[#allocation19 + $0x24] sm:$0xf]
        %v3835 = vld [vmem:[#allocation19 + $0x28] sm:$0xf]
        %v3836 = vld [vmem:[#allocation19 + $0x2c] sm:$0xf]
        %v3837 = vld [vmem:[#allocation19 + $0x30] sm:$0xf]
        %v3838 = vld [vmem:[#allocation19 + $0x34] sm:$0xf]
        %v3839 = vld [vmem:[#allocation19 + $0x38] sm:$0xf]
        %v3840 = vld [vmem:[#allocation19 + $0x3c] sm:$0xf]
        %v3841 = vld [vmem:[%s45] sm:$0x1]
        %v3843 = vperm.slane %v3841, 0
        %v3861 = vunpack.c.l.b16 %v3825
        %v3862 = vunpack.c.l.b16 %v3826
        %v3863 = vunpack.c.l.b16 %v3827
        %v3864 = vunpack.c.l.b16 %v3828
        %v3865 = vunpack.c.l.b16 %v3829
        %v3866 = vunpack.c.l.b16 %v3830
        %v3867 = vunpack.c.l.b16 %v3831
        %v3868 = vunpack.c.l.b16 %v3832
        %v3869 = vunpack.c.l.b16 %v3833
        %v3870 = vunpack.c.l.b16 %v3834
        %v3871 = vunpack.c.l.b16 %v3835
        %v3872 = vunpack.c.l.b16 %v3836
        %v3873 = vunpack.c.l.b16 %v3837
        %v3874 = vunpack.c.l.b16 %v3838
        %v3875 = vunpack.c.l.b16 %v3839
        %v3876 = vunpack.c.l.b16 %v3840
        %v3877 = vpack.c.b16 %v3862, %v3861
        %v3878 = vpack.c.b16 %v3864, %v3863
        %v3879 = vpack.c.b16 %v3866, %v3865
        %v3880 = vpack.c.b16 %v3868, %v3867
        %v3881 = vpack.c.b16 %v3870, %v3869
        %v3882 = vpack.c.b16 %v3872, %v3871
        %v3883 = vpack.c.b16 %v3874, %v3873
        %v3884 = vpack.c.b16 %v3876, %v3875
        %3893 = vmatpush.bf16.msra.mxu0 %v3884
        %3894 = vmatpush.bf16.msra.mxu0 %v3883
        %3895 = vmatpush.bf16.msra.mxu0 %v3882
        %3896 = vmatpush.bf16.msra.mxu0 %v3881
        %3897 = vmatpush.bf16.msra.mxu0 %v3880
        %3898 = vmatpush.bf16.msra.mxu0 %v3879
        %3899 = vmatpush.bf16.msra.mxu0 %v3878
        %3900 = vmatpush.bf16.msra.mxu0 %v3877
        %3901 = vmatmul.bf16.gmra.mxu0 %v3809
        %v3902 = vpop.f32.mrf.mxu0
        %v3903 = vadd.f32 %v3843, %v3902
        %v3904 = vpop.f32.mrf.mxu0
        %v3905 = vadd.f32 %v3843, %v3904
        %3906 = vmatmul.bf16.gmra.mxu0 %v3810
        %v3907 = vpop.f32.mrf.mxu0
        %v3908 = vadd.f32 %v3843, %v3907
        %v3909 = vpop.f32.mrf.mxu0
        %v3910 = vadd.f32 %v3843, %v3909
        %3911 = vmatmul.bf16.gmra.mxu0 %v3811
        %v3912 = vpop.f32.mrf.mxu0
        %v3913 = vadd.f32 %v3843, %v3912
        %v3914 = vpop.f32.mrf.mxu0
        %v3915 = vadd.f32 %v3843, %v3914
        %3916 = vmatmul.bf16.gmra.mxu0 %v3812
        %v3917 = vpop.f32.mrf.mxu0
        %v3918 = vadd.f32 %v3843, %v3917
        %v3919 = vpop.f32.mrf.mxu0
        %v3920 = vadd.f32 %v3843, %v3919
        %3921 = vmatmul.bf16.gmra.mxu0 %v3813
        %v3922 = vpop.f32.mrf.mxu0
        %v3923 = vadd.f32 %v3843, %v3922
        %v3924 = vpop.f32.mrf.mxu0
        %v3925 = vadd.f32 %v3843, %v3924
        %3926 = vmatmul.bf16.gmra.mxu0 %v3814
        %v3927 = vpop.f32.mrf.mxu0
        %v3928 = vadd.f32 %v3843, %v3927
        %v3929 = vpop.f32.mrf.mxu0
        %v3930 = vadd.f32 %v3843, %v3929
        %3931 = vmatmul.bf16.gmra.mxu0 %v3815
        %v3932 = vpop.f32.mrf.mxu0
        %v3933 = vadd.f32 %v3843, %v3932
        %v3934 = vpop.f32.mrf.mxu0
        %v3935 = vadd.f32 %v3843, %v3934
        %3936 = vmatmul.bf16.gmra.mxu0 %v3816
        %v3937 = vpop.f32.mrf.mxu0
        %v3938 = vadd.f32 %v3843, %v3937
        %v3939 = vpop.f32.mrf.mxu0
        %v3940 = vadd.f32 %v3843, %v3939
        %3941 = vmatmul.bf16.gmra.mxu0 %v3817
        %v3942 = vpop.f32.mrf.mxu0
        %v3943 = vadd.f32 %v3843, %v3942
        %v3944 = vpop.f32.mrf.mxu0
        %v3945 = vadd.f32 %v3843, %v3944
        %3946 = vmatmul.bf16.gmra.mxu0 %v3818
        %v3947 = vpop.f32.mrf.mxu0
        %v3948 = vadd.f32 %v3843, %v3947
        %v3949 = vpop.f32.mrf.mxu0
        %v3950 = vadd.f32 %v3843, %v3949
        %3951 = vmatmul.bf16.gmra.mxu0 %v3819
        %v3952 = vpop.f32.mrf.mxu0
        %v3953 = vadd.f32 %v3843, %v3952
        %v3954 = vpop.f32.mrf.mxu0
        %v3955 = vadd.f32 %v3843, %v3954
        %3956 = vmatmul.bf16.gmra.mxu0 %v3820
        %v3957 = vpop.f32.mrf.mxu0
        %v3958 = vadd.f32 %v3843, %v3957
        %v3959 = vpop.f32.mrf.mxu0
        %v3960 = vadd.f32 %v3843, %v3959
        %3961 = vmatmul.bf16.gmra.mxu0 %v3821
        %v3962 = vpop.f32.mrf.mxu0
        %v3963 = vadd.f32 %v3843, %v3962
        %v3964 = vpop.f32.mrf.mxu0
        %v3965 = vadd.f32 %v3843, %v3964
        %3966 = vmatmul.bf16.gmra.mxu0 %v3822
        %v3967 = vpop.f32.mrf.mxu0
        %v3968 = vadd.f32 %v3843, %v3967
        %v3969 = vpop.f32.mrf.mxu0
        %v3970 = vadd.f32 %v3843, %v3969
        %3971 = vmatmul.bf16.gmra.mxu0 %v3823
        %v3972 = vpop.f32.mrf.mxu0
        %v3973 = vadd.f32 %v3843, %v3972
        %v3974 = vpop.f32.mrf.mxu0
        %v3975 = vadd.f32 %v3843, %v3974
        %3976 = vmatmul.bf16.gmra.mxu0 %v3824
        %v3977 = vpop.f32.mrf.mxu0
        %v3978 = vadd.f32 %v3843, %v3977
        %v3979 = vpop.f32.mrf.mxu0
        %v3980 = vadd.f32 %v3843, %v3979
        %3981 = vdwg.mxu0
        %v3982 = vmax.f32 %v3903, 0.0
        %v3983 = vmax.f32 %v3905, 0.0
        %v3984 = vmax.f32 %v3908, 0.0
        %v3985 = vmax.f32 %v3910, 0.0
        %v3986 = vmax.f32 %v3913, 0.0
        %v3987 = vmax.f32 %v3915, 0.0
        %v3988 = vmax.f32 %v3918, 0.0
        %v3989 = vmax.f32 %v3920, 0.0
        %v3990 = vmax.f32 %v3923, 0.0
        %v3991 = vmax.f32 %v3925, 0.0
        %v3992 = vmax.f32 %v3928, 0.0
        %v3993 = vmax.f32 %v3930, 0.0
        %v3994 = vmax.f32 %v3933, 0.0
        %v3995 = vmax.f32 %v3935, 0.0
        %v3996 = vmax.f32 %v3938, 0.0
        %v3997 = vmax.f32 %v3940, 0.0
        %v3998 = vmax.f32 %v3943, 0.0
        %v3999 = vmax.f32 %v3945, 0.0
        %v4000 = vmax.f32 %v3948, 0.0
        %v4001 = vmax.f32 %v3950, 0.0
        %v4002 = vmax.f32 %v3953, 0.0
        %v4003 = vmax.f32 %v3955, 0.0
        %v4004 = vmax.f32 %v3958, 0.0
        %v4005 = vmax.f32 %v3960, 0.0
        %v4006 = vmax.f32 %v3963, 0.0
        %v4007 = vmax.f32 %v3965, 0.0
        %v4008 = vmax.f32 %v3968, 0.0
        %v4009 = vmax.f32 %v3970, 0.0
        %v4010 = vmax.f32 %v3973, 0.0
        %v4011 = vmax.f32 %v3975, 0.0
        %v4012 = vmax.f32 %v3978, 0.0
        %v4013 = vmax.f32 %v3980, 0.0
        %v4014 = vpack.c.bf16 %v3983, %v3982
        %v4015 = vpack.c.bf16 %v3985, %v3984
        %v4016 = vpack.c.bf16 %v3987, %v3986
        %v4017 = vpack.c.bf16 %v3989, %v3988
        %v4018 = vpack.c.bf16 %v3991, %v3990
        %v4019 = vpack.c.bf16 %v3993, %v3992
        %v4020 = vpack.c.bf16 %v3995, %v3994
        %v4021 = vpack.c.bf16 %v3997, %v3996
        %v4022 = vpack.c.bf16 %v3999, %v3998
        %v4023 = vpack.c.bf16 %v4001, %v4000
        %v4024 = vpack.c.bf16 %v4003, %v4002
        %v4025 = vpack.c.bf16 %v4005, %v4004
        %v4026 = vpack.c.bf16 %v4007, %v4006
        %v4027 = vpack.c.bf16 %v4009, %v4008
        %v4028 = vpack.c.bf16 %v4011, %v4010
        %v4029 = vpack.c.bf16 %v4013, %v4012
        %v4030 = vld [vmem:[#allocation20] sm:$0xf]
        %v4031 = vld [vmem:[#allocation20 + $0x4] sm:$0xf]
        %v4032 = vld [vmem:[#allocation20 + $0x8] sm:$0xf]
        %v4033 = vld [vmem:[#allocation20 + $0xc] sm:$0xf]
        %v4034 = vld [vmem:[#allocation20 + $0x10] sm:$0xf]
        %v4035 = vld [vmem:[#allocation20 + $0x14] sm:$0xf]
        %v4036 = vld [vmem:[#allocation20 + $0x18] sm:$0xf]
        %v4037 = vld [vmem:[#allocation20 + $0x1c] sm:$0xf]
        %v4038 = vld [vmem:[#allocation20 + $0x20] sm:$0xf]
        %v4039 = vld [vmem:[#allocation20 + $0x24] sm:$0xf]
        %v4040 = vld [vmem:[#allocation20 + $0x28] sm:$0xf]
        %v4041 = vld [vmem:[#allocation20 + $0x2c] sm:$0xf]
        %v4042 = vld [vmem:[#allocation20 + $0x30] sm:$0xf]
        %v4043 = vld [vmem:[#allocation20 + $0x34] sm:$0xf]
        %v4044 = vld [vmem:[#allocation20 + $0x38] sm:$0xf]
        %v4045 = vld [vmem:[#allocation20 + $0x3c] sm:$0xf]
        %v4046 = vld [vmem:[%s49] sm:$0x1]
        %v4048 = vperm.slane %v4046, 0
        %v4066 = vunpack.c.l.b16 %v4030
        %v4067 = vunpack.c.l.b16 %v4031
        %v4068 = vunpack.c.l.b16 %v4032
        %v4069 = vunpack.c.l.b16 %v4033
        %v4070 = vunpack.c.l.b16 %v4034
        %v4071 = vunpack.c.l.b16 %v4035
        %v4072 = vunpack.c.l.b16 %v4036
        %v4073 = vunpack.c.l.b16 %v4037
        %v4074 = vunpack.c.l.b16 %v4038
        %v4075 = vunpack.c.l.b16 %v4039
        %v4076 = vunpack.c.l.b16 %v4040
        %v4077 = vunpack.c.l.b16 %v4041
        %v4078 = vunpack.c.l.b16 %v4042
        %v4079 = vunpack.c.l.b16 %v4043
        %v4080 = vunpack.c.l.b16 %v4044
        %v4081 = vunpack.c.l.b16 %v4045
        %v4082 = vpack.c.b16 %v4067, %v4066
        %v4083 = vpack.c.b16 %v4069, %v4068
        %v4084 = vpack.c.b16 %v4071, %v4070
        %v4085 = vpack.c.b16 %v4073, %v4072
        %v4086 = vpack.c.b16 %v4075, %v4074
        %v4087 = vpack.c.b16 %v4077, %v4076
        %v4088 = vpack.c.b16 %v4079, %v4078
        %v4089 = vpack.c.b16 %v4081, %v4080
        %4098 = vmatpush.bf16.msra.mxu0 %v4089
        %4099 = vmatpush.bf16.msra.mxu0 %v4088
        %4100 = vmatpush.bf16.msra.mxu0 %v4087
        %4101 = vmatpush.bf16.msra.mxu0 %v4086
        %4102 = vmatpush.bf16.msra.mxu0 %v4085
        %4103 = vmatpush.bf16.msra.mxu0 %v4084
        %4104 = vmatpush.bf16.msra.mxu0 %v4083
        %4105 = vmatpush.bf16.msra.mxu0 %v4082
        %4106 = vmatmul.bf16.gmra.mxu0 %v4014
        %v4107 = vpop.f32.mrf.mxu0
        %v4108 = vadd.f32 %v4048, %v4107
        %v4109 = vpop.f32.mrf.mxu0
        %v4110 = vadd.f32 %v4048, %v4109
        %4111 = vmatmul.bf16.gmra.mxu0 %v4015
        %v4112 = vpop.f32.mrf.mxu0
        %v4113 = vadd.f32 %v4048, %v4112
        %v4114 = vpop.f32.mrf.mxu0
        %v4115 = vadd.f32 %v4048, %v4114
        %4116 = vmatmul.bf16.gmra.mxu0 %v4016
        %v4117 = vpop.f32.mrf.mxu0
        %v4118 = vadd.f32 %v4048, %v4117
        %v4119 = vpop.f32.mrf.mxu0
        %v4120 = vadd.f32 %v4048, %v4119
        %4121 = vmatmul.bf16.gmra.mxu0 %v4017
        %v4122 = vpop.f32.mrf.mxu0
        %v4123 = vadd.f32 %v4048, %v4122
        %v4124 = vpop.f32.mrf.mxu0
        %v4125 = vadd.f32 %v4048, %v4124
        %4126 = vmatmul.bf16.gmra.mxu0 %v4018
        %v4127 = vpop.f32.mrf.mxu0
        %v4128 = vadd.f32 %v4048, %v4127
        %v4129 = vpop.f32.mrf.mxu0
        %v4130 = vadd.f32 %v4048, %v4129
        %4131 = vmatmul.bf16.gmra.mxu0 %v4019
        %v4132 = vpop.f32.mrf.mxu0
        %v4133 = vadd.f32 %v4048, %v4132
        %v4134 = vpop.f32.mrf.mxu0
        %v4135 = vadd.f32 %v4048, %v4134
        %4136 = vmatmul.bf16.gmra.mxu0 %v4020
        %v4137 = vpop.f32.mrf.mxu0
        %v4138 = vadd.f32 %v4048, %v4137
        %v4139 = vpop.f32.mrf.mxu0
        %v4140 = vadd.f32 %v4048, %v4139
        %4141 = vmatmul.bf16.gmra.mxu0 %v4021
        %v4142 = vpop.f32.mrf.mxu0
        %v4143 = vadd.f32 %v4048, %v4142
        %v4144 = vpop.f32.mrf.mxu0
        %v4145 = vadd.f32 %v4048, %v4144
        %4146 = vmatmul.bf16.gmra.mxu0 %v4022
        %v4147 = vpop.f32.mrf.mxu0
        %v4148 = vadd.f32 %v4048, %v4147
        %v4149 = vpop.f32.mrf.mxu0
        %v4150 = vadd.f32 %v4048, %v4149
        %4151 = vmatmul.bf16.gmra.mxu0 %v4023
        %v4152 = vpop.f32.mrf.mxu0
        %v4153 = vadd.f32 %v4048, %v4152
        %v4154 = vpop.f32.mrf.mxu0
        %v4155 = vadd.f32 %v4048, %v4154
        %4156 = vmatmul.bf16.gmra.mxu0 %v4024
        %v4157 = vpop.f32.mrf.mxu0
        %v4158 = vadd.f32 %v4048, %v4157
        %v4159 = vpop.f32.mrf.mxu0
        %v4160 = vadd.f32 %v4048, %v4159
        %4161 = vmatmul.bf16.gmra.mxu0 %v4025
        %v4162 = vpop.f32.mrf.mxu0
        %v4163 = vadd.f32 %v4048, %v4162
        %v4164 = vpop.f32.mrf.mxu0
        %v4165 = vadd.f32 %v4048, %v4164
        %4166 = vmatmul.bf16.gmra.mxu0 %v4026
        %v4167 = vpop.f32.mrf.mxu0
        %v4168 = vadd.f32 %v4048, %v4167
        %v4169 = vpop.f32.mrf.mxu0
        %v4170 = vadd.f32 %v4048, %v4169
        %4171 = vmatmul.bf16.gmra.mxu0 %v4027
        %v4172 = vpop.f32.mrf.mxu0
        %v4173 = vadd.f32 %v4048, %v4172
        %v4174 = vpop.f32.mrf.mxu0
        %v4175 = vadd.f32 %v4048, %v4174
        %4176 = vmatmul.bf16.gmra.mxu0 %v4028
        %v4177 = vpop.f32.mrf.mxu0
        %v4178 = vadd.f32 %v4048, %v4177
        %v4179 = vpop.f32.mrf.mxu0
        %v4180 = vadd.f32 %v4048, %v4179
        %4181 = vmatmul.bf16.gmra.mxu0 %v4029
        %v4182 = vpop.f32.mrf.mxu0
        %v4183 = vadd.f32 %v4048, %v4182
        %v4184 = vpop.f32.mrf.mxu0
        %v4185 = vadd.f32 %v4048, %v4184
        %4186 = vdwg.mxu0
        %v4187 = vmax.f32 %v4108, 0.0
        %v4188 = vmax.f32 %v4110, 0.0
        %v4189 = vmax.f32 %v4113, 0.0
        %v4190 = vmax.f32 %v4115, 0.0
        %v4191 = vmax.f32 %v4118, 0.0
        %v4192 = vmax.f32 %v4120, 0.0
        %v4193 = vmax.f32 %v4123, 0.0
        %v4194 = vmax.f32 %v4125, 0.0
        %v4195 = vmax.f32 %v4128, 0.0
        %v4196 = vmax.f32 %v4130, 0.0
        %v4197 = vmax.f32 %v4133, 0.0
        %v4198 = vmax.f32 %v4135, 0.0
        %v4199 = vmax.f32 %v4138, 0.0
        %v4200 = vmax.f32 %v4140, 0.0
        %v4201 = vmax.f32 %v4143, 0.0
        %v4202 = vmax.f32 %v4145, 0.0
        %v4203 = vmax.f32 %v4148, 0.0
        %v4204 = vmax.f32 %v4150, 0.0
        %v4205 = vmax.f32 %v4153, 0.0
        %v4206 = vmax.f32 %v4155, 0.0
        %v4207 = vmax.f32 %v4158, 0.0
        %v4208 = vmax.f32 %v4160, 0.0
        %v4209 = vmax.f32 %v4163, 0.0
        %v4210 = vmax.f32 %v4165, 0.0
        %v4211 = vmax.f32 %v4168, 0.0
        %v4212 = vmax.f32 %v4170, 0.0
        %v4213 = vmax.f32 %v4173, 0.0
        %v4214 = vmax.f32 %v4175, 0.0
        %v4215 = vmax.f32 %v4178, 0.0
        %v4216 = vmax.f32 %v4180, 0.0
        %v4217 = vmax.f32 %v4183, 0.0
        %v4218 = vmax.f32 %v4185, 0.0
        %v4219 = vpack.c.bf16 %v4188, %v4187
        %v4220 = vpack.c.bf16 %v4190, %v4189
        %v4221 = vpack.c.bf16 %v4192, %v4191
        %v4222 = vpack.c.bf16 %v4194, %v4193
        %v4223 = vpack.c.bf16 %v4196, %v4195
        %v4224 = vpack.c.bf16 %v4198, %v4197
        %v4225 = vpack.c.bf16 %v4200, %v4199
        %v4226 = vpack.c.bf16 %v4202, %v4201
        %v4227 = vpack.c.bf16 %v4204, %v4203
        %v4228 = vpack.c.bf16 %v4206, %v4205
        %v4229 = vpack.c.bf16 %v4208, %v4207
        %v4230 = vpack.c.bf16 %v4210, %v4209
        %v4231 = vpack.c.bf16 %v4212, %v4211
        %v4232 = vpack.c.bf16 %v4214, %v4213
        %v4233 = vpack.c.bf16 %v4216, %v4215
        %v4234 = vpack.c.bf16 %v4218, %v4217
        %v4235 = vld [vmem:[#allocation22] sm:$0xf]
        %v4236 = vld [vmem:[#allocation22 + $0x4] sm:$0xf]
        %v4237 = vld [vmem:[#allocation22 + $0x8] sm:$0xf]
        %v4238 = vld [vmem:[#allocation22 + $0xc] sm:$0xf]
        %v4239 = vld [vmem:[#allocation22 + $0x10] sm:$0xf]
        %v4240 = vld [vmem:[#allocation22 + $0x14] sm:$0xf]
        %v4241 = vld [vmem:[#allocation22 + $0x18] sm:$0xf]
        %v4242 = vld [vmem:[#allocation22 + $0x1c] sm:$0xf]
        %v4243 = vld [vmem:[#allocation22 + $0x20] sm:$0xf]
        %v4244 = vld [vmem:[#allocation22 + $0x24] sm:$0xf]
        %v4245 = vld [vmem:[#allocation22 + $0x28] sm:$0xf]
        %v4246 = vld [vmem:[#allocation22 + $0x2c] sm:$0xf]
        %v4247 = vld [vmem:[#allocation22 + $0x30] sm:$0xf]
        %v4248 = vld [vmem:[#allocation22 + $0x34] sm:$0xf]
        %v4249 = vld [vmem:[#allocation22 + $0x38] sm:$0xf]
        %v4250 = vld [vmem:[#allocation22 + $0x3c] sm:$0xf]
        %v4251 = vld [vmem:[%s53] sm:$0x1]
        %v4253 = vperm.slane %v4251, 0
        %v4271 = vunpack.c.l.b16 %v4235
        %v4272 = vunpack.c.l.b16 %v4236
        %v4273 = vunpack.c.l.b16 %v4237
        %v4274 = vunpack.c.l.b16 %v4238
        %v4275 = vunpack.c.l.b16 %v4239
        %v4276 = vunpack.c.l.b16 %v4240
        %v4277 = vunpack.c.l.b16 %v4241
        %v4278 = vunpack.c.l.b16 %v4242
        %v4279 = vunpack.c.l.b16 %v4243
        %v4280 = vunpack.c.l.b16 %v4244
        %v4281 = vunpack.c.l.b16 %v4245
        %v4282 = vunpack.c.l.b16 %v4246
        %v4283 = vunpack.c.l.b16 %v4247
        %v4284 = vunpack.c.l.b16 %v4248
        %v4285 = vunpack.c.l.b16 %v4249
        %v4286 = vunpack.c.l.b16 %v4250
        %v4287 = vpack.c.b16 %v4272, %v4271
        %v4288 = vpack.c.b16 %v4274, %v4273
        %v4289 = vpack.c.b16 %v4276, %v4275
        %v4290 = vpack.c.b16 %v4278, %v4277
        %v4291 = vpack.c.b16 %v4280, %v4279
        %v4292 = vpack.c.b16 %v4282, %v4281
        %v4293 = vpack.c.b16 %v4284, %v4283
        %v4294 = vpack.c.b16 %v4286, %v4285
        %4303 = vmatpush.bf16.msra.mxu0 %v4294
        %4304 = vmatpush.bf16.msra.mxu0 %v4293
        %4305 = vmatpush.bf16.msra.mxu0 %v4292
        %4306 = vmatpush.bf16.msra.mxu0 %v4291
        %4307 = vmatpush.bf16.msra.mxu0 %v4290
        %4308 = vmatpush.bf16.msra.mxu0 %v4289
        %4309 = vmatpush.bf16.msra.mxu0 %v4288
        %4310 = vmatpush.bf16.msra.mxu0 %v4287
        %4311 = vmatmul.bf16.gmra.mxu0 %v4219
        %v4312 = vpop.f32.mrf.mxu0
        %v4313 = vadd.f32 %v4253, %v4312
        %v4314 = vpop.f32.mrf.mxu0
        %v4315 = vadd.f32 %v4253, %v4314
        %4316 = vmatmul.bf16.gmra.mxu0 %v4220
        %v4317 = vpop.f32.mrf.mxu0
        %v4318 = vadd.f32 %v4253, %v4317
        %v4319 = vpop.f32.mrf.mxu0
        %v4320 = vadd.f32 %v4253, %v4319
        %4321 = vmatmul.bf16.gmra.mxu0 %v4221
        %v4322 = vpop.f32.mrf.mxu0
        %v4323 = vadd.f32 %v4253, %v4322
        %v4324 = vpop.f32.mrf.mxu0
        %v4325 = vadd.f32 %v4253, %v4324
        %4326 = vmatmul.bf16.gmra.mxu0 %v4222
        %v4327 = vpop.f32.mrf.mxu0
        %v4328 = vadd.f32 %v4253, %v4327
        %v4329 = vpop.f32.mrf.mxu0
        %v4330 = vadd.f32 %v4253, %v4329
        %4331 = vmatmul.bf16.gmra.mxu0 %v4223
        %v4332 = vpop.f32.mrf.mxu0
        %v4333 = vadd.f32 %v4253, %v4332
        %v4334 = vpop.f32.mrf.mxu0
        %v4335 = vadd.f32 %v4253, %v4334
        %4336 = vmatmul.bf16.gmra.mxu0 %v4224
        %v4337 = vpop.f32.mrf.mxu0
        %v4338 = vadd.f32 %v4253, %v4337
        %v4339 = vpop.f32.mrf.mxu0
        %v4340 = vadd.f32 %v4253, %v4339
        %4341 = vmatmul.bf16.gmra.mxu0 %v4225
        %v4342 = vpop.f32.mrf.mxu0
        %v4343 = vadd.f32 %v4253, %v4342
        %v4344 = vpop.f32.mrf.mxu0
        %v4345 = vadd.f32 %v4253, %v4344
        %4346 = vmatmul.bf16.gmra.mxu0 %v4226
        %v4347 = vpop.f32.mrf.mxu0
        %v4348 = vadd.f32 %v4253, %v4347
        %v4349 = vpop.f32.mrf.mxu0
        %v4350 = vadd.f32 %v4253, %v4349
        %4351 = vmatmul.bf16.gmra.mxu0 %v4227
        %v4352 = vpop.f32.mrf.mxu0
        %v4353 = vadd.f32 %v4253, %v4352
        %v4354 = vpop.f32.mrf.mxu0
        %v4355 = vadd.f32 %v4253, %v4354
        %4356 = vmatmul.bf16.gmra.mxu0 %v4228
        %v4357 = vpop.f32.mrf.mxu0
        %v4358 = vadd.f32 %v4253, %v4357
        %v4359 = vpop.f32.mrf.mxu0
        %v4360 = vadd.f32 %v4253, %v4359
        %4361 = vmatmul.bf16.gmra.mxu0 %v4229
        %v4362 = vpop.f32.mrf.mxu0
        %v4363 = vadd.f32 %v4253, %v4362
        %v4364 = vpop.f32.mrf.mxu0
        %v4365 = vadd.f32 %v4253, %v4364
        %4366 = vmatmul.bf16.gmra.mxu0 %v4230
        %v4367 = vpop.f32.mrf.mxu0
        %v4368 = vadd.f32 %v4253, %v4367
        %v4369 = vpop.f32.mrf.mxu0
        %v4370 = vadd.f32 %v4253, %v4369
        %4371 = vmatmul.bf16.gmra.mxu0 %v4231
        %v4372 = vpop.f32.mrf.mxu0
        %v4373 = vadd.f32 %v4253, %v4372
        %v4374 = vpop.f32.mrf.mxu0
        %v4375 = vadd.f32 %v4253, %v4374
        %4376 = vmatmul.bf16.gmra.mxu0 %v4232
        %v4377 = vpop.f32.mrf.mxu0
        %v4378 = vadd.f32 %v4253, %v4377
        %v4379 = vpop.f32.mrf.mxu0
        %v4380 = vadd.f32 %v4253, %v4379
        %4381 = vmatmul.bf16.gmra.mxu0 %v4233
        %v4382 = vpop.f32.mrf.mxu0
        %v4383 = vadd.f32 %v4253, %v4382
        %v4384 = vpop.f32.mrf.mxu0
        %v4385 = vadd.f32 %v4253, %v4384
        %4386 = vmatmul.bf16.gmra.mxu0 %v4234
        %v4387 = vpop.f32.mrf.mxu0
        %v4388 = vadd.f32 %v4253, %v4387
        %v4389 = vpop.f32.mrf.mxu0
        %v4390 = vadd.f32 %v4253, %v4389
        %4391 = vdwg.mxu0
        %v4392 = vadd.f32 %v3903, %v4313
        %v4393 = vadd.f32 %v3905, %v4315
        %v4394 = vadd.f32 %v3908, %v4318
        %v4395 = vadd.f32 %v3910, %v4320
        %v4396 = vadd.f32 %v3913, %v4323
        %v4397 = vadd.f32 %v3915, %v4325
        %v4398 = vadd.f32 %v3918, %v4328
        %v4399 = vadd.f32 %v3920, %v4330
        %v4400 = vadd.f32 %v3923, %v4333
        %v4401 = vadd.f32 %v3925, %v4335
        %v4402 = vadd.f32 %v3928, %v4338
        %v4403 = vadd.f32 %v3930, %v4340
        %v4404 = vadd.f32 %v3933, %v4343
        %v4405 = vadd.f32 %v3935, %v4345
        %v4406 = vadd.f32 %v3938, %v4348
        %v4407 = vadd.f32 %v3940, %v4350
        %v4408 = vadd.f32 %v3943, %v4353
        %v4409 = vadd.f32 %v3945, %v4355
        %v4410 = vadd.f32 %v3948, %v4358
        %v4411 = vadd.f32 %v3950, %v4360
        %v4412 = vadd.f32 %v3953, %v4363
        %v4413 = vadd.f32 %v3955, %v4365
        %v4414 = vadd.f32 %v3958, %v4368
        %v4415 = vadd.f32 %v3960, %v4370
        %v4416 = vadd.f32 %v3963, %v4373
        %v4417 = vadd.f32 %v3965, %v4375
        %v4418 = vadd.f32 %v3968, %v4378
        %v4419 = vadd.f32 %v3970, %v4380
        %v4420 = vadd.f32 %v3973, %v4383
        %v4421 = vadd.f32 %v3975, %v4385
        %v4422 = vadd.f32 %v3978, %v4388
        %v4423 = vadd.f32 %v3980, %v4390
        %v4424 = vmax.f32 %v4392, 0.0
        %v4425 = vmax.f32 %v4393, 0.0
        %v4426 = vmax.f32 %v4394, 0.0
        %v4427 = vmax.f32 %v4395, 0.0
        %v4428 = vmax.f32 %v4396, 0.0
        %v4429 = vmax.f32 %v4397, 0.0
        %v4430 = vmax.f32 %v4398, 0.0
        %v4431 = vmax.f32 %v4399, 0.0
        %v4432 = vmax.f32 %v4400, 0.0
        %v4433 = vmax.f32 %v4401, 0.0
        %v4434 = vmax.f32 %v4402, 0.0
        %v4435 = vmax.f32 %v4403, 0.0
        %v4436 = vmax.f32 %v4404, 0.0
        %v4437 = vmax.f32 %v4405, 0.0
        %v4438 = vmax.f32 %v4406, 0.0
        %v4439 = vmax.f32 %v4407, 0.0
        %v4440 = vmax.f32 %v4408, 0.0
        %v4441 = vmax.f32 %v4409, 0.0
        %v4442 = vmax.f32 %v4410, 0.0
        %v4443 = vmax.f32 %v4411, 0.0
        %v4444 = vmax.f32 %v4412, 0.0
        %v4445 = vmax.f32 %v4413, 0.0
        %v4446 = vmax.f32 %v4414, 0.0
        %v4447 = vmax.f32 %v4415, 0.0
        %v4448 = vmax.f32 %v4416, 0.0
        %v4449 = vmax.f32 %v4417, 0.0
        %v4450 = vmax.f32 %v4418, 0.0
        %v4451 = vmax.f32 %v4419, 0.0
        %v4452 = vmax.f32 %v4420, 0.0
        %v4453 = vmax.f32 %v4421, 0.0
        %v4454 = vmax.f32 %v4422, 0.0
        %v4455 = vmax.f32 %v4423, 0.0
        %v4456 = vpack.c.bf16 %v4425, %v4424
        %v4457 = vpack.c.bf16 %v4427, %v4426
        %v4458 = vpack.c.bf16 %v4429, %v4428
        %v4459 = vpack.c.bf16 %v4431, %v4430
        %v4460 = vpack.c.bf16 %v4433, %v4432
        %v4461 = vpack.c.bf16 %v4435, %v4434
        %v4462 = vpack.c.bf16 %v4437, %v4436
        %v4463 = vpack.c.bf16 %v4439, %v4438
        %v4464 = vpack.c.bf16 %v4441, %v4440
        %v4465 = vpack.c.bf16 %v4443, %v4442
        %v4466 = vpack.c.bf16 %v4445, %v4444
        %v4467 = vpack.c.bf16 %v4447, %v4446
        %v4468 = vpack.c.bf16 %v4449, %v4448
        %v4469 = vpack.c.bf16 %v4451, %v4450
        %v4470 = vpack.c.bf16 %v4453, %v4452
        %v4471 = vpack.c.bf16 %v4455, %v4454
        %v4472 = vld [vmem:[#allocation23] sm:$0xf]
        %v4473 = vld [vmem:[#allocation23 + $0x4] sm:$0xf]
        %v4474 = vld [vmem:[#allocation23 + $0x8] sm:$0xf]
        %v4475 = vld [vmem:[#allocation23 + $0xc] sm:$0xf]
        %v4476 = vld [vmem:[#allocation23 + $0x10] sm:$0xf]
        %v4477 = vld [vmem:[#allocation23 + $0x14] sm:$0xf]
        %v4478 = vld [vmem:[#allocation23 + $0x18] sm:$0xf]
        %v4479 = vld [vmem:[#allocation23 + $0x1c] sm:$0xf]
        %v4480 = vld [vmem:[#allocation23 + $0x20] sm:$0xf]
        %v4481 = vld [vmem:[#allocation23 + $0x24] sm:$0xf]
        %v4482 = vld [vmem:[#allocation23 + $0x28] sm:$0xf]
        %v4483 = vld [vmem:[#allocation23 + $0x2c] sm:$0xf]
        %v4484 = vld [vmem:[#allocation23 + $0x30] sm:$0xf]
        %v4485 = vld [vmem:[#allocation23 + $0x34] sm:$0xf]
        %v4486 = vld [vmem:[#allocation23 + $0x38] sm:$0xf]
        %v4487 = vld [vmem:[#allocation23 + $0x3c] sm:$0xf]
        %v4488 = vld [vmem:[%s57] sm:$0x1]
        %v4490 = vperm.slane %v4488, 0
        %v4508 = vunpack.c.l.b16 %v4472
        %v4509 = vunpack.c.l.b16 %v4473
        %v4510 = vunpack.c.l.b16 %v4474
        %v4511 = vunpack.c.l.b16 %v4475
        %v4512 = vunpack.c.l.b16 %v4476
        %v4513 = vunpack.c.l.b16 %v4477
        %v4514 = vunpack.c.l.b16 %v4478
        %v4515 = vunpack.c.l.b16 %v4479
        %v4516 = vunpack.c.l.b16 %v4480
        %v4517 = vunpack.c.l.b16 %v4481
        %v4518 = vunpack.c.l.b16 %v4482
        %v4519 = vunpack.c.l.b16 %v4483
        %v4520 = vunpack.c.l.b16 %v4484
        %v4521 = vunpack.c.l.b16 %v4485
        %v4522 = vunpack.c.l.b16 %v4486
        %v4523 = vunpack.c.l.b16 %v4487
        %v4524 = vpack.c.b16 %v4509, %v4508
        %v4525 = vpack.c.b16 %v4511, %v4510
        %v4526 = vpack.c.b16 %v4513, %v4512
        %v4527 = vpack.c.b16 %v4515, %v4514
        %v4528 = vpack.c.b16 %v4517, %v4516
        %v4529 = vpack.c.b16 %v4519, %v4518
        %v4530 = vpack.c.b16 %v4521, %v4520
        %v4531 = vpack.c.b16 %v4523, %v4522
        %4540 = vmatpush.bf16.msra.mxu0 %v4531
        %4541 = vmatpush.bf16.msra.mxu0 %v4530
        %4542 = vmatpush.bf16.msra.mxu0 %v4529
        %4543 = vmatpush.bf16.msra.mxu0 %v4528
        %4544 = vmatpush.bf16.msra.mxu0 %v4527
        %4545 = vmatpush.bf16.msra.mxu0 %v4526
        %4546 = vmatpush.bf16.msra.mxu0 %v4525
        %4547 = vmatpush.bf16.msra.mxu0 %v4524
        %4548 = vmatmul.bf16.gmra.mxu0 %v4456
        %v4549 = vpop.f32.mrf.mxu0
        %v4550 = vadd.f32 %v4490, %v4549
        %v4551 = vpop.f32.mrf.mxu0
        %v4552 = vadd.f32 %v4490, %v4551
        %4553 = vmatmul.bf16.gmra.mxu0 %v4457
        %v4554 = vpop.f32.mrf.mxu0
        %v4555 = vadd.f32 %v4490, %v4554
        %v4556 = vpop.f32.mrf.mxu0
        %v4557 = vadd.f32 %v4490, %v4556
        %4558 = vmatmul.bf16.gmra.mxu0 %v4458
        %v4559 = vpop.f32.mrf.mxu0
        %v4560 = vadd.f32 %v4490, %v4559
        %v4561 = vpop.f32.mrf.mxu0
        %v4562 = vadd.f32 %v4490, %v4561
        %4563 = vmatmul.bf16.gmra.mxu0 %v4459
        %v4564 = vpop.f32.mrf.mxu0
        %v4565 = vadd.f32 %v4490, %v4564
        %v4566 = vpop.f32.mrf.mxu0
        %v4567 = vadd.f32 %v4490, %v4566
        %4568 = vmatmul.bf16.gmra.mxu0 %v4460
        %v4569 = vpop.f32.mrf.mxu0
        %v4570 = vadd.f32 %v4490, %v4569
        %v4571 = vpop.f32.mrf.mxu0
        %v4572 = vadd.f32 %v4490, %v4571
        %4573 = vmatmul.bf16.gmra.mxu0 %v4461
        %v4574 = vpop.f32.mrf.mxu0
        %v4575 = vadd.f32 %v4490, %v4574
        %v4576 = vpop.f32.mrf.mxu0
        %v4577 = vadd.f32 %v4490, %v4576
        %4578 = vmatmul.bf16.gmra.mxu0 %v4462
        %v4579 = vpop.f32.mrf.mxu0
        %v4580 = vadd.f32 %v4490, %v4579
        %v4581 = vpop.f32.mrf.mxu0
        %v4582 = vadd.f32 %v4490, %v4581
        %4583 = vmatmul.bf16.gmra.mxu0 %v4463
        %v4584 = vpop.f32.mrf.mxu0
        %v4585 = vadd.f32 %v4490, %v4584
        %v4586 = vpop.f32.mrf.mxu0
        %v4587 = vadd.f32 %v4490, %v4586
        %4588 = vmatmul.bf16.gmra.mxu0 %v4464
        %v4589 = vpop.f32.mrf.mxu0
        %v4590 = vadd.f32 %v4490, %v4589
        %v4591 = vpop.f32.mrf.mxu0
        %v4592 = vadd.f32 %v4490, %v4591
        %4593 = vmatmul.bf16.gmra.mxu0 %v4465
        %v4594 = vpop.f32.mrf.mxu0
        %v4595 = vadd.f32 %v4490, %v4594
        %v4596 = vpop.f32.mrf.mxu0
        %v4597 = vadd.f32 %v4490, %v4596
        %4598 = vmatmul.bf16.gmra.mxu0 %v4466
        %v4599 = vpop.f32.mrf.mxu0
        %v4600 = vadd.f32 %v4490, %v4599
        %v4601 = vpop.f32.mrf.mxu0
        %v4602 = vadd.f32 %v4490, %v4601
        %4603 = vmatmul.bf16.gmra.mxu0 %v4467
        %v4604 = vpop.f32.mrf.mxu0
        %v4605 = vadd.f32 %v4490, %v4604
        %v4606 = vpop.f32.mrf.mxu0
        %v4607 = vadd.f32 %v4490, %v4606
        %4608 = vmatmul.bf16.gmra.mxu0 %v4468
        %v4609 = vpop.f32.mrf.mxu0
        %v4610 = vadd.f32 %v4490, %v4609
        %v4611 = vpop.f32.mrf.mxu0
        %v4612 = vadd.f32 %v4490, %v4611
        %4613 = vmatmul.bf16.gmra.mxu0 %v4469
        %v4614 = vpop.f32.mrf.mxu0
        %v4615 = vadd.f32 %v4490, %v4614
        %v4616 = vpop.f32.mrf.mxu0
        %v4617 = vadd.f32 %v4490, %v4616
        %4618 = vmatmul.bf16.gmra.mxu0 %v4470
        %v4619 = vpop.f32.mrf.mxu0
        %v4620 = vadd.f32 %v4490, %v4619
        %v4621 = vpop.f32.mrf.mxu0
        %v4622 = vadd.f32 %v4490, %v4621
        %4623 = vmatmul.bf16.gmra.mxu0 %v4471
        %v4624 = vpop.f32.mrf.mxu0
        %v4625 = vadd.f32 %v4490, %v4624
        %v4626 = vpop.f32.mrf.mxu0
        %v4627 = vadd.f32 %v4490, %v4626
        %4628 = vdwg.mxu0
        %v4629 = vmax.f32 %v4550, 0.0
        %v4630 = vmax.f32 %v4552, 0.0
        %v4631 = vmax.f32 %v4555, 0.0
        %v4632 = vmax.f32 %v4557, 0.0
        %v4633 = vmax.f32 %v4560, 0.0
        %v4634 = vmax.f32 %v4562, 0.0
        %v4635 = vmax.f32 %v4565, 0.0
        %v4636 = vmax.f32 %v4567, 0.0
        %v4637 = vmax.f32 %v4570, 0.0
        %v4638 = vmax.f32 %v4572, 0.0
        %v4639 = vmax.f32 %v4575, 0.0
        %v4640 = vmax.f32 %v4577, 0.0
        %v4641 = vmax.f32 %v4580, 0.0
        %v4642 = vmax.f32 %v4582, 0.0
        %v4643 = vmax.f32 %v4585, 0.0
        %v4644 = vmax.f32 %v4587, 0.0
        %v4645 = vmax.f32 %v4590, 0.0
        %v4646 = vmax.f32 %v4592, 0.0
        %v4647 = vmax.f32 %v4595, 0.0
        %v4648 = vmax.f32 %v4597, 0.0
        %v4649 = vmax.f32 %v4600, 0.0
        %v4650 = vmax.f32 %v4602, 0.0
        %v4651 = vmax.f32 %v4605, 0.0
        %v4652 = vmax.f32 %v4607, 0.0
        %v4653 = vmax.f32 %v4610, 0.0
        %v4654 = vmax.f32 %v4612, 0.0
        %v4655 = vmax.f32 %v4615, 0.0
        %v4656 = vmax.f32 %v4617, 0.0
        %v4657 = vmax.f32 %v4620, 0.0
        %v4658 = vmax.f32 %v4622, 0.0
        %v4659 = vmax.f32 %v4625, 0.0
        %v4660 = vmax.f32 %v4627, 0.0
        %v4661 = vpack.c.bf16 %v4630, %v4629
        %v4662 = vpack.c.bf16 %v4632, %v4631
        %v4663 = vpack.c.bf16 %v4634, %v4633
        %v4664 = vpack.c.bf16 %v4636, %v4635
        %v4665 = vpack.c.bf16 %v4638, %v4637
        %v4666 = vpack.c.bf16 %v4640, %v4639
        %v4667 = vpack.c.bf16 %v4642, %v4641
        %v4668 = vpack.c.bf16 %v4644, %v4643
        %v4669 = vpack.c.bf16 %v4646, %v4645
        %v4670 = vpack.c.bf16 %v4648, %v4647
        %v4671 = vpack.c.bf16 %v4650, %v4649
        %v4672 = vpack.c.bf16 %v4652, %v4651
        %v4673 = vpack.c.bf16 %v4654, %v4653
        %v4674 = vpack.c.bf16 %v4656, %v4655
        %v4675 = vpack.c.bf16 %v4658, %v4657
        %v4676 = vpack.c.bf16 %v4660, %v4659
        %v4677 = vld [vmem:[#allocation25] sm:$0xf]
        %v4678 = vld [vmem:[#allocation25 + $0x4] sm:$0xf]
        %v4679 = vld [vmem:[#allocation25 + $0x8] sm:$0xf]
        %v4680 = vld [vmem:[#allocation25 + $0xc] sm:$0xf]
        %v4681 = vld [vmem:[#allocation25 + $0x10] sm:$0xf]
        %v4682 = vld [vmem:[#allocation25 + $0x14] sm:$0xf]
        %v4683 = vld [vmem:[#allocation25 + $0x18] sm:$0xf]
        %v4684 = vld [vmem:[#allocation25 + $0x1c] sm:$0xf]
        %v4685 = vld [vmem:[#allocation25 + $0x20] sm:$0xf]
        %v4686 = vld [vmem:[#allocation25 + $0x24] sm:$0xf]
        %v4687 = vld [vmem:[#allocation25 + $0x28] sm:$0xf]
        %v4688 = vld [vmem:[#allocation25 + $0x2c] sm:$0xf]
        %v4689 = vld [vmem:[#allocation25 + $0x30] sm:$0xf]
        %v4690 = vld [vmem:[#allocation25 + $0x34] sm:$0xf]
        %v4691 = vld [vmem:[#allocation25 + $0x38] sm:$0xf]
        %v4692 = vld [vmem:[#allocation25 + $0x3c] sm:$0xf]
        %v4693 = vld [vmem:[%s61] sm:$0x1]
        %v4695 = vperm.slane %v4693, 0
        %v4713 = vunpack.c.l.b16 %v4677
        %v4714 = vunpack.c.l.b16 %v4678
        %v4715 = vunpack.c.l.b16 %v4679
        %v4716 = vunpack.c.l.b16 %v4680
        %v4717 = vunpack.c.l.b16 %v4681
        %v4718 = vunpack.c.l.b16 %v4682
        %v4719 = vunpack.c.l.b16 %v4683
        %v4720 = vunpack.c.l.b16 %v4684
        %v4721 = vunpack.c.l.b16 %v4685
        %v4722 = vunpack.c.l.b16 %v4686
        %v4723 = vunpack.c.l.b16 %v4687
        %v4724 = vunpack.c.l.b16 %v4688
        %v4725 = vunpack.c.l.b16 %v4689
        %v4726 = vunpack.c.l.b16 %v4690
        %v4727 = vunpack.c.l.b16 %v4691
        %v4728 = vunpack.c.l.b16 %v4692
        %v4729 = vpack.c.b16 %v4714, %v4713
        %v4730 = vpack.c.b16 %v4716, %v4715
        %v4731 = vpack.c.b16 %v4718, %v4717
        %v4732 = vpack.c.b16 %v4720, %v4719
        %v4733 = vpack.c.b16 %v4722, %v4721
        %v4734 = vpack.c.b16 %v4724, %v4723
        %v4735 = vpack.c.b16 %v4726, %v4725
        %v4736 = vpack.c.b16 %v4728, %v4727
        %4745 = vmatpush.bf16.msra.mxu0 %v4736
        %4746 = vmatpush.bf16.msra.mxu0 %v4735
        %4747 = vmatpush.bf16.msra.mxu0 %v4734
        %4748 = vmatpush.bf16.msra.mxu0 %v4733
        %4749 = vmatpush.bf16.msra.mxu0 %v4732
        %4750 = vmatpush.bf16.msra.mxu0 %v4731
        %4751 = vmatpush.bf16.msra.mxu0 %v4730
        %4752 = vmatpush.bf16.msra.mxu0 %v4729
        %4753 = vmatmul.bf16.gmra.mxu0 %v4661
        %v4754 = vpop.f32.mrf.mxu0
        %v4755 = vadd.f32 %v4695, %v4754
        %v4756 = vpop.f32.mrf.mxu0
        %v4757 = vadd.f32 %v4695, %v4756
        %4758 = vmatmul.bf16.gmra.mxu0 %v4662
        %v4759 = vpop.f32.mrf.mxu0
        %v4760 = vadd.f32 %v4695, %v4759
        %v4761 = vpop.f32.mrf.mxu0
        %v4762 = vadd.f32 %v4695, %v4761
        %4763 = vmatmul.bf16.gmra.mxu0 %v4663
        %v4764 = vpop.f32.mrf.mxu0
        %v4765 = vadd.f32 %v4695, %v4764
        %v4766 = vpop.f32.mrf.mxu0
        %v4767 = vadd.f32 %v4695, %v4766
        %4768 = vmatmul.bf16.gmra.mxu0 %v4664
        %v4769 = vpop.f32.mrf.mxu0
        %v4770 = vadd.f32 %v4695, %v4769
        %v4771 = vpop.f32.mrf.mxu0
        %v4772 = vadd.f32 %v4695, %v4771
        %4773 = vmatmul.bf16.gmra.mxu0 %v4665
        %v4774 = vpop.f32.mrf.mxu0
        %v4775 = vadd.f32 %v4695, %v4774
        %v4776 = vpop.f32.mrf.mxu0
        %v4777 = vadd.f32 %v4695, %v4776
        %4778 = vmatmul.bf16.gmra.mxu0 %v4666
        %v4779 = vpop.f32.mrf.mxu0
        %v4780 = vadd.f32 %v4695, %v4779
        %v4781 = vpop.f32.mrf.mxu0
        %v4782 = vadd.f32 %v4695, %v4781
        %4783 = vmatmul.bf16.gmra.mxu0 %v4667
        %v4784 = vpop.f32.mrf.mxu0
        %v4785 = vadd.f32 %v4695, %v4784
        %v4786 = vpop.f32.mrf.mxu0
        %v4787 = vadd.f32 %v4695, %v4786
        %4788 = vmatmul.bf16.gmra.mxu0 %v4668
        %v4789 = vpop.f32.mrf.mxu0
        %v4790 = vadd.f32 %v4695, %v4789
        %v4791 = vpop.f32.mrf.mxu0
        %v4792 = vadd.f32 %v4695, %v4791
        %4793 = vmatmul.bf16.gmra.mxu0 %v4669
        %v4794 = vpop.f32.mrf.mxu0
        %v4795 = vadd.f32 %v4695, %v4794
        %v4796 = vpop.f32.mrf.mxu0
        %v4797 = vadd.f32 %v4695, %v4796
        %4798 = vmatmul.bf16.gmra.mxu0 %v4670
        %v4799 = vpop.f32.mrf.mxu0
        %v4800 = vadd.f32 %v4695, %v4799
        %v4801 = vpop.f32.mrf.mxu0
        %v4802 = vadd.f32 %v4695, %v4801
        %4803 = vmatmul.bf16.gmra.mxu0 %v4671
        %v4804 = vpop.f32.mrf.mxu0
        %v4805 = vadd.f32 %v4695, %v4804
        %v4806 = vpop.f32.mrf.mxu0
        %v4807 = vadd.f32 %v4695, %v4806
        %4808 = vmatmul.bf16.gmra.mxu0 %v4672
        %v4809 = vpop.f32.mrf.mxu0
        %v4810 = vadd.f32 %v4695, %v4809
        %v4811 = vpop.f32.mrf.mxu0
        %v4812 = vadd.f32 %v4695, %v4811
        %4813 = vmatmul.bf16.gmra.mxu0 %v4673
        %v4814 = vpop.f32.mrf.mxu0
        %v4815 = vadd.f32 %v4695, %v4814
        %v4816 = vpop.f32.mrf.mxu0
        %v4817 = vadd.f32 %v4695, %v4816
        %4818 = vmatmul.bf16.gmra.mxu0 %v4674
        %v4819 = vpop.f32.mrf.mxu0
        %v4820 = vadd.f32 %v4695, %v4819
        %v4821 = vpop.f32.mrf.mxu0
        %v4822 = vadd.f32 %v4695, %v4821
        %4823 = vmatmul.bf16.gmra.mxu0 %v4675
        %v4824 = vpop.f32.mrf.mxu0
        %v4825 = vadd.f32 %v4695, %v4824
        %v4826 = vpop.f32.mrf.mxu0
        %v4827 = vadd.f32 %v4695, %v4826
        %4828 = vmatmul.bf16.gmra.mxu0 %v4676
        %v4829 = vpop.f32.mrf.mxu0
        %v4830 = vadd.f32 %v4695, %v4829
        %v4831 = vpop.f32.mrf.mxu0
        %v4832 = vadd.f32 %v4695, %v4831
        %4833 = vdwg.mxu0
        %v4834 = vadd.f32 %v4392, %v4755
        %v4835 = vadd.f32 %v4393, %v4757
        %v4836 = vadd.f32 %v4394, %v4760
        %v4837 = vadd.f32 %v4395, %v4762
        %v4838 = vadd.f32 %v4396, %v4765
        %v4839 = vadd.f32 %v4397, %v4767
        %v4840 = vadd.f32 %v4398, %v4770
        %v4841 = vadd.f32 %v4399, %v4772
        %v4842 = vadd.f32 %v4400, %v4775
        %v4843 = vadd.f32 %v4401, %v4777
        %v4844 = vadd.f32 %v4402, %v4780
        %v4845 = vadd.f32 %v4403, %v4782
        %v4846 = vadd.f32 %v4404, %v4785
        %v4847 = vadd.f32 %v4405, %v4787
        %v4848 = vadd.f32 %v4406, %v4790
        %v4849 = vadd.f32 %v4407, %v4792
        %v4850 = vadd.f32 %v4408, %v4795
        %v4851 = vadd.f32 %v4409, %v4797
        %v4852 = vadd.f32 %v4410, %v4800
        %v4853 = vadd.f32 %v4411, %v4802
        %v4854 = vadd.f32 %v4412, %v4805
        %v4855 = vadd.f32 %v4413, %v4807
        %v4856 = vadd.f32 %v4414, %v4810
        %v4857 = vadd.f32 %v4415, %v4812
        %v4858 = vadd.f32 %v4416, %v4815
        %v4859 = vadd.f32 %v4417, %v4817
        %v4860 = vadd.f32 %v4418, %v4820
        %v4861 = vadd.f32 %v4419, %v4822
        %v4862 = vadd.f32 %v4420, %v4825
        %v4863 = vadd.f32 %v4421, %v4827
        %v4864 = vadd.f32 %v4422, %v4830
        %v4865 = vadd.f32 %v4423, %v4832
        %v4866 = vpack.c.bf16 %v4835, %v4834
        %v4867 = vpack.c.bf16 %v4837, %v4836
        %v4868 = vpack.c.bf16 %v4839, %v4838
        %v4869 = vpack.c.bf16 %v4841, %v4840
        %v4870 = vpack.c.bf16 %v4843, %v4842
        %v4871 = vpack.c.bf16 %v4845, %v4844
        %v4872 = vpack.c.bf16 %v4847, %v4846
        %v4873 = vpack.c.bf16 %v4849, %v4848
        %v4874 = vpack.c.bf16 %v4851, %v4850
        %v4875 = vpack.c.bf16 %v4853, %v4852
        %v4876 = vpack.c.bf16 %v4855, %v4854
        %v4877 = vpack.c.bf16 %v4857, %v4856
        %v4878 = vpack.c.bf16 %v4859, %v4858
        %v4879 = vpack.c.bf16 %v4861, %v4860
        %v4880 = vpack.c.bf16 %v4863, %v4862
        %v4881 = vpack.c.bf16 %v4865, %v4864
        %v4882 = vld [vmem:[#allocation26] sm:$0xf]
        %v4883 = vld [vmem:[#allocation26 + $0x4] sm:$0xf]
        %v4884 = vld [vmem:[#allocation26 + $0x8] sm:$0xf]
        %v4885 = vld [vmem:[#allocation26 + $0xc] sm:$0xf]
        %v4886 = vld [vmem:[#allocation26 + $0x10] sm:$0xf]
        %v4887 = vld [vmem:[#allocation26 + $0x14] sm:$0xf]
        %v4888 = vld [vmem:[#allocation26 + $0x18] sm:$0xf]
        %v4889 = vld [vmem:[#allocation26 + $0x1c] sm:$0xf]
        %v4890 = vld [vmem:[#allocation26 + $0x20] sm:$0xf]
        %v4891 = vld [vmem:[#allocation26 + $0x24] sm:$0xf]
        %v4892 = vld [vmem:[#allocation26 + $0x28] sm:$0xf]
        %v4893 = vld [vmem:[#allocation26 + $0x2c] sm:$0xf]
        %v4894 = vld [vmem:[#allocation26 + $0x30] sm:$0xf]
        %v4895 = vld [vmem:[#allocation26 + $0x34] sm:$0xf]
        %v4896 = vld [vmem:[#allocation26 + $0x38] sm:$0xf]
        %v4897 = vld [vmem:[#allocation26 + $0x3c] sm:$0xf]
        %v4898 = vld [vmem:[%s65] sm:$0x1]
        %v4900 = vperm.slane %v4898, 0
        %v4918 = vunpack.c.l.b16 %v4882
        %v4919 = vunpack.c.l.b16 %v4883
        %v4920 = vunpack.c.l.b16 %v4884
        %v4921 = vunpack.c.l.b16 %v4885
        %v4922 = vunpack.c.l.b16 %v4886
        %v4923 = vunpack.c.l.b16 %v4887
        %v4924 = vunpack.c.l.b16 %v4888
        %v4925 = vunpack.c.l.b16 %v4889
        %v4926 = vunpack.c.l.b16 %v4890
        %v4927 = vunpack.c.l.b16 %v4891
        %v4928 = vunpack.c.l.b16 %v4892
        %v4929 = vunpack.c.l.b16 %v4893
        %v4930 = vunpack.c.l.b16 %v4894
        %v4931 = vunpack.c.l.b16 %v4895
        %v4932 = vunpack.c.l.b16 %v4896
        %v4933 = vunpack.c.l.b16 %v4897
        %v4934 = vpack.c.b16 %v4919, %v4918
        %v4935 = vpack.c.b16 %v4921, %v4920
        %v4936 = vpack.c.b16 %v4923, %v4922
        %v4937 = vpack.c.b16 %v4925, %v4924
        %v4938 = vpack.c.b16 %v4927, %v4926
        %v4939 = vpack.c.b16 %v4929, %v4928
        %v4940 = vpack.c.b16 %v4931, %v4930
        %v4941 = vpack.c.b16 %v4933, %v4932
        %4950 = vmatpush.bf16.msra.mxu0 %v4941
        %4951 = vmatpush.bf16.msra.mxu0 %v4940
        %4952 = vmatpush.bf16.msra.mxu0 %v4939
        %4953 = vmatpush.bf16.msra.mxu0 %v4938
        %4954 = vmatpush.bf16.msra.mxu0 %v4937
        %4955 = vmatpush.bf16.msra.mxu0 %v4936
        %4956 = vmatpush.bf16.msra.mxu0 %v4935
        %4957 = vmatpush.bf16.msra.mxu0 %v4934
        %4958 = vmatmul.bf16.gmra.mxu0 %v4866
        %v4959 = vpop.f32.mrf.mxu0
        %v4960 = vadd.f32 %v4900, %v4959
        %v4961 = vpop.f32.mrf.mxu0
        %v4962 = vadd.f32 %v4900, %v4961
        %4963 = vmatmul.bf16.gmra.mxu0 %v4867
        %v4964 = vpop.f32.mrf.mxu0
        %v4965 = vadd.f32 %v4900, %v4964
        %v4966 = vpop.f32.mrf.mxu0
        %v4967 = vadd.f32 %v4900, %v4966
        %4968 = vmatmul.bf16.gmra.mxu0 %v4868
        %v4969 = vpop.f32.mrf.mxu0
        %v4970 = vadd.f32 %v4900, %v4969
        %v4971 = vpop.f32.mrf.mxu0
        %v4972 = vadd.f32 %v4900, %v4971
        %4973 = vmatmul.bf16.gmra.mxu0 %v4869
        %v4974 = vpop.f32.mrf.mxu0
        %v4975 = vadd.f32 %v4900, %v4974
        %v4976 = vpop.f32.mrf.mxu0
        %v4977 = vadd.f32 %v4900, %v4976
        %4978 = vmatmul.bf16.gmra.mxu0 %v4870
        %v4979 = vpop.f32.mrf.mxu0
        %v4980 = vadd.f32 %v4900, %v4979
        %v4981 = vpop.f32.mrf.mxu0
        %v4982 = vadd.f32 %v4900, %v4981
        %4983 = vmatmul.bf16.gmra.mxu0 %v4871
        %v4984 = vpop.f32.mrf.mxu0
        %v4985 = vadd.f32 %v4900, %v4984
        %v4986 = vpop.f32.mrf.mxu0
        %v4987 = vadd.f32 %v4900, %v4986
        %4988 = vmatmul.bf16.gmra.mxu0 %v4872
        %v4989 = vpop.f32.mrf.mxu0
        %v4990 = vadd.f32 %v4900, %v4989
        %v4991 = vpop.f32.mrf.mxu0
        %v4992 = vadd.f32 %v4900, %v4991
        %4993 = vmatmul.bf16.gmra.mxu0 %v4873
        %v4994 = vpop.f32.mrf.mxu0
        %v4995 = vadd.f32 %v4900, %v4994
        %v4996 = vpop.f32.mrf.mxu0
        %v4997 = vadd.f32 %v4900, %v4996
        %4998 = vmatmul.bf16.gmra.mxu0 %v4874
        %v4999 = vpop.f32.mrf.mxu0
        %v5000 = vadd.f32 %v4900, %v4999
        %v5001 = vpop.f32.mrf.mxu0
        %v5002 = vadd.f32 %v4900, %v5001
        %5003 = vmatmul.bf16.gmra.mxu0 %v4875
        %v5004 = vpop.f32.mrf.mxu0
        %v5005 = vadd.f32 %v4900, %v5004
        %v5006 = vpop.f32.mrf.mxu0
        %v5007 = vadd.f32 %v4900, %v5006
        %5008 = vmatmul.bf16.gmra.mxu0 %v4876
        %v5009 = vpop.f32.mrf.mxu0
        %v5010 = vadd.f32 %v4900, %v5009
        %v5011 = vpop.f32.mrf.mxu0
        %v5012 = vadd.f32 %v4900, %v5011
        %5013 = vmatmul.bf16.gmra.mxu0 %v4877
        %v5014 = vpop.f32.mrf.mxu0
        %v5015 = vadd.f32 %v4900, %v5014
        %v5016 = vpop.f32.mrf.mxu0
        %v5017 = vadd.f32 %v4900, %v5016
        %5018 = vmatmul.bf16.gmra.mxu0 %v4878
        %v5019 = vpop.f32.mrf.mxu0
        %v5020 = vadd.f32 %v4900, %v5019
        %v5021 = vpop.f32.mrf.mxu0
        %v5022 = vadd.f32 %v4900, %v5021
        %5023 = vmatmul.bf16.gmra.mxu0 %v4879
        %v5024 = vpop.f32.mrf.mxu0
        %v5025 = vadd.f32 %v4900, %v5024
        %v5026 = vpop.f32.mrf.mxu0
        %v5027 = vadd.f32 %v4900, %v5026
        %5028 = vmatmul.bf16.gmra.mxu0 %v4880
        %v5029 = vpop.f32.mrf.mxu0
        %v5030 = vadd.f32 %v4900, %v5029
        %v5031 = vpop.f32.mrf.mxu0
        %v5032 = vadd.f32 %v4900, %v5031
        %5033 = vmatmul.bf16.gmra.mxu0 %v4881
        %v5034 = vpop.f32.mrf.mxu0
        %v5035 = vadd.f32 %v4900, %v5034
        %v5036 = vpop.f32.mrf.mxu0
        %v5037 = vadd.f32 %v4900, %v5036
        %5038 = vdwg.mxu0
        %v5039 = vld [vmem:[%s67] sm:$0xf]
        %v5040 = vld [vmem:[%s67 + $0x4] sm:$0xf]
        %v5041 = vld [vmem:[%s67 + $0x8] sm:$0xf]
        %v5042 = vld [vmem:[%s67 + $0xc] sm:$0xf]
        %v5043 = vld [vmem:[%s67 + $0x10] sm:$0xf]
        %v5044 = vld [vmem:[%s67 + $0x14] sm:$0xf]
        %v5045 = vld [vmem:[%s67 + $0x18] sm:$0xf]
        %v5046 = vld [vmem:[%s67 + $0x1c] sm:$0xf]
        %v5047 = vld [vmem:[%s67 + $0x20] sm:$0xf]
        %v5048 = vld [vmem:[%s67 + $0x24] sm:$0xf]
        %v5049 = vld [vmem:[%s67 + $0x28] sm:$0xf]
        %v5050 = vld [vmem:[%s67 + $0x2c] sm:$0xf]
        %v5051 = vld [vmem:[%s67 + $0x30] sm:$0xf]
        %v5052 = vld [vmem:[%s67 + $0x34] sm:$0xf]
        %v5053 = vld [vmem:[%s67 + $0x38] sm:$0xf]
        %v5054 = vld [vmem:[%s67 + $0x3c] sm:$0xf]
        %v5055 = vld [vmem:[%s69] sm:$0x1]
        %v5057 = vperm.slane %v5055, 0
        %v5075 = vunpack.c.l.b16 %v5039
        %v5076 = vunpack.c.l.b16 %v5040
        %v5077 = vunpack.c.l.b16 %v5041
        %v5078 = vunpack.c.l.b16 %v5042
        %v5079 = vunpack.c.l.b16 %v5043
        %v5080 = vunpack.c.l.b16 %v5044
        %v5081 = vunpack.c.l.b16 %v5045
        %v5082 = vunpack.c.l.b16 %v5046
        %v5083 = vunpack.c.l.b16 %v5047
        %v5084 = vunpack.c.l.b16 %v5048
        %v5085 = vunpack.c.l.b16 %v5049
        %v5086 = vunpack.c.l.b16 %v5050
        %v5087 = vunpack.c.l.b16 %v5051
        %v5088 = vunpack.c.l.b16 %v5052
        %v5089 = vunpack.c.l.b16 %v5053
        %v5090 = vunpack.c.l.b16 %v5054
        %v5091 = vpack.c.b16 %v5076, %v5075
        %v5092 = vpack.c.b16 %v5078, %v5077
        %v5093 = vpack.c.b16 %v5080, %v5079
        %v5094 = vpack.c.b16 %v5082, %v5081
        %v5095 = vpack.c.b16 %v5084, %v5083
        %v5096 = vpack.c.b16 %v5086, %v5085
        %v5097 = vpack.c.b16 %v5088, %v5087
        %v5098 = vpack.c.b16 %v5090, %v5089
        %5107 = vmatpush.bf16.msra.mxu0 %v5098
        %5108 = vmatpush.bf16.msra.mxu0 %v5097
        %5109 = vmatpush.bf16.msra.mxu0 %v5096
        %5110 = vmatpush.bf16.msra.mxu0 %v5095
        %5111 = vmatpush.bf16.msra.mxu0 %v5094
        %5112 = vmatpush.bf16.msra.mxu0 %v5093
        %5113 = vmatpush.bf16.msra.mxu0 %v5092
        %5114 = vmatpush.bf16.msra.mxu0 %v5091
        %5115 = vmatmul.bf16.gmra.mxu0 %v4866
        %v5116 = vpop.f32.mrf.mxu0
        %v5117 = vadd.f32 %v5057, %v5116
        %v5118 = vpop.f32.mrf.mxu0
        %v5119 = vadd.f32 %v5057, %v5118
        %5120 = vmatmul.bf16.gmra.mxu0 %v4867
        %v5121 = vpop.f32.mrf.mxu0
        %v5122 = vadd.f32 %v5057, %v5121
        %v5123 = vpop.f32.mrf.mxu0
        %v5124 = vadd.f32 %v5057, %v5123
        %5125 = vmatmul.bf16.gmra.mxu0 %v4868
        %v5126 = vpop.f32.mrf.mxu0
        %v5127 = vadd.f32 %v5057, %v5126
        %v5128 = vpop.f32.mrf.mxu0
        %v5129 = vadd.f32 %v5057, %v5128
        %5130 = vmatmul.bf16.gmra.mxu0 %v4869
        %v5131 = vpop.f32.mrf.mxu0
        %v5132 = vadd.f32 %v5057, %v5131
        %v5133 = vpop.f32.mrf.mxu0
        %v5134 = vadd.f32 %v5057, %v5133
        %5135 = vmatmul.bf16.gmra.mxu0 %v4870
        %v5136 = vpop.f32.mrf.mxu0
        %v5137 = vadd.f32 %v5057, %v5136
        %v5138 = vpop.f32.mrf.mxu0
        %v5139 = vadd.f32 %v5057, %v5138
        %5140 = vmatmul.bf16.gmra.mxu0 %v4871
        %v5141 = vpop.f32.mrf.mxu0
        %v5142 = vadd.f32 %v5057, %v5141
        %v5143 = vpop.f32.mrf.mxu0
        %v5144 = vadd.f32 %v5057, %v5143
        %5145 = vmatmul.bf16.gmra.mxu0 %v4872
        %v5146 = vpop.f32.mrf.mxu0
        %v5147 = vadd.f32 %v5057, %v5146
        %v5148 = vpop.f32.mrf.mxu0
        %v5149 = vadd.f32 %v5057, %v5148
        %5150 = vmatmul.bf16.gmra.mxu0 %v4873
        %v5151 = vpop.f32.mrf.mxu0
        %v5152 = vadd.f32 %v5057, %v5151
        %v5153 = vpop.f32.mrf.mxu0
        %v5154 = vadd.f32 %v5057, %v5153
        %5155 = vmatmul.bf16.gmra.mxu0 %v4874
        %v5156 = vpop.f32.mrf.mxu0
        %v5157 = vadd.f32 %v5057, %v5156
        %v5158 = vpop.f32.mrf.mxu0
        %v5159 = vadd.f32 %v5057, %v5158
        %5160 = vmatmul.bf16.gmra.mxu0 %v4875
        %v5161 = vpop.f32.mrf.mxu0
        %v5162 = vadd.f32 %v5057, %v5161
        %v5163 = vpop.f32.mrf.mxu0
        %v5164 = vadd.f32 %v5057, %v5163
        %5165 = vmatmul.bf16.gmra.mxu0 %v4876
        %v5166 = vpop.f32.mrf.mxu0
        %v5167 = vadd.f32 %v5057, %v5166
        %v5168 = vpop.f32.mrf.mxu0
        %v5169 = vadd.f32 %v5057, %v5168
        %5170 = vmatmul.bf16.gmra.mxu0 %v4877
        %v5171 = vpop.f32.mrf.mxu0
        %v5172 = vadd.f32 %v5057, %v5171
        %v5173 = vpop.f32.mrf.mxu0
        %v5174 = vadd.f32 %v5057, %v5173
        %5175 = vmatmul.bf16.gmra.mxu0 %v4878
        %v5176 = vpop.f32.mrf.mxu0
        %v5177 = vadd.f32 %v5057, %v5176
        %v5178 = vpop.f32.mrf.mxu0
        %v5179 = vadd.f32 %v5057, %v5178
        %5180 = vmatmul.bf16.gmra.mxu0 %v4879
        %v5181 = vpop.f32.mrf.mxu0
        %v5182 = vadd.f32 %v5057, %v5181
        %v5183 = vpop.f32.mrf.mxu0
        %v5184 = vadd.f32 %v5057, %v5183
        %5185 = vmatmul.bf16.gmra.mxu0 %v4880
        %v5186 = vpop.f32.mrf.mxu0
        %v5187 = vadd.f32 %v5057, %v5186
        %v5188 = vpop.f32.mrf.mxu0
        %v5189 = vadd.f32 %v5057, %v5188
        %5190 = vmatmul.bf16.gmra.mxu0 %v4881
        %v5191 = vpop.f32.mrf.mxu0
        %v5192 = vadd.f32 %v5057, %v5191
        %v5193 = vpop.f32.mrf.mxu0
        %v5194 = vadd.f32 %v5057, %v5193
        %5195 = vdwg.mxu0
        %v5196 = vld [vmem:[#allocation28] sm:$0xf]
        %v5197 = vld [vmem:[#allocation28 + $0x4] sm:$0xf]
        %v5198 = vld [vmem:[#allocation28 + $0x8] sm:$0xf]
        %v5199 = vld [vmem:[#allocation28 + $0xc] sm:$0xf]
        %v5200 = vld [vmem:[#allocation28 + $0x10] sm:$0xf]
        %v5201 = vld [vmem:[#allocation28 + $0x14] sm:$0xf]
        %v5202 = vld [vmem:[#allocation28 + $0x18] sm:$0xf]
        %v5203 = vld [vmem:[#allocation28 + $0x1c] sm:$0xf]
        %v5204 = vld [vmem:[#allocation28 + $0x20] sm:$0xf]
        %v5205 = vld [vmem:[#allocation28 + $0x24] sm:$0xf]
        %v5206 = vld [vmem:[#allocation28 + $0x28] sm:$0xf]
        %v5207 = vld [vmem:[#allocation28 + $0x2c] sm:$0xf]
        %v5208 = vld [vmem:[#allocation28 + $0x30] sm:$0xf]
        %v5209 = vld [vmem:[#allocation28 + $0x34] sm:$0xf]
        %v5210 = vld [vmem:[#allocation28 + $0x38] sm:$0xf]
        %v5211 = vld [vmem:[#allocation28 + $0x3c] sm:$0xf]
        %v5212 = vld [vmem:[%s73] sm:$0x1]
        %v5214 = vperm.slane %v5212, 0
        %v5232 = vunpack.c.l.b16 %v5196
        %v5233 = vunpack.c.l.b16 %v5197
        %v5234 = vunpack.c.l.b16 %v5198
        %v5235 = vunpack.c.l.b16 %v5199
        %v5236 = vunpack.c.l.b16 %v5200
        %v5237 = vunpack.c.l.b16 %v5201
        %v5238 = vunpack.c.l.b16 %v5202
        %v5239 = vunpack.c.l.b16 %v5203
        %v5240 = vunpack.c.l.b16 %v5204
        %v5241 = vunpack.c.l.b16 %v5205
        %v5242 = vunpack.c.l.b16 %v5206
        %v5243 = vunpack.c.l.b16 %v5207
        %v5244 = vunpack.c.l.b16 %v5208
        %v5245 = vunpack.c.l.b16 %v5209
        %v5246 = vunpack.c.l.b16 %v5210
        %v5247 = vunpack.c.l.b16 %v5211
        %v5248 = vpack.c.b16 %v5233, %v5232
        %v5249 = vpack.c.b16 %v5235, %v5234
        %v5250 = vpack.c.b16 %v5237, %v5236
        %v5251 = vpack.c.b16 %v5239, %v5238
        %v5252 = vpack.c.b16 %v5241, %v5240
        %v5253 = vpack.c.b16 %v5243, %v5242
        %v5254 = vpack.c.b16 %v5245, %v5244
        %v5255 = vpack.c.b16 %v5247, %v5246
        %5264 = vmatpush.bf16.msra.mxu0 %v5255
        %5265 = vmatpush.bf16.msra.mxu0 %v5254
        %5266 = vmatpush.bf16.msra.mxu0 %v5253
        %5267 = vmatpush.bf16.msra.mxu0 %v5252
        %5268 = vmatpush.bf16.msra.mxu0 %v5251
        %5269 = vmatpush.bf16.msra.mxu0 %v5250
        %5270 = vmatpush.bf16.msra.mxu0 %v5249
        %5271 = vmatpush.bf16.msra.mxu0 %v5248
        %5272 = vmatmul.bf16.gmra.mxu0 %v4866
        %v5273 = vpop.f32.mrf.mxu0
        %v5274 = vadd.f32 %v5214, %v5273
        %v5275 = vpop.f32.mrf.mxu0
        %v5276 = vadd.f32 %v5214, %v5275
        %5277 = vmatmul.bf16.gmra.mxu0 %v4867
        %v5278 = vpop.f32.mrf.mxu0
        %v5279 = vadd.f32 %v5214, %v5278
        %v5280 = vpop.f32.mrf.mxu0
        %v5281 = vadd.f32 %v5214, %v5280
        %5282 = vmatmul.bf16.gmra.mxu0 %v4868
        %v5283 = vpop.f32.mrf.mxu0
        %v5284 = vadd.f32 %v5214, %v5283
        %v5285 = vpop.f32.mrf.mxu0
        %v5286 = vadd.f32 %v5214, %v5285
        %5287 = vmatmul.bf16.gmra.mxu0 %v4869
        %v5288 = vpop.f32.mrf.mxu0
        %v5289 = vadd.f32 %v5214, %v5288
        %v5290 = vpop.f32.mrf.mxu0
        %v5291 = vadd.f32 %v5214, %v5290
        %5292 = vmatmul.bf16.gmra.mxu0 %v4870
        %v5293 = vpop.f32.mrf.mxu0
        %v5294 = vadd.f32 %v5214, %v5293
        %v5295 = vpop.f32.mrf.mxu0
        %v5296 = vadd.f32 %v5214, %v5295
        %5297 = vmatmul.bf16.gmra.mxu0 %v4871
        %v5298 = vpop.f32.mrf.mxu0
        %v5299 = vadd.f32 %v5214, %v5298
        %v5300 = vpop.f32.mrf.mxu0
        %v5301 = vadd.f32 %v5214, %v5300
        %5302 = vmatmul.bf16.gmra.mxu0 %v4872
        %v5303 = vpop.f32.mrf.mxu0
        %v5304 = vadd.f32 %v5214, %v5303
        %v5305 = vpop.f32.mrf.mxu0
        %v5306 = vadd.f32 %v5214, %v5305
        %5307 = vmatmul.bf16.gmra.mxu0 %v4873
        %v5308 = vpop.f32.mrf.mxu0
        %v5309 = vadd.f32 %v5214, %v5308
        %v5310 = vpop.f32.mrf.mxu0
        %v5311 = vadd.f32 %v5214, %v5310
        %5312 = vmatmul.bf16.gmra.mxu0 %v4874
        %v5313 = vpop.f32.mrf.mxu0
        %v5314 = vadd.f32 %v5214, %v5313
        %v5315 = vpop.f32.mrf.mxu0
        %v5316 = vadd.f32 %v5214, %v5315
        %5317 = vmatmul.bf16.gmra.mxu0 %v4875
        %v5318 = vpop.f32.mrf.mxu0
        %v5319 = vadd.f32 %v5214, %v5318
        %v5320 = vpop.f32.mrf.mxu0
        %v5321 = vadd.f32 %v5214, %v5320
        %5322 = vmatmul.bf16.gmra.mxu0 %v4876
        %v5323 = vpop.f32.mrf.mxu0
        %v5324 = vadd.f32 %v5214, %v5323
        %v5325 = vpop.f32.mrf.mxu0
        %v5326 = vadd.f32 %v5214, %v5325
        %5327 = vmatmul.bf16.gmra.mxu0 %v4877
        %v5328 = vpop.f32.mrf.mxu0
        %v5329 = vadd.f32 %v5214, %v5328
        %v5330 = vpop.f32.mrf.mxu0
        %v5331 = vadd.f32 %v5214, %v5330
        %5332 = vmatmul.bf16.gmra.mxu0 %v4878
        %v5333 = vpop.f32.mrf.mxu0
        %v5334 = vadd.f32 %v5214, %v5333
        %v5335 = vpop.f32.mrf.mxu0
        %v5336 = vadd.f32 %v5214, %v5335
        %5337 = vmatmul.bf16.gmra.mxu0 %v4879
        %v5338 = vpop.f32.mrf.mxu0
        %v5339 = vadd.f32 %v5214, %v5338
        %v5340 = vpop.f32.mrf.mxu0
        %v5341 = vadd.f32 %v5214, %v5340
        %5342 = vmatmul.bf16.gmra.mxu0 %v4880
        %v5343 = vpop.f32.mrf.mxu0
        %v5344 = vadd.f32 %v5214, %v5343
        %v5345 = vpop.f32.mrf.mxu0
        %v5346 = vadd.f32 %v5214, %v5345
        %5347 = vmatmul.bf16.gmra.mxu0 %v4881
        %v5348 = vpop.f32.mrf.mxu0
        %v5349 = vadd.f32 %v5214, %v5348
        %v5350 = vpop.f32.mrf.mxu0
        %v5351 = vadd.f32 %v5214, %v5350
        %5352 = vdwg.mxu0
        %v5353 = vld [vmem:[#allocation29] sm:$0xf]
        %v5354 = vld [vmem:[#allocation29 + $0x4] sm:$0xf]
        %v5355 = vld [vmem:[#allocation29 + $0x8] sm:$0xf]
        %v5356 = vld [vmem:[#allocation29 + $0xc] sm:$0xf]
        %v5357 = vld [vmem:[#allocation29 + $0x10] sm:$0xf]
        %v5358 = vld [vmem:[#allocation29 + $0x14] sm:$0xf]
        %v5359 = vld [vmem:[#allocation29 + $0x18] sm:$0xf]
        %v5360 = vld [vmem:[#allocation29 + $0x1c] sm:$0xf]
        %v5361 = vld [vmem:[#allocation29 + $0x20] sm:$0xf]
        %v5362 = vld [vmem:[#allocation29 + $0x24] sm:$0xf]
        %v5363 = vld [vmem:[#allocation29 + $0x28] sm:$0xf]
        %v5364 = vld [vmem:[#allocation29 + $0x2c] sm:$0xf]
        %v5365 = vld [vmem:[#allocation29 + $0x30] sm:$0xf]
        %v5366 = vld [vmem:[#allocation29 + $0x34] sm:$0xf]
        %v5367 = vld [vmem:[#allocation29 + $0x38] sm:$0xf]
        %v5368 = vld [vmem:[#allocation29 + $0x3c] sm:$0xf]
        %v5369 = vld [vmem:[%s77] sm:$0x1]
        %v5371 = vperm.slane %v5369, 0
        %v5389 = vunpack.c.l.b16 %v5353
        %v5390 = vunpack.c.l.b16 %v5354
        %v5391 = vunpack.c.l.b16 %v5355
        %v5392 = vunpack.c.l.b16 %v5356
        %v5393 = vunpack.c.l.b16 %v5357
        %v5394 = vunpack.c.l.b16 %v5358
        %v5395 = vunpack.c.l.b16 %v5359
        %v5396 = vunpack.c.l.b16 %v5360
        %v5397 = vunpack.c.l.b16 %v5361
        %v5398 = vunpack.c.l.b16 %v5362
        %v5399 = vunpack.c.l.b16 %v5363
        %v5400 = vunpack.c.l.b16 %v5364
        %v5401 = vunpack.c.l.b16 %v5365
        %v5402 = vunpack.c.l.b16 %v5366
        %v5403 = vunpack.c.l.b16 %v5367
        %v5404 = vunpack.c.l.b16 %v5368
        %v5405 = vpack.c.b16 %v5390, %v5389
        %v5406 = vpack.c.b16 %v5392, %v5391
        %v5407 = vpack.c.b16 %v5394, %v5393
        %v5408 = vpack.c.b16 %v5396, %v5395
        %v5409 = vpack.c.b16 %v5398, %v5397
        %v5410 = vpack.c.b16 %v5400, %v5399
        %v5411 = vpack.c.b16 %v5402, %v5401
        %v5412 = vpack.c.b16 %v5404, %v5403
        %5421 = vmatpush.bf16.msra.mxu0 %v5412
        %5422 = vmatpush.bf16.msra.mxu0 %v5411
        %5423 = vmatpush.bf16.msra.mxu0 %v5410
        %5424 = vmatpush.bf16.msra.mxu0 %v5409
        %5425 = vmatpush.bf16.msra.mxu0 %v5408
        %5426 = vmatpush.bf16.msra.mxu0 %v5407
        %5427 = vmatpush.bf16.msra.mxu0 %v5406
        %5428 = vmatpush.bf16.msra.mxu0 %v5405
        %5429 = vmatmul.bf16.gmra.mxu0 %v4866
        %v5430 = vpop.f32.mrf.mxu0
        %v5431 = vadd.f32 %v5371, %v5430
        %v5432 = vpop.f32.mrf.mxu0
        %v5433 = vadd.f32 %v5371, %v5432
        %5434 = vmatmul.bf16.gmra.mxu0 %v4867
        %v5435 = vpop.f32.mrf.mxu0
        %v5436 = vadd.f32 %v5371, %v5435
        %v5437 = vpop.f32.mrf.mxu0
        %v5438 = vadd.f32 %v5371, %v5437
        %5439 = vmatmul.bf16.gmra.mxu0 %v4868
        %v5440 = vpop.f32.mrf.mxu0
        %v5441 = vadd.f32 %v5371, %v5440
        %v5442 = vpop.f32.mrf.mxu0
        %v5443 = vadd.f32 %v5371, %v5442
        %5444 = vmatmul.bf16.gmra.mxu0 %v4869
        %v5445 = vpop.f32.mrf.mxu0
        %v5446 = vadd.f32 %v5371, %v5445
        %v5447 = vpop.f32.mrf.mxu0
        %v5448 = vadd.f32 %v5371, %v5447
        %5449 = vmatmul.bf16.gmra.mxu0 %v4870
        %v5450 = vpop.f32.mrf.mxu0
        %v5451 = vadd.f32 %v5371, %v5450
        %v5452 = vpop.f32.mrf.mxu0
        %v5453 = vadd.f32 %v5371, %v5452
        %5454 = vmatmul.bf16.gmra.mxu0 %v4871
        %v5455 = vpop.f32.mrf.mxu0
        %v5456 = vadd.f32 %v5371, %v5455
        %v5457 = vpop.f32.mrf.mxu0
        %v5458 = vadd.f32 %v5371, %v5457
        %5459 = vmatmul.bf16.gmra.mxu0 %v4872
        %v5460 = vpop.f32.mrf.mxu0
        %v5461 = vadd.f32 %v5371, %v5460
        %v5462 = vpop.f32.mrf.mxu0
        %v5463 = vadd.f32 %v5371, %v5462
        %5464 = vmatmul.bf16.gmra.mxu0 %v4873
        %v5465 = vpop.f32.mrf.mxu0
        %v5466 = vadd.f32 %v5371, %v5465
        %v5467 = vpop.f32.mrf.mxu0
        %v5468 = vadd.f32 %v5371, %v5467
        %5469 = vmatmul.bf16.gmra.mxu0 %v4874
        %v5470 = vpop.f32.mrf.mxu0
        %v5471 = vadd.f32 %v5371, %v5470
        %v5472 = vpop.f32.mrf.mxu0
        %v5473 = vadd.f32 %v5371, %v5472
        %5474 = vmatmul.bf16.gmra.mxu0 %v4875
        %v5475 = vpop.f32.mrf.mxu0
        %v5476 = vadd.f32 %v5371, %v5475
        %v5477 = vpop.f32.mrf.mxu0
        %v5478 = vadd.f32 %v5371, %v5477
        %5479 = vmatmul.bf16.gmra.mxu0 %v4876
        %v5480 = vpop.f32.mrf.mxu0
        %v5481 = vadd.f32 %v5371, %v5480
        %v5482 = vpop.f32.mrf.mxu0
        %v5483 = vadd.f32 %v5371, %v5482
        %5484 = vmatmul.bf16.gmra.mxu0 %v4877
        %v5485 = vpop.f32.mrf.mxu0
        %v5486 = vadd.f32 %v5371, %v5485
        %v5487 = vpop.f32.mrf.mxu0
        %v5488 = vadd.f32 %v5371, %v5487
        %5489 = vmatmul.bf16.gmra.mxu0 %v4878
        %v5490 = vpop.f32.mrf.mxu0
        %v5491 = vadd.f32 %v5371, %v5490
        %v5492 = vpop.f32.mrf.mxu0
        %v5493 = vadd.f32 %v5371, %v5492
        %5494 = vmatmul.bf16.gmra.mxu0 %v4879
        %v5495 = vpop.f32.mrf.mxu0
        %v5496 = vadd.f32 %v5371, %v5495
        %v5497 = vpop.f32.mrf.mxu0
        %v5498 = vadd.f32 %v5371, %v5497
        %5499 = vmatmul.bf16.gmra.mxu0 %v4880
        %v5500 = vpop.f32.mrf.mxu0
        %v5501 = vadd.f32 %v5371, %v5500
        %v5502 = vpop.f32.mrf.mxu0
        %v5503 = vadd.f32 %v5371, %v5502
        %5504 = vmatmul.bf16.gmra.mxu0 %v4881
        %v5505 = vpop.f32.mrf.mxu0
        %v5506 = vadd.f32 %v5371, %v5505
        %v5507 = vpop.f32.mrf.mxu0
        %v5508 = vadd.f32 %v5371, %v5507
        %5509 = vdwg.mxu0
        %5542 = vrot.lane.b32.xlu0 %v1615, 4
        %v5543 = vpop.permute.xlu0 %5542
        %5544 = vrot.lane.b32.xlu0 %v1616, 4
        %v5545 = vpop.permute.xlu0 %5544
        %5546 = vrot.lane.b32.xlu0 %v1617, 4
        %v5547 = vpop.permute.xlu0 %5546
        %5548 = vrot.lane.b32.xlu0 %v1618, 4
        %v5549 = vpop.permute.xlu0 %5548
        %5550 = vrot.lane.b32.xlu0 %v1619, 4
        %v5551 = vpop.permute.xlu0 %5550
        %5552 = vrot.lane.b32.xlu0 %v1620, 4
        %v5553 = vpop.permute.xlu0 %5552
        %5554 = vrot.lane.b32.xlu0 %v1621, 4
        %v5555 = vpop.permute.xlu0 %5554
        %5556 = vrot.lane.b32.xlu0 %v1622, 4
        %v5557 = vpop.permute.xlu0 %5556
        %5558 = vrot.lane.b32.xlu0 %v1623, 4
        %v5559 = vpop.permute.xlu0 %5558
        %5560 = vrot.lane.b32.xlu0 %v1624, 4
        %v5561 = vpop.permute.xlu0 %5560
        %5562 = vrot.lane.b32.xlu0 %v1625, 4
        %v5563 = vpop.permute.xlu0 %5562
        %5564 = vrot.lane.b32.xlu0 %v1626, 4
        %v5565 = vpop.permute.xlu0 %5564
        %5566 = vrot.lane.b32.xlu0 %v1627, 4
        %v5567 = vpop.permute.xlu0 %5566
        %5568 = vrot.lane.b32.xlu0 %v1628, 4
        %v5569 = vpop.permute.xlu0 %5568
        %5570 = vrot.lane.b32.xlu0 %v1629, 4
        %v5571 = vpop.permute.xlu0 %5570
        %5572 = vrot.lane.b32.xlu0 %v1630, 4
        %v5573 = vpop.permute.xlu0 %5572
        %5574 = vrot.lane.b32.xlu0 %v1631, 4
        %v5575 = vpop.permute.xlu0 %5574
        %5576 = vrot.lane.b32.xlu0 %v1632, 4
        %v5577 = vpop.permute.xlu0 %5576
        %5578 = vrot.lane.b32.xlu0 %v1633, 4
        %v5579 = vpop.permute.xlu0 %5578
        %5580 = vrot.lane.b32.xlu0 %v1634, 4
        %v5581 = vpop.permute.xlu0 %5580
        %5582 = vrot.lane.b32.xlu0 %v1635, 4
        %v5583 = vpop.permute.xlu0 %5582
        %5584 = vrot.lane.b32.xlu0 %v1636, 4
        %v5585 = vpop.permute.xlu0 %5584
        %5586 = vrot.lane.b32.xlu0 %v1637, 4
        %v5587 = vpop.permute.xlu0 %5586
        %5588 = vrot.lane.b32.xlu0 %v1638, 4
        %v5589 = vpop.permute.xlu0 %5588
        %5590 = vrot.lane.b32.xlu0 %v1639, 4
        %v5591 = vpop.permute.xlu0 %5590
        %5592 = vrot.lane.b32.xlu0 %v1640, 4
        %v5593 = vpop.permute.xlu0 %5592
        %5594 = vrot.lane.b32.xlu0 %v1641, 4
        %v5595 = vpop.permute.xlu0 %5594
        %5596 = vrot.lane.b32.xlu0 %v1642, 4
        %v5597 = vpop.permute.xlu0 %5596
        %5598 = vrot.lane.b32.xlu0 %v1643, 4
        %v5599 = vpop.permute.xlu0 %5598
        %5600 = vrot.lane.b32.xlu0 %v1644, 4
        %v5601 = vpop.permute.xlu0 %5600
        %5602 = vrot.lane.b32.xlu0 %v1645, 4
        %v5603 = vpop.permute.xlu0 %5602
        %5604 = vrot.lane.b32.xlu0 %v1646, 4
        %v5605 = vpop.permute.xlu0 %5604
        %5638 = vrot.lane.b32.xlu0 %v1615, 8
        %v5639 = vpop.permute.xlu0 %5638
        %5640 = vrot.lane.b32.xlu0 %v1616, 8
        %v5641 = vpop.permute.xlu0 %5640
        %5642 = vrot.lane.b32.xlu0 %v1617, 8
        %v5643 = vpop.permute.xlu0 %5642
        %5644 = vrot.lane.b32.xlu0 %v1618, 8
        %v5645 = vpop.permute.xlu0 %5644
        %5646 = vrot.lane.b32.xlu0 %v1619, 8
        %v5647 = vpop.permute.xlu0 %5646
        %5648 = vrot.lane.b32.xlu0 %v1620, 8
        %v5649 = vpop.permute.xlu0 %5648
        %5650 = vrot.lane.b32.xlu0 %v1621, 8
        %v5651 = vpop.permute.xlu0 %5650
        %5652 = vrot.lane.b32.xlu0 %v1622, 8
        %v5653 = vpop.permute.xlu0 %5652
        %5654 = vrot.lane.b32.xlu0 %v1623, 8
        %v5655 = vpop.permute.xlu0 %5654
        %5656 = vrot.lane.b32.xlu0 %v1624, 8
        %v5657 = vpop.permute.xlu0 %5656
        %5658 = vrot.lane.b32.xlu0 %v1625, 8
        %v5659 = vpop.permute.xlu0 %5658
        %5660 = vrot.lane.b32.xlu0 %v1626, 8
        %v5661 = vpop.permute.xlu0 %5660
        %5662 = vrot.lane.b32.xlu0 %v1627, 8
        %v5663 = vpop.permute.xlu0 %5662
        %5664 = vrot.lane.b32.xlu0 %v1628, 8
        %v5665 = vpop.permute.xlu0 %5664
        %5666 = vrot.lane.b32.xlu0 %v1629, 8
        %v5667 = vpop.permute.xlu0 %5666
        %5668 = vrot.lane.b32.xlu0 %v1630, 8
        %v5669 = vpop.permute.xlu0 %5668
        %5670 = vrot.lane.b32.xlu0 %v1631, 8
        %v5671 = vpop.permute.xlu0 %5670
        %5672 = vrot.lane.b32.xlu0 %v1632, 8
        %v5673 = vpop.permute.xlu0 %5672
        %5674 = vrot.lane.b32.xlu0 %v1633, 8
        %v5675 = vpop.permute.xlu0 %5674
        %5676 = vrot.lane.b32.xlu0 %v1634, 8
        %v5677 = vpop.permute.xlu0 %5676
        %5678 = vrot.lane.b32.xlu0 %v1635, 8
        %v5679 = vpop.permute.xlu0 %5678
        %5680 = vrot.lane.b32.xlu0 %v1636, 8
        %v5681 = vpop.permute.xlu0 %5680
        %5682 = vrot.lane.b32.xlu0 %v1637, 8
        %v5683 = vpop.permute.xlu0 %5682
        %5684 = vrot.lane.b32.xlu0 %v1638, 8
        %v5685 = vpop.permute.xlu0 %5684
        %5686 = vrot.lane.b32.xlu0 %v1639, 8
        %v5687 = vpop.permute.xlu0 %5686
        %5688 = vrot.lane.b32.xlu0 %v1640, 8
        %v5689 = vpop.permute.xlu0 %5688
        %5690 = vrot.lane.b32.xlu0 %v1641, 8
        %v5691 = vpop.permute.xlu0 %5690
        %5692 = vrot.lane.b32.xlu0 %v1642, 8
        %v5693 = vpop.permute.xlu0 %5692
        %5694 = vrot.lane.b32.xlu0 %v1643, 8
        %v5695 = vpop.permute.xlu0 %5694
        %5696 = vrot.lane.b32.xlu0 %v1644, 8
        %v5697 = vpop.permute.xlu0 %5696
        %5698 = vrot.lane.b32.xlu0 %v1645, 8
        %v5699 = vpop.permute.xlu0 %5698
        %5700 = vrot.lane.b32.xlu0 %v1646, 8
        %v5701 = vpop.permute.xlu0 %5700
        %5734 = vrot.lane.b32.xlu0 %v1615, 12
        %v5735 = vpop.permute.xlu0 %5734
        %5736 = vrot.lane.b32.xlu0 %v1616, 12
        %v5737 = vpop.permute.xlu0 %5736
        %5738 = vrot.lane.b32.xlu0 %v1617, 12
        %v5739 = vpop.permute.xlu0 %5738
        %5740 = vrot.lane.b32.xlu0 %v1618, 12
        %v5741 = vpop.permute.xlu0 %5740
        %5742 = vrot.lane.b32.xlu0 %v1619, 12
        %v5743 = vpop.permute.xlu0 %5742
        %5744 = vrot.lane.b32.xlu0 %v1620, 12
        %v5745 = vpop.permute.xlu0 %5744
        %5746 = vrot.lane.b32.xlu0 %v1621, 12
        %v5747 = vpop.permute.xlu0 %5746
        %5748 = vrot.lane.b32.xlu0 %v1622, 12
        %v5749 = vpop.permute.xlu0 %5748
        %5750 = vrot.lane.b32.xlu0 %v1623, 12
        %v5751 = vpop.permute.xlu0 %5750
        %5752 = vrot.lane.b32.xlu0 %v1624, 12
        %v5753 = vpop.permute.xlu0 %5752
        %5754 = vrot.lane.b32.xlu0 %v1625, 12
        %v5755 = vpop.permute.xlu0 %5754
        %5756 = vrot.lane.b32.xlu0 %v1626, 12
        %v5757 = vpop.permute.xlu0 %5756
        %5758 = vrot.lane.b32.xlu0 %v1627, 12
        %v5759 = vpop.permute.xlu0 %5758
        %5760 = vrot.lane.b32.xlu0 %v1628, 12
        %v5761 = vpop.permute.xlu0 %5760
        %5762 = vrot.lane.b32.xlu0 %v1629, 12
        %v5763 = vpop.permute.xlu0 %5762
        %5764 = vrot.lane.b32.xlu0 %v1630, 12
        %v5765 = vpop.permute.xlu0 %5764
        %5766 = vrot.lane.b32.xlu0 %v1631, 12
        %v5767 = vpop.permute.xlu0 %5766
        %5768 = vrot.lane.b32.xlu0 %v1632, 12
        %v5769 = vpop.permute.xlu0 %5768
        %5770 = vrot.lane.b32.xlu0 %v1633, 12
        %v5771 = vpop.permute.xlu0 %5770
        %5772 = vrot.lane.b32.xlu0 %v1634, 12
        %v5773 = vpop.permute.xlu0 %5772
        %5774 = vrot.lane.b32.xlu0 %v1635, 12
        %v5775 = vpop.permute.xlu0 %5774
        %5776 = vrot.lane.b32.xlu0 %v1636, 12
        %v5777 = vpop.permute.xlu0 %5776
        %5778 = vrot.lane.b32.xlu0 %v1637, 12
        %v5779 = vpop.permute.xlu0 %5778
        %5780 = vrot.lane.b32.xlu0 %v1638, 12
        %v5781 = vpop.permute.xlu0 %5780
        %5782 = vrot.lane.b32.xlu0 %v1639, 12
        %v5783 = vpop.permute.xlu0 %5782
        %5784 = vrot.lane.b32.xlu0 %v1640, 12
        %v5785 = vpop.permute.xlu0 %5784
        %5786 = vrot.lane.b32.xlu0 %v1641, 12
        %v5787 = vpop.permute.xlu0 %5786
        %5788 = vrot.lane.b32.xlu0 %v1642, 12
        %v5789 = vpop.permute.xlu0 %5788
        %5790 = vrot.lane.b32.xlu0 %v1643, 12
        %v5791 = vpop.permute.xlu0 %5790
        %5792 = vrot.lane.b32.xlu0 %v1644, 12
        %v5793 = vpop.permute.xlu0 %5792
        %5794 = vrot.lane.b32.xlu0 %v1645, 12
        %v5795 = vpop.permute.xlu0 %5794
        %5796 = vrot.lane.b32.xlu0 %v1646, 12
        %v5797 = vpop.permute.xlu0 %5796
        %5830 = vrot.lane.b32.xlu0 %v1615, 16
        %v5831 = vpop.permute.xlu0 %5830
        %5832 = vrot.lane.b32.xlu0 %v1616, 16
        %v5833 = vpop.permute.xlu0 %5832
        %5834 = vrot.lane.b32.xlu0 %v1617, 16
        %v5835 = vpop.permute.xlu0 %5834
        %5836 = vrot.lane.b32.xlu0 %v1618, 16
        %v5837 = vpop.permute.xlu0 %5836
        %5838 = vrot.lane.b32.xlu0 %v1619, 16
        %v5839 = vpop.permute.xlu0 %5838
        %5840 = vrot.lane.b32.xlu0 %v1620, 16
        %v5841 = vpop.permute.xlu0 %5840
        %5842 = vrot.lane.b32.xlu0 %v1621, 16
        %v5843 = vpop.permute.xlu0 %5842
        %5844 = vrot.lane.b32.xlu0 %v1622, 16
        %v5845 = vpop.permute.xlu0 %5844
        %5846 = vrot.lane.b32.xlu0 %v1623, 16
        %v5847 = vpop.permute.xlu0 %5846
        %5848 = vrot.lane.b32.xlu0 %v1624, 16
        %v5849 = vpop.permute.xlu0 %5848
        %5850 = vrot.lane.b32.xlu0 %v1625, 16
        %v5851 = vpop.permute.xlu0 %5850
        %5852 = vrot.lane.b32.xlu0 %v1626, 16
        %v5853 = vpop.permute.xlu0 %5852
        %5854 = vrot.lane.b32.xlu0 %v1627, 16
        %v5855 = vpop.permute.xlu0 %5854
        %5856 = vrot.lane.b32.xlu0 %v1628, 16
        %v5857 = vpop.permute.xlu0 %5856
        %5858 = vrot.lane.b32.xlu0 %v1629, 16
        %v5859 = vpop.permute.xlu0 %5858
        %5860 = vrot.lane.b32.xlu0 %v1630, 16
        %v5861 = vpop.permute.xlu0 %5860
        %5862 = vrot.lane.b32.xlu0 %v1631, 16
        %v5863 = vpop.permute.xlu0 %5862
        %5864 = vrot.lane.b32.xlu0 %v1632, 16
        %v5865 = vpop.permute.xlu0 %5864
        %5866 = vrot.lane.b32.xlu0 %v1633, 16
        %v5867 = vpop.permute.xlu0 %5866
        %5868 = vrot.lane.b32.xlu0 %v1634, 16
        %v5869 = vpop.permute.xlu0 %5868
        %5870 = vrot.lane.b32.xlu0 %v1635, 16
        %v5871 = vpop.permute.xlu0 %5870
        %5872 = vrot.lane.b32.xlu0 %v1636, 16
        %v5873 = vpop.permute.xlu0 %5872
        %5874 = vrot.lane.b32.xlu0 %v1637, 16
        %v5875 = vpop.permute.xlu0 %5874
        %5876 = vrot.lane.b32.xlu0 %v1638, 16
        %v5877 = vpop.permute.xlu0 %5876
        %5878 = vrot.lane.b32.xlu0 %v1639, 16
        %v5879 = vpop.permute.xlu0 %5878
        %5880 = vrot.lane.b32.xlu0 %v1640, 16
        %v5881 = vpop.permute.xlu0 %5880
        %5882 = vrot.lane.b32.xlu0 %v1641, 16
        %v5883 = vpop.permute.xlu0 %5882
        %5884 = vrot.lane.b32.xlu0 %v1642, 16
        %v5885 = vpop.permute.xlu0 %5884
        %5886 = vrot.lane.b32.xlu0 %v1643, 16
        %v5887 = vpop.permute.xlu0 %5886
        %5888 = vrot.lane.b32.xlu0 %v1644, 16
        %v5889 = vpop.permute.xlu0 %5888
        %5890 = vrot.lane.b32.xlu0 %v1645, 16
        %v5891 = vpop.permute.xlu0 %5890
        %5892 = vrot.lane.b32.xlu0 %v1646, 16
        %v5893 = vpop.permute.xlu0 %5892
        %5926 = vrot.lane.b32.xlu0 %v1615, 20
        %v5927 = vpop.permute.xlu0 %5926
        %5928 = vrot.lane.b32.xlu0 %v1616, 20
        %v5929 = vpop.permute.xlu0 %5928
        %5930 = vrot.lane.b32.xlu0 %v1617, 20
        %v5931 = vpop.permute.xlu0 %5930
        %5932 = vrot.lane.b32.xlu0 %v1618, 20
        %v5933 = vpop.permute.xlu0 %5932
        %5934 = vrot.lane.b32.xlu0 %v1619, 20
        %v5935 = vpop.permute.xlu0 %5934
        %5936 = vrot.lane.b32.xlu0 %v1620, 20
        %v5937 = vpop.permute.xlu0 %5936
        %5938 = vrot.lane.b32.xlu0 %v1621, 20
        %v5939 = vpop.permute.xlu0 %5938
        %5940 = vrot.lane.b32.xlu0 %v1622, 20
        %v5941 = vpop.permute.xlu0 %5940
        %5942 = vrot.lane.b32.xlu0 %v1623, 20
        %v5943 = vpop.permute.xlu0 %5942
        %5944 = vrot.lane.b32.xlu0 %v1624, 20
        %v5945 = vpop.permute.xlu0 %5944
        %5946 = vrot.lane.b32.xlu0 %v1625, 20
        %v5947 = vpop.permute.xlu0 %5946
        %5948 = vrot.lane.b32.xlu0 %v1626, 20
        %v5949 = vpop.permute.xlu0 %5948
        %5950 = vrot.lane.b32.xlu0 %v1627, 20
        %v5951 = vpop.permute.xlu0 %5950
        %5952 = vrot.lane.b32.xlu0 %v1628, 20
        %v5953 = vpop.permute.xlu0 %5952
        %5954 = vrot.lane.b32.xlu0 %v1629, 20
        %v5955 = vpop.permute.xlu0 %5954
        %5956 = vrot.lane.b32.xlu0 %v1630, 20
        %v5957 = vpop.permute.xlu0 %5956
        %5958 = vrot.lane.b32.xlu0 %v1631, 20
        %v5959 = vpop.permute.xlu0 %5958
        %5960 = vrot.lane.b32.xlu0 %v1632, 20
        %v5961 = vpop.permute.xlu0 %5960
        %5962 = vrot.lane.b32.xlu0 %v1633, 20
        %v5963 = vpop.permute.xlu0 %5962
        %5964 = vrot.lane.b32.xlu0 %v1634, 20
        %v5965 = vpop.permute.xlu0 %5964
        %5966 = vrot.lane.b32.xlu0 %v1635, 20
        %v5967 = vpop.permute.xlu0 %5966
        %5968 = vrot.lane.b32.xlu0 %v1636, 20
        %v5969 = vpop.permute.xlu0 %5968
        %5970 = vrot.lane.b32.xlu0 %v1637, 20
        %v5971 = vpop.permute.xlu0 %5970
        %5972 = vrot.lane.b32.xlu0 %v1638, 20
        %v5973 = vpop.permute.xlu0 %5972
        %5974 = vrot.lane.b32.xlu0 %v1639, 20
        %v5975 = vpop.permute.xlu0 %5974
        %5976 = vrot.lane.b32.xlu0 %v1640, 20
        %v5977 = vpop.permute.xlu0 %5976
        %5978 = vrot.lane.b32.xlu0 %v1641, 20
        %v5979 = vpop.permute.xlu0 %5978
        %5980 = vrot.lane.b32.xlu0 %v1642, 20
        %v5981 = vpop.permute.xlu0 %5980
        %5982 = vrot.lane.b32.xlu0 %v1643, 20
        %v5983 = vpop.permute.xlu0 %5982
        %5984 = vrot.lane.b32.xlu0 %v1644, 20
        %v5985 = vpop.permute.xlu0 %5984
        %5986 = vrot.lane.b32.xlu0 %v1645, 20
        %v5987 = vpop.permute.xlu0 %5986
        %5988 = vrot.lane.b32.xlu0 %v1646, 20
        %v5989 = vpop.permute.xlu0 %5988
        %6022 = vrot.lane.b32.xlu0 %v1615, 24
        %v6023 = vpop.permute.xlu0 %6022
        %6024 = vrot.lane.b32.xlu0 %v1616, 24
        %v6025 = vpop.permute.xlu0 %6024
        %6026 = vrot.lane.b32.xlu0 %v1617, 24
        %v6027 = vpop.permute.xlu0 %6026
        %6028 = vrot.lane.b32.xlu0 %v1618, 24
        %v6029 = vpop.permute.xlu0 %6028
        %6030 = vrot.lane.b32.xlu0 %v1619, 24
        %v6031 = vpop.permute.xlu0 %6030
        %6032 = vrot.lane.b32.xlu0 %v1620, 24
        %v6033 = vpop.permute.xlu0 %6032
        %6034 = vrot.lane.b32.xlu0 %v1621, 24
        %v6035 = vpop.permute.xlu0 %6034
        %6036 = vrot.lane.b32.xlu0 %v1622, 24
        %v6037 = vpop.permute.xlu0 %6036
        %6038 = vrot.lane.b32.xlu0 %v1623, 24
        %v6039 = vpop.permute.xlu0 %6038
        %6040 = vrot.lane.b32.xlu0 %v1624, 24
        %v6041 = vpop.permute.xlu0 %6040
        %6042 = vrot.lane.b32.xlu0 %v1625, 24
        %v6043 = vpop.permute.xlu0 %6042
        %6044 = vrot.lane.b32.xlu0 %v1626, 24
        %v6045 = vpop.permute.xlu0 %6044
        %6046 = vrot.lane.b32.xlu0 %v1627, 24
        %v6047 = vpop.permute.xlu0 %6046
        %6048 = vrot.lane.b32.xlu0 %v1628, 24
        %v6049 = vpop.permute.xlu0 %6048
        %6050 = vrot.lane.b32.xlu0 %v1629, 24
        %v6051 = vpop.permute.xlu0 %6050
        %6052 = vrot.lane.b32.xlu0 %v1630, 24
        %v6053 = vpop.permute.xlu0 %6052
        %6054 = vrot.lane.b32.xlu0 %v1631, 24
        %v6055 = vpop.permute.xlu0 %6054
        %6056 = vrot.lane.b32.xlu0 %v1632, 24
        %v6057 = vpop.permute.xlu0 %6056
        %6058 = vrot.lane.b32.xlu0 %v1633, 24
        %v6059 = vpop.permute.xlu0 %6058
        %6060 = vrot.lane.b32.xlu0 %v1634, 24
        %v6061 = vpop.permute.xlu0 %6060
        %6062 = vrot.lane.b32.xlu0 %v1635, 24
        %v6063 = vpop.permute.xlu0 %6062
        %6064 = vrot.lane.b32.xlu0 %v1636, 24
        %v6065 = vpop.permute.xlu0 %6064
        %6066 = vrot.lane.b32.xlu0 %v1637, 24
        %v6067 = vpop.permute.xlu0 %6066
        %6068 = vrot.lane.b32.xlu0 %v1638, 24
        %v6069 = vpop.permute.xlu0 %6068
        %6070 = vrot.lane.b32.xlu0 %v1639, 24
        %v6071 = vpop.permute.xlu0 %6070
        %6072 = vrot.lane.b32.xlu0 %v1640, 24
        %v6073 = vpop.permute.xlu0 %6072
        %6074 = vrot.lane.b32.xlu0 %v1641, 24
        %v6075 = vpop.permute.xlu0 %6074
        %6076 = vrot.lane.b32.xlu0 %v1642, 24
        %v6077 = vpop.permute.xlu0 %6076
        %6078 = vrot.lane.b32.xlu0 %v1643, 24
        %v6079 = vpop.permute.xlu0 %6078
        %6080 = vrot.lane.b32.xlu0 %v1644, 24
        %v6081 = vpop.permute.xlu0 %6080
        %6082 = vrot.lane.b32.xlu0 %v1645, 24
        %v6083 = vpop.permute.xlu0 %6082
        %6084 = vrot.lane.b32.xlu0 %v1646, 24
        %v6085 = vpop.permute.xlu0 %6084
        %6118 = vrot.lane.b32.xlu0 %v1615, 28
        %v6119 = vpop.permute.xlu0 %6118
        %6120 = vrot.lane.b32.xlu0 %v1616, 28
        %v6121 = vpop.permute.xlu0 %6120
        %6122 = vrot.lane.b32.xlu0 %v1617, 28
        %v6123 = vpop.permute.xlu0 %6122
        %6124 = vrot.lane.b32.xlu0 %v1618, 28
        %v6125 = vpop.permute.xlu0 %6124
        %6126 = vrot.lane.b32.xlu0 %v1619, 28
        %v6127 = vpop.permute.xlu0 %6126
        %6128 = vrot.lane.b32.xlu0 %v1620, 28
        %v6129 = vpop.permute.xlu0 %6128
        %6130 = vrot.lane.b32.xlu0 %v1621, 28
        %v6131 = vpop.permute.xlu0 %6130
        %6132 = vrot.lane.b32.xlu0 %v1622, 28
        %v6133 = vpop.permute.xlu0 %6132
        %6134 = vrot.lane.b32.xlu0 %v1623, 28
        %v6135 = vpop.permute.xlu0 %6134
        %6136 = vrot.lane.b32.xlu0 %v1624, 28
        %v6137 = vpop.permute.xlu0 %6136
        %6138 = vrot.lane.b32.xlu0 %v1625, 28
        %v6139 = vpop.permute.xlu0 %6138
        %6140 = vrot.lane.b32.xlu0 %v1626, 28
        %v6141 = vpop.permute.xlu0 %6140
        %6142 = vrot.lane.b32.xlu0 %v1627, 28
        %v6143 = vpop.permute.xlu0 %6142
        %6144 = vrot.lane.b32.xlu0 %v1628, 28
        %v6145 = vpop.permute.xlu0 %6144
        %6146 = vrot.lane.b32.xlu0 %v1629, 28
        %v6147 = vpop.permute.xlu0 %6146
        %6148 = vrot.lane.b32.xlu0 %v1630, 28
        %v6149 = vpop.permute.xlu0 %6148
        %6150 = vrot.lane.b32.xlu0 %v1631, 28
        %v6151 = vpop.permute.xlu0 %6150
        %6152 = vrot.lane.b32.xlu0 %v1632, 28
        %v6153 = vpop.permute.xlu0 %6152
        %6154 = vrot.lane.b32.xlu0 %v1633, 28
        %v6155 = vpop.permute.xlu0 %6154
        %6156 = vrot.lane.b32.xlu0 %v1634, 28
        %v6157 = vpop.permute.xlu0 %6156
        %6158 = vrot.lane.b32.xlu0 %v1635, 28
        %v6159 = vpop.permute.xlu0 %6158
        %6160 = vrot.lane.b32.xlu0 %v1636, 28
        %v6161 = vpop.permute.xlu0 %6160
        %6162 = vrot.lane.b32.xlu0 %v1637, 28
        %v6163 = vpop.permute.xlu0 %6162
        %6164 = vrot.lane.b32.xlu0 %v1638, 28
        %v6165 = vpop.permute.xlu0 %6164
        %6166 = vrot.lane.b32.xlu0 %v1639, 28
        %v6167 = vpop.permute.xlu0 %6166
        %6168 = vrot.lane.b32.xlu0 %v1640, 28
        %v6169 = vpop.permute.xlu0 %6168
        %6170 = vrot.lane.b32.xlu0 %v1641, 28
        %v6171 = vpop.permute.xlu0 %6170
        %6172 = vrot.lane.b32.xlu0 %v1642, 28
        %v6173 = vpop.permute.xlu0 %6172
        %6174 = vrot.lane.b32.xlu0 %v1643, 28
        %v6175 = vpop.permute.xlu0 %6174
        %6176 = vrot.lane.b32.xlu0 %v1644, 28
        %v6177 = vpop.permute.xlu0 %6176
        %6178 = vrot.lane.b32.xlu0 %v1645, 28
        %v6179 = vpop.permute.xlu0 %6178
        %6180 = vrot.lane.b32.xlu0 %v1646, 28
        %v6181 = vpop.permute.xlu0 %6180
        %6214 = vrot.lane.b32.xlu0 %v1615, 32
        %v6215 = vpop.permute.xlu0 %6214
        %6216 = vrot.lane.b32.xlu0 %v1616, 32
        %v6217 = vpop.permute.xlu0 %6216
        %6218 = vrot.lane.b32.xlu0 %v1617, 32
        %v6219 = vpop.permute.xlu0 %6218
        %6220 = vrot.lane.b32.xlu0 %v1618, 32
        %v6221 = vpop.permute.xlu0 %6220
        %6222 = vrot.lane.b32.xlu0 %v1619, 32
        %v6223 = vpop.permute.xlu0 %6222
        %6224 = vrot.lane.b32.xlu0 %v1620, 32
        %v6225 = vpop.permute.xlu0 %6224
        %6226 = vrot.lane.b32.xlu0 %v1621, 32
        %v6227 = vpop.permute.xlu0 %6226
        %6228 = vrot.lane.b32.xlu0 %v1622, 32
        %v6229 = vpop.permute.xlu0 %6228
        %6230 = vrot.lane.b32.xlu0 %v1623, 32
        %v6231 = vpop.permute.xlu0 %6230
        %6232 = vrot.lane.b32.xlu0 %v1624, 32
        %v6233 = vpop.permute.xlu0 %6232
        %6234 = vrot.lane.b32.xlu0 %v1625, 32
        %v6235 = vpop.permute.xlu0 %6234
        %6236 = vrot.lane.b32.xlu0 %v1626, 32
        %v6237 = vpop.permute.xlu0 %6236
        %6238 = vrot.lane.b32.xlu0 %v1627, 32
        %v6239 = vpop.permute.xlu0 %6238
        %6240 = vrot.lane.b32.xlu0 %v1628, 32
        %v6241 = vpop.permute.xlu0 %6240
        %6242 = vrot.lane.b32.xlu0 %v1629, 32
        %v6243 = vpop.permute.xlu0 %6242
        %6244 = vrot.lane.b32.xlu0 %v1630, 32
        %v6245 = vpop.permute.xlu0 %6244
        %6246 = vrot.lane.b32.xlu0 %v1631, 32
        %v6247 = vpop.permute.xlu0 %6246
        %6248 = vrot.lane.b32.xlu0 %v1632, 32
        %v6249 = vpop.permute.xlu0 %6248
        %6250 = vrot.lane.b32.xlu0 %v1633, 32
        %v6251 = vpop.permute.xlu0 %6250
        %6252 = vrot.lane.b32.xlu0 %v1634, 32
        %v6253 = vpop.permute.xlu0 %6252
        %6254 = vrot.lane.b32.xlu0 %v1635, 32
        %v6255 = vpop.permute.xlu0 %6254
        %6256 = vrot.lane.b32.xlu0 %v1636, 32
        %v6257 = vpop.permute.xlu0 %6256
        %6258 = vrot.lane.b32.xlu0 %v1637, 32
        %v6259 = vpop.permute.xlu0 %6258
        %6260 = vrot.lane.b32.xlu0 %v1638, 32
        %v6261 = vpop.permute.xlu0 %6260
        %6262 = vrot.lane.b32.xlu0 %v1639, 32
        %v6263 = vpop.permute.xlu0 %6262
        %6264 = vrot.lane.b32.xlu0 %v1640, 32
        %v6265 = vpop.permute.xlu0 %6264
        %6266 = vrot.lane.b32.xlu0 %v1641, 32
        %v6267 = vpop.permute.xlu0 %6266
        %6268 = vrot.lane.b32.xlu0 %v1642, 32
        %v6269 = vpop.permute.xlu0 %6268
        %6270 = vrot.lane.b32.xlu0 %v1643, 32
        %v6271 = vpop.permute.xlu0 %6270
        %6272 = vrot.lane.b32.xlu0 %v1644, 32
        %v6273 = vpop.permute.xlu0 %6272
        %6274 = vrot.lane.b32.xlu0 %v1645, 32
        %v6275 = vpop.permute.xlu0 %6274
        %6276 = vrot.lane.b32.xlu0 %v1646, 32
        %v6277 = vpop.permute.xlu0 %6276
        %6310 = vrot.lane.b32.xlu0 %v1615, 36
        %v6311 = vpop.permute.xlu0 %6310
        %6312 = vrot.lane.b32.xlu0 %v1616, 36
        %v6313 = vpop.permute.xlu0 %6312
        %6314 = vrot.lane.b32.xlu0 %v1617, 36
        %v6315 = vpop.permute.xlu0 %6314
        %6316 = vrot.lane.b32.xlu0 %v1618, 36
        %v6317 = vpop.permute.xlu0 %6316
        %6318 = vrot.lane.b32.xlu0 %v1619, 36
        %v6319 = vpop.permute.xlu0 %6318
        %6320 = vrot.lane.b32.xlu0 %v1620, 36
        %v6321 = vpop.permute.xlu0 %6320
        %6322 = vrot.lane.b32.xlu0 %v1621, 36
        %v6323 = vpop.permute.xlu0 %6322
        %6324 = vrot.lane.b32.xlu0 %v1622, 36
        %v6325 = vpop.permute.xlu0 %6324
        %6326 = vrot.lane.b32.xlu0 %v1623, 36
        %v6327 = vpop.permute.xlu0 %6326
        %6328 = vrot.lane.b32.xlu0 %v1624, 36
        %v6329 = vpop.permute.xlu0 %6328
        %6330 = vrot.lane.b32.xlu0 %v1625, 36
        %v6331 = vpop.permute.xlu0 %6330
        %6332 = vrot.lane.b32.xlu0 %v1626, 36
        %v6333 = vpop.permute.xlu0 %6332
        %6334 = vrot.lane.b32.xlu0 %v1627, 36
        %v6335 = vpop.permute.xlu0 %6334
        %6336 = vrot.lane.b32.xlu0 %v1628, 36
        %v6337 = vpop.permute.xlu0 %6336
        %6338 = vrot.lane.b32.xlu0 %v1629, 36
        %v6339 = vpop.permute.xlu0 %6338
        %6340 = vrot.lane.b32.xlu0 %v1630, 36
        %v6341 = vpop.permute.xlu0 %6340
        %6342 = vrot.lane.b32.xlu0 %v1631, 36
        %v6343 = vpop.permute.xlu0 %6342
        %6344 = vrot.lane.b32.xlu0 %v1632, 36
        %v6345 = vpop.permute.xlu0 %6344
        %6346 = vrot.lane.b32.xlu0 %v1633, 36
        %v6347 = vpop.permute.xlu0 %6346
        %6348 = vrot.lane.b32.xlu0 %v1634, 36
        %v6349 = vpop.permute.xlu0 %6348
        %6350 = vrot.lane.b32.xlu0 %v1635, 36
        %v6351 = vpop.permute.xlu0 %6350
        %6352 = vrot.lane.b32.xlu0 %v1636, 36
        %v6353 = vpop.permute.xlu0 %6352
        %6354 = vrot.lane.b32.xlu0 %v1637, 36
        %v6355 = vpop.permute.xlu0 %6354
        %6356 = vrot.lane.b32.xlu0 %v1638, 36
        %v6357 = vpop.permute.xlu0 %6356
        %6358 = vrot.lane.b32.xlu0 %v1639, 36
        %v6359 = vpop.permute.xlu0 %6358
        %6360 = vrot.lane.b32.xlu0 %v1640, 36
        %v6361 = vpop.permute.xlu0 %6360
        %6362 = vrot.lane.b32.xlu0 %v1641, 36
        %v6363 = vpop.permute.xlu0 %6362
        %6364 = vrot.lane.b32.xlu0 %v1642, 36
        %v6365 = vpop.permute.xlu0 %6364
        %6366 = vrot.lane.b32.xlu0 %v1643, 36
        %v6367 = vpop.permute.xlu0 %6366
        %6368 = vrot.lane.b32.xlu0 %v1644, 36
        %v6369 = vpop.permute.xlu0 %6368
        %6370 = vrot.lane.b32.xlu0 %v1645, 36
        %v6371 = vpop.permute.xlu0 %6370
        %6372 = vrot.lane.b32.xlu0 %v1646, 36
        %v6373 = vpop.permute.xlu0 %6372
        %6406 = vrot.lane.b32.xlu0 %v1615, 40
        %v6407 = vpop.permute.xlu0 %6406
        %6408 = vrot.lane.b32.xlu0 %v1616, 40
        %v6409 = vpop.permute.xlu0 %6408
        %6410 = vrot.lane.b32.xlu0 %v1617, 40
        %v6411 = vpop.permute.xlu0 %6410
        %6412 = vrot.lane.b32.xlu0 %v1618, 40
        %v6413 = vpop.permute.xlu0 %6412
        %6414 = vrot.lane.b32.xlu0 %v1619, 40
        %v6415 = vpop.permute.xlu0 %6414
        %6416 = vrot.lane.b32.xlu0 %v1620, 40
        %v6417 = vpop.permute.xlu0 %6416
        %6418 = vrot.lane.b32.xlu0 %v1621, 40
        %v6419 = vpop.permute.xlu0 %6418
        %6420 = vrot.lane.b32.xlu0 %v1622, 40
        %v6421 = vpop.permute.xlu0 %6420
        %6422 = vrot.lane.b32.xlu0 %v1623, 40
        %v6423 = vpop.permute.xlu0 %6422
        %6424 = vrot.lane.b32.xlu0 %v1624, 40
        %v6425 = vpop.permute.xlu0 %6424
        %6426 = vrot.lane.b32.xlu0 %v1625, 40
        %v6427 = vpop.permute.xlu0 %6426
        %6428 = vrot.lane.b32.xlu0 %v1626, 40
        %v6429 = vpop.permute.xlu0 %6428
        %6430 = vrot.lane.b32.xlu0 %v1627, 40
        %v6431 = vpop.permute.xlu0 %6430
        %6432 = vrot.lane.b32.xlu0 %v1628, 40
        %v6433 = vpop.permute.xlu0 %6432
        %6434 = vrot.lane.b32.xlu0 %v1629, 40
        %v6435 = vpop.permute.xlu0 %6434
        %6436 = vrot.lane.b32.xlu0 %v1630, 40
        %v6437 = vpop.permute.xlu0 %6436
        %6438 = vrot.lane.b32.xlu0 %v1631, 40
        %v6439 = vpop.permute.xlu0 %6438
        %6440 = vrot.lane.b32.xlu0 %v1632, 40
        %v6441 = vpop.permute.xlu0 %6440
        %6442 = vrot.lane.b32.xlu0 %v1633, 40
        %v6443 = vpop.permute.xlu0 %6442
        %6444 = vrot.lane.b32.xlu0 %v1634, 40
        %v6445 = vpop.permute.xlu0 %6444
        %6446 = vrot.lane.b32.xlu0 %v1635, 40
        %v6447 = vpop.permute.xlu0 %6446
        %6448 = vrot.lane.b32.xlu0 %v1636, 40
        %v6449 = vpop.permute.xlu0 %6448
        %6450 = vrot.lane.b32.xlu0 %v1637, 40
        %v6451 = vpop.permute.xlu0 %6450
        %6452 = vrot.lane.b32.xlu0 %v1638, 40
        %v6453 = vpop.permute.xlu0 %6452
        %6454 = vrot.lane.b32.xlu0 %v1639, 40
        %v6455 = vpop.permute.xlu0 %6454
        %6456 = vrot.lane.b32.xlu0 %v1640, 40
        %v6457 = vpop.permute.xlu0 %6456
        %6458 = vrot.lane.b32.xlu0 %v1641, 40
        %v6459 = vpop.permute.xlu0 %6458
        %6460 = vrot.lane.b32.xlu0 %v1642, 40
        %v6461 = vpop.permute.xlu0 %6460
        %6462 = vrot.lane.b32.xlu0 %v1643, 40
        %v6463 = vpop.permute.xlu0 %6462
        %6464 = vrot.lane.b32.xlu0 %v1644, 40
        %v6465 = vpop.permute.xlu0 %6464
        %6466 = vrot.lane.b32.xlu0 %v1645, 40
        %v6467 = vpop.permute.xlu0 %6466
        %6468 = vrot.lane.b32.xlu0 %v1646, 40
        %v6469 = vpop.permute.xlu0 %6468
        %6502 = vrot.lane.b32.xlu0 %v1615, 44
        %v6503 = vpop.permute.xlu0 %6502
        %6504 = vrot.lane.b32.xlu0 %v1616, 44
        %v6505 = vpop.permute.xlu0 %6504
        %6506 = vrot.lane.b32.xlu0 %v1617, 44
        %v6507 = vpop.permute.xlu0 %6506
        %6508 = vrot.lane.b32.xlu0 %v1618, 44
        %v6509 = vpop.permute.xlu0 %6508
        %6510 = vrot.lane.b32.xlu0 %v1619, 44
        %v6511 = vpop.permute.xlu0 %6510
        %6512 = vrot.lane.b32.xlu0 %v1620, 44
        %v6513 = vpop.permute.xlu0 %6512
        %6514 = vrot.lane.b32.xlu0 %v1621, 44
        %v6515 = vpop.permute.xlu0 %6514
        %6516 = vrot.lane.b32.xlu0 %v1622, 44
        %v6517 = vpop.permute.xlu0 %6516
        %6518 = vrot.lane.b32.xlu0 %v1623, 44
        %v6519 = vpop.permute.xlu0 %6518
        %6520 = vrot.lane.b32.xlu0 %v1624, 44
        %v6521 = vpop.permute.xlu0 %6520
        %6522 = vrot.lane.b32.xlu0 %v1625, 44
        %v6523 = vpop.permute.xlu0 %6522
        %6524 = vrot.lane.b32.xlu0 %v1626, 44
        %v6525 = vpop.permute.xlu0 %6524
        %6526 = vrot.lane.b32.xlu0 %v1627, 44
        %v6527 = vpop.permute.xlu0 %6526
        %6528 = vrot.lane.b32.xlu0 %v1628, 44
        %v6529 = vpop.permute.xlu0 %6528
        %6530 = vrot.lane.b32.xlu0 %v1629, 44
        %v6531 = vpop.permute.xlu0 %6530
        %6532 = vrot.lane.b32.xlu0 %v1630, 44
        %v6533 = vpop.permute.xlu0 %6532
        %6534 = vrot.lane.b32.xlu0 %v1631, 44
        %v6535 = vpop.permute.xlu0 %6534
        %6536 = vrot.lane.b32.xlu0 %v1632, 44
        %v6537 = vpop.permute.xlu0 %6536
        %6538 = vrot.lane.b32.xlu0 %v1633, 44
        %v6539 = vpop.permute.xlu0 %6538
        %6540 = vrot.lane.b32.xlu0 %v1634, 44
        %v6541 = vpop.permute.xlu0 %6540
        %6542 = vrot.lane.b32.xlu0 %v1635, 44
        %v6543 = vpop.permute.xlu0 %6542
        %6544 = vrot.lane.b32.xlu0 %v1636, 44
        %v6545 = vpop.permute.xlu0 %6544
        %6546 = vrot.lane.b32.xlu0 %v1637, 44
        %v6547 = vpop.permute.xlu0 %6546
        %6548 = vrot.lane.b32.xlu0 %v1638, 44
        %v6549 = vpop.permute.xlu0 %6548
        %6550 = vrot.lane.b32.xlu0 %v1639, 44
        %v6551 = vpop.permute.xlu0 %6550
        %6552 = vrot.lane.b32.xlu0 %v1640, 44
        %v6553 = vpop.permute.xlu0 %6552
        %6554 = vrot.lane.b32.xlu0 %v1641, 44
        %v6555 = vpop.permute.xlu0 %6554
        %6556 = vrot.lane.b32.xlu0 %v1642, 44
        %v6557 = vpop.permute.xlu0 %6556
        %6558 = vrot.lane.b32.xlu0 %v1643, 44
        %v6559 = vpop.permute.xlu0 %6558
        %6560 = vrot.lane.b32.xlu0 %v1644, 44
        %v6561 = vpop.permute.xlu0 %6560
        %6562 = vrot.lane.b32.xlu0 %v1645, 44
        %v6563 = vpop.permute.xlu0 %6562
        %6564 = vrot.lane.b32.xlu0 %v1646, 44
        %v6565 = vpop.permute.xlu0 %6564
        %6598 = vrot.lane.b32.xlu0 %v1615, 48
        %v6599 = vpop.permute.xlu0 %6598
        %6600 = vrot.lane.b32.xlu0 %v1616, 48
        %v6601 = vpop.permute.xlu0 %6600
        %6602 = vrot.lane.b32.xlu0 %v1617, 48
        %v6603 = vpop.permute.xlu0 %6602
        %6604 = vrot.lane.b32.xlu0 %v1618, 48
        %v6605 = vpop.permute.xlu0 %6604
        %6606 = vrot.lane.b32.xlu0 %v1619, 48
        %v6607 = vpop.permute.xlu0 %6606
        %6608 = vrot.lane.b32.xlu0 %v1620, 48
        %v6609 = vpop.permute.xlu0 %6608
        %6610 = vrot.lane.b32.xlu0 %v1621, 48
        %v6611 = vpop.permute.xlu0 %6610
        %6612 = vrot.lane.b32.xlu0 %v1622, 48
        %v6613 = vpop.permute.xlu0 %6612
        %6614 = vrot.lane.b32.xlu0 %v1623, 48
        %v6615 = vpop.permute.xlu0 %6614
        %6616 = vrot.lane.b32.xlu0 %v1624, 48
        %v6617 = vpop.permute.xlu0 %6616
        %6618 = vrot.lane.b32.xlu0 %v1625, 48
        %v6619 = vpop.permute.xlu0 %6618
        %6620 = vrot.lane.b32.xlu0 %v1626, 48
        %v6621 = vpop.permute.xlu0 %6620
        %6622 = vrot.lane.b32.xlu0 %v1627, 48
        %v6623 = vpop.permute.xlu0 %6622
        %6624 = vrot.lane.b32.xlu0 %v1628, 48
        %v6625 = vpop.permute.xlu0 %6624
        %6626 = vrot.lane.b32.xlu0 %v1629, 48
        %v6627 = vpop.permute.xlu0 %6626
        %6628 = vrot.lane.b32.xlu0 %v1630, 48
        %v6629 = vpop.permute.xlu0 %6628
        %6630 = vrot.lane.b32.xlu0 %v1631, 48
        %v6631 = vpop.permute.xlu0 %6630
        %6632 = vrot.lane.b32.xlu0 %v1632, 48
        %v6633 = vpop.permute.xlu0 %6632
        %6634 = vrot.lane.b32.xlu0 %v1633, 48
        %v6635 = vpop.permute.xlu0 %6634
        %6636 = vrot.lane.b32.xlu0 %v1634, 48
        %v6637 = vpop.permute.xlu0 %6636
        %6638 = vrot.lane.b32.xlu0 %v1635, 48
        %v6639 = vpop.permute.xlu0 %6638
        %6640 = vrot.lane.b32.xlu0 %v1636, 48
        %v6641 = vpop.permute.xlu0 %6640
        %6642 = vrot.lane.b32.xlu0 %v1637, 48
        %v6643 = vpop.permute.xlu0 %6642
        %6644 = vrot.lane.b32.xlu0 %v1638, 48
        %v6645 = vpop.permute.xlu0 %6644
        %6646 = vrot.lane.b32.xlu0 %v1639, 48
        %v6647 = vpop.permute.xlu0 %6646
        %6648 = vrot.lane.b32.xlu0 %v1640, 48
        %v6649 = vpop.permute.xlu0 %6648
        %6650 = vrot.lane.b32.xlu0 %v1641, 48
        %v6651 = vpop.permute.xlu0 %6650
        %6652 = vrot.lane.b32.xlu0 %v1642, 48
        %v6653 = vpop.permute.xlu0 %6652
        %6654 = vrot.lane.b32.xlu0 %v1643, 48
        %v6655 = vpop.permute.xlu0 %6654
        %6656 = vrot.lane.b32.xlu0 %v1644, 48
        %v6657 = vpop.permute.xlu0 %6656
        %6658 = vrot.lane.b32.xlu0 %v1645, 48
        %v6659 = vpop.permute.xlu0 %6658
        %6660 = vrot.lane.b32.xlu0 %v1646, 48
        %v6661 = vpop.permute.xlu0 %6660
        %6694 = vrot.lane.b32.xlu0 %v1615, 52
        %v6695 = vpop.permute.xlu0 %6694
        %6696 = vrot.lane.b32.xlu0 %v1616, 52
        %v6697 = vpop.permute.xlu0 %6696
        %6698 = vrot.lane.b32.xlu0 %v1617, 52
        %v6699 = vpop.permute.xlu0 %6698
        %6700 = vrot.lane.b32.xlu0 %v1618, 52
        %v6701 = vpop.permute.xlu0 %6700
        %6702 = vrot.lane.b32.xlu0 %v1619, 52
        %v6703 = vpop.permute.xlu0 %6702
        %6704 = vrot.lane.b32.xlu0 %v1620, 52
        %v6705 = vpop.permute.xlu0 %6704
        %6706 = vrot.lane.b32.xlu0 %v1621, 52
        %v6707 = vpop.permute.xlu0 %6706
        %6708 = vrot.lane.b32.xlu0 %v1622, 52
        %v6709 = vpop.permute.xlu0 %6708
        %6710 = vrot.lane.b32.xlu0 %v1623, 52
        %v6711 = vpop.permute.xlu0 %6710
        %6712 = vrot.lane.b32.xlu0 %v1624, 52
        %v6713 = vpop.permute.xlu0 %6712
        %6714 = vrot.lane.b32.xlu0 %v1625, 52
        %v6715 = vpop.permute.xlu0 %6714
        %6716 = vrot.lane.b32.xlu0 %v1626, 52
        %v6717 = vpop.permute.xlu0 %6716
        %6718 = vrot.lane.b32.xlu0 %v1627, 52
        %v6719 = vpop.permute.xlu0 %6718
        %6720 = vrot.lane.b32.xlu0 %v1628, 52
        %v6721 = vpop.permute.xlu0 %6720
        %6722 = vrot.lane.b32.xlu0 %v1629, 52
        %v6723 = vpop.permute.xlu0 %6722
        %6724 = vrot.lane.b32.xlu0 %v1630, 52
        %v6725 = vpop.permute.xlu0 %6724
        %6726 = vrot.lane.b32.xlu0 %v1631, 52
        %v6727 = vpop.permute.xlu0 %6726
        %6728 = vrot.lane.b32.xlu0 %v1632, 52
        %v6729 = vpop.permute.xlu0 %6728
        %6730 = vrot.lane.b32.xlu0 %v1633, 52
        %v6731 = vpop.permute.xlu0 %6730
        %6732 = vrot.lane.b32.xlu0 %v1634, 52
        %v6733 = vpop.permute.xlu0 %6732
        %6734 = vrot.lane.b32.xlu0 %v1635, 52
        %v6735 = vpop.permute.xlu0 %6734
        %6736 = vrot.lane.b32.xlu0 %v1636, 52
        %v6737 = vpop.permute.xlu0 %6736
        %6738 = vrot.lane.b32.xlu0 %v1637, 52
        %v6739 = vpop.permute.xlu0 %6738
        %6740 = vrot.lane.b32.xlu0 %v1638, 52
        %v6741 = vpop.permute.xlu0 %6740
        %6742 = vrot.lane.b32.xlu0 %v1639, 52
        %v6743 = vpop.permute.xlu0 %6742
        %6744 = vrot.lane.b32.xlu0 %v1640, 52
        %v6745 = vpop.permute.xlu0 %6744
        %6746 = vrot.lane.b32.xlu0 %v1641, 52
        %v6747 = vpop.permute.xlu0 %6746
        %6748 = vrot.lane.b32.xlu0 %v1642, 52
        %v6749 = vpop.permute.xlu0 %6748
        %6750 = vrot.lane.b32.xlu0 %v1643, 52
        %v6751 = vpop.permute.xlu0 %6750
        %6752 = vrot.lane.b32.xlu0 %v1644, 52
        %v6753 = vpop.permute.xlu0 %6752
        %6754 = vrot.lane.b32.xlu0 %v1645, 52
        %v6755 = vpop.permute.xlu0 %6754
        %6756 = vrot.lane.b32.xlu0 %v1646, 52
        %v6757 = vpop.permute.xlu0 %6756
        %6790 = vrot.lane.b32.xlu0 %v1615, 56
        %v6791 = vpop.permute.xlu0 %6790
        %6792 = vrot.lane.b32.xlu0 %v1616, 56
        %v6793 = vpop.permute.xlu0 %6792
        %6794 = vrot.lane.b32.xlu0 %v1617, 56
        %v6795 = vpop.permute.xlu0 %6794
        %6796 = vrot.lane.b32.xlu0 %v1618, 56
        %v6797 = vpop.permute.xlu0 %6796
        %6798 = vrot.lane.b32.xlu0 %v1619, 56
        %v6799 = vpop.permute.xlu0 %6798
        %6800 = vrot.lane.b32.xlu0 %v1620, 56
        %v6801 = vpop.permute.xlu0 %6800
        %6802 = vrot.lane.b32.xlu0 %v1621, 56
        %v6803 = vpop.permute.xlu0 %6802
        %6804 = vrot.lane.b32.xlu0 %v1622, 56
        %v6805 = vpop.permute.xlu0 %6804
        %6806 = vrot.lane.b32.xlu0 %v1623, 56
        %v6807 = vpop.permute.xlu0 %6806
        %6808 = vrot.lane.b32.xlu0 %v1624, 56
        %v6809 = vpop.permute.xlu0 %6808
        %6810 = vrot.lane.b32.xlu0 %v1625, 56
        %v6811 = vpop.permute.xlu0 %6810
        %6812 = vrot.lane.b32.xlu0 %v1626, 56
        %v6813 = vpop.permute.xlu0 %6812
        %6814 = vrot.lane.b32.xlu0 %v1627, 56
        %v6815 = vpop.permute.xlu0 %6814
        %6816 = vrot.lane.b32.xlu0 %v1628, 56
        %v6817 = vpop.permute.xlu0 %6816
        %6818 = vrot.lane.b32.xlu0 %v1629, 56
        %v6819 = vpop.permute.xlu0 %6818
        %6820 = vrot.lane.b32.xlu0 %v1630, 56
        %v6821 = vpop.permute.xlu0 %6820
        %6822 = vrot.lane.b32.xlu0 %v1631, 56
        %v6823 = vpop.permute.xlu0 %6822
        %6824 = vrot.lane.b32.xlu0 %v1632, 56
        %v6825 = vpop.permute.xlu0 %6824
        %6826 = vrot.lane.b32.xlu0 %v1633, 56
        %v6827 = vpop.permute.xlu0 %6826
        %6828 = vrot.lane.b32.xlu0 %v1634, 56
        %v6829 = vpop.permute.xlu0 %6828
        %6830 = vrot.lane.b32.xlu0 %v1635, 56
        %v6831 = vpop.permute.xlu0 %6830
        %6832 = vrot.lane.b32.xlu0 %v1636, 56
        %v6833 = vpop.permute.xlu0 %6832
        %6834 = vrot.lane.b32.xlu0 %v1637, 56
        %v6835 = vpop.permute.xlu0 %6834
        %6836 = vrot.lane.b32.xlu0 %v1638, 56
        %v6837 = vpop.permute.xlu0 %6836
        %6838 = vrot.lane.b32.xlu0 %v1639, 56
        %v6839 = vpop.permute.xlu0 %6838
        %6840 = vrot.lane.b32.xlu0 %v1640, 56
        %v6841 = vpop.permute.xlu0 %6840
        %6842 = vrot.lane.b32.xlu0 %v1641, 56
        %v6843 = vpop.permute.xlu0 %6842
        %6844 = vrot.lane.b32.xlu0 %v1642, 56
        %v6845 = vpop.permute.xlu0 %6844
        %6846 = vrot.lane.b32.xlu0 %v1643, 56
        %v6847 = vpop.permute.xlu0 %6846
        %6848 = vrot.lane.b32.xlu0 %v1644, 56
        %v6849 = vpop.permute.xlu0 %6848
        %6850 = vrot.lane.b32.xlu0 %v1645, 56
        %v6851 = vpop.permute.xlu0 %6850
        %6852 = vrot.lane.b32.xlu0 %v1646, 56
        %v6853 = vpop.permute.xlu0 %6852
        %6886 = vrot.lane.b32.xlu0 %v1615, 60
        %v6887 = vpop.permute.xlu0 %6886
        %6888 = vrot.lane.b32.xlu0 %v1616, 60
        %v6889 = vpop.permute.xlu0 %6888
        %6890 = vrot.lane.b32.xlu0 %v1617, 60
        %v6891 = vpop.permute.xlu0 %6890
        %6892 = vrot.lane.b32.xlu0 %v1618, 60
        %v6893 = vpop.permute.xlu0 %6892
        %6894 = vrot.lane.b32.xlu0 %v1619, 60
        %v6895 = vpop.permute.xlu0 %6894
        %6896 = vrot.lane.b32.xlu0 %v1620, 60
        %v6897 = vpop.permute.xlu0 %6896
        %6898 = vrot.lane.b32.xlu0 %v1621, 60
        %v6899 = vpop.permute.xlu0 %6898
        %6900 = vrot.lane.b32.xlu0 %v1622, 60
        %v6901 = vpop.permute.xlu0 %6900
        %6902 = vrot.lane.b32.xlu0 %v1623, 60
        %v6903 = vpop.permute.xlu0 %6902
        %6904 = vrot.lane.b32.xlu0 %v1624, 60
        %v6905 = vpop.permute.xlu0 %6904
        %6906 = vrot.lane.b32.xlu0 %v1625, 60
        %v6907 = vpop.permute.xlu0 %6906
        %6908 = vrot.lane.b32.xlu0 %v1626, 60
        %v6909 = vpop.permute.xlu0 %6908
        %6910 = vrot.lane.b32.xlu0 %v1627, 60
        %v6911 = vpop.permute.xlu0 %6910
        %6912 = vrot.lane.b32.xlu0 %v1628, 60
        %v6913 = vpop.permute.xlu0 %6912
        %6914 = vrot.lane.b32.xlu0 %v1629, 60
        %v6915 = vpop.permute.xlu0 %6914
        %6916 = vrot.lane.b32.xlu0 %v1630, 60
        %v6917 = vpop.permute.xlu0 %6916
        %6918 = vrot.lane.b32.xlu0 %v1631, 60
        %v6919 = vpop.permute.xlu0 %6918
        %6920 = vrot.lane.b32.xlu0 %v1632, 60
        %v6921 = vpop.permute.xlu0 %6920
        %6922 = vrot.lane.b32.xlu0 %v1633, 60
        %v6923 = vpop.permute.xlu0 %6922
        %6924 = vrot.lane.b32.xlu0 %v1634, 60
        %v6925 = vpop.permute.xlu0 %6924
        %6926 = vrot.lane.b32.xlu0 %v1635, 60
        %v6927 = vpop.permute.xlu0 %6926
        %6928 = vrot.lane.b32.xlu0 %v1636, 60
        %v6929 = vpop.permute.xlu0 %6928
        %6930 = vrot.lane.b32.xlu0 %v1637, 60
        %v6931 = vpop.permute.xlu0 %6930
        %6932 = vrot.lane.b32.xlu0 %v1638, 60
        %v6933 = vpop.permute.xlu0 %6932
        %6934 = vrot.lane.b32.xlu0 %v1639, 60
        %v6935 = vpop.permute.xlu0 %6934
        %6936 = vrot.lane.b32.xlu0 %v1640, 60
        %v6937 = vpop.permute.xlu0 %6936
        %6938 = vrot.lane.b32.xlu0 %v1641, 60
        %v6939 = vpop.permute.xlu0 %6938
        %6940 = vrot.lane.b32.xlu0 %v1642, 60
        %v6941 = vpop.permute.xlu0 %6940
        %6942 = vrot.lane.b32.xlu0 %v1643, 60
        %v6943 = vpop.permute.xlu0 %6942
        %6944 = vrot.lane.b32.xlu0 %v1644, 60
        %v6945 = vpop.permute.xlu0 %6944
        %6946 = vrot.lane.b32.xlu0 %v1645, 60
        %v6947 = vpop.permute.xlu0 %6946
        %6948 = vrot.lane.b32.xlu0 %v1646, 60
        %v6949 = vpop.permute.xlu0 %6948
        %6982 = vrot.lane.b32.xlu0 %v1615, 64
        %v6983 = vpop.permute.xlu0 %6982
        %6984 = vrot.lane.b32.xlu0 %v1616, 64
        %v6985 = vpop.permute.xlu0 %6984
        %6986 = vrot.lane.b32.xlu0 %v1617, 64
        %v6987 = vpop.permute.xlu0 %6986
        %6988 = vrot.lane.b32.xlu0 %v1618, 64
        %v6989 = vpop.permute.xlu0 %6988
        %6990 = vrot.lane.b32.xlu0 %v1619, 64
        %v6991 = vpop.permute.xlu0 %6990
        %6992 = vrot.lane.b32.xlu0 %v1620, 64
        %v6993 = vpop.permute.xlu0 %6992
        %6994 = vrot.lane.b32.xlu0 %v1621, 64
        %v6995 = vpop.permute.xlu0 %6994
        %6996 = vrot.lane.b32.xlu0 %v1622, 64
        %v6997 = vpop.permute.xlu0 %6996
        %6998 = vrot.lane.b32.xlu0 %v1623, 64
        %v6999 = vpop.permute.xlu0 %6998
        %7000 = vrot.lane.b32.xlu0 %v1624, 64
        %v7001 = vpop.permute.xlu0 %7000
        %7002 = vrot.lane.b32.xlu0 %v1625, 64
        %v7003 = vpop.permute.xlu0 %7002
        %7004 = vrot.lane.b32.xlu0 %v1626, 64
        %v7005 = vpop.permute.xlu0 %7004
        %7006 = vrot.lane.b32.xlu0 %v1627, 64
        %v7007 = vpop.permute.xlu0 %7006
        %7008 = vrot.lane.b32.xlu0 %v1628, 64
        %v7009 = vpop.permute.xlu0 %7008
        %7010 = vrot.lane.b32.xlu0 %v1629, 64
        %v7011 = vpop.permute.xlu0 %7010
        %7012 = vrot.lane.b32.xlu0 %v1630, 64
        %v7013 = vpop.permute.xlu0 %7012
        %7014 = vrot.lane.b32.xlu0 %v1631, 64
        %v7015 = vpop.permute.xlu0 %7014
        %7016 = vrot.lane.b32.xlu0 %v1632, 64
        %v7017 = vpop.permute.xlu0 %7016
        %7018 = vrot.lane.b32.xlu0 %v1633, 64
        %v7019 = vpop.permute.xlu0 %7018
        %7020 = vrot.lane.b32.xlu0 %v1634, 64
        %v7021 = vpop.permute.xlu0 %7020
        %7022 = vrot.lane.b32.xlu0 %v1635, 64
        %v7023 = vpop.permute.xlu0 %7022
        %7024 = vrot.lane.b32.xlu0 %v1636, 64
        %v7025 = vpop.permute.xlu0 %7024
        %7026 = vrot.lane.b32.xlu0 %v1637, 64
        %v7027 = vpop.permute.xlu0 %7026
        %7028 = vrot.lane.b32.xlu0 %v1638, 64
        %v7029 = vpop.permute.xlu0 %7028
        %7030 = vrot.lane.b32.xlu0 %v1639, 64
        %v7031 = vpop.permute.xlu0 %7030
        %7032 = vrot.lane.b32.xlu0 %v1640, 64
        %v7033 = vpop.permute.xlu0 %7032
        %7034 = vrot.lane.b32.xlu0 %v1641, 64
        %v7035 = vpop.permute.xlu0 %7034
        %7036 = vrot.lane.b32.xlu0 %v1642, 64
        %v7037 = vpop.permute.xlu0 %7036
        %7038 = vrot.lane.b32.xlu0 %v1643, 64
        %v7039 = vpop.permute.xlu0 %7038
        %7040 = vrot.lane.b32.xlu0 %v1644, 64
        %v7041 = vpop.permute.xlu0 %7040
        %7042 = vrot.lane.b32.xlu0 %v1645, 64
        %v7043 = vpop.permute.xlu0 %7042
        %7044 = vrot.lane.b32.xlu0 %v1646, 64
        %v7045 = vpop.permute.xlu0 %7044
        %7078 = vrot.lane.b32.xlu0 %v1615, 68
        %v7079 = vpop.permute.xlu0 %7078
        %7080 = vrot.lane.b32.xlu0 %v1616, 68
        %v7081 = vpop.permute.xlu0 %7080
        %7082 = vrot.lane.b32.xlu0 %v1617, 68
        %v7083 = vpop.permute.xlu0 %7082
        %7084 = vrot.lane.b32.xlu0 %v1618, 68
        %v7085 = vpop.permute.xlu0 %7084
        %7086 = vrot.lane.b32.xlu0 %v1619, 68
        %v7087 = vpop.permute.xlu0 %7086
        %7088 = vrot.lane.b32.xlu0 %v1620, 68
        %v7089 = vpop.permute.xlu0 %7088
        %7090 = vrot.lane.b32.xlu0 %v1621, 68
        %v7091 = vpop.permute.xlu0 %7090
        %7092 = vrot.lane.b32.xlu0 %v1622, 68
        %v7093 = vpop.permute.xlu0 %7092
        %7094 = vrot.lane.b32.xlu0 %v1623, 68
        %v7095 = vpop.permute.xlu0 %7094
        %7096 = vrot.lane.b32.xlu0 %v1624, 68
        %v7097 = vpop.permute.xlu0 %7096
        %7098 = vrot.lane.b32.xlu0 %v1625, 68
        %v7099 = vpop.permute.xlu0 %7098
        %7100 = vrot.lane.b32.xlu0 %v1626, 68
        %v7101 = vpop.permute.xlu0 %7100
        %7102 = vrot.lane.b32.xlu0 %v1627, 68
        %v7103 = vpop.permute.xlu0 %7102
        %7104 = vrot.lane.b32.xlu0 %v1628, 68
        %v7105 = vpop.permute.xlu0 %7104
        %7106 = vrot.lane.b32.xlu0 %v1629, 68
        %v7107 = vpop.permute.xlu0 %7106
        %7108 = vrot.lane.b32.xlu0 %v1630, 68
        %v7109 = vpop.permute.xlu0 %7108
        %7110 = vrot.lane.b32.xlu0 %v1631, 68
        %v7111 = vpop.permute.xlu0 %7110
        %7112 = vrot.lane.b32.xlu0 %v1632, 68
        %v7113 = vpop.permute.xlu0 %7112
        %7114 = vrot.lane.b32.xlu0 %v1633, 68
        %v7115 = vpop.permute.xlu0 %7114
        %7116 = vrot.lane.b32.xlu0 %v1634, 68
        %v7117 = vpop.permute.xlu0 %7116
        %7118 = vrot.lane.b32.xlu0 %v1635, 68
        %v7119 = vpop.permute.xlu0 %7118
        %7120 = vrot.lane.b32.xlu0 %v1636, 68
        %v7121 = vpop.permute.xlu0 %7120
        %7122 = vrot.lane.b32.xlu0 %v1637, 68
        %v7123 = vpop.permute.xlu0 %7122
        %7124 = vrot.lane.b32.xlu0 %v1638, 68
        %v7125 = vpop.permute.xlu0 %7124
        %7126 = vrot.lane.b32.xlu0 %v1639, 68
        %v7127 = vpop.permute.xlu0 %7126
        %7128 = vrot.lane.b32.xlu0 %v1640, 68
        %v7129 = vpop.permute.xlu0 %7128
        %7130 = vrot.lane.b32.xlu0 %v1641, 68
        %v7131 = vpop.permute.xlu0 %7130
        %7132 = vrot.lane.b32.xlu0 %v1642, 68
        %v7133 = vpop.permute.xlu0 %7132
        %7134 = vrot.lane.b32.xlu0 %v1643, 68
        %v7135 = vpop.permute.xlu0 %7134
        %7136 = vrot.lane.b32.xlu0 %v1644, 68
        %v7137 = vpop.permute.xlu0 %7136
        %7138 = vrot.lane.b32.xlu0 %v1645, 68
        %v7139 = vpop.permute.xlu0 %7138
        %7140 = vrot.lane.b32.xlu0 %v1646, 68
        %v7141 = vpop.permute.xlu0 %7140
        %7174 = vrot.lane.b32.xlu0 %v1615, 72
        %v7175 = vpop.permute.xlu0 %7174
        %7176 = vrot.lane.b32.xlu0 %v1616, 72
        %v7177 = vpop.permute.xlu0 %7176
        %7178 = vrot.lane.b32.xlu0 %v1617, 72
        %v7179 = vpop.permute.xlu0 %7178
        %7180 = vrot.lane.b32.xlu0 %v1618, 72
        %v7181 = vpop.permute.xlu0 %7180
        %7182 = vrot.lane.b32.xlu0 %v1619, 72
        %v7183 = vpop.permute.xlu0 %7182
        %7184 = vrot.lane.b32.xlu0 %v1620, 72
        %v7185 = vpop.permute.xlu0 %7184
        %7186 = vrot.lane.b32.xlu0 %v1621, 72
        %v7187 = vpop.permute.xlu0 %7186
        %7188 = vrot.lane.b32.xlu0 %v1622, 72
        %v7189 = vpop.permute.xlu0 %7188
        %7190 = vrot.lane.b32.xlu0 %v1623, 72
        %v7191 = vpop.permute.xlu0 %7190
        %7192 = vrot.lane.b32.xlu0 %v1624, 72
        %v7193 = vpop.permute.xlu0 %7192
        %7194 = vrot.lane.b32.xlu0 %v1625, 72
        %v7195 = vpop.permute.xlu0 %7194
        %7196 = vrot.lane.b32.xlu0 %v1626, 72
        %v7197 = vpop.permute.xlu0 %7196
        %7198 = vrot.lane.b32.xlu0 %v1627, 72
        %v7199 = vpop.permute.xlu0 %7198
        %7200 = vrot.lane.b32.xlu0 %v1628, 72
        %v7201 = vpop.permute.xlu0 %7200
        %7202 = vrot.lane.b32.xlu0 %v1629, 72
        %v7203 = vpop.permute.xlu0 %7202
        %7204 = vrot.lane.b32.xlu0 %v1630, 72
        %v7205 = vpop.permute.xlu0 %7204
        %7206 = vrot.lane.b32.xlu0 %v1631, 72
        %v7207 = vpop.permute.xlu0 %7206
        %7208 = vrot.lane.b32.xlu0 %v1632, 72
        %v7209 = vpop.permute.xlu0 %7208
        %7210 = vrot.lane.b32.xlu0 %v1633, 72
        %v7211 = vpop.permute.xlu0 %7210
        %7212 = vrot.lane.b32.xlu0 %v1634, 72
        %v7213 = vpop.permute.xlu0 %7212
        %7214 = vrot.lane.b32.xlu0 %v1635, 72
        %v7215 = vpop.permute.xlu0 %7214
        %7216 = vrot.lane.b32.xlu0 %v1636, 72
        %v7217 = vpop.permute.xlu0 %7216
        %7218 = vrot.lane.b32.xlu0 %v1637, 72
        %v7219 = vpop.permute.xlu0 %7218
        %7220 = vrot.lane.b32.xlu0 %v1638, 72
        %v7221 = vpop.permute.xlu0 %7220
        %7222 = vrot.lane.b32.xlu0 %v1639, 72
        %v7223 = vpop.permute.xlu0 %7222
        %7224 = vrot.lane.b32.xlu0 %v1640, 72
        %v7225 = vpop.permute.xlu0 %7224
        %7226 = vrot.lane.b32.xlu0 %v1641, 72
        %v7227 = vpop.permute.xlu0 %7226
        %7228 = vrot.lane.b32.xlu0 %v1642, 72
        %v7229 = vpop.permute.xlu0 %7228
        %7230 = vrot.lane.b32.xlu0 %v1643, 72
        %v7231 = vpop.permute.xlu0 %7230
        %7232 = vrot.lane.b32.xlu0 %v1644, 72
        %v7233 = vpop.permute.xlu0 %7232
        %7234 = vrot.lane.b32.xlu0 %v1645, 72
        %v7235 = vpop.permute.xlu0 %7234
        %7236 = vrot.lane.b32.xlu0 %v1646, 72
        %v7237 = vpop.permute.xlu0 %7236
        %7270 = vrot.lane.b32.xlu0 %v1615, 76
        %v7271 = vpop.permute.xlu0 %7270
        %7272 = vrot.lane.b32.xlu0 %v1616, 76
        %v7273 = vpop.permute.xlu0 %7272
        %7274 = vrot.lane.b32.xlu0 %v1617, 76
        %v7275 = vpop.permute.xlu0 %7274
        %7276 = vrot.lane.b32.xlu0 %v1618, 76
        %v7277 = vpop.permute.xlu0 %7276
        %7278 = vrot.lane.b32.xlu0 %v1619, 76
        %v7279 = vpop.permute.xlu0 %7278
        %7280 = vrot.lane.b32.xlu0 %v1620, 76
        %v7281 = vpop.permute.xlu0 %7280
        %7282 = vrot.lane.b32.xlu0 %v1621, 76
        %v7283 = vpop.permute.xlu0 %7282
        %7284 = vrot.lane.b32.xlu0 %v1622, 76
        %v7285 = vpop.permute.xlu0 %7284
        %7286 = vrot.lane.b32.xlu0 %v1623, 76
        %v7287 = vpop.permute.xlu0 %7286
        %7288 = vrot.lane.b32.xlu0 %v1624, 76
        %v7289 = vpop.permute.xlu0 %7288
        %7290 = vrot.lane.b32.xlu0 %v1625, 76
        %v7291 = vpop.permute.xlu0 %7290
        %7292 = vrot.lane.b32.xlu0 %v1626, 76
        %v7293 = vpop.permute.xlu0 %7292
        %7294 = vrot.lane.b32.xlu0 %v1627, 76
        %v7295 = vpop.permute.xlu0 %7294
        %7296 = vrot.lane.b32.xlu0 %v1628, 76
        %v7297 = vpop.permute.xlu0 %7296
        %7298 = vrot.lane.b32.xlu0 %v1629, 76
        %v7299 = vpop.permute.xlu0 %7298
        %7300 = vrot.lane.b32.xlu0 %v1630, 76
        %v7301 = vpop.permute.xlu0 %7300
        %7302 = vrot.lane.b32.xlu0 %v1631, 76
        %v7303 = vpop.permute.xlu0 %7302
        %7304 = vrot.lane.b32.xlu0 %v1632, 76
        %v7305 = vpop.permute.xlu0 %7304
        %7306 = vrot.lane.b32.xlu0 %v1633, 76
        %v7307 = vpop.permute.xlu0 %7306
        %7308 = vrot.lane.b32.xlu0 %v1634, 76
        %v7309 = vpop.permute.xlu0 %7308
        %7310 = vrot.lane.b32.xlu0 %v1635, 76
        %v7311 = vpop.permute.xlu0 %7310
        %7312 = vrot.lane.b32.xlu0 %v1636, 76
        %v7313 = vpop.permute.xlu0 %7312
        %7314 = vrot.lane.b32.xlu0 %v1637, 76
        %v7315 = vpop.permute.xlu0 %7314
        %7316 = vrot.lane.b32.xlu0 %v1638, 76
        %v7317 = vpop.permute.xlu0 %7316
        %7318 = vrot.lane.b32.xlu0 %v1639, 76
        %v7319 = vpop.permute.xlu0 %7318
        %7320 = vrot.lane.b32.xlu0 %v1640, 76
        %v7321 = vpop.permute.xlu0 %7320
        %7322 = vrot.lane.b32.xlu0 %v1641, 76
        %v7323 = vpop.permute.xlu0 %7322
        %7324 = vrot.lane.b32.xlu0 %v1642, 76
        %v7325 = vpop.permute.xlu0 %7324
        %7326 = vrot.lane.b32.xlu0 %v1643, 76
        %v7327 = vpop.permute.xlu0 %7326
        %7328 = vrot.lane.b32.xlu0 %v1644, 76
        %v7329 = vpop.permute.xlu0 %7328
        %7330 = vrot.lane.b32.xlu0 %v1645, 76
        %v7331 = vpop.permute.xlu0 %7330
        %7332 = vrot.lane.b32.xlu0 %v1646, 76
        %v7333 = vpop.permute.xlu0 %7332
        %7366 = vrot.lane.b32.xlu0 %v1615, 80
        %v7367 = vpop.permute.xlu0 %7366
        %7368 = vrot.lane.b32.xlu0 %v1616, 80
        %v7369 = vpop.permute.xlu0 %7368
        %7370 = vrot.lane.b32.xlu0 %v1617, 80
        %v7371 = vpop.permute.xlu0 %7370
        %7372 = vrot.lane.b32.xlu0 %v1618, 80
        %v7373 = vpop.permute.xlu0 %7372
        %7374 = vrot.lane.b32.xlu0 %v1619, 80
        %v7375 = vpop.permute.xlu0 %7374
        %7376 = vrot.lane.b32.xlu0 %v1620, 80
        %v7377 = vpop.permute.xlu0 %7376
        %7378 = vrot.lane.b32.xlu0 %v1621, 80
        %v7379 = vpop.permute.xlu0 %7378
        %7380 = vrot.lane.b32.xlu0 %v1622, 80
        %v7381 = vpop.permute.xlu0 %7380
        %7382 = vrot.lane.b32.xlu0 %v1623, 80
        %v7383 = vpop.permute.xlu0 %7382
        %7384 = vrot.lane.b32.xlu0 %v1624, 80
        %v7385 = vpop.permute.xlu0 %7384
        %7386 = vrot.lane.b32.xlu0 %v1625, 80
        %v7387 = vpop.permute.xlu0 %7386
        %7388 = vrot.lane.b32.xlu0 %v1626, 80
        %v7389 = vpop.permute.xlu0 %7388
        %7390 = vrot.lane.b32.xlu0 %v1627, 80
        %v7391 = vpop.permute.xlu0 %7390
        %7392 = vrot.lane.b32.xlu0 %v1628, 80
        %v7393 = vpop.permute.xlu0 %7392
        %7394 = vrot.lane.b32.xlu0 %v1629, 80
        %v7395 = vpop.permute.xlu0 %7394
        %7396 = vrot.lane.b32.xlu0 %v1630, 80
        %v7397 = vpop.permute.xlu0 %7396
        %7398 = vrot.lane.b32.xlu0 %v1631, 80
        %v7399 = vpop.permute.xlu0 %7398
        %7400 = vrot.lane.b32.xlu0 %v1632, 80
        %v7401 = vpop.permute.xlu0 %7400
        %7402 = vrot.lane.b32.xlu0 %v1633, 80
        %v7403 = vpop.permute.xlu0 %7402
        %7404 = vrot.lane.b32.xlu0 %v1634, 80
        %v7405 = vpop.permute.xlu0 %7404
        %7406 = vrot.lane.b32.xlu0 %v1635, 80
        %v7407 = vpop.permute.xlu0 %7406
        %7408 = vrot.lane.b32.xlu0 %v1636, 80
        %v7409 = vpop.permute.xlu0 %7408
        %7410 = vrot.lane.b32.xlu0 %v1637, 80
        %v7411 = vpop.permute.xlu0 %7410
        %7412 = vrot.lane.b32.xlu0 %v1638, 80
        %v7413 = vpop.permute.xlu0 %7412
        %7414 = vrot.lane.b32.xlu0 %v1639, 80
        %v7415 = vpop.permute.xlu0 %7414
        %7416 = vrot.lane.b32.xlu0 %v1640, 80
        %v7417 = vpop.permute.xlu0 %7416
        %7418 = vrot.lane.b32.xlu0 %v1641, 80
        %v7419 = vpop.permute.xlu0 %7418
        %7420 = vrot.lane.b32.xlu0 %v1642, 80
        %v7421 = vpop.permute.xlu0 %7420
        %7422 = vrot.lane.b32.xlu0 %v1643, 80
        %v7423 = vpop.permute.xlu0 %7422
        %7424 = vrot.lane.b32.xlu0 %v1644, 80
        %v7425 = vpop.permute.xlu0 %7424
        %7426 = vrot.lane.b32.xlu0 %v1645, 80
        %v7427 = vpop.permute.xlu0 %7426
        %7428 = vrot.lane.b32.xlu0 %v1646, 80
        %v7429 = vpop.permute.xlu0 %7428
        %7462 = vrot.lane.b32.xlu0 %v1615, 84
        %v7463 = vpop.permute.xlu0 %7462
        %7464 = vrot.lane.b32.xlu0 %v1616, 84
        %v7465 = vpop.permute.xlu0 %7464
        %7466 = vrot.lane.b32.xlu0 %v1617, 84
        %v7467 = vpop.permute.xlu0 %7466
        %7468 = vrot.lane.b32.xlu0 %v1618, 84
        %v7469 = vpop.permute.xlu0 %7468
        %7470 = vrot.lane.b32.xlu0 %v1619, 84
        %v7471 = vpop.permute.xlu0 %7470
        %7472 = vrot.lane.b32.xlu0 %v1620, 84
        %v7473 = vpop.permute.xlu0 %7472
        %7474 = vrot.lane.b32.xlu0 %v1621, 84
        %v7475 = vpop.permute.xlu0 %7474
        %7476 = vrot.lane.b32.xlu0 %v1622, 84
        %v7477 = vpop.permute.xlu0 %7476
        %7478 = vrot.lane.b32.xlu0 %v1623, 84
        %v7479 = vpop.permute.xlu0 %7478
        %7480 = vrot.lane.b32.xlu0 %v1624, 84
        %v7481 = vpop.permute.xlu0 %7480
        %7482 = vrot.lane.b32.xlu0 %v1625, 84
        %v7483 = vpop.permute.xlu0 %7482
        %7484 = vrot.lane.b32.xlu0 %v1626, 84
        %v7485 = vpop.permute.xlu0 %7484
        %7486 = vrot.lane.b32.xlu0 %v1627, 84
        %v7487 = vpop.permute.xlu0 %7486
        %7488 = vrot.lane.b32.xlu0 %v1628, 84
        %v7489 = vpop.permute.xlu0 %7488
        %7490 = vrot.lane.b32.xlu0 %v1629, 84
        %v7491 = vpop.permute.xlu0 %7490
        %7492 = vrot.lane.b32.xlu0 %v1630, 84
        %v7493 = vpop.permute.xlu0 %7492
        %7494 = vrot.lane.b32.xlu0 %v1631, 84
        %v7495 = vpop.permute.xlu0 %7494
        %7496 = vrot.lane.b32.xlu0 %v1632, 84
        %v7497 = vpop.permute.xlu0 %7496
        %7498 = vrot.lane.b32.xlu0 %v1633, 84
        %v7499 = vpop.permute.xlu0 %7498
        %7500 = vrot.lane.b32.xlu0 %v1634, 84
        %v7501 = vpop.permute.xlu0 %7500
        %7502 = vrot.lane.b32.xlu0 %v1635, 84
        %v7503 = vpop.permute.xlu0 %7502
        %7504 = vrot.lane.b32.xlu0 %v1636, 84
        %v7505 = vpop.permute.xlu0 %7504
        %7506 = vrot.lane.b32.xlu0 %v1637, 84
        %v7507 = vpop.permute.xlu0 %7506
        %7508 = vrot.lane.b32.xlu0 %v1638, 84
        %v7509 = vpop.permute.xlu0 %7508
        %7510 = vrot.lane.b32.xlu0 %v1639, 84
        %v7511 = vpop.permute.xlu0 %7510
        %7512 = vrot.lane.b32.xlu0 %v1640, 84
        %v7513 = vpop.permute.xlu0 %7512
        %7514 = vrot.lane.b32.xlu0 %v1641, 84
        %v7515 = vpop.permute.xlu0 %7514
        %7516 = vrot.lane.b32.xlu0 %v1642, 84
        %v7517 = vpop.permute.xlu0 %7516
        %7518 = vrot.lane.b32.xlu0 %v1643, 84
        %v7519 = vpop.permute.xlu0 %7518
        %7520 = vrot.lane.b32.xlu0 %v1644, 84
        %v7521 = vpop.permute.xlu0 %7520
        %7522 = vrot.lane.b32.xlu0 %v1645, 84
        %v7523 = vpop.permute.xlu0 %7522
        %7524 = vrot.lane.b32.xlu0 %v1646, 84
        %v7525 = vpop.permute.xlu0 %7524
        %7558 = vrot.lane.b32.xlu0 %v1615, 88
        %v7559 = vpop.permute.xlu0 %7558
        %7560 = vrot.lane.b32.xlu0 %v1616, 88
        %v7561 = vpop.permute.xlu0 %7560
        %7562 = vrot.lane.b32.xlu0 %v1617, 88
        %v7563 = vpop.permute.xlu0 %7562
        %7564 = vrot.lane.b32.xlu0 %v1618, 88
        %v7565 = vpop.permute.xlu0 %7564
        %7566 = vrot.lane.b32.xlu0 %v1619, 88
        %v7567 = vpop.permute.xlu0 %7566
        %7568 = vrot.lane.b32.xlu0 %v1620, 88
        %v7569 = vpop.permute.xlu0 %7568
        %7570 = vrot.lane.b32.xlu0 %v1621, 88
        %v7571 = vpop.permute.xlu0 %7570
        %7572 = vrot.lane.b32.xlu0 %v1622, 88
        %v7573 = vpop.permute.xlu0 %7572
        %7574 = vrot.lane.b32.xlu0 %v1623, 88
        %v7575 = vpop.permute.xlu0 %7574
        %7576 = vrot.lane.b32.xlu0 %v1624, 88
        %v7577 = vpop.permute.xlu0 %7576
        %7578 = vrot.lane.b32.xlu0 %v1625, 88
        %v7579 = vpop.permute.xlu0 %7578
        %7580 = vrot.lane.b32.xlu0 %v1626, 88
        %v7581 = vpop.permute.xlu0 %7580
        %7582 = vrot.lane.b32.xlu0 %v1627, 88
        %v7583 = vpop.permute.xlu0 %7582
        %7584 = vrot.lane.b32.xlu0 %v1628, 88
        %v7585 = vpop.permute.xlu0 %7584
        %7586 = vrot.lane.b32.xlu0 %v1629, 88
        %v7587 = vpop.permute.xlu0 %7586
        %7588 = vrot.lane.b32.xlu0 %v1630, 88
        %v7589 = vpop.permute.xlu0 %7588
        %7590 = vrot.lane.b32.xlu0 %v1631, 88
        %v7591 = vpop.permute.xlu0 %7590
        %7592 = vrot.lane.b32.xlu0 %v1632, 88
        %v7593 = vpop.permute.xlu0 %7592
        %7594 = vrot.lane.b32.xlu0 %v1633, 88
        %v7595 = vpop.permute.xlu0 %7594
        %7596 = vrot.lane.b32.xlu0 %v1634, 88
        %v7597 = vpop.permute.xlu0 %7596
        %7598 = vrot.lane.b32.xlu0 %v1635, 88
        %v7599 = vpop.permute.xlu0 %7598
        %7600 = vrot.lane.b32.xlu0 %v1636, 88
        %v7601 = vpop.permute.xlu0 %7600
        %7602 = vrot.lane.b32.xlu0 %v1637, 88
        %v7603 = vpop.permute.xlu0 %7602
        %7604 = vrot.lane.b32.xlu0 %v1638, 88
        %v7605 = vpop.permute.xlu0 %7604
        %7606 = vrot.lane.b32.xlu0 %v1639, 88
        %v7607 = vpop.permute.xlu0 %7606
        %7608 = vrot.lane.b32.xlu0 %v1640, 88
        %v7609 = vpop.permute.xlu0 %7608
        %7610 = vrot.lane.b32.xlu0 %v1641, 88
        %v7611 = vpop.permute.xlu0 %7610
        %7612 = vrot.lane.b32.xlu0 %v1642, 88
        %v7613 = vpop.permute.xlu0 %7612
        %7614 = vrot.lane.b32.xlu0 %v1643, 88
        %v7615 = vpop.permute.xlu0 %7614
        %7616 = vrot.lane.b32.xlu0 %v1644, 88
        %v7617 = vpop.permute.xlu0 %7616
        %7618 = vrot.lane.b32.xlu0 %v1645, 88
        %v7619 = vpop.permute.xlu0 %7618
        %7620 = vrot.lane.b32.xlu0 %v1646, 88
        %v7621 = vpop.permute.xlu0 %7620
        %7654 = vrot.lane.b32.xlu0 %v1615, 92
        %v7655 = vpop.permute.xlu0 %7654
        %7656 = vrot.lane.b32.xlu0 %v1616, 92
        %v7657 = vpop.permute.xlu0 %7656
        %7658 = vrot.lane.b32.xlu0 %v1617, 92
        %v7659 = vpop.permute.xlu0 %7658
        %7660 = vrot.lane.b32.xlu0 %v1618, 92
        %v7661 = vpop.permute.xlu0 %7660
        %7662 = vrot.lane.b32.xlu0 %v1619, 92
        %v7663 = vpop.permute.xlu0 %7662
        %7664 = vrot.lane.b32.xlu0 %v1620, 92
        %v7665 = vpop.permute.xlu0 %7664
        %7666 = vrot.lane.b32.xlu0 %v1621, 92
        %v7667 = vpop.permute.xlu0 %7666
        %7668 = vrot.lane.b32.xlu0 %v1622, 92
        %v7669 = vpop.permute.xlu0 %7668
        %7670 = vrot.lane.b32.xlu0 %v1623, 92
        %v7671 = vpop.permute.xlu0 %7670
        %7672 = vrot.lane.b32.xlu0 %v1624, 92
        %v7673 = vpop.permute.xlu0 %7672
        %7674 = vrot.lane.b32.xlu0 %v1625, 92
        %v7675 = vpop.permute.xlu0 %7674
        %7676 = vrot.lane.b32.xlu0 %v1626, 92
        %v7677 = vpop.permute.xlu0 %7676
        %7678 = vrot.lane.b32.xlu0 %v1627, 92
        %v7679 = vpop.permute.xlu0 %7678
        %7680 = vrot.lane.b32.xlu0 %v1628, 92
        %v7681 = vpop.permute.xlu0 %7680
        %7682 = vrot.lane.b32.xlu0 %v1629, 92
        %v7683 = vpop.permute.xlu0 %7682
        %7684 = vrot.lane.b32.xlu0 %v1630, 92
        %v7685 = vpop.permute.xlu0 %7684
        %7686 = vrot.lane.b32.xlu0 %v1631, 92
        %v7687 = vpop.permute.xlu0 %7686
        %7688 = vrot.lane.b32.xlu0 %v1632, 92
        %v7689 = vpop.permute.xlu0 %7688
        %7690 = vrot.lane.b32.xlu0 %v1633, 92
        %v7691 = vpop.permute.xlu0 %7690
        %7692 = vrot.lane.b32.xlu0 %v1634, 92
        %v7693 = vpop.permute.xlu0 %7692
        %7694 = vrot.lane.b32.xlu0 %v1635, 92
        %v7695 = vpop.permute.xlu0 %7694
        %7696 = vrot.lane.b32.xlu0 %v1636, 92
        %v7697 = vpop.permute.xlu0 %7696
        %7698 = vrot.lane.b32.xlu0 %v1637, 92
        %v7699 = vpop.permute.xlu0 %7698
        %7700 = vrot.lane.b32.xlu0 %v1638, 92
        %v7701 = vpop.permute.xlu0 %7700
        %7702 = vrot.lane.b32.xlu0 %v1639, 92
        %v7703 = vpop.permute.xlu0 %7702
        %7704 = vrot.lane.b32.xlu0 %v1640, 92
        %v7705 = vpop.permute.xlu0 %7704
        %7706 = vrot.lane.b32.xlu0 %v1641, 92
        %v7707 = vpop.permute.xlu0 %7706
        %7708 = vrot.lane.b32.xlu0 %v1642, 92
        %v7709 = vpop.permute.xlu0 %7708
        %7710 = vrot.lane.b32.xlu0 %v1643, 92
        %v7711 = vpop.permute.xlu0 %7710
        %7712 = vrot.lane.b32.xlu0 %v1644, 92
        %v7713 = vpop.permute.xlu0 %7712
        %7714 = vrot.lane.b32.xlu0 %v1645, 92
        %v7715 = vpop.permute.xlu0 %7714
        %7716 = vrot.lane.b32.xlu0 %v1646, 92
        %v7717 = vpop.permute.xlu0 %7716
        %7750 = vrot.lane.b32.xlu0 %v1615, 96
        %v7751 = vpop.permute.xlu0 %7750
        %7752 = vrot.lane.b32.xlu0 %v1616, 96
        %v7753 = vpop.permute.xlu0 %7752
        %7754 = vrot.lane.b32.xlu0 %v1617, 96
        %v7755 = vpop.permute.xlu0 %7754
        %7756 = vrot.lane.b32.xlu0 %v1618, 96
        %v7757 = vpop.permute.xlu0 %7756
        %7758 = vrot.lane.b32.xlu0 %v1619, 96
        %v7759 = vpop.permute.xlu0 %7758
        %7760 = vrot.lane.b32.xlu0 %v1620, 96
        %v7761 = vpop.permute.xlu0 %7760
        %7762 = vrot.lane.b32.xlu0 %v1621, 96
        %v7763 = vpop.permute.xlu0 %7762
        %7764 = vrot.lane.b32.xlu0 %v1622, 96
        %v7765 = vpop.permute.xlu0 %7764
        %7766 = vrot.lane.b32.xlu0 %v1623, 96
        %v7767 = vpop.permute.xlu0 %7766
        %7768 = vrot.lane.b32.xlu0 %v1624, 96
        %v7769 = vpop.permute.xlu0 %7768
        %7770 = vrot.lane.b32.xlu0 %v1625, 96
        %v7771 = vpop.permute.xlu0 %7770
        %7772 = vrot.lane.b32.xlu0 %v1626, 96
        %v7773 = vpop.permute.xlu0 %7772
        %7774 = vrot.lane.b32.xlu0 %v1627, 96
        %v7775 = vpop.permute.xlu0 %7774
        %7776 = vrot.lane.b32.xlu0 %v1628, 96
        %v7777 = vpop.permute.xlu0 %7776
        %7778 = vrot.lane.b32.xlu0 %v1629, 96
        %v7779 = vpop.permute.xlu0 %7778
        %7780 = vrot.lane.b32.xlu0 %v1630, 96
        %v7781 = vpop.permute.xlu0 %7780
        %7782 = vrot.lane.b32.xlu0 %v1631, 96
        %v7783 = vpop.permute.xlu0 %7782
        %7784 = vrot.lane.b32.xlu0 %v1632, 96
        %v7785 = vpop.permute.xlu0 %7784
        %7786 = vrot.lane.b32.xlu0 %v1633, 96
        %v7787 = vpop.permute.xlu0 %7786
        %7788 = vrot.lane.b32.xlu0 %v1634, 96
        %v7789 = vpop.permute.xlu0 %7788
        %7790 = vrot.lane.b32.xlu0 %v1635, 96
        %v7791 = vpop.permute.xlu0 %7790
        %7792 = vrot.lane.b32.xlu0 %v1636, 96
        %v7793 = vpop.permute.xlu0 %7792
        %7794 = vrot.lane.b32.xlu0 %v1637, 96
        %v7795 = vpop.permute.xlu0 %7794
        %7796 = vrot.lane.b32.xlu0 %v1638, 96
        %v7797 = vpop.permute.xlu0 %7796
        %7798 = vrot.lane.b32.xlu0 %v1639, 96
        %v7799 = vpop.permute.xlu0 %7798
        %7800 = vrot.lane.b32.xlu0 %v1640, 96
        %v7801 = vpop.permute.xlu0 %7800
        %7802 = vrot.lane.b32.xlu0 %v1641, 96
        %v7803 = vpop.permute.xlu0 %7802
        %7804 = vrot.lane.b32.xlu0 %v1642, 96
        %v7805 = vpop.permute.xlu0 %7804
        %7806 = vrot.lane.b32.xlu0 %v1643, 96
        %v7807 = vpop.permute.xlu0 %7806
        %7808 = vrot.lane.b32.xlu0 %v1644, 96
        %v7809 = vpop.permute.xlu0 %7808
        %7810 = vrot.lane.b32.xlu0 %v1645, 96
        %v7811 = vpop.permute.xlu0 %7810
        %7812 = vrot.lane.b32.xlu0 %v1646, 96
        %v7813 = vpop.permute.xlu0 %7812
        %7846 = vrot.lane.b32.xlu0 %v1615, 100
        %v7847 = vpop.permute.xlu0 %7846
        %7848 = vrot.lane.b32.xlu0 %v1616, 100
        %v7849 = vpop.permute.xlu0 %7848
        %7850 = vrot.lane.b32.xlu0 %v1617, 100
        %v7851 = vpop.permute.xlu0 %7850
        %7852 = vrot.lane.b32.xlu0 %v1618, 100
        %v7853 = vpop.permute.xlu0 %7852
        %7854 = vrot.lane.b32.xlu0 %v1619, 100
        %v7855 = vpop.permute.xlu0 %7854
        %7856 = vrot.lane.b32.xlu0 %v1620, 100
        %v7857 = vpop.permute.xlu0 %7856
        %7858 = vrot.lane.b32.xlu0 %v1621, 100
        %v7859 = vpop.permute.xlu0 %7858
        %7860 = vrot.lane.b32.xlu0 %v1622, 100
        %v7861 = vpop.permute.xlu0 %7860
        %7862 = vrot.lane.b32.xlu0 %v1623, 100
        %v7863 = vpop.permute.xlu0 %7862
        %7864 = vrot.lane.b32.xlu0 %v1624, 100
        %v7865 = vpop.permute.xlu0 %7864
        %7866 = vrot.lane.b32.xlu0 %v1625, 100
        %v7867 = vpop.permute.xlu0 %7866
        %7868 = vrot.lane.b32.xlu0 %v1626, 100
        %v7869 = vpop.permute.xlu0 %7868
        %7870 = vrot.lane.b32.xlu0 %v1627, 100
        %v7871 = vpop.permute.xlu0 %7870
        %7872 = vrot.lane.b32.xlu0 %v1628, 100
        %v7873 = vpop.permute.xlu0 %7872
        %7874 = vrot.lane.b32.xlu0 %v1629, 100
        %v7875 = vpop.permute.xlu0 %7874
        %7876 = vrot.lane.b32.xlu0 %v1630, 100
        %v7877 = vpop.permute.xlu0 %7876
        %7878 = vrot.lane.b32.xlu0 %v1631, 100
        %v7879 = vpop.permute.xlu0 %7878
        %7880 = vrot.lane.b32.xlu0 %v1632, 100
        %v7881 = vpop.permute.xlu0 %7880
        %7882 = vrot.lane.b32.xlu0 %v1633, 100
        %v7883 = vpop.permute.xlu0 %7882
        %7884 = vrot.lane.b32.xlu0 %v1634, 100
        %v7885 = vpop.permute.xlu0 %7884
        %7886 = vrot.lane.b32.xlu0 %v1635, 100
        %v7887 = vpop.permute.xlu0 %7886
        %7888 = vrot.lane.b32.xlu0 %v1636, 100
        %v7889 = vpop.permute.xlu0 %7888
        %7890 = vrot.lane.b32.xlu0 %v1637, 100
        %v7891 = vpop.permute.xlu0 %7890
        %7892 = vrot.lane.b32.xlu0 %v1638, 100
        %v7893 = vpop.permute.xlu0 %7892
        %7894 = vrot.lane.b32.xlu0 %v1639, 100
        %v7895 = vpop.permute.xlu0 %7894
        %7896 = vrot.lane.b32.xlu0 %v1640, 100
        %v7897 = vpop.permute.xlu0 %7896
        %7898 = vrot.lane.b32.xlu0 %v1641, 100
        %v7899 = vpop.permute.xlu0 %7898
        %7900 = vrot.lane.b32.xlu0 %v1642, 100
        %v7901 = vpop.permute.xlu0 %7900
        %7902 = vrot.lane.b32.xlu0 %v1643, 100
        %v7903 = vpop.permute.xlu0 %7902
        %7904 = vrot.lane.b32.xlu0 %v1644, 100
        %v7905 = vpop.permute.xlu0 %7904
        %7906 = vrot.lane.b32.xlu0 %v1645, 100
        %v7907 = vpop.permute.xlu0 %7906
        %7908 = vrot.lane.b32.xlu0 %v1646, 100
        %v7909 = vpop.permute.xlu0 %7908
        %7942 = vrot.lane.b32.xlu0 %v1615, 104
        %v7943 = vpop.permute.xlu0 %7942
        %7944 = vrot.lane.b32.xlu0 %v1616, 104
        %v7945 = vpop.permute.xlu0 %7944
        %7946 = vrot.lane.b32.xlu0 %v1617, 104
        %v7947 = vpop.permute.xlu0 %7946
        %7948 = vrot.lane.b32.xlu0 %v1618, 104
        %v7949 = vpop.permute.xlu0 %7948
        %7950 = vrot.lane.b32.xlu0 %v1619, 104
        %v7951 = vpop.permute.xlu0 %7950
        %7952 = vrot.lane.b32.xlu0 %v1620, 104
        %v7953 = vpop.permute.xlu0 %7952
        %7954 = vrot.lane.b32.xlu0 %v1621, 104
        %v7955 = vpop.permute.xlu0 %7954
        %7956 = vrot.lane.b32.xlu0 %v1622, 104
        %v7957 = vpop.permute.xlu0 %7956
        %7958 = vrot.lane.b32.xlu0 %v1623, 104
        %v7959 = vpop.permute.xlu0 %7958
        %7960 = vrot.lane.b32.xlu0 %v1624, 104
        %v7961 = vpop.permute.xlu0 %7960
        %7962 = vrot.lane.b32.xlu0 %v1625, 104
        %v7963 = vpop.permute.xlu0 %7962
        %7964 = vrot.lane.b32.xlu0 %v1626, 104
        %v7965 = vpop.permute.xlu0 %7964
        %7966 = vrot.lane.b32.xlu0 %v1627, 104
        %v7967 = vpop.permute.xlu0 %7966
        %7968 = vrot.lane.b32.xlu0 %v1628, 104
        %v7969 = vpop.permute.xlu0 %7968
        %7970 = vrot.lane.b32.xlu0 %v1629, 104
        %v7971 = vpop.permute.xlu0 %7970
        %7972 = vrot.lane.b32.xlu0 %v1630, 104
        %v7973 = vpop.permute.xlu0 %7972
        %7974 = vrot.lane.b32.xlu0 %v1631, 104
        %v7975 = vpop.permute.xlu0 %7974
        %7976 = vrot.lane.b32.xlu0 %v1632, 104
        %v7977 = vpop.permute.xlu0 %7976
        %7978 = vrot.lane.b32.xlu0 %v1633, 104
        %v7979 = vpop.permute.xlu0 %7978
        %7980 = vrot.lane.b32.xlu0 %v1634, 104
        %v7981 = vpop.permute.xlu0 %7980
        %7982 = vrot.lane.b32.xlu0 %v1635, 104
        %v7983 = vpop.permute.xlu0 %7982
        %7984 = vrot.lane.b32.xlu0 %v1636, 104
        %v7985 = vpop.permute.xlu0 %7984
        %7986 = vrot.lane.b32.xlu0 %v1637, 104
        %v7987 = vpop.permute.xlu0 %7986
        %7988 = vrot.lane.b32.xlu0 %v1638, 104
        %v7989 = vpop.permute.xlu0 %7988
        %7990 = vrot.lane.b32.xlu0 %v1639, 104
        %v7991 = vpop.permute.xlu0 %7990
        %7992 = vrot.lane.b32.xlu0 %v1640, 104
        %v7993 = vpop.permute.xlu0 %7992
        %7994 = vrot.lane.b32.xlu0 %v1641, 104
        %v7995 = vpop.permute.xlu0 %7994
        %7996 = vrot.lane.b32.xlu0 %v1642, 104
        %v7997 = vpop.permute.xlu0 %7996
        %7998 = vrot.lane.b32.xlu0 %v1643, 104
        %v7999 = vpop.permute.xlu0 %7998
        %8000 = vrot.lane.b32.xlu0 %v1644, 104
        %v8001 = vpop.permute.xlu0 %8000
        %8002 = vrot.lane.b32.xlu0 %v1645, 104
        %v8003 = vpop.permute.xlu0 %8002
        %8004 = vrot.lane.b32.xlu0 %v1646, 104
        %v8005 = vpop.permute.xlu0 %8004
        %8038 = vrot.lane.b32.xlu0 %v1615, 108
        %v8039 = vpop.permute.xlu0 %8038
        %8040 = vrot.lane.b32.xlu0 %v1616, 108
        %v8041 = vpop.permute.xlu0 %8040
        %8042 = vrot.lane.b32.xlu0 %v1617, 108
        %v8043 = vpop.permute.xlu0 %8042
        %8044 = vrot.lane.b32.xlu0 %v1618, 108
        %v8045 = vpop.permute.xlu0 %8044
        %8046 = vrot.lane.b32.xlu0 %v1619, 108
        %v8047 = vpop.permute.xlu0 %8046
        %8048 = vrot.lane.b32.xlu0 %v1620, 108
        %v8049 = vpop.permute.xlu0 %8048
        %8050 = vrot.lane.b32.xlu0 %v1621, 108
        %v8051 = vpop.permute.xlu0 %8050
        %8052 = vrot.lane.b32.xlu0 %v1622, 108
        %v8053 = vpop.permute.xlu0 %8052
        %8054 = vrot.lane.b32.xlu0 %v1623, 108
        %v8055 = vpop.permute.xlu0 %8054
        %8056 = vrot.lane.b32.xlu0 %v1624, 108
        %v8057 = vpop.permute.xlu0 %8056
        %8058 = vrot.lane.b32.xlu0 %v1625, 108
        %v8059 = vpop.permute.xlu0 %8058
        %8060 = vrot.lane.b32.xlu0 %v1626, 108
        %v8061 = vpop.permute.xlu0 %8060
        %8062 = vrot.lane.b32.xlu0 %v1627, 108
        %v8063 = vpop.permute.xlu0 %8062
        %8064 = vrot.lane.b32.xlu0 %v1628, 108
        %v8065 = vpop.permute.xlu0 %8064
        %8066 = vrot.lane.b32.xlu0 %v1629, 108
        %v8067 = vpop.permute.xlu0 %8066
        %8068 = vrot.lane.b32.xlu0 %v1630, 108
        %v8069 = vpop.permute.xlu0 %8068
        %8070 = vrot.lane.b32.xlu0 %v1631, 108
        %v8071 = vpop.permute.xlu0 %8070
        %8072 = vrot.lane.b32.xlu0 %v1632, 108
        %v8073 = vpop.permute.xlu0 %8072
        %8074 = vrot.lane.b32.xlu0 %v1633, 108
        %v8075 = vpop.permute.xlu0 %8074
        %8076 = vrot.lane.b32.xlu0 %v1634, 108
        %v8077 = vpop.permute.xlu0 %8076
        %8078 = vrot.lane.b32.xlu0 %v1635, 108
        %v8079 = vpop.permute.xlu0 %8078
        %8080 = vrot.lane.b32.xlu0 %v1636, 108
        %v8081 = vpop.permute.xlu0 %8080
        %8082 = vrot.lane.b32.xlu0 %v1637, 108
        %v8083 = vpop.permute.xlu0 %8082
        %8084 = vrot.lane.b32.xlu0 %v1638, 108
        %v8085 = vpop.permute.xlu0 %8084
        %8086 = vrot.lane.b32.xlu0 %v1639, 108
        %v8087 = vpop.permute.xlu0 %8086
        %8088 = vrot.lane.b32.xlu0 %v1640, 108
        %v8089 = vpop.permute.xlu0 %8088
        %8090 = vrot.lane.b32.xlu0 %v1641, 108
        %v8091 = vpop.permute.xlu0 %8090
        %8092 = vrot.lane.b32.xlu0 %v1642, 108
        %v8093 = vpop.permute.xlu0 %8092
        %8094 = vrot.lane.b32.xlu0 %v1643, 108
        %v8095 = vpop.permute.xlu0 %8094
        %8096 = vrot.lane.b32.xlu0 %v1644, 108
        %v8097 = vpop.permute.xlu0 %8096
        %8098 = vrot.lane.b32.xlu0 %v1645, 108
        %v8099 = vpop.permute.xlu0 %8098
        %8100 = vrot.lane.b32.xlu0 %v1646, 108
        %v8101 = vpop.permute.xlu0 %8100
        %8134 = vrot.lane.b32.xlu0 %v1615, 112
        %v8135 = vpop.permute.xlu0 %8134
        %8136 = vrot.lane.b32.xlu0 %v1616, 112
        %v8137 = vpop.permute.xlu0 %8136
        %8138 = vrot.lane.b32.xlu0 %v1617, 112
        %v8139 = vpop.permute.xlu0 %8138
        %8140 = vrot.lane.b32.xlu0 %v1618, 112
        %v8141 = vpop.permute.xlu0 %8140
        %8142 = vrot.lane.b32.xlu0 %v1619, 112
        %v8143 = vpop.permute.xlu0 %8142
        %8144 = vrot.lane.b32.xlu0 %v1620, 112
        %v8145 = vpop.permute.xlu0 %8144
        %8146 = vrot.lane.b32.xlu0 %v1621, 112
        %v8147 = vpop.permute.xlu0 %8146
        %8148 = vrot.lane.b32.xlu0 %v1622, 112
        %v8149 = vpop.permute.xlu0 %8148
        %8150 = vrot.lane.b32.xlu0 %v1623, 112
        %v8151 = vpop.permute.xlu0 %8150
        %8152 = vrot.lane.b32.xlu0 %v1624, 112
        %v8153 = vpop.permute.xlu0 %8152
        %8154 = vrot.lane.b32.xlu0 %v1625, 112
        %v8155 = vpop.permute.xlu0 %8154
        %8156 = vrot.lane.b32.xlu0 %v1626, 112
        %v8157 = vpop.permute.xlu0 %8156
        %8158 = vrot.lane.b32.xlu0 %v1627, 112
        %v8159 = vpop.permute.xlu0 %8158
        %8160 = vrot.lane.b32.xlu0 %v1628, 112
        %v8161 = vpop.permute.xlu0 %8160
        %8162 = vrot.lane.b32.xlu0 %v1629, 112
        %v8163 = vpop.permute.xlu0 %8162
        %8164 = vrot.lane.b32.xlu0 %v1630, 112
        %v8165 = vpop.permute.xlu0 %8164
        %8166 = vrot.lane.b32.xlu0 %v1631, 112
        %v8167 = vpop.permute.xlu0 %8166
        %8168 = vrot.lane.b32.xlu0 %v1632, 112
        %v8169 = vpop.permute.xlu0 %8168
        %8170 = vrot.lane.b32.xlu0 %v1633, 112
        %v8171 = vpop.permute.xlu0 %8170
        %8172 = vrot.lane.b32.xlu0 %v1634, 112
        %v8173 = vpop.permute.xlu0 %8172
        %8174 = vrot.lane.b32.xlu0 %v1635, 112
        %v8175 = vpop.permute.xlu0 %8174
        %8176 = vrot.lane.b32.xlu0 %v1636, 112
        %v8177 = vpop.permute.xlu0 %8176
        %8178 = vrot.lane.b32.xlu0 %v1637, 112
        %v8179 = vpop.permute.xlu0 %8178
        %8180 = vrot.lane.b32.xlu0 %v1638, 112
        %v8181 = vpop.permute.xlu0 %8180
        %8182 = vrot.lane.b32.xlu0 %v1639, 112
        %v8183 = vpop.permute.xlu0 %8182
        %8184 = vrot.lane.b32.xlu0 %v1640, 112
        %v8185 = vpop.permute.xlu0 %8184
        %8186 = vrot.lane.b32.xlu0 %v1641, 112
        %v8187 = vpop.permute.xlu0 %8186
        %8188 = vrot.lane.b32.xlu0 %v1642, 112
        %v8189 = vpop.permute.xlu0 %8188
        %8190 = vrot.lane.b32.xlu0 %v1643, 112
        %v8191 = vpop.permute.xlu0 %8190
        %8192 = vrot.lane.b32.xlu0 %v1644, 112
        %v8193 = vpop.permute.xlu0 %8192
        %8194 = vrot.lane.b32.xlu0 %v1645, 112
        %v8195 = vpop.permute.xlu0 %8194
        %8196 = vrot.lane.b32.xlu0 %v1646, 112
        %v8197 = vpop.permute.xlu0 %8196
        %8230 = vrot.lane.b32.xlu0 %v1615, 116
        %v8231 = vpop.permute.xlu0 %8230
        %8232 = vrot.lane.b32.xlu0 %v1616, 116
        %v8233 = vpop.permute.xlu0 %8232
        %8234 = vrot.lane.b32.xlu0 %v1617, 116
        %v8235 = vpop.permute.xlu0 %8234
        %8236 = vrot.lane.b32.xlu0 %v1618, 116
        %v8237 = vpop.permute.xlu0 %8236
        %8238 = vrot.lane.b32.xlu0 %v1619, 116
        %v8239 = vpop.permute.xlu0 %8238
        %8240 = vrot.lane.b32.xlu0 %v1620, 116
        %v8241 = vpop.permute.xlu0 %8240
        %8242 = vrot.lane.b32.xlu0 %v1621, 116
        %v8243 = vpop.permute.xlu0 %8242
        %8244 = vrot.lane.b32.xlu0 %v1622, 116
        %v8245 = vpop.permute.xlu0 %8244
        %8246 = vrot.lane.b32.xlu0 %v1623, 116
        %v8247 = vpop.permute.xlu0 %8246
        %8248 = vrot.lane.b32.xlu0 %v1624, 116
        %v8249 = vpop.permute.xlu0 %8248
        %8250 = vrot.lane.b32.xlu0 %v1625, 116
        %v8251 = vpop.permute.xlu0 %8250
        %8252 = vrot.lane.b32.xlu0 %v1626, 116
        %v8253 = vpop.permute.xlu0 %8252
        %8254 = vrot.lane.b32.xlu0 %v1627, 116
        %v8255 = vpop.permute.xlu0 %8254
        %8256 = vrot.lane.b32.xlu0 %v1628, 116
        %v8257 = vpop.permute.xlu0 %8256
        %8258 = vrot.lane.b32.xlu0 %v1629, 116
        %v8259 = vpop.permute.xlu0 %8258
        %8260 = vrot.lane.b32.xlu0 %v1630, 116
        %v8261 = vpop.permute.xlu0 %8260
        %8262 = vrot.lane.b32.xlu0 %v1631, 116
        %v8263 = vpop.permute.xlu0 %8262
        %8264 = vrot.lane.b32.xlu0 %v1632, 116
        %v8265 = vpop.permute.xlu0 %8264
        %8266 = vrot.lane.b32.xlu0 %v1633, 116
        %v8267 = vpop.permute.xlu0 %8266
        %8268 = vrot.lane.b32.xlu0 %v1634, 116
        %v8269 = vpop.permute.xlu0 %8268
        %8270 = vrot.lane.b32.xlu0 %v1635, 116
        %v8271 = vpop.permute.xlu0 %8270
        %8272 = vrot.lane.b32.xlu0 %v1636, 116
        %v8273 = vpop.permute.xlu0 %8272
        %8274 = vrot.lane.b32.xlu0 %v1637, 116
        %v8275 = vpop.permute.xlu0 %8274
        %8276 = vrot.lane.b32.xlu0 %v1638, 116
        %v8277 = vpop.permute.xlu0 %8276
        %8278 = vrot.lane.b32.xlu0 %v1639, 116
        %v8279 = vpop.permute.xlu0 %8278
        %8280 = vrot.lane.b32.xlu0 %v1640, 116
        %v8281 = vpop.permute.xlu0 %8280
        %8282 = vrot.lane.b32.xlu0 %v1641, 116
        %v8283 = vpop.permute.xlu0 %8282
        %8284 = vrot.lane.b32.xlu0 %v1642, 116
        %v8285 = vpop.permute.xlu0 %8284
        %8286 = vrot.lane.b32.xlu0 %v1643, 116
        %v8287 = vpop.permute.xlu0 %8286
        %8288 = vrot.lane.b32.xlu0 %v1644, 116
        %v8289 = vpop.permute.xlu0 %8288
        %8290 = vrot.lane.b32.xlu0 %v1645, 116
        %v8291 = vpop.permute.xlu0 %8290
        %8292 = vrot.lane.b32.xlu0 %v1646, 116
        %v8293 = vpop.permute.xlu0 %8292
        %8326 = vrot.lane.b32.xlu0 %v1615, 120
        %v8327 = vpop.permute.xlu0 %8326
        %8328 = vrot.lane.b32.xlu0 %v1616, 120
        %v8329 = vpop.permute.xlu0 %8328
        %8330 = vrot.lane.b32.xlu0 %v1617, 120
        %v8331 = vpop.permute.xlu0 %8330
        %8332 = vrot.lane.b32.xlu0 %v1618, 120
        %v8333 = vpop.permute.xlu0 %8332
        %8334 = vrot.lane.b32.xlu0 %v1619, 120
        %v8335 = vpop.permute.xlu0 %8334
        %8336 = vrot.lane.b32.xlu0 %v1620, 120
        %v8337 = vpop.permute.xlu0 %8336
        %8338 = vrot.lane.b32.xlu0 %v1621, 120
        %v8339 = vpop.permute.xlu0 %8338
        %8340 = vrot.lane.b32.xlu0 %v1622, 120
        %v8341 = vpop.permute.xlu0 %8340
        %8342 = vrot.lane.b32.xlu0 %v1623, 120
        %v8343 = vpop.permute.xlu0 %8342
        %8344 = vrot.lane.b32.xlu0 %v1624, 120
        %v8345 = vpop.permute.xlu0 %8344
        %8346 = vrot.lane.b32.xlu0 %v1625, 120
        %v8347 = vpop.permute.xlu0 %8346
        %8348 = vrot.lane.b32.xlu0 %v1626, 120
        %v8349 = vpop.permute.xlu0 %8348
        %8350 = vrot.lane.b32.xlu0 %v1627, 120
        %v8351 = vpop.permute.xlu0 %8350
        %8352 = vrot.lane.b32.xlu0 %v1628, 120
        %v8353 = vpop.permute.xlu0 %8352
        %8354 = vrot.lane.b32.xlu0 %v1629, 120
        %v8355 = vpop.permute.xlu0 %8354
        %8356 = vrot.lane.b32.xlu0 %v1630, 120
        %v8357 = vpop.permute.xlu0 %8356
        %8358 = vrot.lane.b32.xlu0 %v1631, 120
        %v8359 = vpop.permute.xlu0 %8358
        %8360 = vrot.lane.b32.xlu0 %v1632, 120
        %v8361 = vpop.permute.xlu0 %8360
        %8362 = vrot.lane.b32.xlu0 %v1633, 120
        %v8363 = vpop.permute.xlu0 %8362
        %8364 = vrot.lane.b32.xlu0 %v1634, 120
        %v8365 = vpop.permute.xlu0 %8364
        %8366 = vrot.lane.b32.xlu0 %v1635, 120
        %v8367 = vpop.permute.xlu0 %8366
        %8368 = vrot.lane.b32.xlu0 %v1636, 120
        %v8369 = vpop.permute.xlu0 %8368
        %8370 = vrot.lane.b32.xlu0 %v1637, 120
        %v8371 = vpop.permute.xlu0 %8370
        %8372 = vrot.lane.b32.xlu0 %v1638, 120
        %v8373 = vpop.permute.xlu0 %8372
        %8374 = vrot.lane.b32.xlu0 %v1639, 120
        %v8375 = vpop.permute.xlu0 %8374
        %8376 = vrot.lane.b32.xlu0 %v1640, 120
        %v8377 = vpop.permute.xlu0 %8376
        %8378 = vrot.lane.b32.xlu0 %v1641, 120
        %v8379 = vpop.permute.xlu0 %8378
        %8380 = vrot.lane.b32.xlu0 %v1642, 120
        %v8381 = vpop.permute.xlu0 %8380
        %8382 = vrot.lane.b32.xlu0 %v1643, 120
        %v8383 = vpop.permute.xlu0 %8382
        %8384 = vrot.lane.b32.xlu0 %v1644, 120
        %v8385 = vpop.permute.xlu0 %8384
        %8386 = vrot.lane.b32.xlu0 %v1645, 120
        %v8387 = vpop.permute.xlu0 %8386
        %8388 = vrot.lane.b32.xlu0 %v1646, 120
        %v8389 = vpop.permute.xlu0 %8388
        %8422 = vrot.lane.b32.xlu0 %v1615, 124
        %v8423 = vpop.permute.xlu0 %8422
        %8424 = vrot.lane.b32.xlu0 %v1616, 124
        %v8425 = vpop.permute.xlu0 %8424
        %8426 = vrot.lane.b32.xlu0 %v1617, 124
        %v8427 = vpop.permute.xlu0 %8426
        %8428 = vrot.lane.b32.xlu0 %v1618, 124
        %v8429 = vpop.permute.xlu0 %8428
        %8430 = vrot.lane.b32.xlu0 %v1619, 124
        %v8431 = vpop.permute.xlu0 %8430
        %8432 = vrot.lane.b32.xlu0 %v1620, 124
        %v8433 = vpop.permute.xlu0 %8432
        %8434 = vrot.lane.b32.xlu0 %v1621, 124
        %v8435 = vpop.permute.xlu0 %8434
        %8436 = vrot.lane.b32.xlu0 %v1622, 124
        %v8437 = vpop.permute.xlu0 %8436
        %8438 = vrot.lane.b32.xlu0 %v1623, 124
        %v8439 = vpop.permute.xlu0 %8438
        %8440 = vrot.lane.b32.xlu0 %v1624, 124
        %v8441 = vpop.permute.xlu0 %8440
        %8442 = vrot.lane.b32.xlu0 %v1625, 124
        %v8443 = vpop.permute.xlu0 %8442
        %8444 = vrot.lane.b32.xlu0 %v1626, 124
        %v8445 = vpop.permute.xlu0 %8444
        %8446 = vrot.lane.b32.xlu0 %v1627, 124
        %v8447 = vpop.permute.xlu0 %8446
        %8448 = vrot.lane.b32.xlu0 %v1628, 124
        %v8449 = vpop.permute.xlu0 %8448
        %8450 = vrot.lane.b32.xlu0 %v1629, 124
        %v8451 = vpop.permute.xlu0 %8450
        %8452 = vrot.lane.b32.xlu0 %v1630, 124
        %v8453 = vpop.permute.xlu0 %8452
        %8454 = vrot.lane.b32.xlu0 %v1631, 124
        %v8455 = vpop.permute.xlu0 %8454
        %8456 = vrot.lane.b32.xlu0 %v1632, 124
        %v8457 = vpop.permute.xlu0 %8456
        %8458 = vrot.lane.b32.xlu0 %v1633, 124
        %v8459 = vpop.permute.xlu0 %8458
        %8460 = vrot.lane.b32.xlu0 %v1634, 124
        %v8461 = vpop.permute.xlu0 %8460
        %8462 = vrot.lane.b32.xlu0 %v1635, 124
        %v8463 = vpop.permute.xlu0 %8462
        %8464 = vrot.lane.b32.xlu0 %v1636, 124
        %v8465 = vpop.permute.xlu0 %8464
        %8466 = vrot.lane.b32.xlu0 %v1637, 124
        %v8467 = vpop.permute.xlu0 %8466
        %8468 = vrot.lane.b32.xlu0 %v1638, 124
        %v8469 = vpop.permute.xlu0 %8468
        %8470 = vrot.lane.b32.xlu0 %v1639, 124
        %v8471 = vpop.permute.xlu0 %8470
        %8472 = vrot.lane.b32.xlu0 %v1640, 124
        %v8473 = vpop.permute.xlu0 %8472
        %8474 = vrot.lane.b32.xlu0 %v1641, 124
        %v8475 = vpop.permute.xlu0 %8474
        %8476 = vrot.lane.b32.xlu0 %v1642, 124
        %v8477 = vpop.permute.xlu0 %8476
        %8478 = vrot.lane.b32.xlu0 %v1643, 124
        %v8479 = vpop.permute.xlu0 %8478
        %8480 = vrot.lane.b32.xlu0 %v1644, 124
        %v8481 = vpop.permute.xlu0 %8480
        %8482 = vrot.lane.b32.xlu0 %v1645, 124
        %v8483 = vpop.permute.xlu0 %8482
        %8484 = vrot.lane.b32.xlu0 %v1646, 124
        %v8485 = vpop.permute.xlu0 %8484
        %vm8518 = vcmask 31744
        %v8519 = vsel %vm8518, %v1615, %v5543
        %v8520 = vsel %vm8518, %v1616, %v5545
        %v8521 = vsel %vm8518, %v1617, %v5547
        %v8522 = vsel %vm8518, %v1618, %v5549
        %v8523 = vsel %vm8518, %v1619, %v5551
        %v8524 = vsel %vm8518, %v1620, %v5553
        %v8525 = vsel %vm8518, %v1621, %v5555
        %v8526 = vsel %vm8518, %v1622, %v5557
        %v8527 = vsel %vm8518, %v1623, %v5559
        %v8528 = vsel %vm8518, %v1624, %v5561
        %v8529 = vsel %vm8518, %v1625, %v5563
        %v8530 = vsel %vm8518, %v1626, %v5565
        %v8531 = vsel %vm8518, %v1627, %v5567
        %v8532 = vsel %vm8518, %v1628, %v5569
        %v8533 = vsel %vm8518, %v1629, %v5571
        %v8534 = vsel %vm8518, %v1630, %v5573
        %v8535 = vsel %vm8518, %v1631, %v5575
        %v8536 = vsel %vm8518, %v1632, %v5577
        %v8537 = vsel %vm8518, %v1633, %v5579
        %v8538 = vsel %vm8518, %v1634, %v5581
        %v8539 = vsel %vm8518, %v1635, %v5583
        %v8540 = vsel %vm8518, %v1636, %v5585
        %v8541 = vsel %vm8518, %v1637, %v5587
        %v8542 = vsel %vm8518, %v1638, %v5589
        %v8543 = vsel %vm8518, %v1639, %v5591
        %v8544 = vsel %vm8518, %v1640, %v5593
        %v8545 = vsel %vm8518, %v1641, %v5595
        %v8546 = vsel %vm8518, %v1642, %v5597
        %v8547 = vsel %vm8518, %v1643, %v5599
        %v8548 = vsel %vm8518, %v1644, %v5601
        %v8549 = vsel %vm8518, %v1645, %v5603
        %v8550 = vsel %vm8518, %v1646, %v5605
        %vm8551 = vcmask 64512
        %v8552 = vsel %vm8551, %v8519, %v5639
        %v8553 = vsel %vm8551, %v8520, %v5641
        %v8554 = vsel %vm8551, %v8521, %v5643
        %v8555 = vsel %vm8551, %v8522, %v5645
        %v8556 = vsel %vm8551, %v8523, %v5647
        %v8557 = vsel %vm8551, %v8524, %v5649
        %v8558 = vsel %vm8551, %v8525, %v5651
        %v8559 = vsel %vm8551, %v8526, %v5653
        %v8560 = vsel %vm8551, %v8527, %v5655
        %v8561 = vsel %vm8551, %v8528, %v5657
        %v8562 = vsel %vm8551, %v8529, %v5659
        %v8563 = vsel %vm8551, %v8530, %v5661
        %v8564 = vsel %vm8551, %v8531, %v5663
        %v8565 = vsel %vm8551, %v8532, %v5665
        %v8566 = vsel %vm8551, %v8533, %v5667
        %v8567 = vsel %vm8551, %v8534, %v5669
        %v8568 = vsel %vm8551, %v8535, %v5671
        %v8569 = vsel %vm8551, %v8536, %v5673
        %v8570 = vsel %vm8551, %v8537, %v5675
        %v8571 = vsel %vm8551, %v8538, %v5677
        %v8572 = vsel %vm8551, %v8539, %v5679
        %v8573 = vsel %vm8551, %v8540, %v5681
        %v8574 = vsel %vm8551, %v8541, %v5683
        %v8575 = vsel %vm8551, %v8542, %v5685
        %v8576 = vsel %vm8551, %v8543, %v5687
        %v8577 = vsel %vm8551, %v8544, %v5689
        %v8578 = vsel %vm8551, %v8545, %v5691
        %v8579 = vsel %vm8551, %v8546, %v5693
        %v8580 = vsel %vm8551, %v8547, %v5695
        %v8581 = vsel %vm8551, %v8548, %v5697
        %v8582 = vsel %vm8551, %v8549, %v5699
        %v8583 = vsel %vm8551, %v8550, %v5701
        %vm8584 = vcmask 97280
        %v8585 = vsel %vm8584, %v8552, %v5735
        %v8586 = vsel %vm8584, %v8553, %v5737
        %v8587 = vsel %vm8584, %v8554, %v5739
        %v8588 = vsel %vm8584, %v8555, %v5741
        %v8589 = vsel %vm8584, %v8556, %v5743
        %v8590 = vsel %vm8584, %v8557, %v5745
        %v8591 = vsel %vm8584, %v8558, %v5747
        %v8592 = vsel %vm8584, %v8559, %v5749
        %v8593 = vsel %vm8584, %v8560, %v5751
        %v8594 = vsel %vm8584, %v8561, %v5753
        %v8595 = vsel %vm8584, %v8562, %v5755
        %v8596 = vsel %vm8584, %v8563, %v5757
        %v8597 = vsel %vm8584, %v8564, %v5759
        %v8598 = vsel %vm8584, %v8565, %v5761
        %v8599 = vsel %vm8584, %v8566, %v5763
        %v8600 = vsel %vm8584, %v8567, %v5765
        %v8601 = vsel %vm8584, %v8568, %v5767
        %v8602 = vsel %vm8584, %v8569, %v5769
        %v8603 = vsel %vm8584, %v8570, %v5771
        %v8604 = vsel %vm8584, %v8571, %v5773
        %v8605 = vsel %vm8584, %v8572, %v5775
        %v8606 = vsel %vm8584, %v8573, %v5777
        %v8607 = vsel %vm8584, %v8574, %v5779
        %v8608 = vsel %vm8584, %v8575, %v5781
        %v8609 = vsel %vm8584, %v8576, %v5783
        %v8610 = vsel %vm8584, %v8577, %v5785
        %v8611 = vsel %vm8584, %v8578, %v5787
        %v8612 = vsel %vm8584, %v8579, %v5789
        %v8613 = vsel %vm8584, %v8580, %v5791
        %v8614 = vsel %vm8584, %v8581, %v5793
        %v8615 = vsel %vm8584, %v8582, %v5795
        %v8616 = vsel %vm8584, %v8583, %v5797
        %vm8617 = vcmask 130048
        %v8618 = vsel %vm8617, %v8585, %v5831
        %v8619 = vsel %vm8617, %v8586, %v5833
        %v8620 = vsel %vm8617, %v8587, %v5835
        %v8621 = vsel %vm8617, %v8588, %v5837
        %v8622 = vsel %vm8617, %v8589, %v5839
        %v8623 = vsel %vm8617, %v8590, %v5841
        %v8624 = vsel %vm8617, %v8591, %v5843
        %v8625 = vsel %vm8617, %v8592, %v5845
        %v8626 = vsel %vm8617, %v8593, %v5847
        %v8627 = vsel %vm8617, %v8594, %v5849
        %v8628 = vsel %vm8617, %v8595, %v5851
        %v8629 = vsel %vm8617, %v8596, %v5853
        %v8630 = vsel %vm8617, %v8597, %v5855
        %v8631 = vsel %vm8617, %v8598, %v5857
        %v8632 = vsel %vm8617, %v8599, %v5859
        %v8633 = vsel %vm8617, %v8600, %v5861
        %v8634 = vsel %vm8617, %v8601, %v5863
        %v8635 = vsel %vm8617, %v8602, %v5865
        %v8636 = vsel %vm8617, %v8603, %v5867
        %v8637 = vsel %vm8617, %v8604, %v5869
        %v8638 = vsel %vm8617, %v8605, %v5871
        %v8639 = vsel %vm8617, %v8606, %v5873
        %v8640 = vsel %vm8617, %v8607, %v5875
        %v8641 = vsel %vm8617, %v8608, %v5877
        %v8642 = vsel %vm8617, %v8609, %v5879
        %v8643 = vsel %vm8617, %v8610, %v5881
        %v8644 = vsel %vm8617, %v8611, %v5883
        %v8645 = vsel %vm8617, %v8612, %v5885
        %v8646 = vsel %vm8617, %v8613, %v5887
        %v8647 = vsel %vm8617, %v8614, %v5889
        %v8648 = vsel %vm8617, %v8615, %v5891
        %v8649 = vsel %vm8617, %v8616, %v5893
        %vm8650 = vcmask 162816
        %v8651 = vsel %vm8650, %v8618, %v5927
        %v8652 = vsel %vm8650, %v8619, %v5929
        %v8653 = vsel %vm8650, %v8620, %v5931
        %v8654 = vsel %vm8650, %v8621, %v5933
        %v8655 = vsel %vm8650, %v8622, %v5935
        %v8656 = vsel %vm8650, %v8623, %v5937
        %v8657 = vsel %vm8650, %v8624, %v5939
        %v8658 = vsel %vm8650, %v8625, %v5941
        %v8659 = vsel %vm8650, %v8626, %v5943
        %v8660 = vsel %vm8650, %v8627, %v5945
        %v8661 = vsel %vm8650, %v8628, %v5947
        %v8662 = vsel %vm8650, %v8629, %v5949
        %v8663 = vsel %vm8650, %v8630, %v5951
        %v8664 = vsel %vm8650, %v8631, %v5953
        %v8665 = vsel %vm8650, %v8632, %v5955
        %v8666 = vsel %vm8650, %v8633, %v5957
        %v8667 = vsel %vm8650, %v8634, %v5959
        %v8668 = vsel %vm8650, %v8635, %v5961
        %v8669 = vsel %vm8650, %v8636, %v5963
        %v8670 = vsel %vm8650, %v8637, %v5965
        %v8671 = vsel %vm8650, %v8638, %v5967
        %v8672 = vsel %vm8650, %v8639, %v5969
        %v8673 = vsel %vm8650, %v8640, %v5971
        %v8674 = vsel %vm8650, %v8641, %v5973
        %v8675 = vsel %vm8650, %v8642, %v5975
        %v8676 = vsel %vm8650, %v8643, %v5977
        %v8677 = vsel %vm8650, %v8644, %v5979
        %v8678 = vsel %vm8650, %v8645, %v5981
        %v8679 = vsel %vm8650, %v8646, %v5983
        %v8680 = vsel %vm8650, %v8647, %v5985
        %v8681 = vsel %vm8650, %v8648, %v5987
        %v8682 = vsel %vm8650, %v8649, %v5989
        %vm8683 = vcmask 195584
        %v8684 = vsel %vm8683, %v8651, %v6023
        %v8685 = vsel %vm8683, %v8652, %v6025
        %v8686 = vsel %vm8683, %v8653, %v6027
        %v8687 = vsel %vm8683, %v8654, %v6029
        %v8688 = vsel %vm8683, %v8655, %v6031
        %v8689 = vsel %vm8683, %v8656, %v6033
        %v8690 = vsel %vm8683, %v8657, %v6035
        %v8691 = vsel %vm8683, %v8658, %v6037
        %v8692 = vsel %vm8683, %v8659, %v6039
        %v8693 = vsel %vm8683, %v8660, %v6041
        %v8694 = vsel %vm8683, %v8661, %v6043
        %v8695 = vsel %vm8683, %v8662, %v6045
        %v8696 = vsel %vm8683, %v8663, %v6047
        %v8697 = vsel %vm8683, %v8664, %v6049
        %v8698 = vsel %vm8683, %v8665, %v6051
        %v8699 = vsel %vm8683, %v8666, %v6053
        %v8700 = vsel %vm8683, %v8667, %v6055
        %v8701 = vsel %vm8683, %v8668, %v6057
        %v8702 = vsel %vm8683, %v8669, %v6059
        %v8703 = vsel %vm8683, %v8670, %v6061
        %v8704 = vsel %vm8683, %v8671, %v6063
        %v8705 = vsel %vm8683, %v8672, %v6065
        %v8706 = vsel %vm8683, %v8673, %v6067
        %v8707 = vsel %vm8683, %v8674, %v6069
        %v8708 = vsel %vm8683, %v8675, %v6071
        %v8709 = vsel %vm8683, %v8676, %v6073
        %v8710 = vsel %vm8683, %v8677, %v6075
        %v8711 = vsel %vm8683, %v8678, %v6077
        %v8712 = vsel %vm8683, %v8679, %v6079
        %v8713 = vsel %vm8683, %v8680, %v6081
        %v8714 = vsel %vm8683, %v8681, %v6083
        %v8715 = vsel %vm8683, %v8682, %v6085
        %vm8716 = vcmask 228352
        %v8717 = vsel %vm8716, %v8684, %v6119
        %v8718 = vsel %vm8716, %v8685, %v6121
        %v8719 = vsel %vm8716, %v8686, %v6123
        %v8720 = vsel %vm8716, %v8687, %v6125
        %v8721 = vsel %vm8716, %v8688, %v6127
        %v8722 = vsel %vm8716, %v8689, %v6129
        %v8723 = vsel %vm8716, %v8690, %v6131
        %v8724 = vsel %vm8716, %v8691, %v6133
        %v8725 = vsel %vm8716, %v8692, %v6135
        %v8726 = vsel %vm8716, %v8693, %v6137
        %v8727 = vsel %vm8716, %v8694, %v6139
        %v8728 = vsel %vm8716, %v8695, %v6141
        %v8729 = vsel %vm8716, %v8696, %v6143
        %v8730 = vsel %vm8716, %v8697, %v6145
        %v8731 = vsel %vm8716, %v8698, %v6147
        %v8732 = vsel %vm8716, %v8699, %v6149
        %v8733 = vsel %vm8716, %v8700, %v6151
        %v8734 = vsel %vm8716, %v8701, %v6153
        %v8735 = vsel %vm8716, %v8702, %v6155
        %v8736 = vsel %vm8716, %v8703, %v6157
        %v8737 = vsel %vm8716, %v8704, %v6159
        %v8738 = vsel %vm8716, %v8705, %v6161
        %v8739 = vsel %vm8716, %v8706, %v6163
        %v8740 = vsel %vm8716, %v8707, %v6165
        %v8741 = vsel %vm8716, %v8708, %v6167
        %v8742 = vsel %vm8716, %v8709, %v6169
        %v8743 = vsel %vm8716, %v8710, %v6171
        %v8744 = vsel %vm8716, %v8711, %v6173
        %v8745 = vsel %vm8716, %v8712, %v6175
        %v8746 = vsel %vm8716, %v8713, %v6177
        %v8747 = vsel %vm8716, %v8714, %v6179
        %v8748 = vsel %vm8716, %v8715, %v6181
        %vm8749 = vcmask 261120
        %v8750 = vsel %vm8749, %v8717, %v6215
        %v8751 = vsel %vm8749, %v8718, %v6217
        %v8752 = vsel %vm8749, %v8719, %v6219
        %v8753 = vsel %vm8749, %v8720, %v6221
        %v8754 = vsel %vm8749, %v8721, %v6223
        %v8755 = vsel %vm8749, %v8722, %v6225
        %v8756 = vsel %vm8749, %v8723, %v6227
        %v8757 = vsel %vm8749, %v8724, %v6229
        %v8758 = vsel %vm8749, %v8725, %v6231
        %v8759 = vsel %vm8749, %v8726, %v6233
        %v8760 = vsel %vm8749, %v8727, %v6235
        %v8761 = vsel %vm8749, %v8728, %v6237
        %v8762 = vsel %vm8749, %v8729, %v6239
        %v8763 = vsel %vm8749, %v8730, %v6241
        %v8764 = vsel %vm8749, %v8731, %v6243
        %v8765 = vsel %vm8749, %v8732, %v6245
        %v8766 = vsel %vm8749, %v8733, %v6247
        %v8767 = vsel %vm8749, %v8734, %v6249
        %v8768 = vsel %vm8749, %v8735, %v6251
        %v8769 = vsel %vm8749, %v8736, %v6253
        %v8770 = vsel %vm8749, %v8737, %v6255
        %v8771 = vsel %vm8749, %v8738, %v6257
        %v8772 = vsel %vm8749, %v8739, %v6259
        %v8773 = vsel %vm8749, %v8740, %v6261
        %v8774 = vsel %vm8749, %v8741, %v6263
        %v8775 = vsel %vm8749, %v8742, %v6265
        %v8776 = vsel %vm8749, %v8743, %v6267
        %v8777 = vsel %vm8749, %v8744, %v6269
        %v8778 = vsel %vm8749, %v8745, %v6271
        %v8779 = vsel %vm8749, %v8746, %v6273
        %v8780 = vsel %vm8749, %v8747, %v6275
        %v8781 = vsel %vm8749, %v8748, %v6277
        %vm8782 = vcmask 293888
        %v8783 = vsel %vm8782, %v8750, %v6311
        %v8784 = vsel %vm8782, %v8751, %v6313
        %v8785 = vsel %vm8782, %v8752, %v6315
        %v8786 = vsel %vm8782, %v8753, %v6317
        %v8787 = vsel %vm8782, %v8754, %v6319
        %v8788 = vsel %vm8782, %v8755, %v6321
        %v8789 = vsel %vm8782, %v8756, %v6323
        %v8790 = vsel %vm8782, %v8757, %v6325
        %v8791 = vsel %vm8782, %v8758, %v6327
        %v8792 = vsel %vm8782, %v8759, %v6329
        %v8793 = vsel %vm8782, %v8760, %v6331
        %v8794 = vsel %vm8782, %v8761, %v6333
        %v8795 = vsel %vm8782, %v8762, %v6335
        %v8796 = vsel %vm8782, %v8763, %v6337
        %v8797 = vsel %vm8782, %v8764, %v6339
        %v8798 = vsel %vm8782, %v8765, %v6341
        %v8799 = vsel %vm8782, %v8766, %v6343
        %v8800 = vsel %vm8782, %v8767, %v6345
        %v8801 = vsel %vm8782, %v8768, %v6347
        %v8802 = vsel %vm8782, %v8769, %v6349
        %v8803 = vsel %vm8782, %v8770, %v6351
        %v8804 = vsel %vm8782, %v8771, %v6353
        %v8805 = vsel %vm8782, %v8772, %v6355
        %v8806 = vsel %vm8782, %v8773, %v6357
        %v8807 = vsel %vm8782, %v8774, %v6359
        %v8808 = vsel %vm8782, %v8775, %v6361
        %v8809 = vsel %vm8782, %v8776, %v6363
        %v8810 = vsel %vm8782, %v8777, %v6365
        %v8811 = vsel %vm8782, %v8778, %v6367
        %v8812 = vsel %vm8782, %v8779, %v6369
        %v8813 = vsel %vm8782, %v8780, %v6371
        %v8814 = vsel %vm8782, %v8781, %v6373
        %vm8815 = vcmask 326656
        %v8816 = vsel %vm8815, %v8783, %v6407
        %v8817 = vsel %vm8815, %v8784, %v6409
        %v8818 = vsel %vm8815, %v8785, %v6411
        %v8819 = vsel %vm8815, %v8786, %v6413
        %v8820 = vsel %vm8815, %v8787, %v6415
        %v8821 = vsel %vm8815, %v8788, %v6417
        %v8822 = vsel %vm8815, %v8789, %v6419
        %v8823 = vsel %vm8815, %v8790, %v6421
        %v8824 = vsel %vm8815, %v8791, %v6423
        %v8825 = vsel %vm8815, %v8792, %v6425
        %v8826 = vsel %vm8815, %v8793, %v6427
        %v8827 = vsel %vm8815, %v8794, %v6429
        %v8828 = vsel %vm8815, %v8795, %v6431
        %v8829 = vsel %vm8815, %v8796, %v6433
        %v8830 = vsel %vm8815, %v8797, %v6435
        %v8831 = vsel %vm8815, %v8798, %v6437
        %v8832 = vsel %vm8815, %v8799, %v6439
        %v8833 = vsel %vm8815, %v8800, %v6441
        %v8834 = vsel %vm8815, %v8801, %v6443
        %v8835 = vsel %vm8815, %v8802, %v6445
        %v8836 = vsel %vm8815, %v8803, %v6447
        %v8837 = vsel %vm8815, %v8804, %v6449
        %v8838 = vsel %vm8815, %v8805, %v6451
        %v8839 = vsel %vm8815, %v8806, %v6453
        %v8840 = vsel %vm8815, %v8807, %v6455
        %v8841 = vsel %vm8815, %v8808, %v6457
        %v8842 = vsel %vm8815, %v8809, %v6459
        %v8843 = vsel %vm8815, %v8810, %v6461
        %v8844 = vsel %vm8815, %v8811, %v6463
        %v8845 = vsel %vm8815, %v8812, %v6465
        %v8846 = vsel %vm8815, %v8813, %v6467
        %v8847 = vsel %vm8815, %v8814, %v6469
        %vm8848 = vcmask 359424
        %v8849 = vsel %vm8848, %v8816, %v6503
        %v8850 = vsel %vm8848, %v8817, %v6505
        %v8851 = vsel %vm8848, %v8818, %v6507
        %v8852 = vsel %vm8848, %v8819, %v6509
        %v8853 = vsel %vm8848, %v8820, %v6511
        %v8854 = vsel %vm8848, %v8821, %v6513
        %v8855 = vsel %vm8848, %v8822, %v6515
        %v8856 = vsel %vm8848, %v8823, %v6517
        %v8857 = vsel %vm8848, %v8824, %v6519
        %v8858 = vsel %vm8848, %v8825, %v6521
        %v8859 = vsel %vm8848, %v8826, %v6523
        %v8860 = vsel %vm8848, %v8827, %v6525
        %v8861 = vsel %vm8848, %v8828, %v6527
        %v8862 = vsel %vm8848, %v8829, %v6529
        %v8863 = vsel %vm8848, %v8830, %v6531
        %v8864 = vsel %vm8848, %v8831, %v6533
        %v8865 = vsel %vm8848, %v8832, %v6535
        %v8866 = vsel %vm8848, %v8833, %v6537
        %v8867 = vsel %vm8848, %v8834, %v6539
        %v8868 = vsel %vm8848, %v8835, %v6541
        %v8869 = vsel %vm8848, %v8836, %v6543
        %v8870 = vsel %vm8848, %v8837, %v6545
        %v8871 = vsel %vm8848, %v8838, %v6547
        %v8872 = vsel %vm8848, %v8839, %v6549
        %v8873 = vsel %vm8848, %v8840, %v6551
        %v8874 = vsel %vm8848, %v8841, %v6553
        %v8875 = vsel %vm8848, %v8842, %v6555
        %v8876 = vsel %vm8848, %v8843, %v6557
        %v8877 = vsel %vm8848, %v8844, %v6559
        %v8878 = vsel %vm8848, %v8845, %v6561
        %v8879 = vsel %vm8848, %v8846, %v6563
        %v8880 = vsel %vm8848, %v8847, %v6565
        %vm8881 = vcmask 392192
        %v8882 = vsel %vm8881, %v8849, %v6599
        %v8883 = vsel %vm8881, %v8850, %v6601
        %v8884 = vsel %vm8881, %v8851, %v6603
        %v8885 = vsel %vm8881, %v8852, %v6605
        %v8886 = vsel %vm8881, %v8853, %v6607
        %v8887 = vsel %vm8881, %v8854, %v6609
        %v8888 = vsel %vm8881, %v8855, %v6611
        %v8889 = vsel %vm8881, %v8856, %v6613
        %v8890 = vsel %vm8881, %v8857, %v6615
        %v8891 = vsel %vm8881, %v8858, %v6617
        %v8892 = vsel %vm8881, %v8859, %v6619
        %v8893 = vsel %vm8881, %v8860, %v6621
        %v8894 = vsel %vm8881, %v8861, %v6623
        %v8895 = vsel %vm8881, %v8862, %v6625
        %v8896 = vsel %vm8881, %v8863, %v6627
        %v8897 = vsel %vm8881, %v8864, %v6629
        %v8898 = vsel %vm8881, %v8865, %v6631
        %v8899 = vsel %vm8881, %v8866, %v6633
        %v8900 = vsel %vm8881, %v8867, %v6635
        %v8901 = vsel %vm8881, %v8868, %v6637
        %v8902 = vsel %vm8881, %v8869, %v6639
        %v8903 = vsel %vm8881, %v8870, %v6641
        %v8904 = vsel %vm8881, %v8871, %v6643
        %v8905 = vsel %vm8881, %v8872, %v6645
        %v8906 = vsel %vm8881, %v8873, %v6647
        %v8907 = vsel %vm8881, %v8874, %v6649
        %v8908 = vsel %vm8881, %v8875, %v6651
        %v8909 = vsel %vm8881, %v8876, %v6653
        %v8910 = vsel %vm8881, %v8877, %v6655
        %v8911 = vsel %vm8881, %v8878, %v6657
        %v8912 = vsel %vm8881, %v8879, %v6659
        %v8913 = vsel %vm8881, %v8880, %v6661
        %vm8914 = vcmask 424960
        %v8915 = vsel %vm8914, %v8882, %v6695
        %v8916 = vsel %vm8914, %v8883, %v6697
        %v8917 = vsel %vm8914, %v8884, %v6699
        %v8918 = vsel %vm8914, %v8885, %v6701
        %v8919 = vsel %vm8914, %v8886, %v6703
        %v8920 = vsel %vm8914, %v8887, %v6705
        %v8921 = vsel %vm8914, %v8888, %v6707
        %v8922 = vsel %vm8914, %v8889, %v6709
        %v8923 = vsel %vm8914, %v8890, %v6711
        %v8924 = vsel %vm8914, %v8891, %v6713
        %v8925 = vsel %vm8914, %v8892, %v6715
        %v8926 = vsel %vm8914, %v8893, %v6717
        %v8927 = vsel %vm8914, %v8894, %v6719
        %v8928 = vsel %vm8914, %v8895, %v6721
        %v8929 = vsel %vm8914, %v8896, %v6723
        %v8930 = vsel %vm8914, %v8897, %v6725
        %v8931 = vsel %vm8914, %v8898, %v6727
        %v8932 = vsel %vm8914, %v8899, %v6729
        %v8933 = vsel %vm8914, %v8900, %v6731
        %v8934 = vsel %vm8914, %v8901, %v6733
        %v8935 = vsel %vm8914, %v8902, %v6735
        %v8936 = vsel %vm8914, %v8903, %v6737
        %v8937 = vsel %vm8914, %v8904, %v6739
        %v8938 = vsel %vm8914, %v8905, %v6741
        %v8939 = vsel %vm8914, %v8906, %v6743
        %v8940 = vsel %vm8914, %v8907, %v6745
        %v8941 = vsel %vm8914, %v8908, %v6747
        %v8942 = vsel %vm8914, %v8909, %v6749
        %v8943 = vsel %vm8914, %v8910, %v6751
        %v8944 = vsel %vm8914, %v8911, %v6753
        %v8945 = vsel %vm8914, %v8912, %v6755
        %v8946 = vsel %vm8914, %v8913, %v6757
        %vm8947 = vcmask 457728
        %v8948 = vsel %vm8947, %v8915, %v6791
        %v8949 = vsel %vm8947, %v8916, %v6793
        %v8950 = vsel %vm8947, %v8917, %v6795
        %v8951 = vsel %vm8947, %v8918, %v6797
        %v8952 = vsel %vm8947, %v8919, %v6799
        %v8953 = vsel %vm8947, %v8920, %v6801
        %v8954 = vsel %vm8947, %v8921, %v6803
        %v8955 = vsel %vm8947, %v8922, %v6805
        %v8956 = vsel %vm8947, %v8923, %v6807
        %v8957 = vsel %vm8947, %v8924, %v6809
        %v8958 = vsel %vm8947, %v8925, %v6811
        %v8959 = vsel %vm8947, %v8926, %v6813
        %v8960 = vsel %vm8947, %v8927, %v6815
        %v8961 = vsel %vm8947, %v8928, %v6817
        %v8962 = vsel %vm8947, %v8929, %v6819
        %v8963 = vsel %vm8947, %v8930, %v6821
        %v8964 = vsel %vm8947, %v8931, %v6823
        %v8965 = vsel %vm8947, %v8932, %v6825
        %v8966 = vsel %vm8947, %v8933, %v6827
        %v8967 = vsel %vm8947, %v8934, %v6829
        %v8968 = vsel %vm8947, %v8935, %v6831
        %v8969 = vsel %vm8947, %v8936, %v6833
        %v8970 = vsel %vm8947, %v8937, %v6835
        %v8971 = vsel %vm8947, %v8938, %v6837
        %v8972 = vsel %vm8947, %v8939, %v6839
        %v8973 = vsel %vm8947, %v8940, %v6841
        %v8974 = vsel %vm8947, %v8941, %v6843
        %v8975 = vsel %vm8947, %v8942, %v6845
        %v8976 = vsel %vm8947, %v8943, %v6847
        %v8977 = vsel %vm8947, %v8944, %v6849
        %v8978 = vsel %vm8947, %v8945, %v6851
        %v8979 = vsel %vm8947, %v8946, %v6853
        %vm8980 = vcmask 490496
        %v8981 = vsel %vm8980, %v8948, %v6887
        %v8982 = vsel %vm8980, %v8949, %v6889
        %v8983 = vsel %vm8980, %v8950, %v6891
        %v8984 = vsel %vm8980, %v8951, %v6893
        %v8985 = vsel %vm8980, %v8952, %v6895
        %v8986 = vsel %vm8980, %v8953, %v6897
        %v8987 = vsel %vm8980, %v8954, %v6899
        %v8988 = vsel %vm8980, %v8955, %v6901
        %v8989 = vsel %vm8980, %v8956, %v6903
        %v8990 = vsel %vm8980, %v8957, %v6905
        %v8991 = vsel %vm8980, %v8958, %v6907
        %v8992 = vsel %vm8980, %v8959, %v6909
        %v8993 = vsel %vm8980, %v8960, %v6911
        %v8994 = vsel %vm8980, %v8961, %v6913
        %v8995 = vsel %vm8980, %v8962, %v6915
        %v8996 = vsel %vm8980, %v8963, %v6917
        %v8997 = vsel %vm8980, %v8964, %v6919
        %v8998 = vsel %vm8980, %v8965, %v6921
        %v8999 = vsel %vm8980, %v8966, %v6923
        %v9000 = vsel %vm8980, %v8967, %v6925
        %v9001 = vsel %vm8980, %v8968, %v6927
        %v9002 = vsel %vm8980, %v8969, %v6929
        %v9003 = vsel %vm8980, %v8970, %v6931
        %v9004 = vsel %vm8980, %v8971, %v6933
        %v9005 = vsel %vm8980, %v8972, %v6935
        %v9006 = vsel %vm8980, %v8973, %v6937
        %v9007 = vsel %vm8980, %v8974, %v6939
        %v9008 = vsel %vm8980, %v8975, %v6941
        %v9009 = vsel %vm8980, %v8976, %v6943
        %v9010 = vsel %vm8980, %v8977, %v6945
        %v9011 = vsel %vm8980, %v8978, %v6947
        %v9012 = vsel %vm8980, %v8979, %v6949
        %vm9013 = vcmask 523264
        %v9014 = vsel %vm9013, %v8981, %v6983
        %v9015 = vsel %vm9013, %v8982, %v6985
        %v9016 = vsel %vm9013, %v8983, %v6987
        %v9017 = vsel %vm9013, %v8984, %v6989
        %v9018 = vsel %vm9013, %v8985, %v6991
        %v9019 = vsel %vm9013, %v8986, %v6993
        %v9020 = vsel %vm9013, %v8987, %v6995
        %v9021 = vsel %vm9013, %v8988, %v6997
        %v9022 = vsel %vm9013, %v8989, %v6999
        %v9023 = vsel %vm9013, %v8990, %v7001
        %v9024 = vsel %vm9013, %v8991, %v7003
        %v9025 = vsel %vm9013, %v8992, %v7005
        %v9026 = vsel %vm9013, %v8993, %v7007
        %v9027 = vsel %vm9013, %v8994, %v7009
        %v9028 = vsel %vm9013, %v8995, %v7011
        %v9029 = vsel %vm9013, %v8996, %v7013
        %v9030 = vsel %vm9013, %v8997, %v7015
        %v9031 = vsel %vm9013, %v8998, %v7017
        %v9032 = vsel %vm9013, %v8999, %v7019
        %v9033 = vsel %vm9013, %v9000, %v7021
        %v9034 = vsel %vm9013, %v9001, %v7023
        %v9035 = vsel %vm9013, %v9002, %v7025
        %v9036 = vsel %vm9013, %v9003, %v7027
        %v9037 = vsel %vm9013, %v9004, %v7029
        %v9038 = vsel %vm9013, %v9005, %v7031
        %v9039 = vsel %vm9013, %v9006, %v7033
        %v9040 = vsel %vm9013, %v9007, %v7035
        %v9041 = vsel %vm9013, %v9008, %v7037
        %v9042 = vsel %vm9013, %v9009, %v7039
        %v9043 = vsel %vm9013, %v9010, %v7041
        %v9044 = vsel %vm9013, %v9011, %v7043
        %v9045 = vsel %vm9013, %v9012, %v7045
        %vm9046 = vcmask 556032
        %v9047 = vsel %vm9046, %v9014, %v7079
        %v9048 = vsel %vm9046, %v9015, %v7081
        %v9049 = vsel %vm9046, %v9016, %v7083
        %v9050 = vsel %vm9046, %v9017, %v7085
        %v9051 = vsel %vm9046, %v9018, %v7087
        %v9052 = vsel %vm9046, %v9019, %v7089
        %v9053 = vsel %vm9046, %v9020, %v7091
        %v9054 = vsel %vm9046, %v9021, %v7093
        %v9055 = vsel %vm9046, %v9022, %v7095
        %v9056 = vsel %vm9046, %v9023, %v7097
        %v9057 = vsel %vm9046, %v9024, %v7099
        %v9058 = vsel %vm9046, %v9025, %v7101
        %v9059 = vsel %vm9046, %v9026, %v7103
        %v9060 = vsel %vm9046, %v9027, %v7105
        %v9061 = vsel %vm9046, %v9028, %v7107
        %v9062 = vsel %vm9046, %v9029, %v7109
        %v9063 = vsel %vm9046, %v9030, %v7111
        %v9064 = vsel %vm9046, %v9031, %v7113
        %v9065 = vsel %vm9046, %v9032, %v7115
        %v9066 = vsel %vm9046, %v9033, %v7117
        %v9067 = vsel %vm9046, %v9034, %v7119
        %v9068 = vsel %vm9046, %v9035, %v7121
        %v9069 = vsel %vm9046, %v9036, %v7123
        %v9070 = vsel %vm9046, %v9037, %v7125
        %v9071 = vsel %vm9046, %v9038, %v7127
        %v9072 = vsel %vm9046, %v9039, %v7129
        %v9073 = vsel %vm9046, %v9040, %v7131
        %v9074 = vsel %vm9046, %v9041, %v7133
        %v9075 = vsel %vm9046, %v9042, %v7135
        %v9076 = vsel %vm9046, %v9043, %v7137
        %v9077 = vsel %vm9046, %v9044, %v7139
        %v9078 = vsel %vm9046, %v9045, %v7141
        %vm9079 = vcmask 588800
        %v9080 = vsel %vm9079, %v9047, %v7175
        %v9081 = vsel %vm9079, %v9048, %v7177
        %v9082 = vsel %vm9079, %v9049, %v7179
        %v9083 = vsel %vm9079, %v9050, %v7181
        %v9084 = vsel %vm9079, %v9051, %v7183
        %v9085 = vsel %vm9079, %v9052, %v7185
        %v9086 = vsel %vm9079, %v9053, %v7187
        %v9087 = vsel %vm9079, %v9054, %v7189
        %v9088 = vsel %vm9079, %v9055, %v7191
        %v9089 = vsel %vm9079, %v9056, %v7193
        %v9090 = vsel %vm9079, %v9057, %v7195
        %v9091 = vsel %vm9079, %v9058, %v7197
        %v9092 = vsel %vm9079, %v9059, %v7199
        %v9093 = vsel %vm9079, %v9060, %v7201
        %v9094 = vsel %vm9079, %v9061, %v7203
        %v9095 = vsel %vm9079, %v9062, %v7205
        %v9096 = vsel %vm9079, %v9063, %v7207
        %v9097 = vsel %vm9079, %v9064, %v7209
        %v9098 = vsel %vm9079, %v9065, %v7211
        %v9099 = vsel %vm9079, %v9066, %v7213
        %v9100 = vsel %vm9079, %v9067, %v7215
        %v9101 = vsel %vm9079, %v9068, %v7217
        %v9102 = vsel %vm9079, %v9069, %v7219
        %v9103 = vsel %vm9079, %v9070, %v7221
        %v9104 = vsel %vm9079, %v9071, %v7223
        %v9105 = vsel %vm9079, %v9072, %v7225
        %v9106 = vsel %vm9079, %v9073, %v7227
        %v9107 = vsel %vm9079, %v9074, %v7229
        %v9108 = vsel %vm9079, %v9075, %v7231
        %v9109 = vsel %vm9079, %v9076, %v7233
        %v9110 = vsel %vm9079, %v9077, %v7235
        %v9111 = vsel %vm9079, %v9078, %v7237
        %vm9112 = vcmask 621568
        %v9113 = vsel %vm9112, %v9080, %v7271
        %v9114 = vsel %vm9112, %v9081, %v7273
        %v9115 = vsel %vm9112, %v9082, %v7275
        %v9116 = vsel %vm9112, %v9083, %v7277
        %v9117 = vsel %vm9112, %v9084, %v7279
        %v9118 = vsel %vm9112, %v9085, %v7281
        %v9119 = vsel %vm9112, %v9086, %v7283
        %v9120 = vsel %vm9112, %v9087, %v7285
        %v9121 = vsel %vm9112, %v9088, %v7287
        %v9122 = vsel %vm9112, %v9089, %v7289
        %v9123 = vsel %vm9112, %v9090, %v7291
        %v9124 = vsel %vm9112, %v9091, %v7293
        %v9125 = vsel %vm9112, %v9092, %v7295
        %v9126 = vsel %vm9112, %v9093, %v7297
        %v9127 = vsel %vm9112, %v9094, %v7299
        %v9128 = vsel %vm9112, %v9095, %v7301
        %v9129 = vsel %vm9112, %v9096, %v7303
        %v9130 = vsel %vm9112, %v9097, %v7305
        %v9131 = vsel %vm9112, %v9098, %v7307
        %v9132 = vsel %vm9112, %v9099, %v7309
        %v9133 = vsel %vm9112, %v9100, %v7311
        %v9134 = vsel %vm9112, %v9101, %v7313
        %v9135 = vsel %vm9112, %v9102, %v7315
        %v9136 = vsel %vm9112, %v9103, %v7317
        %v9137 = vsel %vm9112, %v9104, %v7319
        %v9138 = vsel %vm9112, %v9105, %v7321
        %v9139 = vsel %vm9112, %v9106, %v7323
        %v9140 = vsel %vm9112, %v9107, %v7325
        %v9141 = vsel %vm9112, %v9108, %v7327
        %v9142 = vsel %vm9112, %v9109, %v7329
        %v9143 = vsel %vm9112, %v9110, %v7331
        %v9144 = vsel %vm9112, %v9111, %v7333
        %vm9145 = vcmask 654336
        %v9146 = vsel %vm9145, %v9113, %v7367
        %v9147 = vsel %vm9145, %v9114, %v7369
        %v9148 = vsel %vm9145, %v9115, %v7371
        %v9149 = vsel %vm9145, %v9116, %v7373
        %v9150 = vsel %vm9145, %v9117, %v7375
        %v9151 = vsel %vm9145, %v9118, %v7377
        %v9152 = vsel %vm9145, %v9119, %v7379
        %v9153 = vsel %vm9145, %v9120, %v7381
        %v9154 = vsel %vm9145, %v9121, %v7383
        %v9155 = vsel %vm9145, %v9122, %v7385
        %v9156 = vsel %vm9145, %v9123, %v7387
        %v9157 = vsel %vm9145, %v9124, %v7389
        %v9158 = vsel %vm9145, %v9125, %v7391
        %v9159 = vsel %vm9145, %v9126, %v7393
        %v9160 = vsel %vm9145, %v9127, %v7395
        %v9161 = vsel %vm9145, %v9128, %v7397
        %v9162 = vsel %vm9145, %v9129, %v7399
        %v9163 = vsel %vm9145, %v9130, %v7401
        %v9164 = vsel %vm9145, %v9131, %v7403
        %v9165 = vsel %vm9145, %v9132, %v7405
        %v9166 = vsel %vm9145, %v9133, %v7407
        %v9167 = vsel %vm9145, %v9134, %v7409
        %v9168 = vsel %vm9145, %v9135, %v7411
        %v9169 = vsel %vm9145, %v9136, %v7413
        %v9170 = vsel %vm9145, %v9137, %v7415
        %v9171 = vsel %vm9145, %v9138, %v7417
        %v9172 = vsel %vm9145, %v9139, %v7419
        %v9173 = vsel %vm9145, %v9140, %v7421
        %v9174 = vsel %vm9145, %v9141, %v7423
        %v9175 = vsel %vm9145, %v9142, %v7425
        %v9176 = vsel %vm9145, %v9143, %v7427
        %v9177 = vsel %vm9145, %v9144, %v7429
        %vm9178 = vcmask 687104
        %v9179 = vsel %vm9178, %v9146, %v7463
        %v9180 = vsel %vm9178, %v9147, %v7465
        %v9181 = vsel %vm9178, %v9148, %v7467
        %v9182 = vsel %vm9178, %v9149, %v7469
        %v9183 = vsel %vm9178, %v9150, %v7471
        %v9184 = vsel %vm9178, %v9151, %v7473
        %v9185 = vsel %vm9178, %v9152, %v7475
        %v9186 = vsel %vm9178, %v9153, %v7477
        %v9187 = vsel %vm9178, %v9154, %v7479
        %v9188 = vsel %vm9178, %v9155, %v7481
        %v9189 = vsel %vm9178, %v9156, %v7483
        %v9190 = vsel %vm9178, %v9157, %v7485
        %v9191 = vsel %vm9178, %v9158, %v7487
        %v9192 = vsel %vm9178, %v9159, %v7489
        %v9193 = vsel %vm9178, %v9160, %v7491
        %v9194 = vsel %vm9178, %v9161, %v7493
        %v9195 = vsel %vm9178, %v9162, %v7495
        %v9196 = vsel %vm9178, %v9163, %v7497
        %v9197 = vsel %vm9178, %v9164, %v7499
        %v9198 = vsel %vm9178, %v9165, %v7501
        %v9199 = vsel %vm9178, %v9166, %v7503
        %v9200 = vsel %vm9178, %v9167, %v7505
        %v9201 = vsel %vm9178, %v9168, %v7507
        %v9202 = vsel %vm9178, %v9169, %v7509
        %v9203 = vsel %vm9178, %v9170, %v7511
        %v9204 = vsel %vm9178, %v9171, %v7513
        %v9205 = vsel %vm9178, %v9172, %v7515
        %v9206 = vsel %vm9178, %v9173, %v7517
        %v9207 = vsel %vm9178, %v9174, %v7519
        %v9208 = vsel %vm9178, %v9175, %v7521
        %v9209 = vsel %vm9178, %v9176, %v7523
        %v9210 = vsel %vm9178, %v9177, %v7525
        %vm9211 = vcmask 719872
        %v9212 = vsel %vm9211, %v9179, %v7559
        %v9213 = vsel %vm9211, %v9180, %v7561
        %v9214 = vsel %vm9211, %v9181, %v7563
        %v9215 = vsel %vm9211, %v9182, %v7565
        %v9216 = vsel %vm9211, %v9183, %v7567
        %v9217 = vsel %vm9211, %v9184, %v7569
        %v9218 = vsel %vm9211, %v9185, %v7571
        %v9219 = vsel %vm9211, %v9186, %v7573
        %v9220 = vsel %vm9211, %v9187, %v7575
        %v9221 = vsel %vm9211, %v9188, %v7577
        %v9222 = vsel %vm9211, %v9189, %v7579
        %v9223 = vsel %vm9211, %v9190, %v7581
        %v9224 = vsel %vm9211, %v9191, %v7583
        %v9225 = vsel %vm9211, %v9192, %v7585
        %v9226 = vsel %vm9211, %v9193, %v7587
        %v9227 = vsel %vm9211, %v9194, %v7589
        %v9228 = vsel %vm9211, %v9195, %v7591
        %v9229 = vsel %vm9211, %v9196, %v7593
        %v9230 = vsel %vm9211, %v9197, %v7595
        %v9231 = vsel %vm9211, %v9198, %v7597
        %v9232 = vsel %vm9211, %v9199, %v7599
        %v9233 = vsel %vm9211, %v9200, %v7601
        %v9234 = vsel %vm9211, %v9201, %v7603
        %v9235 = vsel %vm9211, %v9202, %v7605
        %v9236 = vsel %vm9211, %v9203, %v7607
        %v9237 = vsel %vm9211, %v9204, %v7609
        %v9238 = vsel %vm9211, %v9205, %v7611
        %v9239 = vsel %vm9211, %v9206, %v7613
        %v9240 = vsel %vm9211, %v9207, %v7615
        %v9241 = vsel %vm9211, %v9208, %v7617
        %v9242 = vsel %vm9211, %v9209, %v7619
        %v9243 = vsel %vm9211, %v9210, %v7621
        %vm9244 = vcmask 752640
        %v9245 = vsel %vm9244, %v9212, %v7655
        %v9246 = vsel %vm9244, %v9213, %v7657
        %v9247 = vsel %vm9244, %v9214, %v7659
        %v9248 = vsel %vm9244, %v9215, %v7661
        %v9249 = vsel %vm9244, %v9216, %v7663
        %v9250 = vsel %vm9244, %v9217, %v7665
        %v9251 = vsel %vm9244, %v9218, %v7667
        %v9252 = vsel %vm9244, %v9219, %v7669
        %v9253 = vsel %vm9244, %v9220, %v7671
        %v9254 = vsel %vm9244, %v9221, %v7673
        %v9255 = vsel %vm9244, %v9222, %v7675
        %v9256 = vsel %vm9244, %v9223, %v7677
        %v9257 = vsel %vm9244, %v9224, %v7679
        %v9258 = vsel %vm9244, %v9225, %v7681
        %v9259 = vsel %vm9244, %v9226, %v7683
        %v9260 = vsel %vm9244, %v9227, %v7685
        %v9261 = vsel %vm9244, %v9228, %v7687
        %v9262 = vsel %vm9244, %v9229, %v7689
        %v9263 = vsel %vm9244, %v9230, %v7691
        %v9264 = vsel %vm9244, %v9231, %v7693
        %v9265 = vsel %vm9244, %v9232, %v7695
        %v9266 = vsel %vm9244, %v9233, %v7697
        %v9267 = vsel %vm9244, %v9234, %v7699
        %v9268 = vsel %vm9244, %v9235, %v7701
        %v9269 = vsel %vm9244, %v9236, %v7703
        %v9270 = vsel %vm9244, %v9237, %v7705
        %v9271 = vsel %vm9244, %v9238, %v7707
        %v9272 = vsel %vm9244, %v9239, %v7709
        %v9273 = vsel %vm9244, %v9240, %v7711
        %v9274 = vsel %vm9244, %v9241, %v7713
        %v9275 = vsel %vm9244, %v9242, %v7715
        %v9276 = vsel %vm9244, %v9243, %v7717
        %vm9277 = vcmask 785408
        %v9278 = vsel %vm9277, %v9245, %v7751
        %v9279 = vsel %vm9277, %v9246, %v7753
        %v9280 = vsel %vm9277, %v9247, %v7755
        %v9281 = vsel %vm9277, %v9248, %v7757
        %v9282 = vsel %vm9277, %v9249, %v7759
        %v9283 = vsel %vm9277, %v9250, %v7761
        %v9284 = vsel %vm9277, %v9251, %v7763
        %v9285 = vsel %vm9277, %v9252, %v7765
        %v9286 = vsel %vm9277, %v9253, %v7767
        %v9287 = vsel %vm9277, %v9254, %v7769
        %v9288 = vsel %vm9277, %v9255, %v7771
        %v9289 = vsel %vm9277, %v9256, %v7773
        %v9290 = vsel %vm9277, %v9257, %v7775
        %v9291 = vsel %vm9277, %v9258, %v7777
        %v9292 = vsel %vm9277, %v9259, %v7779
        %v9293 = vsel %vm9277, %v9260, %v7781
        %v9294 = vsel %vm9277, %v9261, %v7783
        %v9295 = vsel %vm9277, %v9262, %v7785
        %v9296 = vsel %vm9277, %v9263, %v7787
        %v9297 = vsel %vm9277, %v9264, %v7789
        %v9298 = vsel %vm9277, %v9265, %v7791
        %v9299 = vsel %vm9277, %v9266, %v7793
        %v9300 = vsel %vm9277, %v9267, %v7795
        %v9301 = vsel %vm9277, %v9268, %v7797
        %v9302 = vsel %vm9277, %v9269, %v7799
        %v9303 = vsel %vm9277, %v9270, %v7801
        %v9304 = vsel %vm9277, %v9271, %v7803
        %v9305 = vsel %vm9277, %v9272, %v7805
        %v9306 = vsel %vm9277, %v9273, %v7807
        %v9307 = vsel %vm9277, %v9274, %v7809
        %v9308 = vsel %vm9277, %v9275, %v7811
        %v9309 = vsel %vm9277, %v9276, %v7813
        %vm9310 = vcmask 818176
        %v9311 = vsel %vm9310, %v9278, %v7847
        %v9312 = vsel %vm9310, %v9279, %v7849
        %v9313 = vsel %vm9310, %v9280, %v7851
        %v9314 = vsel %vm9310, %v9281, %v7853
        %v9315 = vsel %vm9310, %v9282, %v7855
        %v9316 = vsel %vm9310, %v9283, %v7857
        %v9317 = vsel %vm9310, %v9284, %v7859
        %v9318 = vsel %vm9310, %v9285, %v7861
        %v9319 = vsel %vm9310, %v9286, %v7863
        %v9320 = vsel %vm9310, %v9287, %v7865
        %v9321 = vsel %vm9310, %v9288, %v7867
        %v9322 = vsel %vm9310, %v9289, %v7869
        %v9323 = vsel %vm9310, %v9290, %v7871
        %v9324 = vsel %vm9310, %v9291, %v7873
        %v9325 = vsel %vm9310, %v9292, %v7875
        %v9326 = vsel %vm9310, %v9293, %v7877
        %v9327 = vsel %vm9310, %v9294, %v7879
        %v9328 = vsel %vm9310, %v9295, %v7881
        %v9329 = vsel %vm9310, %v9296, %v7883
        %v9330 = vsel %vm9310, %v9297, %v7885
        %v9331 = vsel %vm9310, %v9298, %v7887
        %v9332 = vsel %vm9310, %v9299, %v7889
        %v9333 = vsel %vm9310, %v9300, %v7891
        %v9334 = vsel %vm9310, %v9301, %v7893
        %v9335 = vsel %vm9310, %v9302, %v7895
        %v9336 = vsel %vm9310, %v9303, %v7897
        %v9337 = vsel %vm9310, %v9304, %v7899
        %v9338 = vsel %vm9310, %v9305, %v7901
        %v9339 = vsel %vm9310, %v9306, %v7903
        %v9340 = vsel %vm9310, %v9307, %v7905
        %v9341 = vsel %vm9310, %v9308, %v7907
        %v9342 = vsel %vm9310, %v9309, %v7909
        %vm9343 = vcmask 850944
        %v9344 = vsel %vm9343, %v9311, %v7943
        %v9345 = vsel %vm9343, %v9312, %v7945
        %v9346 = vsel %vm9343, %v9313, %v7947
        %v9347 = vsel %vm9343, %v9314, %v7949
        %v9348 = vsel %vm9343, %v9315, %v7951
        %v9349 = vsel %vm9343, %v9316, %v7953
        %v9350 = vsel %vm9343, %v9317, %v7955
        %v9351 = vsel %vm9343, %v9318, %v7957
        %v9352 = vsel %vm9343, %v9319, %v7959
        %v9353 = vsel %vm9343, %v9320, %v7961
        %v9354 = vsel %vm9343, %v9321, %v7963
        %v9355 = vsel %vm9343, %v9322, %v7965
        %v9356 = vsel %vm9343, %v9323, %v7967
        %v9357 = vsel %vm9343, %v9324, %v7969
        %v9358 = vsel %vm9343, %v9325, %v7971
        %v9359 = vsel %vm9343, %v9326, %v7973
        %v9360 = vsel %vm9343, %v9327, %v7975
        %v9361 = vsel %vm9343, %v9328, %v7977
        %v9362 = vsel %vm9343, %v9329, %v7979
        %v9363 = vsel %vm9343, %v9330, %v7981
        %v9364 = vsel %vm9343, %v9331, %v7983
        %v9365 = vsel %vm9343, %v9332, %v7985
        %v9366 = vsel %vm9343, %v9333, %v7987
        %v9367 = vsel %vm9343, %v9334, %v7989
        %v9368 = vsel %vm9343, %v9335, %v7991
        %v9369 = vsel %vm9343, %v9336, %v7993
        %v9370 = vsel %vm9343, %v9337, %v7995
        %v9371 = vsel %vm9343, %v9338, %v7997
        %v9372 = vsel %vm9343, %v9339, %v7999
        %v9373 = vsel %vm9343, %v9340, %v8001
        %v9374 = vsel %vm9343, %v9341, %v8003
        %v9375 = vsel %vm9343, %v9342, %v8005
        %vm9376 = vcmask 883712
        %v9377 = vsel %vm9376, %v9344, %v8039
        %v9378 = vsel %vm9376, %v9345, %v8041
        %v9379 = vsel %vm9376, %v9346, %v8043
        %v9380 = vsel %vm9376, %v9347, %v8045
        %v9381 = vsel %vm9376, %v9348, %v8047
        %v9382 = vsel %vm9376, %v9349, %v8049
        %v9383 = vsel %vm9376, %v9350, %v8051
        %v9384 = vsel %vm9376, %v9351, %v8053
        %v9385 = vsel %vm9376, %v9352, %v8055
        %v9386 = vsel %vm9376, %v9353, %v8057
        %v9387 = vsel %vm9376, %v9354, %v8059
        %v9388 = vsel %vm9376, %v9355, %v8061
        %v9389 = vsel %vm9376, %v9356, %v8063
        %v9390 = vsel %vm9376, %v9357, %v8065
        %v9391 = vsel %vm9376, %v9358, %v8067
        %v9392 = vsel %vm9376, %v9359, %v8069
        %v9393 = vsel %vm9376, %v9360, %v8071
        %v9394 = vsel %vm9376, %v9361, %v8073
        %v9395 = vsel %vm9376, %v9362, %v8075
        %v9396 = vsel %vm9376, %v9363, %v8077
        %v9397 = vsel %vm9376, %v9364, %v8079
        %v9398 = vsel %vm9376, %v9365, %v8081
        %v9399 = vsel %vm9376, %v9366, %v8083
        %v9400 = vsel %vm9376, %v9367, %v8085
        %v9401 = vsel %vm9376, %v9368, %v8087
        %v9402 = vsel %vm9376, %v9369, %v8089
        %v9403 = vsel %vm9376, %v9370, %v8091
        %v9404 = vsel %vm9376, %v9371, %v8093
        %v9405 = vsel %vm9376, %v9372, %v8095
        %v9406 = vsel %vm9376, %v9373, %v8097
        %v9407 = vsel %vm9376, %v9374, %v8099
        %v9408 = vsel %vm9376, %v9375, %v8101
        %vm9409 = vcmask 916480
        %v9410 = vsel %vm9409, %v9377, %v8135
        %v9411 = vsel %vm9409, %v9378, %v8137
        %v9412 = vsel %vm9409, %v9379, %v8139
        %v9413 = vsel %vm9409, %v9380, %v8141
        %v9414 = vsel %vm9409, %v9381, %v8143
        %v9415 = vsel %vm9409, %v9382, %v8145
        %v9416 = vsel %vm9409, %v9383, %v8147
        %v9417 = vsel %vm9409, %v9384, %v8149
        %v9418 = vsel %vm9409, %v9385, %v8151
        %v9419 = vsel %vm9409, %v9386, %v8153
        %v9420 = vsel %vm9409, %v9387, %v8155
        %v9421 = vsel %vm9409, %v9388, %v8157
        %v9422 = vsel %vm9409, %v9389, %v8159
        %v9423 = vsel %vm9409, %v9390, %v8161
        %v9424 = vsel %vm9409, %v9391, %v8163
        %v9425 = vsel %vm9409, %v9392, %v8165
        %v9426 = vsel %vm9409, %v9393, %v8167
        %v9427 = vsel %vm9409, %v9394, %v8169
        %v9428 = vsel %vm9409, %v9395, %v8171
        %v9429 = vsel %vm9409, %v9396, %v8173
        %v9430 = vsel %vm9409, %v9397, %v8175
        %v9431 = vsel %vm9409, %v9398, %v8177
        %v9432 = vsel %vm9409, %v9399, %v8179
        %v9433 = vsel %vm9409, %v9400, %v8181
        %v9434 = vsel %vm9409, %v9401, %v8183
        %v9435 = vsel %vm9409, %v9402, %v8185
        %v9436 = vsel %vm9409, %v9403, %v8187
        %v9437 = vsel %vm9409, %v9404, %v8189
        %v9438 = vsel %vm9409, %v9405, %v8191
        %v9439 = vsel %vm9409, %v9406, %v8193
        %v9440 = vsel %vm9409, %v9407, %v8195
        %v9441 = vsel %vm9409, %v9408, %v8197
        %vm9442 = vcmask 949248
        %v9443 = vsel %vm9442, %v9410, %v8231
        %v9444 = vsel %vm9442, %v9411, %v8233
        %v9445 = vsel %vm9442, %v9412, %v8235
        %v9446 = vsel %vm9442, %v9413, %v8237
        %v9447 = vsel %vm9442, %v9414, %v8239
        %v9448 = vsel %vm9442, %v9415, %v8241
        %v9449 = vsel %vm9442, %v9416, %v8243
        %v9450 = vsel %vm9442, %v9417, %v8245
        %v9451 = vsel %vm9442, %v9418, %v8247
        %v9452 = vsel %vm9442, %v9419, %v8249
        %v9453 = vsel %vm9442, %v9420, %v8251
        %v9454 = vsel %vm9442, %v9421, %v8253
        %v9455 = vsel %vm9442, %v9422, %v8255
        %v9456 = vsel %vm9442, %v9423, %v8257
        %v9457 = vsel %vm9442, %v9424, %v8259
        %v9458 = vsel %vm9442, %v9425, %v8261
        %v9459 = vsel %vm9442, %v9426, %v8263
        %v9460 = vsel %vm9442, %v9427, %v8265
        %v9461 = vsel %vm9442, %v9428, %v8267
        %v9462 = vsel %vm9442, %v9429, %v8269
        %v9463 = vsel %vm9442, %v9430, %v8271
        %v9464 = vsel %vm9442, %v9431, %v8273
        %v9465 = vsel %vm9442, %v9432, %v8275
        %v9466 = vsel %vm9442, %v9433, %v8277
        %v9467 = vsel %vm9442, %v9434, %v8279
        %v9468 = vsel %vm9442, %v9435, %v8281
        %v9469 = vsel %vm9442, %v9436, %v8283
        %v9470 = vsel %vm9442, %v9437, %v8285
        %v9471 = vsel %vm9442, %v9438, %v8287
        %v9472 = vsel %vm9442, %v9439, %v8289
        %v9473 = vsel %vm9442, %v9440, %v8291
        %v9474 = vsel %vm9442, %v9441, %v8293
        %vm9475 = vcmask 982016
        %v9476 = vsel %vm9475, %v9443, %v8327
        %v9477 = vsel %vm9475, %v9444, %v8329
        %v9478 = vsel %vm9475, %v9445, %v8331
        %v9479 = vsel %vm9475, %v9446, %v8333
        %v9480 = vsel %vm9475, %v9447, %v8335
        %v9481 = vsel %vm9475, %v9448, %v8337
        %v9482 = vsel %vm9475, %v9449, %v8339
        %v9483 = vsel %vm9475, %v9450, %v8341
        %v9484 = vsel %vm9475, %v9451, %v8343
        %v9485 = vsel %vm9475, %v9452, %v8345
        %v9486 = vsel %vm9475, %v9453, %v8347
        %v9487 = vsel %vm9475, %v9454, %v8349
        %v9488 = vsel %vm9475, %v9455, %v8351
        %v9489 = vsel %vm9475, %v9456, %v8353
        %v9490 = vsel %vm9475, %v9457, %v8355
        %v9491 = vsel %vm9475, %v9458, %v8357
        %v9492 = vsel %vm9475, %v9459, %v8359
        %v9493 = vsel %vm9475, %v9460, %v8361
        %v9494 = vsel %vm9475, %v9461, %v8363
        %v9495 = vsel %vm9475, %v9462, %v8365
        %v9496 = vsel %vm9475, %v9463, %v8367
        %v9497 = vsel %vm9475, %v9464, %v8369
        %v9498 = vsel %vm9475, %v9465, %v8371
        %v9499 = vsel %vm9475, %v9466, %v8373
        %v9500 = vsel %vm9475, %v9467, %v8375
        %v9501 = vsel %vm9475, %v9468, %v8377
        %v9502 = vsel %vm9475, %v9469, %v8379
        %v9503 = vsel %vm9475, %v9470, %v8381
        %v9504 = vsel %vm9475, %v9471, %v8383
        %v9505 = vsel %vm9475, %v9472, %v8385
        %v9506 = vsel %vm9475, %v9473, %v8387
        %v9507 = vsel %vm9475, %v9474, %v8389
        %vm9508 = vcmask 1014784
        %v9509 = vsel %vm9508, %v9476, %v8423
        %v9510 = vsel %vm9508, %v9477, %v8425
        %v9511 = vsel %vm9508, %v9478, %v8427
        %v9512 = vsel %vm9508, %v9479, %v8429
        %v9513 = vsel %vm9508, %v9480, %v8431
        %v9514 = vsel %vm9508, %v9481, %v8433
        %v9515 = vsel %vm9508, %v9482, %v8435
        %v9516 = vsel %vm9508, %v9483, %v8437
        %v9517 = vsel %vm9508, %v9484, %v8439
        %v9518 = vsel %vm9508, %v9485, %v8441
        %v9519 = vsel %vm9508, %v9486, %v8443
        %v9520 = vsel %vm9508, %v9487, %v8445
        %v9521 = vsel %vm9508, %v9488, %v8447
        %v9522 = vsel %vm9508, %v9489, %v8449
        %v9523 = vsel %vm9508, %v9490, %v8451
        %v9524 = vsel %vm9508, %v9491, %v8453
        %v9525 = vsel %vm9508, %v9492, %v8455
        %v9526 = vsel %vm9508, %v9493, %v8457
        %v9527 = vsel %vm9508, %v9494, %v8459
        %v9528 = vsel %vm9508, %v9495, %v8461
        %v9529 = vsel %vm9508, %v9496, %v8463
        %v9530 = vsel %vm9508, %v9497, %v8465
        %v9531 = vsel %vm9508, %v9498, %v8467
        %v9532 = vsel %vm9508, %v9499, %v8469
        %v9533 = vsel %vm9508, %v9500, %v8471
        %v9534 = vsel %vm9508, %v9501, %v8473
        %v9535 = vsel %vm9508, %v9502, %v8475
        %v9536 = vsel %vm9508, %v9503, %v8477
        %v9537 = vsel %vm9508, %v9504, %v8479
        %v9538 = vsel %vm9508, %v9505, %v8481
        %v9539 = vsel %vm9508, %v9506, %v8483
        %v9540 = vsel %vm9508, %v9507, %v8485
        %v9541 = vlaneseq
        %v9542 = vshrl.u32 %v9541, 7
        %v9543 = vadd.s32 %v9542, 8
        %v9544 = vadd.s32 %v9542, 16
        %v9545 = vadd.s32 %v9542, 24
        %v9546 = vadd.s32 %v9542, 32
        %v9547 = vadd.s32 %v9542, 40
        %v9548 = vadd.s32 %v9542, 48
        %v9549 = vadd.s32 %v9542, 56
        %v9550 = vadd.s32 %v9542, 64
        %v9551 = vadd.s32 %v9542, 72
        %v9552 = vadd.s32 %v9542, 80
        %v9553 = vadd.s32 %v9542, 88
        %v9554 = vadd.s32 %v9542, 96
        %v9555 = vadd.s32 %v9542, 104
        %v9556 = vadd.s32 %v9542, 112
        %v9557 = vadd.s32 %v9542, 120
        %v9558 = vlaneseq
        %v9559 = vand.u32 %v9558, 127
        %v9560 = vmul.u32 %v9559, 4
        %vm9561 = vcmp.ge.s32.totalorder %v9542, %v9560
        %vm9562 = vcmp.ge.s32.totalorder %v9543, %v9560
        %vm9563 = vcmp.ge.s32.totalorder %v9544, %v9560
        %vm9564 = vcmp.ge.s32.totalorder %v9545, %v9560
        %vm9565 = vcmp.ge.s32.totalorder %v9546, %v9560
        %vm9566 = vcmp.ge.s32.totalorder %v9547, %v9560
        %vm9567 = vcmp.ge.s32.totalorder %v9548, %v9560
        %vm9568 = vcmp.ge.s32.totalorder %v9549, %v9560
        %vm9569 = vcmp.ge.s32.totalorder %v9550, %v9560
        %vm9570 = vcmp.ge.s32.totalorder %v9551, %v9560
        %vm9571 = vcmp.ge.s32.totalorder %v9552, %v9560
        %vm9572 = vcmp.ge.s32.totalorder %v9553, %v9560
        %vm9573 = vcmp.ge.s32.totalorder %v9554, %v9560
        %vm9574 = vcmp.ge.s32.totalorder %v9555, %v9560
        %vm9575 = vcmp.ge.s32.totalorder %v9556, %v9560
        %vm9576 = vcmp.ge.s32.totalorder %v9557, %v9560
        %v9577 = vadd.s32 %v9559, 1
        %v9578 = vmul.u32 %v9577, 4
        %vm9579 = vcmp.lt.s32.totalorder %v9542, %v9578
        %vm9580 = vcmp.lt.s32.totalorder %v9543, %v9578
        %vm9581 = vcmp.lt.s32.totalorder %v9544, %v9578
        %vm9582 = vcmp.lt.s32.totalorder %v9545, %v9578
        %vm9583 = vcmp.lt.s32.totalorder %v9546, %v9578
        %vm9584 = vcmp.lt.s32.totalorder %v9547, %v9578
        %vm9585 = vcmp.lt.s32.totalorder %v9548, %v9578
        %vm9586 = vcmp.lt.s32.totalorder %v9549, %v9578
        %vm9587 = vcmp.lt.s32.totalorder %v9550, %v9578
        %vm9588 = vcmp.lt.s32.totalorder %v9551, %v9578
        %vm9589 = vcmp.lt.s32.totalorder %v9552, %v9578
        %vm9590 = vcmp.lt.s32.totalorder %v9553, %v9578
        %vm9591 = vcmp.lt.s32.totalorder %v9554, %v9578
        %vm9592 = vcmp.lt.s32.totalorder %v9555, %v9578
        %vm9593 = vcmp.lt.s32.totalorder %v9556, %v9578
        %vm9594 = vcmp.lt.s32.totalorder %v9557, %v9578
        %vm9595 = vmand %vm9561, %vm9579
        %vm9596 = vmand %vm9562, %vm9580
        %vm9597 = vmand %vm9563, %vm9581
        %vm9598 = vmand %vm9564, %vm9582
        %vm9599 = vmand %vm9565, %vm9583
        %vm9600 = vmand %vm9566, %vm9584
        %vm9601 = vmand %vm9567, %vm9585
        %vm9602 = vmand %vm9568, %vm9586
        %vm9603 = vmand %vm9569, %vm9587
        %vm9604 = vmand %vm9570, %vm9588
        %vm9605 = vmand %vm9571, %vm9589
        %vm9606 = vmand %vm9572, %vm9590
        %vm9607 = vmand %vm9573, %vm9591
        %vm9608 = vmand %vm9574, %vm9592
        %vm9609 = vmand %vm9575, %vm9593
        %vm9610 = vmand %vm9576, %vm9594
        %v9611 = vsel %vm9595, 1, 0
        %v9612 = vsel %vm9596, 1, 0
        %v9613 = vsel %vm9597, 1, 0
        %v9614 = vsel %vm9598, 1, 0
        %v9615 = vsel %vm9599, 1, 0
        %v9616 = vsel %vm9600, 1, 0
        %v9617 = vsel %vm9601, 1, 0
        %v9618 = vsel %vm9602, 1, 0
        %v9619 = vsel %vm9603, 1, 0
        %v9620 = vsel %vm9604, 1, 0
        %v9621 = vsel %vm9605, 1, 0
        %v9622 = vsel %vm9606, 1, 0
        %v9623 = vsel %vm9607, 1, 0
        %v9624 = vsel %vm9608, 1, 0
        %v9625 = vsel %vm9609, 1, 0
        %v9626 = vsel %vm9610, 1, 0
        %v9627 = vcvt.s32.f32 %v9611
        %v9628 = vcvt.s32.f32 %v9612
        %v9629 = vcvt.s32.f32 %v9613
        %v9630 = vcvt.s32.f32 %v9614
        %v9631 = vcvt.s32.f32 %v9615
        %v9632 = vcvt.s32.f32 %v9616
        %v9633 = vcvt.s32.f32 %v9617
        %v9634 = vcvt.s32.f32 %v9618
        %v9635 = vcvt.s32.f32 %v9619
        %v9636 = vcvt.s32.f32 %v9620
        %v9637 = vcvt.s32.f32 %v9621
        %v9638 = vcvt.s32.f32 %v9622
        %v9639 = vcvt.s32.f32 %v9623
        %v9640 = vcvt.s32.f32 %v9624
        %v9641 = vcvt.s32.f32 %v9625
        %v9642 = vcvt.s32.f32 %v9626
        %v9643 = vpack.c.bf16 %v9628, %v9627
        %v9644 = vpack.c.bf16 %v9630, %v9629
        %v9645 = vpack.c.bf16 %v9632, %v9631
        %v9646 = vpack.c.bf16 %v9634, %v9633
        %v9647 = vpack.c.bf16 %v9636, %v9635
        %v9648 = vpack.c.bf16 %v9638, %v9637
        %v9649 = vpack.c.bf16 %v9640, %v9639
        %v9650 = vpack.c.bf16 %v9642, %v9641
        %v9651 = vmul.f32 %v4960, %v9509
        %v9652 = vmul.f32 %v4962, %v9510
        %v9653 = vmul.f32 %v4965, %v9511
        %v9654 = vmul.f32 %v4967, %v9512
        %v9655 = vmul.f32 %v4970, %v9513
        %v9656 = vmul.f32 %v4972, %v9514
        %v9657 = vmul.f32 %v4975, %v9515
        %v9658 = vmul.f32 %v4977, %v9516
        %v9659 = vmul.f32 %v4980, %v9517
        %v9660 = vmul.f32 %v4982, %v9518
        %v9661 = vmul.f32 %v4985, %v9519
        %v9662 = vmul.f32 %v4987, %v9520
        %v9663 = vmul.f32 %v4990, %v9521
        %v9664 = vmul.f32 %v4992, %v9522
        %v9665 = vmul.f32 %v4995, %v9523
        %v9666 = vmul.f32 %v4997, %v9524
        %v9667 = vmul.f32 %v5000, %v9525
        %v9668 = vmul.f32 %v5002, %v9526
        %v9669 = vmul.f32 %v5005, %v9527
        %v9670 = vmul.f32 %v5007, %v9528
        %v9671 = vmul.f32 %v5010, %v9529
        %v9672 = vmul.f32 %v5012, %v9530
        %v9673 = vmul.f32 %v5015, %v9531
        %v9674 = vmul.f32 %v5017, %v9532
        %v9675 = vmul.f32 %v5020, %v9533
        %v9676 = vmul.f32 %v5022, %v9534
        %v9677 = vmul.f32 %v5025, %v9535
        %v9678 = vmul.f32 %v5027, %v9536
        %v9679 = vmul.f32 %v5030, %v9537
        %v9680 = vmul.f32 %v5032, %v9538
        %v9681 = vmul.f32 %v5035, %v9539
        %v9682 = vmul.f32 %v5037, %v9540
        %v9683 = vpack.c.bf16 %v9652, %v9651
        %v9684 = vpack.c.bf16 %v9654, %v9653
        %v9685 = vpack.c.bf16 %v9656, %v9655
        %v9686 = vpack.c.bf16 %v9658, %v9657
        %v9687 = vpack.c.bf16 %v9660, %v9659
        %v9688 = vpack.c.bf16 %v9662, %v9661
        %v9689 = vpack.c.bf16 %v9664, %v9663
        %v9690 = vpack.c.bf16 %v9666, %v9665
        %v9691 = vpack.c.bf16 %v9668, %v9667
        %v9692 = vpack.c.bf16 %v9670, %v9669
        %v9693 = vpack.c.bf16 %v9672, %v9671
        %v9694 = vpack.c.bf16 %v9674, %v9673
        %v9695 = vpack.c.bf16 %v9676, %v9675
        %v9696 = vpack.c.bf16 %v9678, %v9677
        %v9697 = vpack.c.bf16 %v9680, %v9679
        %v9698 = vpack.c.bf16 %v9682, %v9681
        %9699 = vmatpush.bf16.msra.mxu0 %v9650
        %9700 = vmatpush.bf16.msra.mxu0 %v9649
        %9701 = vmatpush.bf16.msra.mxu0 %v9648
        %9702 = vmatpush.bf16.msra.mxu0 %v9647
        %9703 = vmatpush.bf16.msra.mxu0 %v9646
        %9704 = vmatpush.bf16.msra.mxu0 %v9645
        %9705 = vmatpush.bf16.msra.mxu0 %v9644
        %9706 = vmatpush.bf16.msra.mxu0 %v9643
        %9707 = vmatmul.bf16.gmra.mxu0 %v9683
        %v9708 = vpop.f32.mrf.mxu0
        %v9709 = vadd.f32 %v5117, %v9708
        %v9710 = vpop.f32.mrf.mxu0
        %v9711 = vadd.f32 %v5119, %v9710
        %9712 = vmatmul.bf16.gmra.mxu0 %v9684
        %v9713 = vpop.f32.mrf.mxu0
        %v9714 = vadd.f32 %v5122, %v9713
        %v9715 = vpop.f32.mrf.mxu0
        %v9716 = vadd.f32 %v5124, %v9715
        %9717 = vmatmul.bf16.gmra.mxu0 %v9685
        %v9718 = vpop.f32.mrf.mxu0
        %v9719 = vadd.f32 %v5127, %v9718
        %v9720 = vpop.f32.mrf.mxu0
        %v9721 = vadd.f32 %v5129, %v9720
        %9722 = vmatmul.bf16.gmra.mxu0 %v9686
        %v9723 = vpop.f32.mrf.mxu0
        %v9724 = vadd.f32 %v5132, %v9723
        %v9725 = vpop.f32.mrf.mxu0
        %v9726 = vadd.f32 %v5134, %v9725
        %9727 = vmatmul.bf16.gmra.mxu0 %v9687
        %v9728 = vpop.f32.mrf.mxu0
        %v9729 = vadd.f32 %v5137, %v9728
        %v9730 = vpop.f32.mrf.mxu0
        %v9731 = vadd.f32 %v5139, %v9730
        %9732 = vmatmul.bf16.gmra.mxu0 %v9688
        %v9733 = vpop.f32.mrf.mxu0
        %v9734 = vadd.f32 %v5142, %v9733
        %v9735 = vpop.f32.mrf.mxu0
        %v9736 = vadd.f32 %v5144, %v9735
        %9737 = vmatmul.bf16.gmra.mxu0 %v9689
        %v9738 = vpop.f32.mrf.mxu0
        %v9739 = vadd.f32 %v5147, %v9738
        %v9740 = vpop.f32.mrf.mxu0
        %v9741 = vadd.f32 %v5149, %v9740
        %9742 = vmatmul.bf16.gmra.mxu0 %v9690
        %v9743 = vpop.f32.mrf.mxu0
        %v9744 = vadd.f32 %v5152, %v9743
        %v9745 = vpop.f32.mrf.mxu0
        %v9746 = vadd.f32 %v5154, %v9745
        %9747 = vmatmul.bf16.gmra.mxu0 %v9691
        %v9748 = vpop.f32.mrf.mxu0
        %v9749 = vadd.f32 %v5157, %v9748
        %v9750 = vpop.f32.mrf.mxu0
        %v9751 = vadd.f32 %v5159, %v9750
        %9752 = vmatmul.bf16.gmra.mxu0 %v9692
        %v9753 = vpop.f32.mrf.mxu0
        %v9754 = vadd.f32 %v5162, %v9753
        %v9755 = vpop.f32.mrf.mxu0
        %v9756 = vadd.f32 %v5164, %v9755
        %9757 = vmatmul.bf16.gmra.mxu0 %v9693
        %v9758 = vpop.f32.mrf.mxu0
        %v9759 = vadd.f32 %v5167, %v9758
        %v9760 = vpop.f32.mrf.mxu0
        %v9761 = vadd.f32 %v5169, %v9760
        %9762 = vmatmul.bf16.gmra.mxu0 %v9694
        %v9763 = vpop.f32.mrf.mxu0
        %v9764 = vadd.f32 %v5172, %v9763
        %v9765 = vpop.f32.mrf.mxu0
        %v9766 = vadd.f32 %v5174, %v9765
        %9767 = vmatmul.bf16.gmra.mxu0 %v9695
        %v9768 = vpop.f32.mrf.mxu0
        %v9769 = vadd.f32 %v5177, %v9768
        %v9770 = vpop.f32.mrf.mxu0
        %v9771 = vadd.f32 %v5179, %v9770
        %9772 = vmatmul.bf16.gmra.mxu0 %v9696
        %v9773 = vpop.f32.mrf.mxu0
        %v9774 = vadd.f32 %v5182, %v9773
        %v9775 = vpop.f32.mrf.mxu0
        %v9776 = vadd.f32 %v5184, %v9775
        %9777 = vmatmul.bf16.gmra.mxu0 %v9697
        %v9778 = vpop.f32.mrf.mxu0
        %v9779 = vadd.f32 %v5187, %v9778
        %v9780 = vpop.f32.mrf.mxu0
        %v9781 = vadd.f32 %v5189, %v9780
        %9782 = vmatmul.bf16.gmra.mxu0 %v9698
        %v9783 = vpop.f32.mrf.mxu0
        %v9784 = vadd.f32 %v5192, %v9783
        %v9785 = vpop.f32.mrf.mxu0
        %v9786 = vadd.f32 %v5194, %v9785
        %9787 = vdwg.mxu0
        %v9788 = vmax.f32 %v9709, 0.0
        %v9789 = vmax.f32 %v9711, 0.0
        %v9790 = vmax.f32 %v9714, 0.0
        %v9791 = vmax.f32 %v9716, 0.0
        %v9792 = vmax.f32 %v9719, 0.0
        %v9793 = vmax.f32 %v9721, 0.0
        %v9794 = vmax.f32 %v9724, 0.0
        %v9795 = vmax.f32 %v9726, 0.0
        %v9796 = vmax.f32 %v9729, 0.0
        %v9797 = vmax.f32 %v9731, 0.0
        %v9798 = vmax.f32 %v9734, 0.0
        %v9799 = vmax.f32 %v9736, 0.0
        %v9800 = vmax.f32 %v9739, 0.0
        %v9801 = vmax.f32 %v9741, 0.0
        %v9802 = vmax.f32 %v9744, 0.0
        %v9803 = vmax.f32 %v9746, 0.0
        %v9804 = vmax.f32 %v9749, 0.0
        %v9805 = vmax.f32 %v9751, 0.0
        %v9806 = vmax.f32 %v9754, 0.0
        %v9807 = vmax.f32 %v9756, 0.0
        %v9808 = vmax.f32 %v9759, 0.0
        %v9809 = vmax.f32 %v9761, 0.0
        %v9810 = vmax.f32 %v9764, 0.0
        %v9811 = vmax.f32 %v9766, 0.0
        %v9812 = vmax.f32 %v9769, 0.0
        %v9813 = vmax.f32 %v9771, 0.0
        %v9814 = vmax.f32 %v9774, 0.0
        %v9815 = vmax.f32 %v9776, 0.0
        %v9816 = vmax.f32 %v9779, 0.0
        %v9817 = vmax.f32 %v9781, 0.0
        %v9818 = vmax.f32 %v9784, 0.0
        %v9819 = vmax.f32 %v9786, 0.0
        %9852 = vrot.lane.b32.xlu0 %v9788, 16
        %v9853 = vpop.permute.xlu0 %9852
        %9854 = vrot.lane.b32.xlu0 %v9789, 16
        %v9855 = vpop.permute.xlu0 %9854
        %9856 = vrot.lane.b32.xlu0 %v9790, 16
        %v9857 = vpop.permute.xlu0 %9856
        %9858 = vrot.lane.b32.xlu0 %v9791, 16
        %v9859 = vpop.permute.xlu0 %9858
        %9860 = vrot.lane.b32.xlu0 %v9792, 16
        %v9861 = vpop.permute.xlu0 %9860
        %9862 = vrot.lane.b32.xlu0 %v9793, 16
        %v9863 = vpop.permute.xlu0 %9862
        %9864 = vrot.lane.b32.xlu0 %v9794, 16
        %v9865 = vpop.permute.xlu0 %9864
        %9866 = vrot.lane.b32.xlu0 %v9795, 16
        %v9867 = vpop.permute.xlu0 %9866
        %9868 = vrot.lane.b32.xlu0 %v9796, 16
        %v9869 = vpop.permute.xlu0 %9868
        %9870 = vrot.lane.b32.xlu0 %v9797, 16
        %v9871 = vpop.permute.xlu0 %9870
        %9872 = vrot.lane.b32.xlu0 %v9798, 16
        %v9873 = vpop.permute.xlu0 %9872
        %9874 = vrot.lane.b32.xlu0 %v9799, 16
        %v9875 = vpop.permute.xlu0 %9874
        %9876 = vrot.lane.b32.xlu0 %v9800, 16
        %v9877 = vpop.permute.xlu0 %9876
        %9878 = vrot.lane.b32.xlu0 %v9801, 16
        %v9879 = vpop.permute.xlu0 %9878
        %9880 = vrot.lane.b32.xlu0 %v9802, 16
        %v9881 = vpop.permute.xlu0 %9880
        %9882 = vrot.lane.b32.xlu0 %v9803, 16
        %v9883 = vpop.permute.xlu0 %9882
        %9884 = vrot.lane.b32.xlu0 %v9804, 16
        %v9885 = vpop.permute.xlu0 %9884
        %9886 = vrot.lane.b32.xlu0 %v9805, 16
        %v9887 = vpop.permute.xlu0 %9886
        %9888 = vrot.lane.b32.xlu0 %v9806, 16
        %v9889 = vpop.permute.xlu0 %9888
        %9890 = vrot.lane.b32.xlu0 %v9807, 16
        %v9891 = vpop.permute.xlu0 %9890
        %9892 = vrot.lane.b32.xlu0 %v9808, 16
        %v9893 = vpop.permute.xlu0 %9892
        %9894 = vrot.lane.b32.xlu0 %v9809, 16
        %v9895 = vpop.permute.xlu0 %9894
        %9896 = vrot.lane.b32.xlu0 %v9810, 16
        %v9897 = vpop.permute.xlu0 %9896
        %9898 = vrot.lane.b32.xlu0 %v9811, 16
        %v9899 = vpop.permute.xlu0 %9898
        %9900 = vrot.lane.b32.xlu0 %v9812, 16
        %v9901 = vpop.permute.xlu0 %9900
        %9902 = vrot.lane.b32.xlu0 %v9813, 16
        %v9903 = vpop.permute.xlu0 %9902
        %9904 = vrot.lane.b32.xlu0 %v9814, 16
        %v9905 = vpop.permute.xlu0 %9904
        %9906 = vrot.lane.b32.xlu0 %v9815, 16
        %v9907 = vpop.permute.xlu0 %9906
        %9908 = vrot.lane.b32.xlu0 %v9816, 16
        %v9909 = vpop.permute.xlu0 %9908
        %9910 = vrot.lane.b32.xlu0 %v9817, 16
        %v9911 = vpop.permute.xlu0 %9910
        %9912 = vrot.lane.b32.xlu0 %v9818, 16
        %v9913 = vpop.permute.xlu0 %9912
        %9914 = vrot.lane.b32.xlu0 %v9819, 16
        %v9915 = vpop.permute.xlu0 %9914
        %9948 = vrot.lane.b32.xlu0 %v9788, 32
        %v9949 = vpop.permute.xlu0 %9948
        %9950 = vrot.lane.b32.xlu0 %v9789, 32
        %v9951 = vpop.permute.xlu0 %9950
        %9952 = vrot.lane.b32.xlu0 %v9790, 32
        %v9953 = vpop.permute.xlu0 %9952
        %9954 = vrot.lane.b32.xlu0 %v9791, 32
        %v9955 = vpop.permute.xlu0 %9954
        %9956 = vrot.lane.b32.xlu0 %v9792, 32
        %v9957 = vpop.permute.xlu0 %9956
        %9958 = vrot.lane.b32.xlu0 %v9793, 32
        %v9959 = vpop.permute.xlu0 %9958
        %9960 = vrot.lane.b32.xlu0 %v9794, 32
        %v9961 = vpop.permute.xlu0 %9960
        %9962 = vrot.lane.b32.xlu0 %v9795, 32
        %v9963 = vpop.permute.xlu0 %9962
        %9964 = vrot.lane.b32.xlu0 %v9796, 32
        %v9965 = vpop.permute.xlu0 %9964
        %9966 = vrot.lane.b32.xlu0 %v9797, 32
        %v9967 = vpop.permute.xlu0 %9966
        %9968 = vrot.lane.b32.xlu0 %v9798, 32
        %v9969 = vpop.permute.xlu0 %9968
        %9970 = vrot.lane.b32.xlu0 %v9799, 32
        %v9971 = vpop.permute.xlu0 %9970
        %9972 = vrot.lane.b32.xlu0 %v9800, 32
        %v9973 = vpop.permute.xlu0 %9972
        %9974 = vrot.lane.b32.xlu0 %v9801, 32
        %v9975 = vpop.permute.xlu0 %9974
        %9976 = vrot.lane.b32.xlu0 %v9802, 32
        %v9977 = vpop.permute.xlu0 %9976
        %9978 = vrot.lane.b32.xlu0 %v9803, 32
        %v9979 = vpop.permute.xlu0 %9978
        %9980 = vrot.lane.b32.xlu0 %v9804, 32
        %v9981 = vpop.permute.xlu0 %9980
        %9982 = vrot.lane.b32.xlu0 %v9805, 32
        %v9983 = vpop.permute.xlu0 %9982
        %9984 = vrot.lane.b32.xlu0 %v9806, 32
        %v9985 = vpop.permute.xlu0 %9984
        %9986 = vrot.lane.b32.xlu0 %v9807, 32
        %v9987 = vpop.permute.xlu0 %9986
        %9988 = vrot.lane.b32.xlu0 %v9808, 32
        %v9989 = vpop.permute.xlu0 %9988
        %9990 = vrot.lane.b32.xlu0 %v9809, 32
        %v9991 = vpop.permute.xlu0 %9990
        %9992 = vrot.lane.b32.xlu0 %v9810, 32
        %v9993 = vpop.permute.xlu0 %9992
        %9994 = vrot.lane.b32.xlu0 %v9811, 32
        %v9995 = vpop.permute.xlu0 %9994
        %9996 = vrot.lane.b32.xlu0 %v9812, 32
        %v9997 = vpop.permute.xlu0 %9996
        %9998 = vrot.lane.b32.xlu0 %v9813, 32
        %v9999 = vpop.permute.xlu0 %9998
        %10000 = vrot.lane.b32.xlu0 %v9814, 32
        %v10001 = vpop.permute.xlu0 %10000
        %10002 = vrot.lane.b32.xlu0 %v9815, 32
        %v10003 = vpop.permute.xlu0 %10002
        %10004 = vrot.lane.b32.xlu0 %v9816, 32
        %v10005 = vpop.permute.xlu0 %10004
        %10006 = vrot.lane.b32.xlu0 %v9817, 32
        %v10007 = vpop.permute.xlu0 %10006
        %10008 = vrot.lane.b32.xlu0 %v9818, 32
        %v10009 = vpop.permute.xlu0 %10008
        %10010 = vrot.lane.b32.xlu0 %v9819, 32
        %v10011 = vpop.permute.xlu0 %10010
        %10044 = vrot.lane.b32.xlu0 %v9788, 48
        %v10045 = vpop.permute.xlu0 %10044
        %10046 = vrot.lane.b32.xlu0 %v9789, 48
        %v10047 = vpop.permute.xlu0 %10046
        %10048 = vrot.lane.b32.xlu0 %v9790, 48
        %v10049 = vpop.permute.xlu0 %10048
        %10050 = vrot.lane.b32.xlu0 %v9791, 48
        %v10051 = vpop.permute.xlu0 %10050
        %10052 = vrot.lane.b32.xlu0 %v9792, 48
        %v10053 = vpop.permute.xlu0 %10052
        %10054 = vrot.lane.b32.xlu0 %v9793, 48
        %v10055 = vpop.permute.xlu0 %10054
        %10056 = vrot.lane.b32.xlu0 %v9794, 48
        %v10057 = vpop.permute.xlu0 %10056
        %10058 = vrot.lane.b32.xlu0 %v9795, 48
        %v10059 = vpop.permute.xlu0 %10058
        %10060 = vrot.lane.b32.xlu0 %v9796, 48
        %v10061 = vpop.permute.xlu0 %10060
        %10062 = vrot.lane.b32.xlu0 %v9797, 48
        %v10063 = vpop.permute.xlu0 %10062
        %10064 = vrot.lane.b32.xlu0 %v9798, 48
        %v10065 = vpop.permute.xlu0 %10064
        %10066 = vrot.lane.b32.xlu0 %v9799, 48
        %v10067 = vpop.permute.xlu0 %10066
        %10068 = vrot.lane.b32.xlu0 %v9800, 48
        %v10069 = vpop.permute.xlu0 %10068
        %10070 = vrot.lane.b32.xlu0 %v9801, 48
        %v10071 = vpop.permute.xlu0 %10070
        %10072 = vrot.lane.b32.xlu0 %v9802, 48
        %v10073 = vpop.permute.xlu0 %10072
        %10074 = vrot.lane.b32.xlu0 %v9803, 48
        %v10075 = vpop.permute.xlu0 %10074
        %10076 = vrot.lane.b32.xlu0 %v9804, 48
        %v10077 = vpop.permute.xlu0 %10076
        %10078 = vrot.lane.b32.xlu0 %v9805, 48
        %v10079 = vpop.permute.xlu0 %10078
        %10080 = vrot.lane.b32.xlu0 %v9806, 48
        %v10081 = vpop.permute.xlu0 %10080
        %10082 = vrot.lane.b32.xlu0 %v9807, 48
        %v10083 = vpop.permute.xlu0 %10082
        %10084 = vrot.lane.b32.xlu0 %v9808, 48
        %v10085 = vpop.permute.xlu0 %10084
        %10086 = vrot.lane.b32.xlu0 %v9809, 48
        %v10087 = vpop.permute.xlu0 %10086
        %10088 = vrot.lane.b32.xlu0 %v9810, 48
        %v10089 = vpop.permute.xlu0 %10088
        %10090 = vrot.lane.b32.xlu0 %v9811, 48
        %v10091 = vpop.permute.xlu0 %10090
        %10092 = vrot.lane.b32.xlu0 %v9812, 48
        %v10093 = vpop.permute.xlu0 %10092
        %10094 = vrot.lane.b32.xlu0 %v9813, 48
        %v10095 = vpop.permute.xlu0 %10094
        %10096 = vrot.lane.b32.xlu0 %v9814, 48
        %v10097 = vpop.permute.xlu0 %10096
        %10098 = vrot.lane.b32.xlu0 %v9815, 48
        %v10099 = vpop.permute.xlu0 %10098
        %10100 = vrot.lane.b32.xlu0 %v9816, 48
        %v10101 = vpop.permute.xlu0 %10100
        %10102 = vrot.lane.b32.xlu0 %v9817, 48
        %v10103 = vpop.permute.xlu0 %10102
        %10104 = vrot.lane.b32.xlu0 %v9818, 48
        %v10105 = vpop.permute.xlu0 %10104
        %10106 = vrot.lane.b32.xlu0 %v9819, 48
        %v10107 = vpop.permute.xlu0 %10106
        %10140 = vrot.lane.b32.xlu0 %v9788, 64
        %v10141 = vpop.permute.xlu0 %10140
        %10142 = vrot.lane.b32.xlu0 %v9789, 64
        %v10143 = vpop.permute.xlu0 %10142
        %10144 = vrot.lane.b32.xlu0 %v9790, 64
        %v10145 = vpop.permute.xlu0 %10144
        %10146 = vrot.lane.b32.xlu0 %v9791, 64
        %v10147 = vpop.permute.xlu0 %10146
        %10148 = vrot.lane.b32.xlu0 %v9792, 64
        %v10149 = vpop.permute.xlu0 %10148
        %10150 = vrot.lane.b32.xlu0 %v9793, 64
        %v10151 = vpop.permute.xlu0 %10150
        %10152 = vrot.lane.b32.xlu0 %v9794, 64
        %v10153 = vpop.permute.xlu0 %10152
        %10154 = vrot.lane.b32.xlu0 %v9795, 64
        %v10155 = vpop.permute.xlu0 %10154
        %10156 = vrot.lane.b32.xlu0 %v9796, 64
        %v10157 = vpop.permute.xlu0 %10156
        %10158 = vrot.lane.b32.xlu0 %v9797, 64
        %v10159 = vpop.permute.xlu0 %10158
        %10160 = vrot.lane.b32.xlu0 %v9798, 64
        %v10161 = vpop.permute.xlu0 %10160
        %10162 = vrot.lane.b32.xlu0 %v9799, 64
        %v10163 = vpop.permute.xlu0 %10162
        %10164 = vrot.lane.b32.xlu0 %v9800, 64
        %v10165 = vpop.permute.xlu0 %10164
        %10166 = vrot.lane.b32.xlu0 %v9801, 64
        %v10167 = vpop.permute.xlu0 %10166
        %10168 = vrot.lane.b32.xlu0 %v9802, 64
        %v10169 = vpop.permute.xlu0 %10168
        %10170 = vrot.lane.b32.xlu0 %v9803, 64
        %v10171 = vpop.permute.xlu0 %10170
        %10172 = vrot.lane.b32.xlu0 %v9804, 64
        %v10173 = vpop.permute.xlu0 %10172
        %10174 = vrot.lane.b32.xlu0 %v9805, 64
        %v10175 = vpop.permute.xlu0 %10174
        %10176 = vrot.lane.b32.xlu0 %v9806, 64
        %v10177 = vpop.permute.xlu0 %10176
        %10178 = vrot.lane.b32.xlu0 %v9807, 64
        %v10179 = vpop.permute.xlu0 %10178
        %10180 = vrot.lane.b32.xlu0 %v9808, 64
        %v10181 = vpop.permute.xlu0 %10180
        %10182 = vrot.lane.b32.xlu0 %v9809, 64
        %v10183 = vpop.permute.xlu0 %10182
        %10184 = vrot.lane.b32.xlu0 %v9810, 64
        %v10185 = vpop.permute.xlu0 %10184
        %10186 = vrot.lane.b32.xlu0 %v9811, 64
        %v10187 = vpop.permute.xlu0 %10186
        %10188 = vrot.lane.b32.xlu0 %v9812, 64
        %v10189 = vpop.permute.xlu0 %10188
        %10190 = vrot.lane.b32.xlu0 %v9813, 64
        %v10191 = vpop.permute.xlu0 %10190
        %10192 = vrot.lane.b32.xlu0 %v9814, 64
        %v10193 = vpop.permute.xlu0 %10192
        %10194 = vrot.lane.b32.xlu0 %v9815, 64
        %v10195 = vpop.permute.xlu0 %10194
        %10196 = vrot.lane.b32.xlu0 %v9816, 64
        %v10197 = vpop.permute.xlu0 %10196
        %10198 = vrot.lane.b32.xlu0 %v9817, 64
        %v10199 = vpop.permute.xlu0 %10198
        %10200 = vrot.lane.b32.xlu0 %v9818, 64
        %v10201 = vpop.permute.xlu0 %10200
        %10202 = vrot.lane.b32.xlu0 %v9819, 64
        %v10203 = vpop.permute.xlu0 %10202
        %10236 = vrot.lane.b32.xlu0 %v9788, 80
        %v10237 = vpop.permute.xlu0 %10236
        %10238 = vrot.lane.b32.xlu0 %v9789, 80
        %v10239 = vpop.permute.xlu0 %10238
        %10240 = vrot.lane.b32.xlu0 %v9790, 80
        %v10241 = vpop.permute.xlu0 %10240
        %10242 = vrot.lane.b32.xlu0 %v9791, 80
        %v10243 = vpop.permute.xlu0 %10242
        %10244 = vrot.lane.b32.xlu0 %v9792, 80
        %v10245 = vpop.permute.xlu0 %10244
        %10246 = vrot.lane.b32.xlu0 %v9793, 80
        %v10247 = vpop.permute.xlu0 %10246
        %10248 = vrot.lane.b32.xlu0 %v9794, 80
        %v10249 = vpop.permute.xlu0 %10248
        %10250 = vrot.lane.b32.xlu0 %v9795, 80
        %v10251 = vpop.permute.xlu0 %10250
        %10252 = vrot.lane.b32.xlu0 %v9796, 80
        %v10253 = vpop.permute.xlu0 %10252
        %10254 = vrot.lane.b32.xlu0 %v9797, 80
        %v10255 = vpop.permute.xlu0 %10254
        %10256 = vrot.lane.b32.xlu0 %v9798, 80
        %v10257 = vpop.permute.xlu0 %10256
        %10258 = vrot.lane.b32.xlu0 %v9799, 80
        %v10259 = vpop.permute.xlu0 %10258
        %10260 = vrot.lane.b32.xlu0 %v9800, 80
        %v10261 = vpop.permute.xlu0 %10260
        %10262 = vrot.lane.b32.xlu0 %v9801, 80
        %v10263 = vpop.permute.xlu0 %10262
        %10264 = vrot.lane.b32.xlu0 %v9802, 80
        %v10265 = vpop.permute.xlu0 %10264
        %10266 = vrot.lane.b32.xlu0 %v9803, 80
        %v10267 = vpop.permute.xlu0 %10266
        %10268 = vrot.lane.b32.xlu0 %v9804, 80
        %v10269 = vpop.permute.xlu0 %10268
        %10270 = vrot.lane.b32.xlu0 %v9805, 80
        %v10271 = vpop.permute.xlu0 %10270
        %10272 = vrot.lane.b32.xlu0 %v9806, 80
        %v10273 = vpop.permute.xlu0 %10272
        %10274 = vrot.lane.b32.xlu0 %v9807, 80
        %v10275 = vpop.permute.xlu0 %10274
        %10276 = vrot.lane.b32.xlu0 %v9808, 80
        %v10277 = vpop.permute.xlu0 %10276
        %10278 = vrot.lane.b32.xlu0 %v9809, 80
        %v10279 = vpop.permute.xlu0 %10278
        %10280 = vrot.lane.b32.xlu0 %v9810, 80
        %v10281 = vpop.permute.xlu0 %10280
        %10282 = vrot.lane.b32.xlu0 %v9811, 80
        %v10283 = vpop.permute.xlu0 %10282
        %10284 = vrot.lane.b32.xlu0 %v9812, 80
        %v10285 = vpop.permute.xlu0 %10284
        %10286 = vrot.lane.b32.xlu0 %v9813, 80
        %v10287 = vpop.permute.xlu0 %10286
        %10288 = vrot.lane.b32.xlu0 %v9814, 80
        %v10289 = vpop.permute.xlu0 %10288
        %10290 = vrot.lane.b32.xlu0 %v9815, 80
        %v10291 = vpop.permute.xlu0 %10290
        %10292 = vrot.lane.b32.xlu0 %v9816, 80
        %v10293 = vpop.permute.xlu0 %10292
        %10294 = vrot.lane.b32.xlu0 %v9817, 80
        %v10295 = vpop.permute.xlu0 %10294
        %10296 = vrot.lane.b32.xlu0 %v9818, 80
        %v10297 = vpop.permute.xlu0 %10296
        %10298 = vrot.lane.b32.xlu0 %v9819, 80
        %v10299 = vpop.permute.xlu0 %10298
        %10332 = vrot.lane.b32.xlu0 %v9788, 96
        %v10333 = vpop.permute.xlu0 %10332
        %10334 = vrot.lane.b32.xlu0 %v9789, 96
        %v10335 = vpop.permute.xlu0 %10334
        %10336 = vrot.lane.b32.xlu0 %v9790, 96
        %v10337 = vpop.permute.xlu0 %10336
        %10338 = vrot.lane.b32.xlu0 %v9791, 96
        %v10339 = vpop.permute.xlu0 %10338
        %10340 = vrot.lane.b32.xlu0 %v9792, 96
        %v10341 = vpop.permute.xlu0 %10340
        %10342 = vrot.lane.b32.xlu0 %v9793, 96
        %v10343 = vpop.permute.xlu0 %10342
        %10344 = vrot.lane.b32.xlu0 %v9794, 96
        %v10345 = vpop.permute.xlu0 %10344
        %10346 = vrot.lane.b32.xlu0 %v9795, 96
        %v10347 = vpop.permute.xlu0 %10346
        %10348 = vrot.lane.b32.xlu0 %v9796, 96
        %v10349 = vpop.permute.xlu0 %10348
        %10350 = vrot.lane.b32.xlu0 %v9797, 96
        %v10351 = vpop.permute.xlu0 %10350
        %10352 = vrot.lane.b32.xlu0 %v9798, 96
        %v10353 = vpop.permute.xlu0 %10352
        %10354 = vrot.lane.b32.xlu0 %v9799, 96
        %v10355 = vpop.permute.xlu0 %10354
        %10356 = vrot.lane.b32.xlu0 %v9800, 96
        %v10357 = vpop.permute.xlu0 %10356
        %10358 = vrot.lane.b32.xlu0 %v9801, 96
        %v10359 = vpop.permute.xlu0 %10358
        %10360 = vrot.lane.b32.xlu0 %v9802, 96
        %v10361 = vpop.permute.xlu0 %10360
        %10362 = vrot.lane.b32.xlu0 %v9803, 96
        %v10363 = vpop.permute.xlu0 %10362
        %10364 = vrot.lane.b32.xlu0 %v9804, 96
        %v10365 = vpop.permute.xlu0 %10364
        %10366 = vrot.lane.b32.xlu0 %v9805, 96
        %v10367 = vpop.permute.xlu0 %10366
        %10368 = vrot.lane.b32.xlu0 %v9806, 96
        %v10369 = vpop.permute.xlu0 %10368
        %10370 = vrot.lane.b32.xlu0 %v9807, 96
        %v10371 = vpop.permute.xlu0 %10370
        %10372 = vrot.lane.b32.xlu0 %v9808, 96
        %v10373 = vpop.permute.xlu0 %10372
        %10374 = vrot.lane.b32.xlu0 %v9809, 96
        %v10375 = vpop.permute.xlu0 %10374
        %10376 = vrot.lane.b32.xlu0 %v9810, 96
        %v10377 = vpop.permute.xlu0 %10376
        %10378 = vrot.lane.b32.xlu0 %v9811, 96
        %v10379 = vpop.permute.xlu0 %10378
        %10380 = vrot.lane.b32.xlu0 %v9812, 96
        %v10381 = vpop.permute.xlu0 %10380
        %10382 = vrot.lane.b32.xlu0 %v9813, 96
        %v10383 = vpop.permute.xlu0 %10382
        %10384 = vrot.lane.b32.xlu0 %v9814, 96
        %v10385 = vpop.permute.xlu0 %10384
        %10386 = vrot.lane.b32.xlu0 %v9815, 96
        %v10387 = vpop.permute.xlu0 %10386
        %10388 = vrot.lane.b32.xlu0 %v9816, 96
        %v10389 = vpop.permute.xlu0 %10388
        %10390 = vrot.lane.b32.xlu0 %v9817, 96
        %v10391 = vpop.permute.xlu0 %10390
        %10392 = vrot.lane.b32.xlu0 %v9818, 96
        %v10393 = vpop.permute.xlu0 %10392
        %10394 = vrot.lane.b32.xlu0 %v9819, 96
        %v10395 = vpop.permute.xlu0 %10394
        %10428 = vrot.lane.b32.xlu0 %v9788, 112
        %v10429 = vpop.permute.xlu0 %10428
        %10430 = vrot.lane.b32.xlu0 %v9789, 112
        %v10431 = vpop.permute.xlu0 %10430
        %10432 = vrot.lane.b32.xlu0 %v9790, 112
        %v10433 = vpop.permute.xlu0 %10432
        %10434 = vrot.lane.b32.xlu0 %v9791, 112
        %v10435 = vpop.permute.xlu0 %10434
        %10436 = vrot.lane.b32.xlu0 %v9792, 112
        %v10437 = vpop.permute.xlu0 %10436
        %10438 = vrot.lane.b32.xlu0 %v9793, 112
        %v10439 = vpop.permute.xlu0 %10438
        %10440 = vrot.lane.b32.xlu0 %v9794, 112
        %v10441 = vpop.permute.xlu0 %10440
        %10442 = vrot.lane.b32.xlu0 %v9795, 112
        %v10443 = vpop.permute.xlu0 %10442
        %10444 = vrot.lane.b32.xlu0 %v9796, 112
        %v10445 = vpop.permute.xlu0 %10444
        %10446 = vrot.lane.b32.xlu0 %v9797, 112
        %v10447 = vpop.permute.xlu0 %10446
        %10448 = vrot.lane.b32.xlu0 %v9798, 112
        %v10449 = vpop.permute.xlu0 %10448
        %10450 = vrot.lane.b32.xlu0 %v9799, 112
        %v10451 = vpop.permute.xlu0 %10450
        %10452 = vrot.lane.b32.xlu0 %v9800, 112
        %v10453 = vpop.permute.xlu0 %10452
        %10454 = vrot.lane.b32.xlu0 %v9801, 112
        %v10455 = vpop.permute.xlu0 %10454
        %10456 = vrot.lane.b32.xlu0 %v9802, 112
        %v10457 = vpop.permute.xlu0 %10456
        %10458 = vrot.lane.b32.xlu0 %v9803, 112
        %v10459 = vpop.permute.xlu0 %10458
        %10460 = vrot.lane.b32.xlu0 %v9804, 112
        %v10461 = vpop.permute.xlu0 %10460
        %10462 = vrot.lane.b32.xlu0 %v9805, 112
        %v10463 = vpop.permute.xlu0 %10462
        %10464 = vrot.lane.b32.xlu0 %v9806, 112
        %v10465 = vpop.permute.xlu0 %10464
        %10466 = vrot.lane.b32.xlu0 %v9807, 112
        %v10467 = vpop.permute.xlu0 %10466
        %10468 = vrot.lane.b32.xlu0 %v9808, 112
        %v10469 = vpop.permute.xlu0 %10468
        %10470 = vrot.lane.b32.xlu0 %v9809, 112
        %v10471 = vpop.permute.xlu0 %10470
        %10472 = vrot.lane.b32.xlu0 %v9810, 112
        %v10473 = vpop.permute.xlu0 %10472
        %10474 = vrot.lane.b32.xlu0 %v9811, 112
        %v10475 = vpop.permute.xlu0 %10474
        %10476 = vrot.lane.b32.xlu0 %v9812, 112
        %v10477 = vpop.permute.xlu0 %10476
        %10478 = vrot.lane.b32.xlu0 %v9813, 112
        %v10479 = vpop.permute.xlu0 %10478
        %10480 = vrot.lane.b32.xlu0 %v9814, 112
        %v10481 = vpop.permute.xlu0 %10480
        %10482 = vrot.lane.b32.xlu0 %v9815, 112
        %v10483 = vpop.permute.xlu0 %10482
        %10484 = vrot.lane.b32.xlu0 %v9816, 112
        %v10485 = vpop.permute.xlu0 %10484
        %10486 = vrot.lane.b32.xlu0 %v9817, 112
        %v10487 = vpop.permute.xlu0 %10486
        %10488 = vrot.lane.b32.xlu0 %v9818, 112
        %v10489 = vpop.permute.xlu0 %10488
        %10490 = vrot.lane.b32.xlu0 %v9819, 112
        %v10491 = vpop.permute.xlu0 %10490
        %v10524 = vsel %vm8617, %v9788, %v9853
        %v10525 = vsel %vm8617, %v9789, %v9855
        %v10526 = vsel %vm8617, %v9790, %v9857
        %v10527 = vsel %vm8617, %v9791, %v9859
        %v10528 = vsel %vm8617, %v9792, %v9861
        %v10529 = vsel %vm8617, %v9793, %v9863
        %v10530 = vsel %vm8617, %v9794, %v9865
        %v10531 = vsel %vm8617, %v9795, %v9867
        %v10532 = vsel %vm8617, %v9796, %v9869
        %v10533 = vsel %vm8617, %v9797, %v9871
        %v10534 = vsel %vm8617, %v9798, %v9873
        %v10535 = vsel %vm8617, %v9799, %v9875
        %v10536 = vsel %vm8617, %v9800, %v9877
        %v10537 = vsel %vm8617, %v9801, %v9879
        %v10538 = vsel %vm8617, %v9802, %v9881
        %v10539 = vsel %vm8617, %v9803, %v9883
        %v10540 = vsel %vm8617, %v9804, %v9885
        %v10541 = vsel %vm8617, %v9805, %v9887
        %v10542 = vsel %vm8617, %v9806, %v9889
        %v10543 = vsel %vm8617, %v9807, %v9891
        %v10544 = vsel %vm8617, %v9808, %v9893
        %v10545 = vsel %vm8617, %v9809, %v9895
        %v10546 = vsel %vm8617, %v9810, %v9897
        %v10547 = vsel %vm8617, %v9811, %v9899
        %v10548 = vsel %vm8617, %v9812, %v9901
        %v10549 = vsel %vm8617, %v9813, %v9903
        %v10550 = vsel %vm8617, %v9814, %v9905
        %v10551 = vsel %vm8617, %v9815, %v9907
        %v10552 = vsel %vm8617, %v9816, %v9909
        %v10553 = vsel %vm8617, %v9817, %v9911
        %v10554 = vsel %vm8617, %v9818, %v9913
        %v10555 = vsel %vm8617, %v9819, %v9915
        %v10556 = vsel %vm8749, %v10524, %v9949
        %v10557 = vsel %vm8749, %v10525, %v9951
        %v10558 = vsel %vm8749, %v10526, %v9953
        %v10559 = vsel %vm8749, %v10527, %v9955
        %v10560 = vsel %vm8749, %v10528, %v9957
        %v10561 = vsel %vm8749, %v10529, %v9959
        %v10562 = vsel %vm8749, %v10530, %v9961
        %v10563 = vsel %vm8749, %v10531, %v9963
        %v10564 = vsel %vm8749, %v10532, %v9965
        %v10565 = vsel %vm8749, %v10533, %v9967
        %v10566 = vsel %vm8749, %v10534, %v9969
        %v10567 = vsel %vm8749, %v10535, %v9971
        %v10568 = vsel %vm8749, %v10536, %v9973
        %v10569 = vsel %vm8749, %v10537, %v9975
        %v10570 = vsel %vm8749, %v10538, %v9977
        %v10571 = vsel %vm8749, %v10539, %v9979
        %v10572 = vsel %vm8749, %v10540, %v9981
        %v10573 = vsel %vm8749, %v10541, %v9983
        %v10574 = vsel %vm8749, %v10542, %v9985
        %v10575 = vsel %vm8749, %v10543, %v9987
        %v10576 = vsel %vm8749, %v10544, %v9989
        %v10577 = vsel %vm8749, %v10545, %v9991
        %v10578 = vsel %vm8749, %v10546, %v9993
        %v10579 = vsel %vm8749, %v10547, %v9995
        %v10580 = vsel %vm8749, %v10548, %v9997
        %v10581 = vsel %vm8749, %v10549, %v9999
        %v10582 = vsel %vm8749, %v10550, %v10001
        %v10583 = vsel %vm8749, %v10551, %v10003
        %v10584 = vsel %vm8749, %v10552, %v10005
        %v10585 = vsel %vm8749, %v10553, %v10007
        %v10586 = vsel %vm8749, %v10554, %v10009
        %v10587 = vsel %vm8749, %v10555, %v10011
        %v10588 = vsel %vm8881, %v10556, %v10045
        %v10589 = vsel %vm8881, %v10557, %v10047
        %v10590 = vsel %vm8881, %v10558, %v10049
        %v10591 = vsel %vm8881, %v10559, %v10051
        %v10592 = vsel %vm8881, %v10560, %v10053
        %v10593 = vsel %vm8881, %v10561, %v10055
        %v10594 = vsel %vm8881, %v10562, %v10057
        %v10595 = vsel %vm8881, %v10563, %v10059
        %v10596 = vsel %vm8881, %v10564, %v10061
        %v10597 = vsel %vm8881, %v10565, %v10063
        %v10598 = vsel %vm8881, %v10566, %v10065
        %v10599 = vsel %vm8881, %v10567, %v10067
        %v10600 = vsel %vm8881, %v10568, %v10069
        %v10601 = vsel %vm8881, %v10569, %v10071
        %v10602 = vsel %vm8881, %v10570, %v10073
        %v10603 = vsel %vm8881, %v10571, %v10075
        %v10604 = vsel %vm8881, %v10572, %v10077
        %v10605 = vsel %vm8881, %v10573, %v10079
        %v10606 = vsel %vm8881, %v10574, %v10081
        %v10607 = vsel %vm8881, %v10575, %v10083
        %v10608 = vsel %vm8881, %v10576, %v10085
        %v10609 = vsel %vm8881, %v10577, %v10087
        %v10610 = vsel %vm8881, %v10578, %v10089
        %v10611 = vsel %vm8881, %v10579, %v10091
        %v10612 = vsel %vm8881, %v10580, %v10093
        %v10613 = vsel %vm8881, %v10581, %v10095
        %v10614 = vsel %vm8881, %v10582, %v10097
        %v10615 = vsel %vm8881, %v10583, %v10099
        %v10616 = vsel %vm8881, %v10584, %v10101
        %v10617 = vsel %vm8881, %v10585, %v10103
        %v10618 = vsel %vm8881, %v10586, %v10105
        %v10619 = vsel %vm8881, %v10587, %v10107
        %v10620 = vsel %vm9013, %v10588, %v10141
        %v10621 = vsel %vm9013, %v10589, %v10143
        %v10622 = vsel %vm9013, %v10590, %v10145
        %v10623 = vsel %vm9013, %v10591, %v10147
        %v10624 = vsel %vm9013, %v10592, %v10149
        %v10625 = vsel %vm9013, %v10593, %v10151
        %v10626 = vsel %vm9013, %v10594, %v10153
        %v10627 = vsel %vm9013, %v10595, %v10155
        %v10628 = vsel %vm9013, %v10596, %v10157
        %v10629 = vsel %vm9013, %v10597, %v10159
        %v10630 = vsel %vm9013, %v10598, %v10161
        %v10631 = vsel %vm9013, %v10599, %v10163
        %v10632 = vsel %vm9013, %v10600, %v10165
        %v10633 = vsel %vm9013, %v10601, %v10167
        %v10634 = vsel %vm9013, %v10602, %v10169
        %v10635 = vsel %vm9013, %v10603, %v10171
        %v10636 = vsel %vm9013, %v10604, %v10173
        %v10637 = vsel %vm9013, %v10605, %v10175
        %v10638 = vsel %vm9013, %v10606, %v10177
        %v10639 = vsel %vm9013, %v10607, %v10179
        %v10640 = vsel %vm9013, %v10608, %v10181
        %v10641 = vsel %vm9013, %v10609, %v10183
        %v10642 = vsel %vm9013, %v10610, %v10185
        %v10643 = vsel %vm9013, %v10611, %v10187
        %v10644 = vsel %vm9013, %v10612, %v10189
        %v10645 = vsel %vm9013, %v10613, %v10191
        %v10646 = vsel %vm9013, %v10614, %v10193
        %v10647 = vsel %vm9013, %v10615, %v10195
        %v10648 = vsel %vm9013, %v10616, %v10197
        %v10649 = vsel %vm9013, %v10617, %v10199
        %v10650 = vsel %vm9013, %v10618, %v10201
        %v10651 = vsel %vm9013, %v10619, %v10203
        %v10652 = vsel %vm9145, %v10620, %v10237
        %v10653 = vsel %vm9145, %v10621, %v10239
        %v10654 = vsel %vm9145, %v10622, %v10241
        %v10655 = vsel %vm9145, %v10623, %v10243
        %v10656 = vsel %vm9145, %v10624, %v10245
        %v10657 = vsel %vm9145, %v10625, %v10247
        %v10658 = vsel %vm9145, %v10626, %v10249
        %v10659 = vsel %vm9145, %v10627, %v10251
        %v10660 = vsel %vm9145, %v10628, %v10253
        %v10661 = vsel %vm9145, %v10629, %v10255
        %v10662 = vsel %vm9145, %v10630, %v10257
        %v10663 = vsel %vm9145, %v10631, %v10259
        %v10664 = vsel %vm9145, %v10632, %v10261
        %v10665 = vsel %vm9145, %v10633, %v10263
        %v10666 = vsel %vm9145, %v10634, %v10265
        %v10667 = vsel %vm9145, %v10635, %v10267
        %v10668 = vsel %vm9145, %v10636, %v10269
        %v10669 = vsel %vm9145, %v10637, %v10271
        %v10670 = vsel %vm9145, %v10638, %v10273
        %v10671 = vsel %vm9145, %v10639, %v10275
        %v10672 = vsel %vm9145, %v10640, %v10277
        %v10673 = vsel %vm9145, %v10641, %v10279
        %v10674 = vsel %vm9145, %v10642, %v10281
        %v10675 = vsel %vm9145, %v10643, %v10283
        %v10676 = vsel %vm9145, %v10644, %v10285
        %v10677 = vsel %vm9145, %v10645, %v10287
        %v10678 = vsel %vm9145, %v10646, %v10289
        %v10679 = vsel %vm9145, %v10647, %v10291
        %v10680 = vsel %vm9145, %v10648, %v10293
        %v10681 = vsel %vm9145, %v10649, %v10295
        %v10682 = vsel %vm9145, %v10650, %v10297
        %v10683 = vsel %vm9145, %v10651, %v10299
        %v10684 = vsel %vm9277, %v10652, %v10333
        %v10685 = vsel %vm9277, %v10653, %v10335
        %v10686 = vsel %vm9277, %v10654, %v10337
        %v10687 = vsel %vm9277, %v10655, %v10339
        %v10688 = vsel %vm9277, %v10656, %v10341
        %v10689 = vsel %vm9277, %v10657, %v10343
        %v10690 = vsel %vm9277, %v10658, %v10345
        %v10691 = vsel %vm9277, %v10659, %v10347
        %v10692 = vsel %vm9277, %v10660, %v10349
        %v10693 = vsel %vm9277, %v10661, %v10351
        %v10694 = vsel %vm9277, %v10662, %v10353
        %v10695 = vsel %vm9277, %v10663, %v10355
        %v10696 = vsel %vm9277, %v10664, %v10357
        %v10697 = vsel %vm9277, %v10665, %v10359
        %v10698 = vsel %vm9277, %v10666, %v10361
        %v10699 = vsel %vm9277, %v10667, %v10363
        %v10700 = vsel %vm9277, %v10668, %v10365
        %v10701 = vsel %vm9277, %v10669, %v10367
        %v10702 = vsel %vm9277, %v10670, %v10369
        %v10703 = vsel %vm9277, %v10671, %v10371
        %v10704 = vsel %vm9277, %v10672, %v10373
        %v10705 = vsel %vm9277, %v10673, %v10375
        %v10706 = vsel %vm9277, %v10674, %v10377
        %v10707 = vsel %vm9277, %v10675, %v10379
        %v10708 = vsel %vm9277, %v10676, %v10381
        %v10709 = vsel %vm9277, %v10677, %v10383
        %v10710 = vsel %vm9277, %v10678, %v10385
        %v10711 = vsel %vm9277, %v10679, %v10387
        %v10712 = vsel %vm9277, %v10680, %v10389
        %v10713 = vsel %vm9277, %v10681, %v10391
        %v10714 = vsel %vm9277, %v10682, %v10393
        %v10715 = vsel %vm9277, %v10683, %v10395
        %v10716 = vsel %vm9409, %v10684, %v10429
        %v10717 = vsel %vm9409, %v10685, %v10431
        %v10718 = vsel %vm9409, %v10686, %v10433
        %v10719 = vsel %vm9409, %v10687, %v10435
        %v10720 = vsel %vm9409, %v10688, %v10437
        %v10721 = vsel %vm9409, %v10689, %v10439
        %v10722 = vsel %vm9409, %v10690, %v10441
        %v10723 = vsel %vm9409, %v10691, %v10443
        %v10724 = vsel %vm9409, %v10692, %v10445
        %v10725 = vsel %vm9409, %v10693, %v10447
        %v10726 = vsel %vm9409, %v10694, %v10449
        %v10727 = vsel %vm9409, %v10695, %v10451
        %v10728 = vsel %vm9409, %v10696, %v10453
        %v10729 = vsel %vm9409, %v10697, %v10455
        %v10730 = vsel %vm9409, %v10698, %v10457
        %v10731 = vsel %vm9409, %v10699, %v10459
        %v10732 = vsel %vm9409, %v10700, %v10461
        %v10733 = vsel %vm9409, %v10701, %v10463
        %v10734 = vsel %vm9409, %v10702, %v10465
        %v10735 = vsel %vm9409, %v10703, %v10467
        %v10736 = vsel %vm9409, %v10704, %v10469
        %v10737 = vsel %vm9409, %v10705, %v10471
        %v10738 = vsel %vm9409, %v10706, %v10473
        %v10739 = vsel %vm9409, %v10707, %v10475
        %v10740 = vsel %vm9409, %v10708, %v10477
        %v10741 = vsel %vm9409, %v10709, %v10479
        %v10742 = vsel %vm9409, %v10710, %v10481
        %v10743 = vsel %vm9409, %v10711, %v10483
        %v10744 = vsel %vm9409, %v10712, %v10485
        %v10745 = vsel %vm9409, %v10713, %v10487
        %v10746 = vsel %vm9409, %v10714, %v10489
        %v10747 = vsel %vm9409, %v10715, %v10491
        %v10748 = vmul.u32 %v9559, 16
        %vm10749 = vcmp.ge.s32.totalorder %v9542, %v10748
        %vm10750 = vcmp.ge.s32.totalorder %v9543, %v10748
        %vm10751 = vcmp.ge.s32.totalorder %v9544, %v10748
        %vm10752 = vcmp.ge.s32.totalorder %v9545, %v10748
        %vm10753 = vcmp.ge.s32.totalorder %v9546, %v10748
        %vm10754 = vcmp.ge.s32.totalorder %v9547, %v10748
        %vm10755 = vcmp.ge.s32.totalorder %v9548, %v10748
        %vm10756 = vcmp.ge.s32.totalorder %v9549, %v10748
        %vm10757 = vcmp.ge.s32.totalorder %v9550, %v10748
        %vm10758 = vcmp.ge.s32.totalorder %v9551, %v10748
        %vm10759 = vcmp.ge.s32.totalorder %v9552, %v10748
        %vm10760 = vcmp.ge.s32.totalorder %v9553, %v10748
        %vm10761 = vcmp.ge.s32.totalorder %v9554, %v10748
        %vm10762 = vcmp.ge.s32.totalorder %v9555, %v10748
        %vm10763 = vcmp.ge.s32.totalorder %v9556, %v10748
        %vm10764 = vcmp.ge.s32.totalorder %v9557, %v10748
        %v10765 = vmul.u32 %v9577, 16
        %vm10766 = vcmp.lt.s32.totalorder %v9542, %v10765
        %vm10767 = vcmp.lt.s32.totalorder %v9543, %v10765
        %vm10768 = vcmp.lt.s32.totalorder %v9544, %v10765
        %vm10769 = vcmp.lt.s32.totalorder %v9545, %v10765
        %vm10770 = vcmp.lt.s32.totalorder %v9546, %v10765
        %vm10771 = vcmp.lt.s32.totalorder %v9547, %v10765
        %vm10772 = vcmp.lt.s32.totalorder %v9548, %v10765
        %vm10773 = vcmp.lt.s32.totalorder %v9549, %v10765
        %vm10774 = vcmp.lt.s32.totalorder %v9550, %v10765
        %vm10775 = vcmp.lt.s32.totalorder %v9551, %v10765
        %vm10776 = vcmp.lt.s32.totalorder %v9552, %v10765
        %vm10777 = vcmp.lt.s32.totalorder %v9553, %v10765
        %vm10778 = vcmp.lt.s32.totalorder %v9554, %v10765
        %vm10779 = vcmp.lt.s32.totalorder %v9555, %v10765
        %vm10780 = vcmp.lt.s32.totalorder %v9556, %v10765
        %vm10781 = vcmp.lt.s32.totalorder %v9557, %v10765
        %vm10782 = vmand %vm10749, %vm10766
        %vm10783 = vmand %vm10750, %vm10767
        %vm10784 = vmand %vm10751, %vm10768
        %vm10785 = vmand %vm10752, %vm10769
        %vm10786 = vmand %vm10753, %vm10770
        %vm10787 = vmand %vm10754, %vm10771
        %vm10788 = vmand %vm10755, %vm10772
        %vm10789 = vmand %vm10756, %vm10773
        %vm10790 = vmand %vm10757, %vm10774
        %vm10791 = vmand %vm10758, %vm10775
        %vm10792 = vmand %vm10759, %vm10776
        %vm10793 = vmand %vm10760, %vm10777
        %vm10794 = vmand %vm10761, %vm10778
        %vm10795 = vmand %vm10762, %vm10779
        %vm10796 = vmand %vm10763, %vm10780
        %vm10797 = vmand %vm10764, %vm10781
        %v10798 = vsel %vm10782, 1, 0
        %v10799 = vsel %vm10783, 1, 0
        %v10800 = vsel %vm10784, 1, 0
        %v10801 = vsel %vm10785, 1, 0
        %v10802 = vsel %vm10786, 1, 0
        %v10803 = vsel %vm10787, 1, 0
        %v10804 = vsel %vm10788, 1, 0
        %v10805 = vsel %vm10789, 1, 0
        %v10806 = vsel %vm10790, 1, 0
        %v10807 = vsel %vm10791, 1, 0
        %v10808 = vsel %vm10792, 1, 0
        %v10809 = vsel %vm10793, 1, 0
        %v10810 = vsel %vm10794, 1, 0
        %v10811 = vsel %vm10795, 1, 0
        %v10812 = vsel %vm10796, 1, 0
        %v10813 = vsel %vm10797, 1, 0
        %v10814 = vcvt.s32.f32 %v10798
        %v10815 = vcvt.s32.f32 %v10799
        %v10816 = vcvt.s32.f32 %v10800
        %v10817 = vcvt.s32.f32 %v10801
        %v10818 = vcvt.s32.f32 %v10802
        %v10819 = vcvt.s32.f32 %v10803
        %v10820 = vcvt.s32.f32 %v10804
        %v10821 = vcvt.s32.f32 %v10805
        %v10822 = vcvt.s32.f32 %v10806
        %v10823 = vcvt.s32.f32 %v10807
        %v10824 = vcvt.s32.f32 %v10808
        %v10825 = vcvt.s32.f32 %v10809
        %v10826 = vcvt.s32.f32 %v10810
        %v10827 = vcvt.s32.f32 %v10811
        %v10828 = vcvt.s32.f32 %v10812
        %v10829 = vcvt.s32.f32 %v10813
        %v10830 = vpack.c.bf16 %v10815, %v10814
        %v10831 = vpack.c.bf16 %v10817, %v10816
        %v10832 = vpack.c.bf16 %v10819, %v10818
        %v10833 = vpack.c.bf16 %v10821, %v10820
        %v10834 = vpack.c.bf16 %v10823, %v10822
        %v10835 = vpack.c.bf16 %v10825, %v10824
        %v10836 = vpack.c.bf16 %v10827, %v10826
        %v10837 = vpack.c.bf16 %v10829, %v10828
        %v10838 = vmul.f32 %v5274, %v10716
        %v10839 = vmul.f32 %v5276, %v10717
        %v10840 = vmul.f32 %v5279, %v10718
        %v10841 = vmul.f32 %v5281, %v10719
        %v10842 = vmul.f32 %v5284, %v10720
        %v10843 = vmul.f32 %v5286, %v10721
        %v10844 = vmul.f32 %v5289, %v10722
        %v10845 = vmul.f32 %v5291, %v10723
        %v10846 = vmul.f32 %v5294, %v10724
        %v10847 = vmul.f32 %v5296, %v10725
        %v10848 = vmul.f32 %v5299, %v10726
        %v10849 = vmul.f32 %v5301, %v10727
        %v10850 = vmul.f32 %v5304, %v10728
        %v10851 = vmul.f32 %v5306, %v10729
        %v10852 = vmul.f32 %v5309, %v10730
        %v10853 = vmul.f32 %v5311, %v10731
        %v10854 = vmul.f32 %v5314, %v10732
        %v10855 = vmul.f32 %v5316, %v10733
        %v10856 = vmul.f32 %v5319, %v10734
        %v10857 = vmul.f32 %v5321, %v10735
        %v10858 = vmul.f32 %v5324, %v10736
        %v10859 = vmul.f32 %v5326, %v10737
        %v10860 = vmul.f32 %v5329, %v10738
        %v10861 = vmul.f32 %v5331, %v10739
        %v10862 = vmul.f32 %v5334, %v10740
        %v10863 = vmul.f32 %v5336, %v10741
        %v10864 = vmul.f32 %v5339, %v10742
        %v10865 = vmul.f32 %v5341, %v10743
        %v10866 = vmul.f32 %v5344, %v10744
        %v10867 = vmul.f32 %v5346, %v10745
        %v10868 = vmul.f32 %v5349, %v10746
        %v10869 = vmul.f32 %v5351, %v10747
        %v10870 = vpack.c.bf16 %v10839, %v10838
        %v10871 = vpack.c.bf16 %v10841, %v10840
        %v10872 = vpack.c.bf16 %v10843, %v10842
        %v10873 = vpack.c.bf16 %v10845, %v10844
        %v10874 = vpack.c.bf16 %v10847, %v10846
        %v10875 = vpack.c.bf16 %v10849, %v10848
        %v10876 = vpack.c.bf16 %v10851, %v10850
        %v10877 = vpack.c.bf16 %v10853, %v10852
        %v10878 = vpack.c.bf16 %v10855, %v10854
        %v10879 = vpack.c.bf16 %v10857, %v10856
        %v10880 = vpack.c.bf16 %v10859, %v10858
        %v10881 = vpack.c.bf16 %v10861, %v10860
        %v10882 = vpack.c.bf16 %v10863, %v10862
        %v10883 = vpack.c.bf16 %v10865, %v10864
        %v10884 = vpack.c.bf16 %v10867, %v10866
        %v10885 = vpack.c.bf16 %v10869, %v10868
        %10886 = vmatpush.bf16.msra.mxu0 %v10837
        %10887 = vmatpush.bf16.msra.mxu0 %v10836
        %10888 = vmatpush.bf16.msra.mxu0 %v10835
        %10889 = vmatpush.bf16.msra.mxu0 %v10834
        %10890 = vmatpush.bf16.msra.mxu0 %v10833
        %10891 = vmatpush.bf16.msra.mxu0 %v10832
        %10892 = vmatpush.bf16.msra.mxu0 %v10831
        %10893 = vmatpush.bf16.msra.mxu0 %v10830
        %10894 = vmatmul.bf16.gmra.mxu0 %v10870
        %v10895 = vpop.f32.mrf.mxu0
        %v10896 = vadd.f32 %v5431, %v10895
        %v10897 = vpop.f32.mrf.mxu0
        %v10898 = vadd.f32 %v5433, %v10897
        %10899 = vmatmul.bf16.gmra.mxu0 %v10871
        %v10900 = vpop.f32.mrf.mxu0
        %v10901 = vadd.f32 %v5436, %v10900
        %v10902 = vpop.f32.mrf.mxu0
        %v10903 = vadd.f32 %v5438, %v10902
        %10904 = vmatmul.bf16.gmra.mxu0 %v10872
        %v10905 = vpop.f32.mrf.mxu0
        %v10906 = vadd.f32 %v5441, %v10905
        %v10907 = vpop.f32.mrf.mxu0
        %v10908 = vadd.f32 %v5443, %v10907
        %10909 = vmatmul.bf16.gmra.mxu0 %v10873
        %v10910 = vpop.f32.mrf.mxu0
        %v10911 = vadd.f32 %v5446, %v10910
        %v10912 = vpop.f32.mrf.mxu0
        %v10913 = vadd.f32 %v5448, %v10912
        %10914 = vmatmul.bf16.gmra.mxu0 %v10874
        %v10915 = vpop.f32.mrf.mxu0
        %v10916 = vadd.f32 %v5451, %v10915
        %v10917 = vpop.f32.mrf.mxu0
        %v10918 = vadd.f32 %v5453, %v10917
        %10919 = vmatmul.bf16.gmra.mxu0 %v10875
        %v10920 = vpop.f32.mrf.mxu0
        %v10921 = vadd.f32 %v5456, %v10920
        %v10922 = vpop.f32.mrf.mxu0
        %v10923 = vadd.f32 %v5458, %v10922
        %10924 = vmatmul.bf16.gmra.mxu0 %v10876
        %v10925 = vpop.f32.mrf.mxu0
        %v10926 = vadd.f32 %v5461, %v10925
        %v10927 = vpop.f32.mrf.mxu0
        %v10928 = vadd.f32 %v5463, %v10927
        %10929 = vmatmul.bf16.gmra.mxu0 %v10877
        %v10930 = vpop.f32.mrf.mxu0
        %v10931 = vadd.f32 %v5466, %v10930
        %v10932 = vpop.f32.mrf.mxu0
        %v10933 = vadd.f32 %v5468, %v10932
        %10934 = vmatmul.bf16.gmra.mxu0 %v10878
        %v10935 = vpop.f32.mrf.mxu0
        %v10936 = vadd.f32 %v5471, %v10935
        %v10937 = vpop.f32.mrf.mxu0
        %v10938 = vadd.f32 %v5473, %v10937
        %10939 = vmatmul.bf16.gmra.mxu0 %v10879
        %v10940 = vpop.f32.mrf.mxu0
        %v10941 = vadd.f32 %v5476, %v10940
        %v10942 = vpop.f32.mrf.mxu0
        %v10943 = vadd.f32 %v5478, %v10942
        %10944 = vmatmul.bf16.gmra.mxu0 %v10880
        %v10945 = vpop.f32.mrf.mxu0
        %v10946 = vadd.f32 %v5481, %v10945
        %v10947 = vpop.f32.mrf.mxu0
        %v10948 = vadd.f32 %v5483, %v10947
        %10949 = vmatmul.bf16.gmra.mxu0 %v10881
        %v10950 = vpop.f32.mrf.mxu0
        %v10951 = vadd.f32 %v5486, %v10950
        %v10952 = vpop.f32.mrf.mxu0
        %v10953 = vadd.f32 %v5488, %v10952
        %10954 = vmatmul.bf16.gmra.mxu0 %v10882
        %v10955 = vpop.f32.mrf.mxu0
        %v10956 = vadd.f32 %v5491, %v10955
        %v10957 = vpop.f32.mrf.mxu0
        %v10958 = vadd.f32 %v5493, %v10957
        %10959 = vmatmul.bf16.gmra.mxu0 %v10883
        %v10960 = vpop.f32.mrf.mxu0
        %v10961 = vadd.f32 %v5496, %v10960
        %v10962 = vpop.f32.mrf.mxu0
        %v10963 = vadd.f32 %v5498, %v10962
        %10964 = vmatmul.bf16.gmra.mxu0 %v10884
        %v10965 = vpop.f32.mrf.mxu0
        %v10966 = vadd.f32 %v5501, %v10965
        %v10967 = vpop.f32.mrf.mxu0
        %v10968 = vadd.f32 %v5503, %v10967
        %10969 = vmatmul.bf16.gmra.mxu0 %v10885
        %v10970 = vpop.f32.mrf.mxu0
        %v10971 = vadd.f32 %v5506, %v10970
        %v10972 = vpop.f32.mrf.mxu0
        %v10973 = vadd.f32 %v5508, %v10972
        %10974 = vdwg.mxu0
        %10975 = vst [vmem:[%s1484] sm:$0xff] %v4834
        %10976 = vst [vmem:[%s1484 + $0x10] sm:$0xff] %v4835
        %10977 = vst [vmem:[%s1484 + $0x20] sm:$0xff] %v4836
        %10978 = vst [vmem:[%s1484 + $0x30] sm:$0xff] %v4837
        %10979 = vst [vmem:[%s1484 + $0x40] sm:$0xff] %v4838
        %10980 = vst [vmem:[%s1484 + $0x50] sm:$0xff] %v4839
        %10981 = vst [vmem:[%s1484 + $0x60] sm:$0xff] %v4840
        %10982 = vst [vmem:[%s1484 + $0x70] sm:$0xff] %v4841
        %10983 = vst [vmem:[%s1484 + $0x80] sm:$0xff] %v4842
        %10984 = vst [vmem:[%s1484 + $0x90] sm:$0xff] %v4843
        %10985 = vst [vmem:[%s1484 + $0xa0] sm:$0xff] %v4844
        %10986 = vst [vmem:[%s1484 + $0xb0] sm:$0xff] %v4845
        %10987 = vst [vmem:[%s1484 + $0xc0] sm:$0xff] %v4846
        %10988 = vst [vmem:[%s1484 + $0xd0] sm:$0xff] %v4847
        %10989 = vst [vmem:[%s1484 + $0xe0] sm:$0xff] %v4848
        %10990 = vst [vmem:[%s1484 + $0xf0] sm:$0xff] %v4849
        %10991 = vst [vmem:[%s1484 + $0x100] sm:$0xff] %v4850
        %10992 = vst [vmem:[%s1484 + $0x110] sm:$0xff] %v4851
        %10993 = vst [vmem:[%s1484 + $0x120] sm:$0xff] %v4852
        %10994 = vst [vmem:[%s1484 + $0x130] sm:$0xff] %v4853
        %10995 = vst [vmem:[%s1484 + $0x140] sm:$0xff] %v4854
        %10996 = vst [vmem:[%s1484 + $0x150] sm:$0xff] %v4855
        %10997 = vst [vmem:[%s1484 + $0x160] sm:$0xff] %v4856
        %10998 = vst [vmem:[%s1484 + $0x170] sm:$0xff] %v4857
        %10999 = vst [vmem:[%s1484 + $0x180] sm:$0xff] %v4858
        %11000 = vst [vmem:[%s1484 + $0x190] sm:$0xff] %v4859
        %11001 = vst [vmem:[%s1484 + $0x1a0] sm:$0xff] %v4860
        %11002 = vst [vmem:[%s1484 + $0x1b0] sm:$0xff] %v4861
        %11003 = vst [vmem:[%s1484 + $0x1c0] sm:$0xff] %v4862
        %11004 = vst [vmem:[%s1484 + $0x1d0] sm:$0xff] %v4863
        %11005 = vst [vmem:[%s1484 + $0x1e0] sm:$0xff] %v4864
        %11006 = vst [vmem:[%s1484 + $0x1f0] sm:$0xff] %v4865
        %11007 = vst [vmem:[%s1484 + $0x8] sm:$0xff] %v10896
        %11008 = vst [vmem:[%s1484 + $0x18] sm:$0xff] %v10898
        %11009 = vst [vmem:[%s1484 + $0x28] sm:$0xff] %v10901
        %11010 = vst [vmem:[%s1484 + $0x38] sm:$0xff] %v10903
        %11011 = vst [vmem:[%s1484 + $0x48] sm:$0xff] %v10906
        %11012 = vst [vmem:[%s1484 + $0x58] sm:$0xff] %v10908
        %11013 = vst [vmem:[%s1484 + $0x68] sm:$0xff] %v10911
        %11014 = vst [vmem:[%s1484 + $0x78] sm:$0xff] %v10913
        %11015 = vst [vmem:[%s1484 + $0x88] sm:$0xff] %v10916
        %11016 = vst [vmem:[%s1484 + $0x98] sm:$0xff] %v10918
        %11017 = vst [vmem:[%s1484 + $0xa8] sm:$0xff] %v10921
        %11018 = vst [vmem:[%s1484 + $0xb8] sm:$0xff] %v10923
        %11019 = vst [vmem:[%s1484 + $0xc8] sm:$0xff] %v10926
        %11020 = vst [vmem:[%s1484 + $0xd8] sm:$0xff] %v10928
        %11021 = vst [vmem:[%s1484 + $0xe8] sm:$0xff] %v10931
        %11022 = vst [vmem:[%s1484 + $0xf8] sm:$0xff] %v10933
        %11023 = vst [vmem:[%s1484 + $0x108] sm:$0xff] %v10936
        %11024 = vst [vmem:[%s1484 + $0x118] sm:$0xff] %v10938
        %11025 = vst [vmem:[%s1484 + $0x128] sm:$0xff] %v10941
        %11026 = vst [vmem:[%s1484 + $0x138] sm:$0xff] %v10943
        %11027 = vst [vmem:[%s1484 + $0x148] sm:$0xff] %v10946
        %11028 = vst [vmem:[%s1484 + $0x158] sm:$0xff] %v10948
        %11029 = vst [vmem:[%s1484 + $0x168] sm:$0xff] %v10951
        %11030 = vst [vmem:[%s1484 + $0x178] sm:$0xff] %v10953
        %11031 = vst [vmem:[%s1484 + $0x188] sm:$0xff] %v10956
        %11032 = vst [vmem:[%s1484 + $0x198] sm:$0xff] %v10958
        %11033 = vst [vmem:[%s1484 + $0x1a8] sm:$0xff] %v10961
        %11034 = vst [vmem:[%s1484 + $0x1b8] sm:$0xff] %v10963
        %11035 = vst [vmem:[%s1484 + $0x1c8] sm:$0xff] %v10966
        %11036 = vst [vmem:[%s1484 + $0x1d8] sm:$0xff] %v10968
        %11037 = vst [vmem:[%s1484 + $0x1e8] sm:$0xff] %v10971
        %11038 = vst [vmem:[%s1484 + $0x1f8] sm:$0xff] %v10973
        %s11039 = sand.u32 %s937, 1
        %s11040 = scalar_lea.sflag [#allocation4], %s11039
        %s11041 = sand.u32 %s937, 1
        %s11042 = smul.addr %s11041, 512
        %s11043 = scalar_lea.vmem [#allocation31], %s11042
        // Predicated region
        $region249: #{tpu_custom_call.1} parent=175 // pred_check
          %p11044 = pneg %p947
        $region250: #{tpu_custom_call.1} parent=175 // pred_check_branch
          %11046 = sbr.rel (%p11044) target = $region252
        $region251: #{tpu_custom_call.1} parent=175 // pred_region
          %s11047 = smul.u32 32, %s105
          %11049 = vsyncadd %s11040, 0
          %s11050 = smul.addr %s11047, 2
          %s11051 = smul.addr %s11050, 8
          %s11052 = scalar_lea.hbm %s79, %s11051
          %s11053 = sshll.u32 %s11043, 4
          %s11054 = int_to_ptr.vmem [resolvable:$true] %s11053
          %s11055 = sshll.u32 %s11052, 4
          %s11056 = int_to_ptr.hbm [resolvable:$true] %s11055
          %11061 = dma.vmem_to_hbm [thread:$0]  %s11054, 8192, %s11056, %s11040, 256, 256, 16
        $region252: #{tpu_custom_call.1} parent=175 // pred_fallthru
          _
      $region176: #{tpu_custom_call.1} parent=5 // pred_fallthru
        _
      %p11062 = scmp.le.s32.totalorder 2, %s100
      // Predicated region
      $region253: #{tpu_custom_call.1} parent=5 // pred_check
        %p11063 = pneg %p11062
      $region254: #{tpu_custom_call.1} parent=5 // pred_check_branch
        %11065 = sbr.rel (%p11063) target = $region256
      $region255: #{tpu_custom_call.1} parent=5 // pred_region
        %s11066 = ssub.s32 %s100, 2
        // Predicated region
        $region257: #{tpu_custom_call.1} parent=255 // pred_check
          %p11067 = pneg %p953
        $region258: #{tpu_custom_call.1} parent=255 // pred_check_branch
          %11069 = sbr.rel (%p11067) target = $region260
        $region259: #{tpu_custom_call.1} parent=255 // pred_region
          %s11070 = sand.u32 %s938, 1
          %s11071 = scalar_lea.sflag [#allocation4], %s11070
          %s11072 = sand.u32 %s938, 1
          %s11073 = smul.addr %s11072, 512
          %s11074 = scalar_lea.vmem [#allocation31], %s11073
          %11076 = dma.done %s11071, 8192
        $region260: #{tpu_custom_call.1} parent=255 // pred_fallthru
          _
      $region256: #{tpu_custom_call.1} parent=5 // pred_fallthru
        _
    $region6: #{tpu_custom_call.1} parent=1 // loop_footer
      %s104 = sadd.s32 1, %s100
    $region7: #{tpu_custom_call.1} parent=1 // loop_footer_branch
      %99 = sbr.rel target = $region3
    $region8: #{tpu_custom_call.1} parent=1 // loop_exit
      _
    %11077 = vsyncpa [#allocation3], 1
    %s11078 = scalar_lea.sflag [#allocation3], 1
    %11079 = vsyncpa %s11078, 1
    %11080 = vsyncpa [#allocation6], 1
    %11081 = vsyncpa [#allocation9], 1
    %11082 = vsyncpa [#allocation12], 1
    %11083 = vsyncpa [#allocation15], 1
    %11084 = vsyncpa [#allocation18], 1
    %11085 = vsyncpa [#allocation21], 1
    %11086 = vsyncpa [#allocation24], 1
    %11087 = vsyncpa [#allocation27], 1
    %11088 = vsyncpa [#allocation30], 1
    %11089 = vsyncpa [#allocation4], 1
    %s11090 = scalar_lea.sflag [#allocation4], 1
    %11091 = vsyncpa %s11090, 1

</llo_original>
